<compile_context>
chip_gen: v7x
topology: tpu7x:2x2x1
jax: 0.10.0
libtpu: 0.0.40
codegen_flags: <defaults>
</compile_context>

<pallas_src>
import math
from functools import partial

import jax
import jax.numpy as jnp
from jax.experimental import pallas as pl
from jax.experimental.pallas import tpu as pltpu

_LEAK = 0.2      # LeakyReLU(0.2)
_EPS = 1e-5      # InstanceNorm2d default eps (affine=False)


def _default_vmem_limit():
    try:
        cap = int(pltpu.get_tpu_info().vmem_capacity_bytes)
    except Exception:
        cap = 0
    if cap <= 0:
        cap = 128 * 1024 * 1024
    # ~3/4 of physical VMEM, capped at 100 MiB (v5e/v6e: 96 MiB, v7x: 48 MiB).
    return int(min(100 * 1024 * 1024, cap * 3 // 4))


_VMEM_LIMIT = _default_vmem_limit()


# --------------------------------------------------------------------------
# Fused per-block kernel: [conv3x3 [+ blur]] + noise + LeakyReLU
#                         + InstanceNorm + AdaIN   (one batch element / step)
# --------------------------------------------------------------------------
def _gen_block_kernel(*refs, mode, hp, wp, h, w, cin, cout, blk):
    if mode == "first":
        x_ref, nz_ref, nw_ref, st_ref, o_ref = refs
        m_ref = im2col_ref = blur_ref = None
    elif mode == "conv":
        (x_ref, m_ref, nz_ref, cw_ref, cb_ref, nw_ref, st_ref,
         o_ref, im2col_ref) = refs
        blur_ref = None
    else:  # "upconv"
        (x_ref, m_ref, nz_ref, cw_ref, cb_ref, nw_ref, st_ref,
         o_ref, im2col_ref, blur_ref) = refs

    p_pad = hp * wp
    win0 = 0 if mode == "first" else wp + 1      # first computed flat row
    n_win = p_pad - 2 * win0                     # number of computed rows

    if mode == "first":
        y = x_ref[0, :, :]
        m = None
    else:
        m = m_ref[0, win0:win0 + n_win, :]       # (n_win, 1) interior mask

        # --- conv3x3 as im2col-in-VMEM: 9 shifted contiguous row-slice copies
        #     into a (n_win, 9*cin) bf16 scratch, then ONE K=9*cin MXU matmul
        #     with f32 accumulation (no HBM im2col, ~9x fewer MXU pushes than
        #     nine K=cin dots).
        for k in range(9):
            dy, dx = divmod(k, 3)
            s = dy * wp + dx
            im2col_ref[:, k * cin:(k + 1) * cin] = (
                x_ref[0, s:s + n_win, :].astype(jnp.bfloat16))
        acc = jnp.dot(im2col_ref[...], cw_ref[...],
                      preferred_element_type=jnp.float32) + cb_ref[...]

        if mode == "upconv":
            # --- depthwise 3x3 binomial blur of the zero-padded conv output.
            # Only the thin pad-ring rows of the scratch are zero-filled; the
            # interior store already writes masked zeros at the pad columns.
            blur_ref[0:win0, :] = jnp.zeros((win0, cout), jnp.float32)
            blur_ref[win0 + n_win:, :] = jnp.zeros((win0, cout), jnp.float32)
            blur_ref[win0:win0 + n_win, :] = acc * m

            def bt(dy, dx):
                s = dy * wp + dx
                return blur_ref[s:s + n_win, :]

            y = (bt(0, 0) + bt(0, 2) + bt(2, 0) + bt(2, 2)
                 + 2.0 * (bt(0, 1) + bt(1, 0) + bt(1, 2) + bt(2, 1))
                 + 4.0 * bt(1, 1)) * (1.0 / 16.0)
        else:
            y = acc

    # --- noise (wrapper-generated N(0,1), one value per pixel broadcast over
    # channels, like torch.randn(b,1,h,w)) + LeakyReLU(0.2).
    nz = nz_ref[0, win0:win0 + n_win, :]          # (n_win, 1)
    hact = y + nz * nw_ref[...]
    hact = jnp.maximum(hact, _LEAK * hact)

    # --- InstanceNorm over the h*w interior pixels (masked, centered two-pass
    # variance for numerical safety).
    inv_hw = 1.0 / float(h * w)
    if m is None:
        mean = jnp.sum(hact, axis=0, keepdims=True) * inv_hw
        cent = hact - mean
    else:
        mean = jnp.sum(hact * m, axis=0, keepdims=True) * inv_hw
        cent = (hact - mean) * m
    var = jnp.sum(cent * cent, axis=0, keepdims=True) * inv_hw
    hn = (hact - mean) * jax.lax.rsqrt(var + _EPS)

    # --- AdaIN: this block's slab of the hoisted style matmul, sliced
    # statically; the reference "+1" on the style weight is applied here.
    sw = st_ref[0, blk:blk + 1, 0:cout] + 1.0     # (1, cout)
    sb = st_ref[0, blk:blk + 1, cout:2 * cout]    # (1, cout)
    styled = hn * sw + sb

    # write the interior window exactly once; zero only the thin pad-ring rows
    # (the wrapper discards them) instead of a full-block zero-then-overwrite.
    if win0 > 0:
        o_ref[0, 0:win0, :] = jnp.zeros((win0, cout), jnp.float32)
        o_ref[0, win0 + n_win:, :] = jnp.zeros((win0, cout), jnp.float32)
    o_ref[0, win0:win0 + n_win, :] = styled


def generator_block(blk_cfg, blk_prm, x, styles3d, noise_key):
    """x: (B, H, W, Cin) NHWC f32 -> (B, H', W', Cout) NHWC f32."""
    mode = blk_cfg["mode"]
    cout = blk_cfg["cout"]
    blk_idx = blk_cfg["index"]
    if mode == "upconv":
        # nearest-neighbour x2 upsample (XLA glue).
        # TODO(synk): fold the upsample into the conv's tap indexing to avoid
        # the 4x-sized HBM round trip of the upsampled activation.
        x = jnp.repeat(jnp.repeat(x, 2, axis=1), 2, axis=2)
    bsz, h, w, cin = x.shape

    if mode == "first":
        hp, wp = h, w
        xf = x.reshape(bsz, hp * wp, cin)
    else:
        hp, wp = h + 2, w + 2
        xf = jnp.pad(x, ((0, 0), (1, 1), (1, 1), (0, 0))).reshape(
            bsz, hp * wp, cin)
    p_pad = hp * wp
    win0 = 0 if mode == "first" else wp + 1
    n_win = p_pad - 2 * win0

    # per-pixel N(0,1) noise (torch.randn semantics), laid out in the padded
    # flat grid so the kernel reads one contiguous row window.
    noise = jax.random.normal(noise_key, (bsz, h, w), jnp.float32)
    if mode == "first":
        nz = noise.reshape(bsz, p_pad, 1)
    else:
        nz = jnp.pad(noise, ((0, 0), (1, 1), (1, 1))).reshape(bsz, p_pad, 1)

    n_blocks, sc = styles3d.shape[1], styles3d.shape[2]

    in_arrays = [xf]
    in_specs = [pl.BlockSpec((1, p_pad, cin), lambda i: (i, 0, 0))]
    if mode != "first":
        mask = jnp.pad(jnp.ones((h, w, 1), jnp.float32),
                       ((1, 1), (1, 1), (0, 0))).reshape(1, p_pad, 1)
        in_arrays.append(mask)
        in_specs.append(pl.BlockSpec((1, p_pad, 1), lambda i: (0, 0, 0)))
    in_arrays.append(nz)
    in_specs.append(pl.BlockSpec((1, p_pad, 1), lambda i: (i, 0, 0)))
    if mode != "first":
        in_arrays += [blk_prm["conv_w"], blk_prm["conv_b"]]
        in_specs += [pl.BlockSpec((9 * cin, cout), lambda i: (0, 0)),
                     pl.BlockSpec((1, cout), lambda i: (0, 0))]
    in_arrays += [blk_prm["noise_w"], styles3d]
    in_specs += [pl.BlockSpec((1, cout), lambda i: (0, 0)),
                 pl.BlockSpec((1, n_blocks, sc), lambda i: (i, 0, 0))]

    scratch = []
    if mode != "first":
        scratch.append(pltpu.VMEM((n_win, 9 * cin), jnp.bfloat16))
    if mode == "upconv":
        scratch.append(pltpu.VMEM((p_pad, cout), jnp.float32))

    # TODO(synk): at large resolutions one batch element's map no longer fits
    # VMEM (especially v7x's 64 MiB); that needs an H/W grid axis + two-pass
    # masked InstanceNorm with "arbitrary" semantics, bf16 inter-block
    # activations, and batching several batch elements per grid step.
    kernel = partial(_gen_block_kernel, mode=mode, hp=hp, wp=wp, h=h, w=w,
                     cin=cin, cout=cout, blk=blk_idx)
    y = pl.pallas_call(
        kernel,
        grid=(bsz,),                               # batch axis -> parallel
        in_specs=in_specs,
        out_specs=pl.BlockSpec((1, p_pad, cout), lambda i: (i, 0, 0)),
        out_shape=jax.ShapeDtypeStruct((bsz, p_pad, cout), jnp.float32),
        scratch_shapes=scratch,
        compiler_params=pltpu.CompilerParams(
            dimension_semantics=("parallel",),
            vmem_limit_bytes=_VMEM_LIMIT),
    )(*in_arrays)

    if mode == "first":
        return y.reshape(bsz, h, w, cout)
    return y.reshape(bsz, hp, wp, cout)[:, 1:-1, 1:-1, :]


# --------------------------------------------------------------------------
# Fused mapping network + hoisted style matmul + lane-dense out-conv
# --------------------------------------------------------------------------
def _mapping_kernel(*refs, n_layers):
    # refs = (z, w0, b0, w1, b1, ..., out); weights bf16, biases f32.
    z_ref, o_ref = refs[0], refs[-1]
    hcur = z_ref[...]
    for i in range(n_layers):
        w_ref = refs[1 + 2 * i]
        b_ref = refs[2 + 2 * i]
        y = jnp.dot(hcur.astype(jnp.bfloat16), w_ref[...],
                    preferred_element_type=jnp.float32) + b_ref[...]
        hcur = jnp.maximum(y, _LEAK * y)          # LeakyReLU(0.2)
    o_ref[...] = hcur


def pallas_mapping(z, layers):
    args = [z]
    for wgt, bias in layers:
        args += [wgt, bias]
    out_dim = layers[-1][0].shape[1]
    return pl.pallas_call(
        partial(_mapping_kernel, n_layers=len(layers)),
        out_shape=jax.ShapeDtypeStruct((z.shape[0], out_dim), jnp.float32),
        in_specs=[pl.BlockSpec(memory_space=pltpu.MemorySpace.VMEM)] * len(args),
        out_specs=pl.BlockSpec(memory_space=pltpu.MemorySpace.VMEM),
        compiler_params=pltpu.CompilerParams(vmem_limit_bytes=_VMEM_LIMIT),
    )(*args)


def _styles_kernel(w_ref, mat_ref, b_ref, o_ref):
    o_ref[...] = jnp.dot(w_ref[...].astype(jnp.bfloat16), mat_ref[...],
                         preferred_element_type=jnp.float32) + b_ref[...]


def pallas_styles(w_embs, mat, bias):
    return pl.pallas_call(
        _styles_kernel,
        out_shape=jax.ShapeDtypeStruct((w_embs.shape[0], mat.shape[1]),
                                       jnp.float32),
        in_specs=[pl.BlockSpec(memory_space=pltpu.MemorySpace.VMEM)] * 3,
        out_specs=pl.BlockSpec(memory_space=pltpu.MemorySpace.VMEM),
        compiler_params=pltpu.CompilerParams(vmem_limit_bytes=_VMEM_LIMIT),
    )(w_embs, mat, bias)


def _out_conv_kernel(xt_ref, w_ref, b_ref, o_ref):
    # xt: (C, TILE_M) f32, w: (D_pad, C) bf16 -> o: (D_pad, TILE_M) lane-dense.
    # MXU-native contraction (xt contracts on its sublane dim: no hidden
    # per-tile transpose).
    o_ref[...] = jnp.dot(w_ref[...], xt_ref[...].astype(jnp.bfloat16),
                         preferred_element_type=jnp.float32) + b_ref[...]


def pallas_out_conv(xt, wt, bias):
    c, m = xt.shape
    d = wt.shape[0]
    # fat M tiles (fewer ~0.35us grid steps); per-tile VMEM is tiny at C<=512.
    tile_m = m if m <= 4096 else 4096
    return pl.pallas_call(
        _out_conv_kernel,
        grid=(pl.cdiv(m, tile_m),),
        in_specs=[pl.BlockSpec((c, tile_m), lambda i: (0, i)),
                  pl.BlockSpec((d, c), lambda i: (0, 0)),
                  pl.BlockSpec((d, 1), lambda i: (0, 0))],
        out_specs=pl.BlockSpec((d, tile_m), lambda i: (0, i)),
        out_shape=jax.ShapeDtypeStruct((d, m), jnp.float32),
        compiler_params=pltpu.CompilerParams(
            dimension_semantics=("parallel",),
            vmem_limit_bytes=_VMEM_LIMIT),
    )(xt, wt, bias)


# --------------------------------------------------------------------------
# Parameter construction (deterministic, synthetic)
# --------------------------------------------------------------------------
def init_generator_params(key, *, img_size, img_depth, z_dim, w_dim,
                          mapping_depth, input_depth, smallest_map_size,
                          base_depth, max_depth):
    assert img_size > 4 and math.log2(img_size).is_integer()
    keys = iter(jax.random.split(key, 512))

    def dense(in_d, out_d, scale=0.05, dtype=jnp.bfloat16):
        wgt = jax.random.normal(next(keys), (in_d, out_d), jnp.float32) * scale
        return wgt.astype(dtype), jnp.zeros((1, out_d), jnp.float32)

    mapping = []
    in_d = z_dim
    for _ in range(mapping_depth):
        mapping.append(dense(in_d, w_dim))
        in_d = w_dim

    # same block schedule as the torch Generator.__init__
    specs = []
    depth = base_depth * img_size // smallest_map_size
    out_depth = min(depth, max_depth)
    specs += [(input_depth, input_depth, "first"),
              (input_depth, out_depth, "conv")]
    cur_in = out_depth
    depth //= 2
    size = smallest_map_size
    while size < img_size:
        out_depth = min(depth, max_depth)
        specs += [(cur_in, out_depth, "upconv"), (out_depth, out_depth, "conv")]
        cur_in = out_depth
        depth //= 2
        size *= 2

    max_co = max(co for _, co, _ in specs)

    cfgs, blocks, style_slabs = [], [], []
    for idx, (ci, co, mode) in enumerate(specs):
        cfg = {"mode": mode, "cin": ci, "cout": co, "index": idx}
        prm = {"noise_w": jnp.zeros((1, co), jnp.float32)}   # zeros(1,out,1,1)
        if mode != "first":
            # TODO(synk): up_conv_blur / conv3x3 / init_weights bodies were not
            # provided; assumed nearest-up x2 -> conv3x3(pad=1) ->
            # [1,2,1]x[1,2,1]/16 blur and a small-Gaussian init.  A real torch
            # Conv2d weight [out,in,kh,kw] maps to this (9*cin, cout) layout
            # via .permute(2,3,1,0).reshape(9*cin, cout).
            cw = jax.random.normal(next(keys), (3, 3, ci, co),
                                   jnp.float32) * 0.05
            prm["conv_w"] = cw.reshape(9 * ci, co).astype(jnp.bfloat16)
            prm["conv_b"] = jnp.zeros((1, co), jnp.float32)
        sw_w, _ = dense(w_dim, co, dtype=jnp.float32)
        sb_w, _ = dense(w_dim, co, dtype=jnp.float32)
        # fixed-stride slab per block: [0:co]=style_weight, [co:2co]=style_bias
        slab = jnp.zeros((w_dim, 2 * max_co), jnp.float32)
        slab = slab.at[:, 0:co].set(sw_w).at[:, co:2 * co].set(sb_w)
        style_slabs.append(slab)
        cfgs.append(cfg)
        blocks.append(prm)

    d_pad = ((img_depth + 7) // 8) * 8                      # sublane-pad D
    out_w, _ = dense(cur_in, img_depth, dtype=jnp.float32)  # (C, img_depth)
    out_wT = jnp.zeros((d_pad, cur_in), jnp.float32).at[:img_depth].set(out_w.T)

    params = {
        "mapping": mapping,
        "learned_input": jnp.ones((1, input_depth, smallest_map_size,
                                   smallest_map_size), jnp.float32),  # init.ones_
        "blocks": blocks,
        # all blocks' style_weight|style_bias Linears fused into one matrix
        "style_w_all": jnp.concatenate(style_slabs, axis=1).astype(jnp.bfloat16),
        "style_b_all": jnp.zeros((1, len(specs) * 2 * max_co), jnp.float32),
        "out_wT": out_wT.astype(jnp.bfloat16),               # (d_pad, C)
        "out_b": jnp.zeros((d_pad, 1), jnp.float32),
    }
    config = {"blocks": tuple(cfgs), "img_depth": img_depth, "max_co": max_co}
    return config, params


# --------------------------------------------------------------------------
# Forward pass
# --------------------------------------------------------------------------
def generator_forward(config, params, z_embs, noise_key):
    bsz = z_embs.shape[0]
    n_blocks = len(config["blocks"])

    # 1) mapping network: all Linear+LeakyReLU layers fused in one kernel.
    w_embs = pallas_mapping(z_embs, params["mapping"])

    # 2) AdaIN styles for every block hoisted into a single matmul; reshaped
    #    once to (B, n_blocks, 2*max_co) so each block kernel slices its slab
    #    statically in-kernel (no per-block XLA slices).
    styles_all = pallas_styles(w_embs, params["style_w_all"],
                               params["style_b_all"])
    styles3d = styles_all.reshape(bsz, n_blocks, 2 * config["max_co"])

    # 3) learned input (stored NCHW like torch) -> NHWC.
    x = jnp.tile(params["learned_input"], (bsz, 1, 1, 1))
    x = jnp.transpose(x, (0, 2, 3, 1))

    # 4) per-block noise keys (torch.randn noise is generated in the wrapper).
    noise_keys = jax.random.split(noise_key, n_blocks)

    for i, (blk_cfg, blk_prm) in enumerate(zip(config["blocks"],
                                               params["blocks"])):
        x = generator_block(blk_cfg, blk_prm, x, styles3d, noise_keys[i])

    # 5) final 1x1 conv on a (C, M) transposed layout -> lane-dense stores.
    bsz, h, w, c = x.shape
    x_t = x.reshape(bsz * h * w, c).T
    y_t = pallas_out_conv(x_t, params["out_wT"], params["out_b"])
    y_t = y_t[:config["img_depth"]]
    return y_t.reshape(config["img_depth"], bsz, h, w).transpose(1, 0, 2, 3)


# --------------------------------------------------------------------------
if __name__ == "__main__":
    key = jax.random.PRNGKey(0)
    pkey, zkey, nkey = jax.random.split(key, 3)

    IMG_SIZE, IMG_DEPTH, Z_DIM, W_DIM = 8, 3, 32, 32
    config, params = init_generator_params(
        pkey,
        img_size=IMG_SIZE, img_depth=IMG_DEPTH, z_dim=Z_DIM, w_dim=W_DIM,
        mapping_depth=2, input_depth=16, smallest_map_size=4,
        base_depth=8, max_depth=32,
    )

    fwd = jax.jit(partial(generator_forward, config))
    z = jax.random.normal(zkey, (2, Z_DIM), jnp.float32)
    out = jax.block_until_ready(fwd(params, z, nkey))

    assert out.shape == (2, IMG_DEPTH, IMG_SIZE, IMG_SIZE), out.shape
    assert bool(jnp.all(jnp.isfinite(out)))
    print("KERNEL_OK")
</pallas_src>

<mosaic_0001>
module attributes {stable_mosaic.version = 11 : i64} {
  func.func @_mapping_kernel(%arg0: memref<2x32xf32, #tpu.memory_space<vmem>>, %arg1: memref<32x32xbf16, #tpu.memory_space<vmem>>, %arg2: memref<1x32xf32, #tpu.memory_space<vmem>>, %arg3: memref<32x32xbf16, #tpu.memory_space<vmem>>, %arg4: memref<1x32xf32, #tpu.memory_space<vmem>>, %arg5: memref<2x32xf32, #tpu.memory_space<vmem>>) attributes {dimension_semantics = [], scalar_prefetch = 0 : i64, scratch_operands = 0 : i64, tpu.core_type = #tpu.core_type<tc>} {
    %c0 = arith.constant 0 : index
    %c0_0 = arith.constant 0 : index
    %0 = vector.load %arg0[%c0, %c0_0] : memref<2x32xf32, #tpu.memory_space<vmem>>, vector<2x32xf32>
    %1 = arith.truncf %0 : vector<2x32xf32> to vector<2x32xbf16>
    %c0_1 = arith.constant 0 : index
    %c0_2 = arith.constant 0 : index
    %2 = vector.load %arg1[%c0_1, %c0_2] : memref<32x32xbf16, #tpu.memory_space<vmem>>, vector<32x32xbf16>
    %cst = arith.constant dense<0.000000e+00> : vector<2x32xf32>
    %3 = tpu.matmul %1, %2, %cst {dimension_numbers = #tpu.dot_dimension_numbers<[1], [0], [0], [1], [0, 0, 1, 1], [], []>} : vector<2x32xbf16>, vector<32x32xbf16>, vector<2x32xf32> -> vector<2x32xf32>
    %c0_3 = arith.constant 0 : index
    %c0_4 = arith.constant 0 : index
    %4 = vector.load %arg2[%c0_3, %c0_4] : memref<1x32xf32, #tpu.memory_space<vmem>>, vector<1x32xf32>
    %5 = vector.broadcast %4 : vector<1x32xf32> to vector<2x32xf32>
    %6 = arith.addf %3, %5 : vector<2x32xf32>
    %cst_5 = arith.constant 2.000000e-01 : f32
    %7 = vector.broadcast %cst_5 : f32 to vector<2x32xf32>
    %8 = arith.mulf %7, %6 : vector<2x32xf32>
    %9 = arith.maximumf %6, %8 : vector<2x32xf32>
    %10 = arith.truncf %9 : vector<2x32xf32> to vector<2x32xbf16>
    %c0_6 = arith.constant 0 : index
    %c0_7 = arith.constant 0 : index
    %11 = vector.load %arg3[%c0_6, %c0_7] : memref<32x32xbf16, #tpu.memory_space<vmem>>, vector<32x32xbf16>
    %cst_8 = arith.constant dense<0.000000e+00> : vector<2x32xf32>
    %12 = tpu.matmul %10, %11, %cst_8 {dimension_numbers = #tpu.dot_dimension_numbers<[1], [0], [0], [1], [0, 0, 1, 1], [], []>} : vector<2x32xbf16>, vector<32x32xbf16>, vector<2x32xf32> -> vector<2x32xf32>
    %c0_9 = arith.constant 0 : index
    %c0_10 = arith.constant 0 : index
    %13 = vector.load %arg4[%c0_9, %c0_10] : memref<1x32xf32, #tpu.memory_space<vmem>>, vector<1x32xf32>
    %14 = vector.broadcast %13 : vector<1x32xf32> to vector<2x32xf32>
    %15 = arith.addf %12, %14 : vector<2x32xf32>
    %cst_11 = arith.constant 2.000000e-01 : f32
    %16 = vector.broadcast %cst_11 : f32 to vector<2x32xf32>
    %17 = arith.mulf %16, %15 : vector<2x32xf32>
    %18 = arith.maximumf %15, %17 : vector<2x32xf32>
    %c0_12 = arith.constant 0 : index
    %c0_13 = arith.constant 0 : index
    %19 = vector.load %arg5[%c0_12, %c0_13] : memref<2x32xf32, #tpu.memory_space<vmem>>, vector<2x32xf32>
    tpu.vector_store %arg5[%c0_12, %c0_13], %18 {strides = array<i32>} : memref<2x32xf32, #tpu.memory_space<vmem>>, vector<2x32xf32>,
    return
  }
}

module attributes {stable_mosaic.version = 11 : i64} {
  func.func @_styles_kernel(%arg0: memref<2x32xf32, #tpu.memory_space<vmem>>, %arg1: memref<32x128xbf16, #tpu.memory_space<vmem>>, %arg2: memref<1x128xf32, #tpu.memory_space<vmem>>, %arg3: memref<2x128xf32, #tpu.memory_space<vmem>>) attributes {dimension_semantics = [], scalar_prefetch = 0 : i64, scratch_operands = 0 : i64, tpu.core_type = #tpu.core_type<tc>} {
    %c0 = arith.constant 0 : index
    %c0_0 = arith.constant 0 : index
    %0 = vector.load %arg0[%c0, %c0_0] : memref<2x32xf32, #tpu.memory_space<vmem>>, vector<2x32xf32>
    %1 = arith.truncf %0 : vector<2x32xf32> to vector<2x32xbf16>
    %c0_1 = arith.constant 0 : index
    %c0_2 = arith.constant 0 : index
    %2 = vector.load %arg1[%c0_1, %c0_2] : memref<32x128xbf16, #tpu.memory_space<vmem>>, vector<32x128xbf16>
    %cst = arith.constant dense<0.000000e+00> : vector<2x128xf32>
    %3 = tpu.matmul %1, %2, %cst {dimension_numbers = #tpu.dot_dimension_numbers<[1], [0], [0], [1], [0, 0, 1, 1], [], []>} : vector<2x32xbf16>, vector<32x128xbf16>, vector<2x128xf32> -> vector<2x128xf32>
    %c0_3 = arith.constant 0 : index
    %c0_4 = arith.constant 0 : index
    %4 = vector.load %arg2[%c0_3, %c0_4] : memref<1x128xf32, #tpu.memory_space<vmem>>, vector<1x128xf32>
    %5 = vector.broadcast %4 : vector<1x128xf32> to vector<2x128xf32>
    %6 = arith.addf %3, %5 : vector<2x128xf32>
    %c0_5 = arith.constant 0 : index
    %c0_6 = arith.constant 0 : index
    %7 = vector.load %arg3[%c0_5, %c0_6] : memref<2x128xf32, #tpu.memory_space<vmem>>, vector<2x128xf32>
    tpu.vector_store %arg3[%c0_5, %c0_6], %6 {strides = array<i32>} : memref<2x128xf32, #tpu.memory_space<vmem>>, vector<2x128xf32>,
    return
  }
}

module attributes {stable_mosaic.version = 11 : i64} {
  func.func @_gen_block_kernel(%arg0: i32, %arg1: memref<1x16x16xf32, #tpu.memory_space<vmem>>, %arg2: memref<1x16x1xf32, #tpu.memory_space<vmem>>, %arg3: memref<1x16xf32, #tpu.memory_space<vmem>>, %arg4: memref<1x4x32xf32, #tpu.memory_space<vmem>>, %arg5: memref<1x16x16xf32, #tpu.memory_space<vmem>>) attributes {dimension_semantics = [#tpu.dimension_semantics<parallel>], iteration_bounds = array<i64: 2>, scalar_prefetch = 0 : i64, scratch_operands = 0 : i64, tpu.core_type = #tpu.core_type<tc>, window_params = [{transform_indices = @transform_0, window_bounds = array<i64: 1, 16, 16>}, {transform_indices = @transform_1, window_bounds = array<i64: 1, 16, 1>}, {pipeline_mode = #tpu.pipeline_mode<synchronous>, transform_indices = @transform_2, window_bounds = array<i64: 1, 16>}, {transform_indices = @transform_3, window_bounds = array<i64: 1, 4, 32>}, {transform_indices = @transform_4, window_bounds = array<i64: 1, 16, 16>}]} {
    %c0 = arith.constant 0 : index
    %c0_0 = arith.constant 0 : index
    %c0_1 = arith.constant 0 : index
    %0 = vector.load %arg1[%c0, %c0_0, %c0_1] : memref<1x16x16xf32, #tpu.memory_space<vmem>>, vector<1x16x16xf32>
    %1 = vector.shape_cast %0 : vector<1x16x16xf32> to vector<16x16xf32>
    %c0_2 = arith.constant 0 : index
    %c0_3 = arith.constant 0 : index
    %c0_4 = arith.constant 0 : index
    %2 = vector.load %arg2[%c0_2, %c0_3, %c0_4] : memref<1x16x1xf32, #tpu.memory_space<vmem>>, vector<1x16x1xf32>
    %3 = vector.shape_cast %2 : vector<1x16x1xf32> to vector<16x1xf32>
    %c0_5 = arith.constant 0 : index
    %c0_6 = arith.constant 0 : index
    %4 = vector.load %arg3[%c0_5, %c0_6] : memref<1x16xf32, #tpu.memory_space<vmem>>, vector<1x16xf32>
    %5 = vector.broadcast %3 : vector<16x1xf32> to vector<16x16xf32>
    %6 = vector.broadcast %4 : vector<1x16xf32> to vector<16x16xf32>
    %7 = arith.mulf %5, %6 : vector<16x16xf32>
    %8 = arith.addf %1, %7 : vector<16x16xf32>
    %cst = arith.constant 2.000000e-01 : f32
    %9 = vector.broadcast %cst : f32 to vector<16x16xf32>
    %10 = arith.mulf %9, %8 : vector<16x16xf32>
    %11 = arith.maximumf %8, %10 : vector<16x16xf32>
    %cst_7 = arith.constant dense<0.000000e+00> : vector<16xf32>
    %12 = vector.multi_reduction <add>, %11, %cst_7 [0] : vector<16x16xf32> to vector<16xf32>
    %13 = vector.shape_cast %12 : vector<16xf32> to vector<1x16xf32>
    %cst_8 = arith.constant 6.250000e-02 : f32
    %14 = vector.broadcast %cst_8 : f32 to vector<1x16xf32>
    %15 = arith.mulf %13, %14 : vector<1x16xf32>
    %16 = vector.broadcast %15 : vector<1x16xf32> to vector<16x16xf32>
    %17 = arith.subf %11, %16 : vector<16x16xf32>
    %18 = arith.mulf %17, %17 : vector<16x16xf32>
    %cst_9 = arith.constant dense<0.000000e+00> : vector<16xf32>
    %19 = vector.multi_reduction <add>, %18, %cst_9 [0] : vector<16x16xf32> to vector<16xf32>
    %20 = vector.shape_cast %19 : vector<16xf32> to vector<1x16xf32>
    %cst_10 = arith.constant 6.250000e-02 : f32
    %21 = vector.broadcast %cst_10 : f32 to vector<1x16xf32>
    %22 = arith.mulf %20, %21 : vector<1x16xf32>
    %23 = vector.broadcast %15 : vector<1x16xf32> to vector<16x16xf32>
    %24 = arith.subf %11, %23 : vector<16x16xf32>
    %cst_11 = arith.constant 9.99999974E-6 : f32
    %25 = vector.broadcast %cst_11 : f32 to vector<1x16xf32>
    %26 = arith.addf %22, %25 : vector<1x16xf32>
    %27 = math.rsqrt %26 : vector<1x16xf32>
    %28 = vector.broadcast %27 : vector<1x16xf32> to vector<16x16xf32>
    %29 = arith.mulf %24, %28 : vector<16x16xf32>
    %c0_12 = arith.constant 0 : index
    %c0_13 = arith.constant 0 : index
    %c0_14 = arith.constant 0 : index
    %30 = vector.load %arg4[%c0_12, %c0_13, %c0_14] : memref<1x4x32xf32, #tpu.memory_space<vmem>>, vector<1x1x16xf32>
    %31 = vector.shape_cast %30 : vector<1x1x16xf32> to vector<1x16xf32>
    %cst_15 = arith.constant 1.000000e+00 : f32
    %32 = vector.broadcast %cst_15 : f32 to vector<1x16xf32>
    %33 = arith.addf %31, %32 : vector<1x16xf32>
    %c0_16 = arith.constant 0 : index
    %c0_17 = arith.constant 0 : index
    %c16 = arith.constant 16 : index
    %34 = vector.load %arg4[%c0_16, %c0_17, %c16] : memref<1x4x32xf32, #tpu.memory_space<vmem>>, vector<1x1x16xf32>
    %35 = vector.shape_cast %34 : vector<1x1x16xf32> to vector<1x16xf32>
    %36 = vector.broadcast %33 : vector<1x16xf32> to vector<16x16xf32>
    %37 = arith.mulf %29, %36 : vector<16x16xf32>
    %38 = vector.broadcast %35 : vector<1x16xf32> to vector<16x16xf32>
    %39 = arith.addf %37, %38 : vector<16x16xf32>
    %c0_18 = arith.constant 0 : index
    %c0_19 = arith.constant 0 : index
    %c0_20 = arith.constant 0 : index
    %40 = vector.load %arg5[%c0_18, %c0_19, %c0_20] : memref<1x16x16xf32, #tpu.memory_space<vmem>>, vector<1x16x16xf32>
    %41 = vector.shape_cast %40 : vector<1x16x16xf32> to vector<16x16xf32>
    %42 = vector.shape_cast %39 : vector<16x16xf32> to vector<1x16x16xf32>
    tpu.vector_store %arg5[%c0_18, %c0_19, %c0_20], %42 {strides = array<i32>} : memref<1x16x16xf32, #tpu.memory_space<vmem>>, vector<1x16x16xf32>,
    return
  }
  func.func @transform_0(%arg0: i32) -> (i32, i32, i32) {
    %c0_i32 = arith.constant 0 : i32
    %c0_i32_0 = arith.constant 0 : i32
    %c0_i32_1 = arith.constant 0 : i32
    return %arg0, %c0_i32, %c0_i32_0 : i32, i32, i32
  }
  func.func @transform_1(%arg0: i32) -> (i32, i32, i32) {
    %c0_i32 = arith.constant 0 : i32
    %c0_i32_0 = arith.constant 0 : i32
    %c0_i32_1 = arith.constant 0 : i32
    return %arg0, %c0_i32, %c0_i32_0 : i32, i32, i32
  }
  func.func @transform_2(%arg0: i32) -> (i32, i32) {
    %c0_i32 = arith.constant 0 : i32
    %c0_i32_0 = arith.constant 0 : i32
    %c0_i32_1 = arith.constant 0 : i32
    return %c0_i32, %c0_i32_0 : i32, i32
  }
  func.func @transform_3(%arg0: i32) -> (i32, i32, i32) {
    %c0_i32 = arith.constant 0 : i32
    %c0_i32_0 = arith.constant 0 : i32
    %c0_i32_1 = arith.constant 0 : i32
    return %arg0, %c0_i32, %c0_i32_0 : i32, i32, i32
  }
  func.func @transform_4(%arg0: i32) -> (i32, i32, i32) {
    %c0_i32 = arith.constant 0 : i32
    %c0_i32_0 = arith.constant 0 : i32
    %c0_i32_1 = arith.constant 0 : i32
    return %arg0, %c0_i32, %c0_i32_0 : i32, i32, i32
  }
}

module attributes {stable_mosaic.version = 11 : i64} {
  func.func @_gen_block_kernel(%arg0: i32, %arg1: memref<1x36x16xf32, #tpu.memory_space<vmem>>, %arg2: memref<1x36x1xf32, #tpu.memory_space<vmem>>, %arg3: memref<1x36x1xf32, #tpu.memory_space<vmem>>, %arg4: memref<144x16xbf16, #tpu.memory_space<vmem>>, %arg5: memref<1x16xf32, #tpu.memory_space<vmem>>, %arg6: memref<1x16xf32, #tpu.memory_space<vmem>>, %arg7: memref<1x4x32xf32, #tpu.memory_space<vmem>>, %arg8: memref<1x36x16xf32, #tpu.memory_space<vmem>>, %arg9: memref<22x144xbf16, #tpu.memory_space<vmem>>) attributes {dimension_semantics = [#tpu.dimension_semantics<parallel>], iteration_bounds = array<i64: 2>, scalar_prefetch = 0 : i64, scratch_operands = 1 : i64, tpu.core_type = #tpu.core_type<tc>, window_params = [{transform_indices = @transform_0, window_bounds = array<i64: 1, 36, 16>}, {pipeline_mode = #tpu.pipeline_mode<synchronous>, transform_indices = @transform_1, window_bounds = array<i64: 1, 36, 1>}, {transform_indices = @transform_2, window_bounds = array<i64: 1, 36, 1>}, {pipeline_mode = #tpu.pipeline_mode<synchronous>, transform_indices = @transform_3, window_bounds = array<i64: 144, 16>}, {pipeline_mode = #tpu.pipeline_mode<synchronous>, transform_indices = @transform_4, window_bounds = array<i64: 1, 16>}, {pipeline_mode = #tpu.pipeline_mode<synchronous>, transform_indices = @transform_5, window_bounds = array<i64: 1, 16>}, {transform_indices = @transform_6, window_bounds = array<i64: 1, 4, 32>}, {transform_indices = @transform_7, window_bounds = array<i64: 1, 36, 16>}]} {
    %c0 = arith.constant 0 : index
    %c7 = arith.constant 7 : index
    %c0_0 = arith.constant 0 : index
    %0 = vector.load %arg2[%c0, %c7, %c0_0] : memref<1x36x1xf32, #tpu.memory_space<vmem>>, vector<1x22x1xf32>
    %1 = vector.shape_cast %0 : vector<1x22x1xf32> to vector<22x1xf32>
    %c0_1 = arith.constant 0 : index
    %c0_2 = arith.constant 0 : index
    %c0_3 = arith.constant 0 : index
    %2 = vector.load %arg1[%c0_1, %c0_2, %c0_3] : memref<1x36x16xf32, #tpu.memory_space<vmem>>, vector<1x22x16xf32>
    %3 = vector.shape_cast %2 : vector<1x22x16xf32> to vector<22x16xf32>
    %4 = arith.truncf %3 : vector<22x16xf32> to vector<22x16xbf16>
    %c0_4 = arith.constant 0 : index
    %c0_5 = arith.constant 0 : index
    %5 = vector.load %arg9[%c0_4, %c0_5] : memref<22x144xbf16, #tpu.memory_space<vmem>>, vector<22x16xbf16>
    tpu.vector_store %arg9[%c0_4, %c0_5], %4 {strides = array<i32>} : memref<22x144xbf16, #tpu.memory_space<vmem>>, vector<22x16xbf16>,
    %c0_6 = arith.constant 0 : index
    %c1 = arith.constant 1 : index
    %c0_7 = arith.constant 0 : index
    %6 = vector.load %arg1[%c0_6, %c1, %c0_7] : memref<1x36x16xf32, #tpu.memory_space<vmem>>, vector<1x22x16xf32>
    %7 = vector.shape_cast %6 : vector<1x22x16xf32> to vector<22x16xf32>
    %8 = arith.truncf %7 : vector<22x16xf32> to vector<22x16xbf16>
    %c0_8 = arith.constant 0 : index
    %c16 = arith.constant 16 : index
    %9 = vector.load %arg9[%c0_8, %c16] : memref<22x144xbf16, #tpu.memory_space<vmem>>, vector<22x16xbf16>
    tpu.vector_store %arg9[%c0_8, %c16], %8 {strides = array<i32>} : memref<22x144xbf16, #tpu.memory_space<vmem>>, vector<22x16xbf16>,
    %c0_9 = arith.constant 0 : index
    %c2 = arith.constant 2 : index
    %c0_10 = arith.constant 0 : index
    %10 = vector.load %arg1[%c0_9, %c2, %c0_10] : memref<1x36x16xf32, #tpu.memory_space<vmem>>, vector<1x22x16xf32>
    %11 = vector.shape_cast %10 : vector<1x22x16xf32> to vector<22x16xf32>
    %12 = arith.truncf %11 : vector<22x16xf32> to vector<22x16xbf16>
    %c0_11 = arith.constant 0 : index
    %c32 = arith.constant 32 : index
    %13 = vector.load %arg9[%c0_11, %c32] : memref<22x144xbf16, #tpu.memory_space<vmem>>, vector<22x16xbf16>
    tpu.vector_store %arg9[%c0_11, %c32], %12 {strides = array<i32>} : memref<22x144xbf16, #tpu.memory_space<vmem>>, vector<22x16xbf16>,
    %c0_12 = arith.constant 0 : index
    %c6 = arith.constant 6 : index
    %c0_13 = arith.constant 0 : index
    %14 = vector.load %arg1[%c0_12, %c6, %c0_13] : memref<1x36x16xf32, #tpu.memory_space<vmem>>, vector<1x22x16xf32>
    %15 = vector.shape_cast %14 : vector<1x22x16xf32> to vector<22x16xf32>
    %16 = arith.truncf %15 : vector<22x16xf32> to vector<22x16xbf16>
    %c0_14 = arith.constant 0 : index
    %c48 = arith.constant 48 : index
    %17 = vector.load %arg9[%c0_14, %c48] : memref<22x144xbf16, #tpu.memory_space<vmem>>, vector<22x16xbf16>
    tpu.vector_store %arg9[%c0_14, %c48], %16 {strides = array<i32>} : memref<22x144xbf16, #tpu.memory_space<vmem>>, vector<22x16xbf16>,
    %c0_15 = arith.constant 0 : index
    %c7_16 = arith.constant 7 : index
    %c0_17 = arith.constant 0 : index
    %18 = vector.load %arg1[%c0_15, %c7_16, %c0_17] : memref<1x36x16xf32, #tpu.memory_space<vmem>>, vector<1x22x16xf32>
    %19 = vector.shape_cast %18 : vector<1x22x16xf32> to vector<22x16xf32>
    %20 = arith.truncf %19 : vector<22x16xf32> to vector<22x16xbf16>
    %c0_18 = arith.constant 0 : index
    %c64 = arith.constant 64 : index
    %21 = vector.load %arg9[%c0_18, %c64] : memref<22x144xbf16, #tpu.memory_space<vmem>>, vector<22x16xbf16>
    tpu.vector_store %arg9[%c0_18, %c64], %20 {strides = array<i32>} : memref<22x144xbf16, #tpu.memory_space<vmem>>, vector<22x16xbf16>,
    %c0_19 = arith.constant 0 : index
    %c8 = arith.constant 8 : index
    %c0_20 = arith.constant 0 : index
    %22 = vector.load %arg1[%c0_19, %c8, %c0_20] : memref<1x36x16xf32, #tpu.memory_space<vmem>>, vector<1x22x16xf32>
    %23 = vector.shape_cast %22 : vector<1x22x16xf32> to vector<22x16xf32>
    %24 = arith.truncf %23 : vector<22x16xf32> to vector<22x16xbf16>
    %c0_21 = arith.constant 0 : index
    %c80 = arith.constant 80 : index
    %25 = vector.load %arg9[%c0_21, %c80] : memref<22x144xbf16, #tpu.memory_space<vmem>>, vector<22x16xbf16>
    tpu.vector_store %arg9[%c0_21, %c80], %24 {strides = array<i32>} : memref<22x144xbf16, #tpu.memory_space<vmem>>, vector<22x16xbf16>,
    %c0_22 = arith.constant 0 : index
    %c12 = arith.constant 12 : index
    %c0_23 = arith.constant 0 : index
    %26 = vector.load %arg1[%c0_22, %c12, %c0_23] : memref<1x36x16xf32, #tpu.memory_space<vmem>>, vector<1x22x16xf32>
    %27 = vector.shape_cast %26 : vector<1x22x16xf32> to vector<22x16xf32>
    %28 = arith.truncf %27 : vector<22x16xf32> to vector<22x16xbf16>
    %c0_24 = arith.constant 0 : index
    %c96 = arith.constant 96 : index
    %29 = vector.load %arg9[%c0_24, %c96] : memref<22x144xbf16, #tpu.memory_space<vmem>>, vector<22x16xbf16>
    tpu.vector_store %arg9[%c0_24, %c96], %28 {strides = array<i32>} : memref<22x144xbf16, #tpu.memory_space<vmem>>, vector<22x16xbf16>,
    %c0_25 = arith.constant 0 : index
    %c13 = arith.constant 13 : index
    %c0_26 = arith.constant 0 : index
    %30 = vector.load %arg1[%c0_25, %c13, %c0_26] : memref<1x36x16xf32, #tpu.memory_space<vmem>>, vector<1x22x16xf32>
    %31 = vector.shape_cast %30 : vector<1x22x16xf32> to vector<22x16xf32>
    %32 = arith.truncf %31 : vector<22x16xf32> to vector<22x16xbf16>
    %c0_27 = arith.constant 0 : index
    %c112 = arith.constant 112 : index
    %33 = vector.load %arg9[%c0_27, %c112] : memref<22x144xbf16, #tpu.memory_space<vmem>>, vector<22x16xbf16>
    tpu.vector_store %arg9[%c0_27, %c112], %32 {strides = array<i32>} : memref<22x144xbf16, #tpu.memory_space<vmem>>, vector<22x16xbf16>,
    %c0_28 = arith.constant 0 : index
    %c14 = arith.constant 14 : index
    %c0_29 = arith.constant 0 : index
    %34 = vector.load %arg1[%c0_28, %c14, %c0_29] : memref<1x36x16xf32, #tpu.memory_space<vmem>>, vector<1x22x16xf32>
    %35 = vector.shape_cast %34 : vector<1x22x16xf32> to vector<22x16xf32>
    %36 = arith.truncf %35 : vector<22x16xf32> to vector<22x16xbf16>
    %c0_30 = arith.constant 0 : index
    %c128 = arith.constant 128 : index
    %37 = vector.load %arg9[%c0_30, %c128] : memref<22x144xbf16, #tpu.memory_space<vmem>>, vector<22x16xbf16>
    tpu.vector_store %arg9[%c0_30, %c128], %36 {strides = array<i32>} : memref<22x144xbf16, #tpu.memory_space<vmem>>, vector<22x16xbf16>,
    %c0_31 = arith.constant 0 : index
    %c0_32 = arith.constant 0 : index
    %38 = vector.load %arg9[%c0_31, %c0_32] : memref<22x144xbf16, #tpu.memory_space<vmem>>, vector<22x144xbf16>
    %c0_33 = arith.constant 0 : index
    %c0_34 = arith.constant 0 : index
    %39 = vector.load %arg4[%c0_33, %c0_34] : memref<144x16xbf16, #tpu.memory_space<vmem>>, vector<144x16xbf16>
    %cst = arith.constant dense<0.000000e+00> : vector<22x16xf32>
    %40 = tpu.matmul %38, %39, %cst {dimension_numbers = #tpu.dot_dimension_numbers<[1], [0], [0], [1], [0, 0, 1, 1], [], []>} : vector<22x144xbf16>, vector<144x16xbf16>, vector<22x16xf32> -> vector<22x16xf32>
    %c0_35 = arith.constant 0 : index
    %c0_36 = arith.constant 0 : index
    %41 = vector.load %arg5[%c0_35, %c0_36] : memref<1x16xf32, #tpu.memory_space<vmem>>, vector<1x16xf32>
    %42 = vector.broadcast %41 : vector<1x16xf32> to vector<22x16xf32>
    %43 = arith.addf %40, %42 : vector<22x16xf32>
    %c0_37 = arith.constant 0 : index
    %c7_38 = arith.constant 7 : index
    %c0_39 = arith.constant 0 : index
    %44 = vector.load %arg3[%c0_37, %c7_38, %c0_39] : memref<1x36x1xf32, #tpu.memory_space<vmem>>, vector<1x22x1xf32>
    %45 = vector.shape_cast %44 : vector<1x22x1xf32> to vector<22x1xf32>
    %c0_40 = arith.constant 0 : index
    %c0_41 = arith.constant 0 : index
    %46 = vector.load %arg6[%c0_40, %c0_41] : memref<1x16xf32, #tpu.memory_space<vmem>>, vector<1x16xf32>
    %47 = vector.broadcast %45 : vector<22x1xf32> to vector<22x16xf32>
    %48 = vector.broadcast %46 : vector<1x16xf32> to vector<22x16xf32>
    %49 = arith.mulf %47, %48 : vector<22x16xf32>
    %50 = arith.addf %43, %49 : vector<22x16xf32>
    %cst_42 = arith.constant 2.000000e-01 : f32
    %51 = vector.broadcast %cst_42 : f32 to vector<22x16xf32>
    %52 = arith.mulf %51, %50 : vector<22x16xf32>
    %53 = arith.maximumf %50, %52 : vector<22x16xf32>
    %54 = vector.broadcast %1 : vector<22x1xf32> to vector<22x16xf32>
    %55 = arith.mulf %53, %54 : vector<22x16xf32>
    %cst_43 = arith.constant dense<0.000000e+00> : vector<16xf32>
    %56 = vector.multi_reduction <add>, %55, %cst_43 [0] : vector<22x16xf32> to vector<16xf32>
    %57 = vector.shape_cast %56 : vector<16xf32> to vector<1x16xf32>
    %cst_44 = arith.constant 6.250000e-02 : f32
    %58 = vector.broadcast %cst_44 : f32 to vector<1x16xf32>
    %59 = arith.mulf %57, %58 : vector<1x16xf32>
    %60 = vector.broadcast %59 : vector<1x16xf32> to vector<22x16xf32>
    %61 = arith.subf %53, %60 : vector<22x16xf32>
    %62 = vector.broadcast %1 : vector<22x1xf32> to vector<22x16xf32>
    %63 = arith.mulf %61, %62 : vector<22x16xf32>
    %64 = arith.mulf %63, %63 : vector<22x16xf32>
    %cst_45 = arith.constant dense<0.000000e+00> : vector<16xf32>
    %65 = vector.multi_reduction <add>, %64, %cst_45 [0] : vector<22x16xf32> to vector<16xf32>
    %66 = vector.shape_cast %65 : vector<16xf32> to vector<1x16xf32>
    %cst_46 = arith.constant 6.250000e-02 : f32
    %67 = vector.broadcast %cst_46 : f32 to vector<1x16xf32>
    %68 = arith.mulf %66, %67 : vector<1x16xf32>
    %69 = vector.broadcast %59 : vector<1x16xf32> to vector<22x16xf32>
    %70 = arith.subf %53, %69 : vector<22x16xf32>
    %cst_47 = arith.constant 9.99999974E-6 : f32
    %71 = vector.broadcast %cst_47 : f32 to vector<1x16xf32>
    %72 = arith.addf %68, %71 : vector<1x16xf32>
    %73 = math.rsqrt %72 : vector<1x16xf32>
    %74 = vector.broadcast %73 : vector<1x16xf32> to vector<22x16xf32>
    %75 = arith.mulf %70, %74 : vector<22x16xf32>
    %c0_48 = arith.constant 0 : index
    %c1_49 = arith.constant 1 : index
    %c0_50 = arith.constant 0 : index
    %76 = vector.load %arg7[%c0_48, %c1_49, %c0_50] : memref<1x4x32xf32, #tpu.memory_space<vmem>>, vector<1x1x16xf32>
    %77 = vector.shape_cast %76 : vector<1x1x16xf32> to vector<1x16xf32>
    %cst_51 = arith.constant 1.000000e+00 : f32
    %78 = vector.broadcast %cst_51 : f32 to vector<1x16xf32>
    %79 = arith.addf %77, %78 : vector<1x16xf32>
    %c0_52 = arith.constant 0 : index
    %c1_53 = arith.constant 1 : index
    %c16_54 = arith.constant 16 : index
    %80 = vector.load %arg7[%c0_52, %c1_53, %c16_54] : memref<1x4x32xf32, #tpu.memory_space<vmem>>, vector<1x1x16xf32>
    %81 = vector.shape_cast %80 : vector<1x1x16xf32> to vector<1x16xf32>
    %82 = vector.broadcast %79 : vector<1x16xf32> to vector<22x16xf32>
    %83 = arith.mulf %75, %82 : vector<22x16xf32>
    %84 = vector.broadcast %81 : vector<1x16xf32> to vector<22x16xf32>
    %85 = arith.addf %83, %84 : vector<22x16xf32>
    %cst_55 = arith.constant 0.000000e+00 : f32
    %86 = vector.broadcast %cst_55 : f32 to vector<7x16xf32>
    %c0_56 = arith.constant 0 : index
    %c0_57 = arith.constant 0 : index
    %c0_58 = arith.constant 0 : index
    %87 = vector.load %arg8[%c0_56, %c0_57, %c0_58] : memref<1x36x16xf32, #tpu.memory_space<vmem>>, vector<1x7x16xf32>
    %88 = vector.shape_cast %87 : vector<1x7x16xf32> to vector<7x16xf32>
    %89 = vector.shape_cast %86 : vector<7x16xf32> to vector<1x7x16xf32>
    tpu.vector_store %arg8[%c0_56, %c0_57, %c0_58], %89 {strides = array<i32>} : memref<1x36x16xf32, #tpu.memory_space<vmem>>, vector<1x7x16xf32>,
    %cst_59 = arith.constant 0.000000e+00 : f32
    %90 = vector.broadcast %cst_59 : f32 to vector<7x16xf32>
    %c0_60 = arith.constant 0 : index
    %c29 = arith.constant 29 : index
    %c0_61 = arith.constant 0 : index
    %91 = vector.load %arg8[%c0_60, %c29, %c0_61] : memref<1x36x16xf32, #tpu.memory_space<vmem>>, vector<1x7x16xf32>
    %92 = vector.shape_cast %91 : vector<1x7x16xf32> to vector<7x16xf32>
    %93 = vector.shape_cast %90 : vector<7x16xf32> to vector<1x7x16xf32>
    tpu.vector_store %arg8[%c0_60, %c29, %c0_61], %93 {strides = array<i32>} : memref<1x36x16xf32, #tpu.memory_space<vmem>>, vector<1x7x16xf32>,
    %c0_62 = arith.constant 0 : index
    %c7_63 = arith.constant 7 : index
    %c0_64 = arith.constant 0 : index
    %94 = vector.load %arg8[%c0_62, %c7_63, %c0_64] : memref<1x36x16xf32, #tpu.memory_space<vmem>>, vector<1x22x16xf32>
    %95 = vector.shape_cast %94 : vector<1x22x16xf32> to vector<22x16xf32>
    %96 = vector.shape_cast %85 : vector<22x16xf32> to vector<1x22x16xf32>
    tpu.vector_store %arg8[%c0_62, %c7_63, %c0_64], %96 {strides = array<i32>} : memref<1x36x16xf32, #tpu.memory_space<vmem>>, vector<1x22x16xf32>,
    return
  }
  func.func @transform_0(%arg0: i32) -> (i32, i32, i32) {
    %c0_i32 = arith.constant 0 : i32
    %c0_i32_0 = arith.constant 0 : i32
    %c0_i32_1 = arith.constant 0 : i32
    return %arg0, %c0_i32, %c0_i32_0 : i32, i32, i32
  }
  func.func @transform_1(%arg0: i32) -> (i32, i32, i32) {
    %c0_i32 = arith.constant 0 : i32
    %c0_i32_0 = arith.constant 0 : i32
    %c0_i32_1 = arith.constant 0 : i32
    %c0_i32_2 = arith.constant 0 : i32
    return %c0_i32, %c0_i32_0, %c0_i32_1 : i32, i32, i32
  }
  func.func @transform_2(%arg0: i32) -> (i32, i32, i32) {
    %c0_i32 = arith.constant 0 : i32
    %c0_i32_0 = arith.constant 0 : i32
    %c0_i32_1 = arith.constant 0 : i32
    return %arg0, %c0_i32, %c0_i32_0 : i32, i32, i32
  }
  func.func @transform_3(%arg0: i32) -> (i32, i32) {
    %c0_i32 = arith.constant 0 : i32
    %c0_i32_0 = arith.constant 0 : i32
    %c0_i32_1 = arith.constant 0 : i32
    return %c0_i32, %c0_i32_0 : i32, i32
  }
  func.func @transform_4(%arg0: i32) -> (i32, i32) {
    %c0_i32 = arith.constant 0 : i32
    %c0_i32_0 = arith.constant 0 : i32
    %c0_i32_1 = arith.constant 0 : i32
    return %c0_i32, %c0_i32_0 : i32, i32
  }
  func.func @transform_5(%arg0: i32) -> (i32, i32) {
    %c0_i32 = arith.constant 0 : i32
    %c0_i32_0 = arith.constant 0 : i32
    %c0_i32_1 = arith.constant 0 : i32
    return %c0_i32, %c0_i32_0 : i32, i32
  }
  func.func @transform_6(%arg0: i32) -> (i32, i32, i32) {
    %c0_i32 = arith.constant 0 : i32
    %c0_i32_0 = arith.constant 0 : i32
    %c0_i32_1 = arith.constant 0 : i32
    return %arg0, %c0_i32, %c0_i32_0 : i32, i32, i32
  }
  func.func @transform_7(%arg0: i32) -> (i32, i32, i32) {
    %c0_i32 = arith.constant 0 : i32
    %c0_i32_0 = arith.constant 0 : i32
    %c0_i32_1 = arith.constant 0 : i32
    return %arg0, %c0_i32, %c0_i32_0 : i32, i32, i32
  }
}

module attributes {stable_mosaic.version = 11 : i64} {
  func.func @_gen_block_kernel(%arg0: i32, %arg1: memref<1x100x16xf32, #tpu.memory_space<vmem>>, %arg2: memref<1x100x1xf32, #tpu.memory_space<vmem>>, %arg3: memref<1x100x1xf32, #tpu.memory_space<vmem>>, %arg4: memref<144x8xbf16, #tpu.memory_space<vmem>>, %arg5: memref<1x8xf32, #tpu.memory_space<vmem>>, %arg6: memref<1x8xf32, #tpu.memory_space<vmem>>, %arg7: memref<1x4x32xf32, #tpu.memory_space<vmem>>, %arg8: memref<1x100x8xf32, #tpu.memory_space<vmem>>, %arg9: memref<78x144xbf16, #tpu.memory_space<vmem>>, %arg10: memref<100x8xf32, #tpu.memory_space<vmem>>) attributes {dimension_semantics = [#tpu.dimension_semantics<parallel>], iteration_bounds = array<i64: 2>, scalar_prefetch = 0 : i64, scratch_operands = 2 : i64, tpu.core_type = #tpu.core_type<tc>, window_params = [{transform_indices = @transform_0, window_bounds = array<i64: 1, 100, 16>}, {pipeline_mode = #tpu.pipeline_mode<synchronous>, transform_indices = @transform_1, window_bounds = array<i64: 1, 100, 1>}, {transform_indices = @transform_2, window_bounds = array<i64: 1, 100, 1>}, {pipeline_mode = #tpu.pipeline_mode<synchronous>, transform_indices = @transform_3, window_bounds = array<i64: 144, 8>}, {pipeline_mode = #tpu.pipeline_mode<synchronous>, transform_indices = @transform_4, window_bounds = array<i64: 1, 8>}, {pipeline_mode = #tpu.pipeline_mode<synchronous>, transform_indices = @transform_5, window_bounds = array<i64: 1, 8>}, {transform_indices = @transform_6, window_bounds = array<i64: 1, 4, 32>}, {transform_indices = @transform_7, window_bounds = array<i64: 1, 100, 8>}]} {
    %c0 = arith.constant 0 : index
    %c11 = arith.constant 11 : index
    %c0_0 = arith.constant 0 : index
    %0 = vector.load %arg2[%c0, %c11, %c0_0] : memref<1x100x1xf32, #tpu.memory_space<vmem>>, vector<1x78x1xf32>
    %1 = vector.shape_cast %0 : vector<1x78x1xf32> to vector<78x1xf32>
    %c0_1 = arith.constant 0 : index
    %c0_2 = arith.constant 0 : index
    %c0_3 = arith.constant 0 : index
    %2 = vector.load %arg1[%c0_1, %c0_2, %c0_3] : memref<1x100x16xf32, #tpu.memory_space<vmem>>, vector<1x78x16xf32>
    %3 = vector.shape_cast %2 : vector<1x78x16xf32> to vector<78x16xf32>
    %4 = arith.truncf %3 : vector<78x16xf32> to vector<78x16xbf16>
    %c0_4 = arith.constant 0 : index
    %c0_5 = arith.constant 0 : index
    %5 = vector.load %arg9[%c0_4, %c0_5] : memref<78x144xbf16, #tpu.memory_space<vmem>>, vector<78x16xbf16>
    tpu.vector_store %arg9[%c0_4, %c0_5], %4 {strides = array<i32>} : memref<78x144xbf16, #tpu.memory_space<vmem>>, vector<78x16xbf16>,
    %c0_6 = arith.constant 0 : index
    %c1 = arith.constant 1 : index
    %c0_7 = arith.constant 0 : index
    %6 = vector.load %arg1[%c0_6, %c1, %c0_7] : memref<1x100x16xf32, #tpu.memory_space<vmem>>, vector<1x78x16xf32>
    %7 = vector.shape_cast %6 : vector<1x78x16xf32> to vector<78x16xf32>
    %8 = arith.truncf %7 : vector<78x16xf32> to vector<78x16xbf16>
    %c0_8 = arith.constant 0 : index
    %c16 = arith.constant 16 : index
    %9 = vector.load %arg9[%c0_8, %c16] : memref<78x144xbf16, #tpu.memory_space<vmem>>, vector<78x16xbf16>
    tpu.vector_store %arg9[%c0_8, %c16], %8 {strides = array<i32>} : memref<78x144xbf16, #tpu.memory_space<vmem>>, vector<78x16xbf16>,
    %c0_9 = arith.constant 0 : index
    %c2 = arith.constant 2 : index
    %c0_10 = arith.constant 0 : index
    %10 = vector.load %arg1[%c0_9, %c2, %c0_10] : memref<1x100x16xf32, #tpu.memory_space<vmem>>, vector<1x78x16xf32>
    %11 = vector.shape_cast %10 : vector<1x78x16xf32> to vector<78x16xf32>
    %12 = arith.truncf %11 : vector<78x16xf32> to vector<78x16xbf16>
    %c0_11 = arith.constant 0 : index
    %c32 = arith.constant 32 : index
    %13 = vector.load %arg9[%c0_11, %c32] : memref<78x144xbf16, #tpu.memory_space<vmem>>, vector<78x16xbf16>
    tpu.vector_store %arg9[%c0_11, %c32], %12 {strides = array<i32>} : memref<78x144xbf16, #tpu.memory_space<vmem>>, vector<78x16xbf16>,
    %c0_12 = arith.constant 0 : index
    %c10 = arith.constant 10 : index
    %c0_13 = arith.constant 0 : index
    %14 = vector.load %arg1[%c0_12, %c10, %c0_13] : memref<1x100x16xf32, #tpu.memory_space<vmem>>, vector<1x78x16xf32>
    %15 = vector.shape_cast %14 : vector<1x78x16xf32> to vector<78x16xf32>
    %16 = arith.truncf %15 : vector<78x16xf32> to vector<78x16xbf16>
    %c0_14 = arith.constant 0 : index
    %c48 = arith.constant 48 : index
    %17 = vector.load %arg9[%c0_14, %c48] : memref<78x144xbf16, #tpu.memory_space<vmem>>, vector<78x16xbf16>
    tpu.vector_store %arg9[%c0_14, %c48], %16 {strides = array<i32>} : memref<78x144xbf16, #tpu.memory_space<vmem>>, vector<78x16xbf16>,
    %c0_15 = arith.constant 0 : index
    %c11_16 = arith.constant 11 : index
    %c0_17 = arith.constant 0 : index
    %18 = vector.load %arg1[%c0_15, %c11_16, %c0_17] : memref<1x100x16xf32, #tpu.memory_space<vmem>>, vector<1x78x16xf32>
    %19 = vector.shape_cast %18 : vector<1x78x16xf32> to vector<78x16xf32>
    %20 = arith.truncf %19 : vector<78x16xf32> to vector<78x16xbf16>
    %c0_18 = arith.constant 0 : index
    %c64 = arith.constant 64 : index
    %21 = vector.load %arg9[%c0_18, %c64] : memref<78x144xbf16, #tpu.memory_space<vmem>>, vector<78x16xbf16>
    tpu.vector_store %arg9[%c0_18, %c64], %20 {strides = array<i32>} : memref<78x144xbf16, #tpu.memory_space<vmem>>, vector<78x16xbf16>,
    %c0_19 = arith.constant 0 : index
    %c12 = arith.constant 12 : index
    %c0_20 = arith.constant 0 : index
    %22 = vector.load %arg1[%c0_19, %c12, %c0_20] : memref<1x100x16xf32, #tpu.memory_space<vmem>>, vector<1x78x16xf32>
    %23 = vector.shape_cast %22 : vector<1x78x16xf32> to vector<78x16xf32>
    %24 = arith.truncf %23 : vector<78x16xf32> to vector<78x16xbf16>
    %c0_21 = arith.constant 0 : index
    %c80 = arith.constant 80 : index
    %25 = vector.load %arg9[%c0_21, %c80] : memref<78x144xbf16, #tpu.memory_space<vmem>>, vector<78x16xbf16>
    tpu.vector_store %arg9[%c0_21, %c80], %24 {strides = array<i32>} : memref<78x144xbf16, #tpu.memory_space<vmem>>, vector<78x16xbf16>,
    %c0_22 = arith.constant 0 : index
    %c20 = arith.constant 20 : index
    %c0_23 = arith.constant 0 : index
    %26 = vector.load %arg1[%c0_22, %c20, %c0_23] : memref<1x100x16xf32, #tpu.memory_space<vmem>>, vector<1x78x16xf32>
    %27 = vector.shape_cast %26 : vector<1x78x16xf32> to vector<78x16xf32>
    %28 = arith.truncf %27 : vector<78x16xf32> to vector<78x16xbf16>
    %c0_24 = arith.constant 0 : index
    %c96 = arith.constant 96 : index
    %29 = vector.load %arg9[%c0_24, %c96] : memref<78x144xbf16, #tpu.memory_space<vmem>>, vector<78x16xbf16>
    tpu.vector_store %arg9[%c0_24, %c96], %28 {strides = array<i32>} : memref<78x144xbf16, #tpu.memory_space<vmem>>, vector<78x16xbf16>,
    %c0_25 = arith.constant 0 : index
    %c21 = arith.constant 21 : index
    %c0_26 = arith.constant 0 : index
    %30 = vector.load %arg1[%c0_25, %c21, %c0_26] : memref<1x100x16xf32, #tpu.memory_space<vmem>>, vector<1x78x16xf32>
    %31 = vector.shape_cast %30 : vector<1x78x16xf32> to vector<78x16xf32>
    %32 = arith.truncf %31 : vector<78x16xf32> to vector<78x16xbf16>
    %c0_27 = arith.constant 0 : index
    %c112 = arith.constant 112 : index
    %33 = vector.load %arg9[%c0_27, %c112] : memref<78x144xbf16, #tpu.memory_space<vmem>>, vector<78x16xbf16>
    tpu.vector_store %arg9[%c0_27, %c112], %32 {strides = array<i32>} : memref<78x144xbf16, #tpu.memory_space<vmem>>, vector<78x16xbf16>,
    %c0_28 = arith.constant 0 : index
    %c22 = arith.constant 22 : index
    %c0_29 = arith.constant 0 : index
    %34 = vector.load %arg1[%c0_28, %c22, %c0_29] : memref<1x100x16xf32, #tpu.memory_space<vmem>>, vector<1x78x16xf32>
    %35 = vector.shape_cast %34 : vector<1x78x16xf32> to vector<78x16xf32>
    %36 = arith.truncf %35 : vector<78x16xf32> to vector<78x16xbf16>
    %c0_30 = arith.constant 0 : index
    %c128 = arith.constant 128 : index
    %37 = vector.load %arg9[%c0_30, %c128] : memref<78x144xbf16, #tpu.memory_space<vmem>>, vector<78x16xbf16>
    tpu.vector_store %arg9[%c0_30, %c128], %36 {strides = array<i32>} : memref<78x144xbf16, #tpu.memory_space<vmem>>, vector<78x16xbf16>,
    %c0_31 = arith.constant 0 : index
    %c0_32 = arith.constant 0 : index
    %38 = vector.load %arg9[%c0_31, %c0_32] : memref<78x144xbf16, #tpu.memory_space<vmem>>, vector<78x144xbf16>
    %c0_33 = arith.constant 0 : index
    %c0_34 = arith.constant 0 : index
    %39 = vector.load %arg4[%c0_33, %c0_34] : memref<144x8xbf16, #tpu.memory_space<vmem>>, vector<144x8xbf16>
    %cst = arith.constant dense<0.000000e+00> : vector<78x8xf32>
    %40 = tpu.matmul %38, %39, %cst {dimension_numbers = #tpu.dot_dimension_numbers<[1], [0], [0], [1], [0, 0, 1, 1], [], []>} : vector<78x144xbf16>, vector<144x8xbf16>, vector<78x8xf32> -> vector<78x8xf32>
    %c0_35 = arith.constant 0 : index
    %c0_36 = arith.constant 0 : index
    %41 = vector.load %arg5[%c0_35, %c0_36] : memref<1x8xf32, #tpu.memory_space<vmem>>, vector<1x8xf32>
    %42 = vector.broadcast %41 : vector<1x8xf32> to vector<78x8xf32>
    %43 = arith.addf %40, %42 : vector<78x8xf32>
    %cst_37 = arith.constant 0.000000e+00 : f32
    %44 = vector.broadcast %cst_37 : f32 to vector<11x8xf32>
    %c0_38 = arith.constant 0 : index
    %c0_39 = arith.constant 0 : index
    %45 = vector.load %arg10[%c0_38, %c0_39] : memref<100x8xf32, #tpu.memory_space<vmem>>, vector<11x8xf32>
    tpu.vector_store %arg10[%c0_38, %c0_39], %44 {strides = array<i32>} : memref<100x8xf32, #tpu.memory_space<vmem>>, vector<11x8xf32>,
    %cst_40 = arith.constant 0.000000e+00 : f32
    %46 = vector.broadcast %cst_40 : f32 to vector<11x8xf32>
    %c89 = arith.constant 89 : index
    %c0_41 = arith.constant 0 : index
    %47 = vector.load %arg10[%c89, %c0_41] : memref<100x8xf32, #tpu.memory_space<vmem>>, vector<11x8xf32>
    tpu.vector_store %arg10[%c89, %c0_41], %46 {strides = array<i32>} : memref<100x8xf32, #tpu.memory_space<vmem>>, vector<11x8xf32>,
    %48 = vector.broadcast %1 : vector<78x1xf32> to vector<78x8xf32>
    %49 = arith.mulf %43, %48 : vector<78x8xf32>
    %c11_42 = arith.constant 11 : index
    %c0_43 = arith.constant 0 : index
    %50 = vector.load %arg10[%c11_42, %c0_43] : memref<100x8xf32, #tpu.memory_space<vmem>>, vector<78x8xf32>
    tpu.vector_store %arg10[%c11_42, %c0_43], %49 {strides = array<i32>} : memref<100x8xf32, #tpu.memory_space<vmem>>, vector<78x8xf32>,
    %c0_44 = arith.constant 0 : index
    %c0_45 = arith.constant 0 : index
    %51 = vector.load %arg10[%c0_44, %c0_45] : memref<100x8xf32, #tpu.memory_space<vmem>>, vector<78x8xf32>
    %c2_46 = arith.constant 2 : index
    %c0_47 = arith.constant 0 : index
    %52 = vector.load %arg10[%c2_46, %c0_47] : memref<100x8xf32, #tpu.memory_space<vmem>>, vector<78x8xf32>
    %53 = arith.addf %51, %52 : vector<78x8xf32>
    %c20_48 = arith.constant 20 : index
    %c0_49 = arith.constant 0 : index
    %54 = vector.load %arg10[%c20_48, %c0_49] : memref<100x8xf32, #tpu.memory_space<vmem>>, vector<78x8xf32>
    %55 = arith.addf %53, %54 : vector<78x8xf32>
    %c22_50 = arith.constant 22 : index
    %c0_51 = arith.constant 0 : index
    %56 = vector.load %arg10[%c22_50, %c0_51] : memref<100x8xf32, #tpu.memory_space<vmem>>, vector<78x8xf32>
    %57 = arith.addf %55, %56 : vector<78x8xf32>
    %c1_52 = arith.constant 1 : index
    %c0_53 = arith.constant 0 : index
    %58 = vector.load %arg10[%c1_52, %c0_53] : memref<100x8xf32, #tpu.memory_space<vmem>>, vector<78x8xf32>
    %c10_54 = arith.constant 10 : index
    %c0_55 = arith.constant 0 : index
    %59 = vector.load %arg10[%c10_54, %c0_55] : memref<100x8xf32, #tpu.memory_space<vmem>>, vector<78x8xf32>
    %60 = arith.addf %58, %59 : vector<78x8xf32>
    %c12_56 = arith.constant 12 : index
    %c0_57 = arith.constant 0 : index
    %61 = vector.load %arg10[%c12_56, %c0_57] : memref<100x8xf32, #tpu.memory_space<vmem>>, vector<78x8xf32>
    %62 = arith.addf %60, %61 : vector<78x8xf32>
    %c21_58 = arith.constant 21 : index
    %c0_59 = arith.constant 0 : index
    %63 = vector.load %arg10[%c21_58, %c0_59] : memref<100x8xf32, #tpu.memory_space<vmem>>, vector<78x8xf32>
    %64 = arith.addf %62, %63 : vector<78x8xf32>
    %cst_60 = arith.constant 2.000000e+00 : f32
    %65 = vector.broadcast %cst_60 : f32 to vector<78x8xf32>
    %66 = arith.mulf %65, %64 : vector<78x8xf32>
    %67 = arith.addf %57, %66 : vector<78x8xf32>
    %c11_61 = arith.constant 11 : index
    %c0_62 = arith.constant 0 : index
    %68 = vector.load %arg10[%c11_61, %c0_62] : memref<100x8xf32, #tpu.memory_space<vmem>>, vector<78x8xf32>
    %cst_63 = arith.constant 4.000000e+00 : f32
    %69 = vector.broadcast %cst_63 : f32 to vector<78x8xf32>
    %70 = arith.mulf %69, %68 : vector<78x8xf32>
    %71 = arith.addf %67, %70 : vector<78x8xf32>
    %cst_64 = arith.constant 6.250000e-02 : f32
    %72 = vector.broadcast %cst_64 : f32 to vector<78x8xf32>
    %73 = arith.mulf %71, %72 : vector<78x8xf32>
    %c0_65 = arith.constant 0 : index
    %c11_66 = arith.constant 11 : index
    %c0_67 = arith.constant 0 : index
    %74 = vector.load %arg3[%c0_65, %c11_66, %c0_67] : memref<1x100x1xf32, #tpu.memory_space<vmem>>, vector<1x78x1xf32>
    %75 = vector.shape_cast %74 : vector<1x78x1xf32> to vector<78x1xf32>
    %c0_68 = arith.constant 0 : index
    %c0_69 = arith.constant 0 : index
    %76 = vector.load %arg6[%c0_68, %c0_69] : memref<1x8xf32, #tpu.memory_space<vmem>>, vector<1x8xf32>
    %77 = vector.broadcast %75 : vector<78x1xf32> to vector<78x8xf32>
    %78 = vector.broadcast %76 : vector<1x8xf32> to vector<78x8xf32>
    %79 = arith.mulf %77, %78 : vector<78x8xf32>
    %80 = arith.addf %73, %79 : vector<78x8xf32>
    %cst_70 = arith.constant 2.000000e-01 : f32
    %81 = vector.broadcast %cst_70 : f32 to vector<78x8xf32>
    %82 = arith.mulf %81, %80 : vector<78x8xf32>
    %83 = arith.maximumf %80, %82 : vector<78x8xf32>
    %84 = vector.broadcast %1 : vector<78x1xf32> to vector<78x8xf32>
    %85 = arith.mulf %83, %84 : vector<78x8xf32>
    %cst_71 = arith.constant dense<0.000000e+00> : vector<8xf32>
    %86 = vector.multi_reduction <add>, %85, %cst_71 [0] : vector<78x8xf32> to vector<8xf32>
    %87 = vector.shape_cast %86 : vector<8xf32> to vector<1x8xf32>
    %cst_72 = arith.constant 1.562500e-02 : f32
    %88 = vector.broadcast %cst_72 : f32 to vector<1x8xf32>
    %89 = arith.mulf %87, %88 : vector<1x8xf32>
    %90 = vector.broadcast %89 : vector<1x8xf32> to vector<78x8xf32>
    %91 = arith.subf %83, %90 : vector<78x8xf32>
    %92 = vector.broadcast %1 : vector<78x1xf32> to vector<78x8xf32>
    %93 = arith.mulf %91, %92 : vector<78x8xf32>
    %94 = arith.mulf %93, %93 : vector<78x8xf32>
    %cst_73 = arith.constant dense<0.000000e+00> : vector<8xf32>
    %95 = vector.multi_reduction <add>, %94, %cst_73 [0] : vector<78x8xf32> to vector<8xf32>
    %96 = vector.shape_cast %95 : vector<8xf32> to vector<1x8xf32>
    %cst_74 = arith.constant 1.562500e-02 : f32
    %97 = vector.broadcast %cst_74 : f32 to vector<1x8xf32>
    %98 = arith.mulf %96, %97 : vector<1x8xf32>
    %99 = vector.broadcast %89 : vector<1x8xf32> to vector<78x8xf32>
    %100 = arith.subf %83, %99 : vector<78x8xf32>
    %cst_75 = arith.constant 9.99999974E-6 : f32
    %101 = vector.broadcast %cst_75 : f32 to vector<1x8xf32>
    %102 = arith.addf %98, %101 : vector<1x8xf32>
    %103 = math.rsqrt %102 : vector<1x8xf32>
    %104 = vector.broadcast %103 : vector<1x8xf32> to vector<78x8xf32>
    %105 = arith.mulf %100, %104 : vector<78x8xf32>
    %c0_76 = arith.constant 0 : index
    %c2_77 = arith.constant 2 : index
    %c0_78 = arith.constant 0 : index
    %106 = vector.load %arg7[%c0_76, %c2_77, %c0_78] : memref<1x4x32xf32, #tpu.memory_space<vmem>>, vector<1x1x8xf32>
    %107 = vector.shape_cast %106 : vector<1x1x8xf32> to vector<1x8xf32>
    %cst_79 = arith.constant 1.000000e+00 : f32
    %108 = vector.broadcast %cst_79 : f32 to vector<1x8xf32>
    %109 = arith.addf %107, %108 : vector<1x8xf32>
    %c0_80 = arith.constant 0 : index
    %c2_81 = arith.constant 2 : index
    %c8 = arith.constant 8 : index
    %110 = vector.load %arg7[%c0_80, %c2_81, %c8] : memref<1x4x32xf32, #tpu.memory_space<vmem>>, vector<1x1x8xf32>
    %111 = vector.shape_cast %110 : vector<1x1x8xf32> to vector<1x8xf32>
    %112 = vector.broadcast %109 : vector<1x8xf32> to vector<78x8xf32>
    %113 = arith.mulf %105, %112 : vector<78x8xf32>
    %114 = vector.broadcast %111 : vector<1x8xf32> to vector<78x8xf32>
    %115 = arith.addf %113, %114 : vector<78x8xf32>
    %cst_82 = arith.constant 0.000000e+00 : f32
    %116 = vector.broadcast %cst_82 : f32 to vector<11x8xf32>
    %c0_83 = arith.constant 0 : index
    %c0_84 = arith.constant 0 : index
    %c0_85 = arith.constant 0 : index
    %117 = vector.load %arg8[%c0_83, %c0_84, %c0_85] : memref<1x100x8xf32, #tpu.memory_space<vmem>>, vector<1x11x8xf32>
    %118 = vector.shape_cast %117 : vector<1x11x8xf32> to vector<11x8xf32>
    %119 = vector.shape_cast %116 : vector<11x8xf32> to vector<1x11x8xf32>
    tpu.vector_store %arg8[%c0_83, %c0_84, %c0_85], %119 {strides = array<i32>} : memref<1x100x8xf32, #tpu.memory_space<vmem>>, vector<1x11x8xf32>,
    %cst_86 = arith.constant 0.000000e+00 : f32
    %120 = vector.broadcast %cst_86 : f32 to vector<11x8xf32>
    %c0_87 = arith.constant 0 : index
    %c89_88 = arith.constant 89 : index
    %c0_89 = arith.constant 0 : index
    %121 = vector.load %arg8[%c0_87, %c89_88, %c0_89] : memref<1x100x8xf32, #tpu.memory_space<vmem>>, vector<1x11x8xf32>
    %122 = vector.shape_cast %121 : vector<1x11x8xf32> to vector<11x8xf32>
    %123 = vector.shape_cast %120 : vector<11x8xf32> to vector<1x11x8xf32>
    tpu.vector_store %arg8[%c0_87, %c89_88, %c0_89], %123 {strides = array<i32>} : memref<1x100x8xf32, #tpu.memory_space<vmem>>, vector<1x11x8xf32>,
    %c0_90 = arith.constant 0 : index
    %c11_91 = arith.constant 11 : index
    %c0_92 = arith.constant 0 : index
    %124 = vector.load %arg8[%c0_90, %c11_91, %c0_92] : memref<1x100x8xf32, #tpu.memory_space<vmem>>, vector<1x78x8xf32>
    %125 = vector.shape_cast %124 : vector<1x78x8xf32> to vector<78x8xf32>
    %126 = vector.shape_cast %115 : vector<78x8xf32> to vector<1x78x8xf32>
    tpu.vector_store %arg8[%c0_90, %c11_91, %c0_92], %126 {strides = array<i32>} : memref<1x100x8xf32, #tpu.memory_space<vmem>>, vector<1x78x8xf32>,
    return
  }
  func.func @transform_0(%arg0: i32) -> (i32, i32, i32) {
    %c0_i32 = arith.constant 0 : i32
    %c0_i32_0 = arith.constant 0 : i32
    %c0_i32_1 = arith.constant 0 : i32
    return %arg0, %c0_i32, %c0_i32_0 : i32, i32, i32
  }
  func.func @transform_1(%arg0: i32) -> (i32, i32, i32) {
    %c0_i32 = arith.constant 0 : i32
    %c0_i32_0 = arith.constant 0 : i32
    %c0_i32_1 = arith.constant 0 : i32
    %c0_i32_2 = arith.constant 0 : i32
    return %c0_i32, %c0_i32_0, %c0_i32_1 : i32, i32, i32
  }
  func.func @transform_2(%arg0: i32) -> (i32, i32, i32) {
    %c0_i32 = arith.constant 0 : i32
    %c0_i32_0 = arith.constant 0 : i32
    %c0_i32_1 = arith.constant 0 : i32
    return %arg0, %c0_i32, %c0_i32_0 : i32, i32, i32
  }
  func.func @transform_3(%arg0: i32) -> (i32, i32) {
    %c0_i32 = arith.constant 0 : i32
    %c0_i32_0 = arith.constant 0 : i32
    %c0_i32_1 = arith.constant 0 : i32
    return %c0_i32, %c0_i32_0 : i32, i32
  }
  func.func @transform_4(%arg0: i32) -> (i32, i32) {
    %c0_i32 = arith.constant 0 : i32
    %c0_i32_0 = arith.constant 0 : i32
    %c0_i32_1 = arith.constant 0 : i32
    return %c0_i32, %c0_i32_0 : i32, i32
  }
  func.func @transform_5(%arg0: i32) -> (i32, i32) {
    %c0_i32 = arith.constant 0 : i32
    %c0_i32_0 = arith.constant 0 : i32
    %c0_i32_1 = arith.constant 0 : i32
    return %c0_i32, %c0_i32_0 : i32, i32
  }
  func.func @transform_6(%arg0: i32) -> (i32, i32, i32) {
    %c0_i32 = arith.constant 0 : i32
    %c0_i32_0 = arith.constant 0 : i32
    %c0_i32_1 = arith.constant 0 : i32
    return %arg0, %c0_i32, %c0_i32_0 : i32, i32, i32
  }
  func.func @transform_7(%arg0: i32) -> (i32, i32, i32) {
    %c0_i32 = arith.constant 0 : i32
    %c0_i32_0 = arith.constant 0 : i32
    %c0_i32_1 = arith.constant 0 : i32
    return %arg0, %c0_i32, %c0_i32_0 : i32, i32, i32
  }
}

module attributes {stable_mosaic.version = 11 : i64} {
  func.func @_gen_block_kernel(%arg0: i32, %arg1: memref<1x100x8xf32, #tpu.memory_space<vmem>>, %arg2: memref<1x100x1xf32, #tpu.memory_space<vmem>>, %arg3: memref<1x100x1xf32, #tpu.memory_space<vmem>>, %arg4: memref<72x8xbf16, #tpu.memory_space<vmem>>, %arg5: memref<1x8xf32, #tpu.memory_space<vmem>>, %arg6: memref<1x8xf32, #tpu.memory_space<vmem>>, %arg7: memref<1x4x32xf32, #tpu.memory_space<vmem>>, %arg8: memref<1x100x8xf32, #tpu.memory_space<vmem>>, %arg9: memref<78x72xbf16, #tpu.memory_space<vmem>>) attributes {dimension_semantics = [#tpu.dimension_semantics<parallel>], iteration_bounds = array<i64: 2>, scalar_prefetch = 0 : i64, scratch_operands = 1 : i64, tpu.core_type = #tpu.core_type<tc>, window_params = [{transform_indices = @transform_0, window_bounds = array<i64: 1, 100, 8>}, {pipeline_mode = #tpu.pipeline_mode<synchronous>, transform_indices = @transform_1, window_bounds = array<i64: 1, 100, 1>}, {transform_indices = @transform_2, window_bounds = array<i64: 1, 100, 1>}, {pipeline_mode = #tpu.pipeline_mode<synchronous>, transform_indices = @transform_3, window_bounds = array<i64: 72, 8>}, {pipeline_mode = #tpu.pipeline_mode<synchronous>, transform_indices = @transform_4, window_bounds = array<i64: 1, 8>}, {pipeline_mode = #tpu.pipeline_mode<synchronous>, transform_indices = @transform_5, window_bounds = array<i64: 1, 8>}, {transform_indices = @transform_6, window_bounds = array<i64: 1, 4, 32>}, {transform_indices = @transform_7, window_bounds = array<i64: 1, 100, 8>}]} {
    %c0 = arith.constant 0 : index
    %c11 = arith.constant 11 : index
    %c0_0 = arith.constant 0 : index
    %0 = vector.load %arg2[%c0, %c11, %c0_0] : memref<1x100x1xf32, #tpu.memory_space<vmem>>, vector<1x78x1xf32>
    %1 = vector.shape_cast %0 : vector<1x78x1xf32> to vector<78x1xf32>
    %c0_1 = arith.constant 0 : index
    %c0_2 = arith.constant 0 : index
    %c0_3 = arith.constant 0 : index
    %2 = vector.load %arg1[%c0_1, %c0_2, %c0_3] : memref<1x100x8xf32, #tpu.memory_space<vmem>>, vector<1x78x8xf32>
    %3 = vector.shape_cast %2 : vector<1x78x8xf32> to vector<78x8xf32>
    %4 = arith.truncf %3 : vector<78x8xf32> to vector<78x8xbf16>
    %c0_4 = arith.constant 0 : index
    %c0_5 = arith.constant 0 : index
    %5 = vector.load %arg9[%c0_4, %c0_5] : memref<78x72xbf16, #tpu.memory_space<vmem>>, vector<78x8xbf16>
    tpu.vector_store %arg9[%c0_4, %c0_5], %4 {strides = array<i32>} : memref<78x72xbf16, #tpu.memory_space<vmem>>, vector<78x8xbf16>,
    %c0_6 = arith.constant 0 : index
    %c1 = arith.constant 1 : index
    %c0_7 = arith.constant 0 : index
    %6 = vector.load %arg1[%c0_6, %c1, %c0_7] : memref<1x100x8xf32, #tpu.memory_space<vmem>>, vector<1x78x8xf32>
    %7 = vector.shape_cast %6 : vector<1x78x8xf32> to vector<78x8xf32>
    %8 = arith.truncf %7 : vector<78x8xf32> to vector<78x8xbf16>
    %c0_8 = arith.constant 0 : index
    %c8 = arith.constant 8 : index
    %9 = vector.load %arg9[%c0_8, %c8] : memref<78x72xbf16, #tpu.memory_space<vmem>>, vector<78x8xbf16>
    tpu.vector_store %arg9[%c0_8, %c8], %8 {strides = array<i32>} : memref<78x72xbf16, #tpu.memory_space<vmem>>, vector<78x8xbf16>,
    %c0_9 = arith.constant 0 : index
    %c2 = arith.constant 2 : index
    %c0_10 = arith.constant 0 : index
    %10 = vector.load %arg1[%c0_9, %c2, %c0_10] : memref<1x100x8xf32, #tpu.memory_space<vmem>>, vector<1x78x8xf32>
    %11 = vector.shape_cast %10 : vector<1x78x8xf32> to vector<78x8xf32>
    %12 = arith.truncf %11 : vector<78x8xf32> to vector<78x8xbf16>
    %c0_11 = arith.constant 0 : index
    %c16 = arith.constant 16 : index
    %13 = vector.load %arg9[%c0_11, %c16] : memref<78x72xbf16, #tpu.memory_space<vmem>>, vector<78x8xbf16>
    tpu.vector_store %arg9[%c0_11, %c16], %12 {strides = array<i32>} : memref<78x72xbf16, #tpu.memory_space<vmem>>, vector<78x8xbf16>,
    %c0_12 = arith.constant 0 : index
    %c10 = arith.constant 10 : index
    %c0_13 = arith.constant 0 : index
    %14 = vector.load %arg1[%c0_12, %c10, %c0_13] : memref<1x100x8xf32, #tpu.memory_space<vmem>>, vector<1x78x8xf32>
    %15 = vector.shape_cast %14 : vector<1x78x8xf32> to vector<78x8xf32>
    %16 = arith.truncf %15 : vector<78x8xf32> to vector<78x8xbf16>
    %c0_14 = arith.constant 0 : index
    %c24 = arith.constant 24 : index
    %17 = vector.load %arg9[%c0_14, %c24] : memref<78x72xbf16, #tpu.memory_space<vmem>>, vector<78x8xbf16>
    tpu.vector_store %arg9[%c0_14, %c24], %16 {strides = array<i32>} : memref<78x72xbf16, #tpu.memory_space<vmem>>, vector<78x8xbf16>,
    %c0_15 = arith.constant 0 : index
    %c11_16 = arith.constant 11 : index
    %c0_17 = arith.constant 0 : index
    %18 = vector.load %arg1[%c0_15, %c11_16, %c0_17] : memref<1x100x8xf32, #tpu.memory_space<vmem>>, vector<1x78x8xf32>
    %19 = vector.shape_cast %18 : vector<1x78x8xf32> to vector<78x8xf32>
    %20 = arith.truncf %19 : vector<78x8xf32> to vector<78x8xbf16>
    %c0_18 = arith.constant 0 : index
    %c32 = arith.constant 32 : index
    %21 = vector.load %arg9[%c0_18, %c32] : memref<78x72xbf16, #tpu.memory_space<vmem>>, vector<78x8xbf16>
    tpu.vector_store %arg9[%c0_18, %c32], %20 {strides = array<i32>} : memref<78x72xbf16, #tpu.memory_space<vmem>>, vector<78x8xbf16>,
    %c0_19 = arith.constant 0 : index
    %c12 = arith.constant 12 : index
    %c0_20 = arith.constant 0 : index
    %22 = vector.load %arg1[%c0_19, %c12, %c0_20] : memref<1x100x8xf32, #tpu.memory_space<vmem>>, vector<1x78x8xf32>
    %23 = vector.shape_cast %22 : vector<1x78x8xf32> to vector<78x8xf32>
    %24 = arith.truncf %23 : vector<78x8xf32> to vector<78x8xbf16>
    %c0_21 = arith.constant 0 : index
    %c40 = arith.constant 40 : index
    %25 = vector.load %arg9[%c0_21, %c40] : memref<78x72xbf16, #tpu.memory_space<vmem>>, vector<78x8xbf16>
    tpu.vector_store %arg9[%c0_21, %c40], %24 {strides = array<i32>} : memref<78x72xbf16, #tpu.memory_space<vmem>>, vector<78x8xbf16>,
    %c0_22 = arith.constant 0 : index
    %c20 = arith.constant 20 : index
    %c0_23 = arith.constant 0 : index
    %26 = vector.load %arg1[%c0_22, %c20, %c0_23] : memref<1x100x8xf32, #tpu.memory_space<vmem>>, vector<1x78x8xf32>
    %27 = vector.shape_cast %26 : vector<1x78x8xf32> to vector<78x8xf32>
    %28 = arith.truncf %27 : vector<78x8xf32> to vector<78x8xbf16>
    %c0_24 = arith.constant 0 : index
    %c48 = arith.constant 48 : index
    %29 = vector.load %arg9[%c0_24, %c48] : memref<78x72xbf16, #tpu.memory_space<vmem>>, vector<78x8xbf16>
    tpu.vector_store %arg9[%c0_24, %c48], %28 {strides = array<i32>} : memref<78x72xbf16, #tpu.memory_space<vmem>>, vector<78x8xbf16>,
    %c0_25 = arith.constant 0 : index
    %c21 = arith.constant 21 : index
    %c0_26 = arith.constant 0 : index
    %30 = vector.load %arg1[%c0_25, %c21, %c0_26] : memref<1x100x8xf32, #tpu.memory_space<vmem>>, vector<1x78x8xf32>
    %31 = vector.shape_cast %30 : vector<1x78x8xf32> to vector<78x8xf32>
    %32 = arith.truncf %31 : vector<78x8xf32> to vector<78x8xbf16>
    %c0_27 = arith.constant 0 : index
    %c56 = arith.constant 56 : index
    %33 = vector.load %arg9[%c0_27, %c56] : memref<78x72xbf16, #tpu.memory_space<vmem>>, vector<78x8xbf16>
    tpu.vector_store %arg9[%c0_27, %c56], %32 {strides = array<i32>} : memref<78x72xbf16, #tpu.memory_space<vmem>>, vector<78x8xbf16>,
    %c0_28 = arith.constant 0 : index
    %c22 = arith.constant 22 : index
    %c0_29 = arith.constant 0 : index
    %34 = vector.load %arg1[%c0_28, %c22, %c0_29] : memref<1x100x8xf32, #tpu.memory_space<vmem>>, vector<1x78x8xf32>
    %35 = vector.shape_cast %34 : vector<1x78x8xf32> to vector<78x8xf32>
    %36 = arith.truncf %35 : vector<78x8xf32> to vector<78x8xbf16>
    %c0_30 = arith.constant 0 : index
    %c64 = arith.constant 64 : index
    %37 = vector.load %arg9[%c0_30, %c64] : memref<78x72xbf16, #tpu.memory_space<vmem>>, vector<78x8xbf16>
    tpu.vector_store %arg9[%c0_30, %c64], %36 {strides = array<i32>} : memref<78x72xbf16, #tpu.memory_space<vmem>>, vector<78x8xbf16>,
    %c0_31 = arith.constant 0 : index
    %c0_32 = arith.constant 0 : index
    %38 = vector.load %arg9[%c0_31, %c0_32] : memref<78x72xbf16, #tpu.memory_space<vmem>>, vector<78x72xbf16>
    %c0_33 = arith.constant 0 : index
    %c0_34 = arith.constant 0 : index
    %39 = vector.load %arg4[%c0_33, %c0_34] : memref<72x8xbf16, #tpu.memory_space<vmem>>, vector<72x8xbf16>
    %cst = arith.constant dense<0.000000e+00> : vector<78x8xf32>
    %40 = tpu.matmul %38, %39, %cst {dimension_numbers = #tpu.dot_dimension_numbers<[1], [0], [0], [1], [0, 0, 1, 1], [], []>} : vector<78x72xbf16>, vector<72x8xbf16>, vector<78x8xf32> -> vector<78x8xf32>
    %c0_35 = arith.constant 0 : index
    %c0_36 = arith.constant 0 : index
    %41 = vector.load %arg5[%c0_35, %c0_36] : memref<1x8xf32, #tpu.memory_space<vmem>>, vector<1x8xf32>
    %42 = vector.broadcast %41 : vector<1x8xf32> to vector<78x8xf32>
    %43 = arith.addf %40, %42 : vector<78x8xf32>
    %c0_37 = arith.constant 0 : index
    %c11_38 = arith.constant 11 : index
    %c0_39 = arith.constant 0 : index
    %44 = vector.load %arg3[%c0_37, %c11_38, %c0_39] : memref<1x100x1xf32, #tpu.memory_space<vmem>>, vector<1x78x1xf32>
    %45 = vector.shape_cast %44 : vector<1x78x1xf32> to vector<78x1xf32>
    %c0_40 = arith.constant 0 : index
    %c0_41 = arith.constant 0 : index
    %46 = vector.load %arg6[%c0_40, %c0_41] : memref<1x8xf32, #tpu.memory_space<vmem>>, vector<1x8xf32>
    %47 = vector.broadcast %45 : vector<78x1xf32> to vector<78x8xf32>
    %48 = vector.broadcast %46 : vector<1x8xf32> to vector<78x8xf32>
    %49 = arith.mulf %47, %48 : vector<78x8xf32>
    %50 = arith.addf %43, %49 : vector<78x8xf32>
    %cst_42 = arith.constant 2.000000e-01 : f32
    %51 = vector.broadcast %cst_42 : f32 to vector<78x8xf32>
    %52 = arith.mulf %51, %50 : vector<78x8xf32>
    %53 = arith.maximumf %50, %52 : vector<78x8xf32>
    %54 = vector.broadcast %1 : vector<78x1xf32> to vector<78x8xf32>
    %55 = arith.mulf %53, %54 : vector<78x8xf32>
    %cst_43 = arith.constant dense<0.000000e+00> : vector<8xf32>
    %56 = vector.multi_reduction <add>, %55, %cst_43 [0] : vector<78x8xf32> to vector<8xf32>
    %57 = vector.shape_cast %56 : vector<8xf32> to vector<1x8xf32>
    %cst_44 = arith.constant 1.562500e-02 : f32
    %58 = vector.broadcast %cst_44 : f32 to vector<1x8xf32>
    %59 = arith.mulf %57, %58 : vector<1x8xf32>
    %60 = vector.broadcast %59 : vector<1x8xf32> to vector<78x8xf32>
    %61 = arith.subf %53, %60 : vector<78x8xf32>
    %62 = vector.broadcast %1 : vector<78x1xf32> to vector<78x8xf32>
    %63 = arith.mulf %61, %62 : vector<78x8xf32>
    %64 = arith.mulf %63, %63 : vector<78x8xf32>
    %cst_45 = arith.constant dense<0.000000e+00> : vector<8xf32>
    %65 = vector.multi_reduction <add>, %64, %cst_45 [0] : vector<78x8xf32> to vector<8xf32>
    %66 = vector.shape_cast %65 : vector<8xf32> to vector<1x8xf32>
    %cst_46 = arith.constant 1.562500e-02 : f32
    %67 = vector.broadcast %cst_46 : f32 to vector<1x8xf32>
    %68 = arith.mulf %66, %67 : vector<1x8xf32>
    %69 = vector.broadcast %59 : vector<1x8xf32> to vector<78x8xf32>
    %70 = arith.subf %53, %69 : vector<78x8xf32>
    %cst_47 = arith.constant 9.99999974E-6 : f32
    %71 = vector.broadcast %cst_47 : f32 to vector<1x8xf32>
    %72 = arith.addf %68, %71 : vector<1x8xf32>
    %73 = math.rsqrt %72 : vector<1x8xf32>
    %74 = vector.broadcast %73 : vector<1x8xf32> to vector<78x8xf32>
    %75 = arith.mulf %70, %74 : vector<78x8xf32>
    %c0_48 = arith.constant 0 : index
    %c3 = arith.constant 3 : index
    %c0_49 = arith.constant 0 : index
    %76 = vector.load %arg7[%c0_48, %c3, %c0_49] : memref<1x4x32xf32, #tpu.memory_space<vmem>>, vector<1x1x8xf32>
    %77 = vector.shape_cast %76 : vector<1x1x8xf32> to vector<1x8xf32>
    %cst_50 = arith.constant 1.000000e+00 : f32
    %78 = vector.broadcast %cst_50 : f32 to vector<1x8xf32>
    %79 = arith.addf %77, %78 : vector<1x8xf32>
    %c0_51 = arith.constant 0 : index
    %c3_52 = arith.constant 3 : index
    %c8_53 = arith.constant 8 : index
    %80 = vector.load %arg7[%c0_51, %c3_52, %c8_53] : memref<1x4x32xf32, #tpu.memory_space<vmem>>, vector<1x1x8xf32>
    %81 = vector.shape_cast %80 : vector<1x1x8xf32> to vector<1x8xf32>
    %82 = vector.broadcast %79 : vector<1x8xf32> to vector<78x8xf32>
    %83 = arith.mulf %75, %82 : vector<78x8xf32>
    %84 = vector.broadcast %81 : vector<1x8xf32> to vector<78x8xf32>
    %85 = arith.addf %83, %84 : vector<78x8xf32>
    %cst_54 = arith.constant 0.000000e+00 : f32
    %86 = vector.broadcast %cst_54 : f32 to vector<11x8xf32>
    %c0_55 = arith.constant 0 : index
    %c0_56 = arith.constant 0 : index
    %c0_57 = arith.constant 0 : index
    %87 = vector.load %arg8[%c0_55, %c0_56, %c0_57] : memref<1x100x8xf32, #tpu.memory_space<vmem>>, vector<1x11x8xf32>
    %88 = vector.shape_cast %87 : vector<1x11x8xf32> to vector<11x8xf32>
    %89 = vector.shape_cast %86 : vector<11x8xf32> to vector<1x11x8xf32>
    tpu.vector_store %arg8[%c0_55, %c0_56, %c0_57], %89 {strides = array<i32>} : memref<1x100x8xf32, #tpu.memory_space<vmem>>, vector<1x11x8xf32>,
    %cst_58 = arith.constant 0.000000e+00 : f32
    %90 = vector.broadcast %cst_58 : f32 to vector<11x8xf32>
    %c0_59 = arith.constant 0 : index
    %c89 = arith.constant 89 : index
    %c0_60 = arith.constant 0 : index
    %91 = vector.load %arg8[%c0_59, %c89, %c0_60] : memref<1x100x8xf32, #tpu.memory_space<vmem>>, vector<1x11x8xf32>
    %92 = vector.shape_cast %91 : vector<1x11x8xf32> to vector<11x8xf32>
    %93 = vector.shape_cast %90 : vector<11x8xf32> to vector<1x11x8xf32>
    tpu.vector_store %arg8[%c0_59, %c89, %c0_60], %93 {strides = array<i32>} : memref<1x100x8xf32, #tpu.memory_space<vmem>>, vector<1x11x8xf32>,
    %c0_61 = arith.constant 0 : index
    %c11_62 = arith.constant 11 : index
    %c0_63 = arith.constant 0 : index
    %94 = vector.load %arg8[%c0_61, %c11_62, %c0_63] : memref<1x100x8xf32, #tpu.memory_space<vmem>>, vector<1x78x8xf32>
    %95 = vector.shape_cast %94 : vector<1x78x8xf32> to vector<78x8xf32>
    %96 = vector.shape_cast %85 : vector<78x8xf32> to vector<1x78x8xf32>
    tpu.vector_store %arg8[%c0_61, %c11_62, %c0_63], %96 {strides = array<i32>} : memref<1x100x8xf32, #tpu.memory_space<vmem>>, vector<1x78x8xf32>,
    return
  }
  func.func @transform_0(%arg0: i32) -> (i32, i32, i32) {
    %c0_i32 = arith.constant 0 : i32
    %c0_i32_0 = arith.constant 0 : i32
    %c0_i32_1 = arith.constant 0 : i32
    return %arg0, %c0_i32, %c0_i32_0 : i32, i32, i32
  }
  func.func @transform_1(%arg0: i32) -> (i32, i32, i32) {
    %c0_i32 = arith.constant 0 : i32
    %c0_i32_0 = arith.constant 0 : i32
    %c0_i32_1 = arith.constant 0 : i32
    %c0_i32_2 = arith.constant 0 : i32
    return %c0_i32, %c0_i32_0, %c0_i32_1 : i32, i32, i32
  }
  func.func @transform_2(%arg0: i32) -> (i32, i32, i32) {
    %c0_i32 = arith.constant 0 : i32
    %c0_i32_0 = arith.constant 0 : i32
    %c0_i32_1 = arith.constant 0 : i32
    return %arg0, %c0_i32, %c0_i32_0 : i32, i32, i32
  }
  func.func @transform_3(%arg0: i32) -> (i32, i32) {
    %c0_i32 = arith.constant 0 : i32
    %c0_i32_0 = arith.constant 0 : i32
    %c0_i32_1 = arith.constant 0 : i32
    return %c0_i32, %c0_i32_0 : i32, i32
  }
  func.func @transform_4(%arg0: i32) -> (i32, i32) {
    %c0_i32 = arith.constant 0 : i32
    %c0_i32_0 = arith.constant 0 : i32
    %c0_i32_1 = arith.constant 0 : i32
    return %c0_i32, %c0_i32_0 : i32, i32
  }
  func.func @transform_5(%arg0: i32) -> (i32, i32) {
    %c0_i32 = arith.constant 0 : i32
    %c0_i32_0 = arith.constant 0 : i32
    %c0_i32_1 = arith.constant 0 : i32
    return %c0_i32, %c0_i32_0 : i32, i32
  }
  func.func @transform_6(%arg0: i32) -> (i32, i32, i32) {
    %c0_i32 = arith.constant 0 : i32
    %c0_i32_0 = arith.constant 0 : i32
    %c0_i32_1 = arith.constant 0 : i32
    return %arg0, %c0_i32, %c0_i32_0 : i32, i32, i32
  }
  func.func @transform_7(%arg0: i32) -> (i32, i32, i32) {
    %c0_i32 = arith.constant 0 : i32
    %c0_i32_0 = arith.constant 0 : i32
    %c0_i32_1 = arith.constant 0 : i32
    return %arg0, %c0_i32, %c0_i32_0 : i32, i32, i32
  }
}

module attributes {stable_mosaic.version = 11 : i64} {
  func.func @_out_conv_kernel(%arg0: i32, %arg1: memref<8x128xf32, #tpu.memory_space<vmem>>, %arg2: memref<8x8xbf16, #tpu.memory_space<vmem>>, %arg3: memref<8x1xf32, #tpu.memory_space<vmem>>, %arg4: memref<8x128xf32, #tpu.memory_space<vmem>>) attributes {dimension_semantics = [#tpu.dimension_semantics<parallel>], iteration_bounds = array<i64: 1>, scalar_prefetch = 0 : i64, scratch_operands = 0 : i64, tpu.core_type = #tpu.core_type<tc>, window_params = [{transform_indices = @transform_0, window_bounds = array<i64: 8, 128>}, {pipeline_mode = #tpu.pipeline_mode<synchronous>, transform_indices = @transform_1, window_bounds = array<i64: 8, 8>}, {pipeline_mode = #tpu.pipeline_mode<synchronous>, transform_indices = @transform_2, window_bounds = array<i64: 8, 1>}, {transform_indices = @transform_3, window_bounds = array<i64: 8, 128>}]} {
    %c0 = arith.constant 0 : index
    %c0_0 = arith.constant 0 : index
    %0 = vector.load %arg2[%c0, %c0_0] : memref<8x8xbf16, #tpu.memory_space<vmem>>, vector<8x8xbf16>
    %c0_1 = arith.constant 0 : index
    %c0_2 = arith.constant 0 : index
    %1 = vector.load %arg1[%c0_1, %c0_2] : memref<8x128xf32, #tpu.memory_space<vmem>>, vector<8x128xf32>
    %2 = arith.truncf %1 : vector<8x128xf32> to vector<8x128xbf16>
    %cst = arith.constant dense<0.000000e+00> : vector<8x128xf32>
    %3 = tpu.matmul %0, %2, %cst {dimension_numbers = #tpu.dot_dimension_numbers<[1], [0], [0], [1], [0, 0, 1, 1], [], []>} : vector<8x8xbf16>, vector<8x128xbf16>, vector<8x128xf32> -> vector<8x128xf32>
    %c0_3 = arith.constant 0 : index
    %c0_4 = arith.constant 0 : index
    %4 = vector.load %arg3[%c0_3, %c0_4] : memref<8x1xf32, #tpu.memory_space<vmem>>, vector<8x1xf32>
    %5 = vector.broadcast %4 : vector<8x1xf32> to vector<8x128xf32>
    %6 = arith.addf %3, %5 : vector<8x128xf32>
    %c0_5 = arith.constant 0 : index
    %c0_6 = arith.constant 0 : index
    %7 = vector.load %arg4[%c0_5, %c0_6] : memref<8x128xf32, #tpu.memory_space<vmem>>, vector<8x128xf32>
    tpu.vector_store %arg4[%c0_5, %c0_6], %6 {strides = array<i32>} : memref<8x128xf32, #tpu.memory_space<vmem>>, vector<8x128xf32>,
    return
  }
  func.func @transform_0(%arg0: i32) -> (i32, i32) {
    %c0_i32 = arith.constant 0 : i32
    %c0_i32_0 = arith.constant 0 : i32
    return %c0_i32, %arg0 : i32, i32
  }
  func.func @transform_1(%arg0: i32) -> (i32, i32) {
    %c0_i32 = arith.constant 0 : i32
    %c0_i32_0 = arith.constant 0 : i32
    %c0_i32_1 = arith.constant 0 : i32
    return %c0_i32, %c0_i32_0 : i32, i32
  }
  func.func @transform_2(%arg0: i32) -> (i32, i32) {
    %c0_i32 = arith.constant 0 : i32
    %c0_i32_0 = arith.constant 0 : i32
    %c0_i32_1 = arith.constant 0 : i32
    return %c0_i32, %c0_i32_0 : i32, i32
  }
  func.func @transform_3(%arg0: i32) -> (i32, i32) {
    %c0_i32 = arith.constant 0 : i32
    %c0_i32_0 = arith.constant 0 : i32
    return %c0_i32, %arg0 : i32, i32
  }
}

</mosaic_0001>

<llo_original>
// kernel: generator_forward.9
$region0: #{generator_forward.9}
  #allocation0 [shape = 'u32[]', space=smem, size = 0x4, offset = 0x4, fixed_abs, tag = 'smem constant byte address 0x4 - core index']
  #allocation1 [shape = 'u32[144,128]{1,0:T(1,128)}', space=vmem, size = 0x12000, scoped, tag = 'internal scratch']
  %s0 = inlined_call_operand.hbm [shape: f32[2,32], index: 0, kind: input, shape index: {}]
  %s1 = inlined_call_operand.hbm [shape: bf16[32,32], index: 1, kind: input, shape index: {}]
  %s2 = inlined_call_operand.hbm [shape: f32[1,32], index: 2, kind: input, shape index: {}]
  %s3 = inlined_call_operand.hbm [shape: bf16[32,32], index: 3, kind: input, shape index: {}]
  %s4 = inlined_call_operand.hbm [shape: f32[1,32], index: 4, kind: input, shape index: {}]
  %s5 = inlined_call_operand.hbm [shape: f32[2,32], index: 5, kind: output, shape index: {}]
  %s6 = sld [smem:[#allocation0]]
  $region50: #{generator_forward.9} parent=0
    _
  %s8 = ssub.s32 1, %s6
  %s9 = scalar_select 0, %s8, %s6
  $region1: #{generator_forward.9} parent=0
    #allocation2 [shape = 'u8[1024]{0}', space=vmem, size = 0x400, scoped, tag = 'input window, operand 0, single buffered']
    #allocation3 [shape = 's32[1]{0}', space=sflag, size = 0x4, scoped, tag = 'scoped memory for generator_forward.9']
    #allocation4 [shape = 's32[1]{0}', space=sflag, size = 0x4, scoped, tag = 'scoped memory for generator_forward.9']
    #allocation5 [shape = 'u8[8192]{0}', space=vmem, size = 0x2000, scoped, tag = 'input window, operand 1, single buffered']
    #allocation6 [shape = 's32[1]{0}', space=sflag, size = 0x4, scoped, tag = 'scoped memory for generator_forward.9']
    #allocation7 [shape = 'u8[512]{0}', space=vmem, size = 0x400, scoped, tag = 'input window, operand 2, single buffered']
    #allocation8 [shape = 'u8[8192]{0}', space=vmem, size = 0x2000, scoped, tag = 'input window, operand 3, single buffered']
    #allocation9 [shape = 's32[1]{0}', space=sflag, size = 0x4, scoped, tag = 'scoped memory for generator_forward.9']
    #allocation10 [shape = 'u8[512]{0}', space=vmem, size = 0x400, scoped, tag = 'input window, operand 4, single buffered']
    #allocation11 [shape = 'u8[1024]{0}', space=vmem, size = 0x400, scoped, tag = 'output window, operand 0, single buffered']
    %10 = vsyncpa [#allocation3], 0
    %11 = vsyncpa [#allocation6], 0
    %12 = vsyncpa [#allocation9], 0
    %13 = vsyncpa [#allocation4], 0
    // Predicated region
    $region2: #{generator_forward.9} parent=1 // pred_check
      _
    $region3: #{generator_forward.9} parent=1 // pred_check_branch
      %15 = sbr.rel (0) target = $region5
    $region4: #{generator_forward.9} parent=1 // pred_region
      %s17 = ssub.s32 32, 32
      %18 = vsyncadd [#allocation3], %s17
      %s20 = sshll.u32 [#allocation2], 4
      %s21 = int_to_ptr.vmem [resolvable:$true] %s20
      %23 = dma.hbm_to_vmem [thread:$0]  %s0, 32, %s21, [#allocation3]
    $region5: #{generator_forward.9} parent=1 // pred_fallthru
      _
    // Predicated region
    $region6: #{generator_forward.9} parent=1 // pred_check
      _
    $region7: #{generator_forward.9} parent=1 // pred_check_branch
      %25 = sbr.rel (0) target = $region9
    $region8: #{generator_forward.9} parent=1 // pred_region
      %s27 = ssub.s32 256, 256
      %28 = vsyncadd [#allocation6], %s27
      %s29 = sshll.u32 [#allocation5], 4
      %s30 = int_to_ptr.vmem [resolvable:$true] %s29
      %35 = dma.hbm_to_vmem [thread:$0]  %s1, 256, %s30, [#allocation6], 64, 64, 4
    $region9: #{generator_forward.9} parent=1 // pred_fallthru
      _
    // Predicated region
    $region10: #{generator_forward.9} parent=1 // pred_check
      _
    $region11: #{generator_forward.9} parent=1 // pred_check_branch
      %37 = sbr.rel (0) target = $region13
    $region12: #{generator_forward.9} parent=1 // pred_region
      %s39 = ssub.s32 16, 16
      %40 = vsyncadd [#allocation6], %s39
      %s42 = sshll.u32 [#allocation7], 4
      %s43 = int_to_ptr.vmem [resolvable:$true] %s42
      %45 = dma.hbm_to_vmem [thread:$0]  %s2, 16, %s43, [#allocation6]
    $region13: #{generator_forward.9} parent=1 // pred_fallthru
      _
    // Predicated region
    $region14: #{generator_forward.9} parent=1 // pred_check
      _
    $region15: #{generator_forward.9} parent=1 // pred_check_branch
      %47 = sbr.rel (0) target = $region17
    $region16: #{generator_forward.9} parent=1 // pred_region
      %s49 = ssub.s32 256, 256
      %50 = vsyncadd [#allocation9], %s49
      %s51 = sshll.u32 [#allocation8], 4
      %s52 = int_to_ptr.vmem [resolvable:$true] %s51
      %57 = dma.hbm_to_vmem [thread:$0]  %s3, 256, %s52, [#allocation9], 64, 64, 4
    $region17: #{generator_forward.9} parent=1 // pred_fallthru
      _
    // Predicated region
    $region18: #{generator_forward.9} parent=1 // pred_check
      _
    $region19: #{generator_forward.9} parent=1 // pred_check_branch
      %59 = sbr.rel (0) target = $region21
    $region20: #{generator_forward.9} parent=1 // pred_region
      %s61 = ssub.s32 16, 16
      %62 = vsyncadd [#allocation9], %s61
      %s64 = sshll.u32 [#allocation10], 4
      %s65 = int_to_ptr.vmem [resolvable:$true] %s64
      %67 = dma.hbm_to_vmem [thread:$0]  %s4, 16, %s65, [#allocation9]
    $region21: #{generator_forward.9} parent=1 // pred_fallthru
      _
    // Predicated region
    $region22: #{generator_forward.9} parent=1 // pred_check
      _
    $region23: #{generator_forward.9} parent=1 // pred_check_branch
      %69 = sbr.rel (0) target = $region25
    $region24: #{generator_forward.9} parent=1 // pred_region
      %70 = dma.done [#allocation3], 32
    $region25: #{generator_forward.9} parent=1 // pred_fallthru
      _
    // Predicated region
    $region26: #{generator_forward.9} parent=1 // pred_check
      _
    $region27: #{generator_forward.9} parent=1 // pred_check_branch
      %72 = sbr.rel (0) target = $region29
    $region28: #{generator_forward.9} parent=1 // pred_region
      %73 = dma.done [#allocation6], 256
    $region29: #{generator_forward.9} parent=1 // pred_fallthru
      _
    // Predicated region
    $region30: #{generator_forward.9} parent=1 // pred_check
      _
    $region31: #{generator_forward.9} parent=1 // pred_check_branch
      %75 = sbr.rel (0) target = $region33
    $region32: #{generator_forward.9} parent=1 // pred_region
      %76 = dma.done [#allocation6], 16
    $region33: #{generator_forward.9} parent=1 // pred_fallthru
      _
    // Predicated region
    $region34: #{generator_forward.9} parent=1 // pred_check
      _
    $region35: #{generator_forward.9} parent=1 // pred_check_branch
      %78 = sbr.rel (0) target = $region37
    $region36: #{generator_forward.9} parent=1 // pred_region
      %79 = dma.done [#allocation9], 256
    $region37: #{generator_forward.9} parent=1 // pred_fallthru
      _
    // Predicated region
    $region38: #{generator_forward.9} parent=1 // pred_check
      _
    $region39: #{generator_forward.9} parent=1 // pred_check_branch
      %81 = sbr.rel (0) target = $region41
    $region40: #{generator_forward.9} parent=1 // pred_region
      %82 = dma.done [#allocation9], 16
    $region41: #{generator_forward.9} parent=1 // pred_fallthru
      _
    %v84 = vld [vmem:[#allocation2] sm:$0x3]
    %v85 = vpack.c.bf16 %v84, %v84
    %v86 = vld [vmem:[#allocation5] sm:$0xf]
    %v87 = vld [vmem:[#allocation5 + $0x4] sm:$0xf]
    %v88 = vld [vmem:[#allocation5 + $0x8] sm:$0xf]
    %v89 = vld [vmem:[#allocation5 + $0xc] sm:$0xf]
    %v90 = vld [vmem:[#allocation7] sm:$0x1]
    %v92 = vlaneseq
    %v93 = vshrl.u32 %v92, 7
    %v94 = vsub.s32 0, %v93
    %v95 = vrot.slane %v90, %v94
    %v101 = vunpack.c.l.b16 %v86
    %v102 = vunpack.c.l.b16 %v87
    %v103 = vunpack.c.l.b16 %v88
    %v104 = vunpack.c.l.b16 %v89
    %v105 = vpack.c.b16 %v102, %v101
    %v106 = vpack.c.b16 %v104, %v103
    %vm109 = vcmask 261120
    %v111 = vsel %vm109, %v85, 0
    %113 = vmatprep.subr.bf16.mxu0 0
    %114 = vmatpush1.bf16.msra.mxu0 %v105
    %115 = vmatprep.subr.bf16.mxu0 0
    %116 = vmatpush1.bf16.msra.mxu0 %v106
    %117 = vmatprep.subr.bf16.mxu0 0
    %118 = vmatpush1.bf16.msra.mxu0 0
    %119 = vmatprep.subr.bf16.mxu0 0
    %120 = vmatpush1.bf16.msra.mxu0 0
    %121 = vmatprep.subr.bf16.mxu0 0
    %122 = vmatpush1.bf16.msra.mxu0 0
    %123 = vmatprep.subr.bf16.mxu0 0
    %124 = vmatpush1.bf16.msra.mxu0 0
    %125 = vmatprep.subr.bf16.mxu0 0
    %126 = vmatpush1.bf16.msra.mxu0 0
    %127 = vmatprep.subr.bf16.mxu0 0
    %128 = vmatpush1.bf16.msra.mxu0 0
    %129 = vmatprep.subr.bf16.mxu0 0
    %130 = vmatpush1.bf16.msra.mxu0 0
    %131 = vmatprep.subr.bf16.mxu0 0
    %132 = vmatpush1.bf16.msra.mxu0 0
    %133 = vmatprep.subr.bf16.mxu0 0
    %134 = vmatpush1.bf16.msra.mxu0 0
    %135 = vmatprep.subr.bf16.mxu0 0
    %136 = vmatpush1.bf16.msra.mxu0 0
    %137 = vmatprep.subr.bf16.mxu0 0
    %138 = vmatpush1.bf16.msra.mxu0 0
    %139 = vmatprep.subr.bf16.mxu0 0
    %140 = vmatpush1.bf16.msra.mxu0 0
    %141 = vmatprep.subr.bf16.mxu0 0
    %142 = vmatpush1.bf16.msra.mxu0 0
    %143 = vmatprep.subr.bf16.mxu0 0
    %144 = vmatpush1.bf16.msra.mxu0 0
    %145 = vmatprep.mubr.bf16.mxu0 0
    %146 = vmatmul.mubr.bf16.gmra.mrb[0].mxu0 %v111
    %v147 = vpop.f32.mrb[0].mxu0
    %v148 = vadd.f32 %v95, %v147
    %v149 = vpop.f32.mrb[0].mxu0
    %v150 = vpop.f32.mrb[0].mxu0
    %v151 = vpop.f32.mrb[0].mxu0
    %152 = vdwg.mxu0
    %v153 = vmul.f32 %v148, 0.2
    %v154 = vmax.f32 %v148, %v153
    %v155 = vpack.c.bf16 %v154, %v154
    %v156 = vld [vmem:[#allocation8] sm:$0xf]
    %v157 = vld [vmem:[#allocation8 + $0x4] sm:$0xf]
    %v158 = vld [vmem:[#allocation8 + $0x8] sm:$0xf]
    %v159 = vld [vmem:[#allocation8 + $0xc] sm:$0xf]
    %v160 = vld [vmem:[#allocation10] sm:$0x1]
    %v162 = vlaneseq
    %v163 = vshrl.u32 %v162, 7
    %v164 = vsub.s32 0, %v163
    %v165 = vrot.slane %v160, %v164
    %v171 = vunpack.c.l.b16 %v156
    %v172 = vunpack.c.l.b16 %v157
    %v173 = vunpack.c.l.b16 %v158
    %v174 = vunpack.c.l.b16 %v159
    %v175 = vpack.c.b16 %v172, %v171
    %v176 = vpack.c.b16 %v174, %v173
    %v180 = vsel %vm109, %v155, 0
    %182 = vmatprep.subr.bf16.mxu0 0
    %183 = vmatpush1.bf16.msra.mxu0 %v175
    %184 = vmatprep.subr.bf16.mxu0 0
    %185 = vmatpush1.bf16.msra.mxu0 %v176
    %186 = vmatprep.subr.bf16.mxu0 0
    %187 = vmatpush1.bf16.msra.mxu0 0
    %188 = vmatprep.subr.bf16.mxu0 0
    %189 = vmatpush1.bf16.msra.mxu0 0
    %190 = vmatprep.subr.bf16.mxu0 0
    %191 = vmatpush1.bf16.msra.mxu0 0
    %192 = vmatprep.subr.bf16.mxu0 0
    %193 = vmatpush1.bf16.msra.mxu0 0
    %194 = vmatprep.subr.bf16.mxu0 0
    %195 = vmatpush1.bf16.msra.mxu0 0
    %196 = vmatprep.subr.bf16.mxu0 0
    %197 = vmatpush1.bf16.msra.mxu0 0
    %198 = vmatprep.subr.bf16.mxu0 0
    %199 = vmatpush1.bf16.msra.mxu0 0
    %200 = vmatprep.subr.bf16.mxu0 0
    %201 = vmatpush1.bf16.msra.mxu0 0
    %202 = vmatprep.subr.bf16.mxu0 0
    %203 = vmatpush1.bf16.msra.mxu0 0
    %204 = vmatprep.subr.bf16.mxu0 0
    %205 = vmatpush1.bf16.msra.mxu0 0
    %206 = vmatprep.subr.bf16.mxu0 0
    %207 = vmatpush1.bf16.msra.mxu0 0
    %208 = vmatprep.subr.bf16.mxu0 0
    %209 = vmatpush1.bf16.msra.mxu0 0
    %210 = vmatprep.subr.bf16.mxu0 0
    %211 = vmatpush1.bf16.msra.mxu0 0
    %212 = vmatprep.subr.bf16.mxu0 0
    %213 = vmatpush1.bf16.msra.mxu0 0
    %214 = vmatprep.mubr.bf16.mxu0 0
    %215 = vmatmul.mubr.bf16.gmra.mrb[0].mxu0 %v180
    %v216 = vpop.f32.mrb[0].mxu0
    %v217 = vadd.f32 %v165, %v216
    %v218 = vpop.f32.mrb[0].mxu0
    %v219 = vpop.f32.mrb[0].mxu0
    %v220 = vpop.f32.mrb[0].mxu0
    %221 = vdwg.mxu0
    %v222 = vmul.f32 %v217, 0.2
    %v223 = vmax.f32 %v217, %v222
    %vm224 = vcmask 254976
    %225 = vst.msk [vmem:[#allocation11] sm:$0x3] %vm224, %v223
    // Predicated region
    $region42: #{generator_forward.9} parent=1 // pred_check
      _
    $region43: #{generator_forward.9} parent=1 // pred_check_branch
      %227 = sbr.rel (0) target = $region45
    $region44: #{generator_forward.9} parent=1 // pred_region
      %s229 = ssub.s32 32, 32
      %230 = vsyncadd [#allocation4], %s229
      %s232 = sshll.u32 [#allocation11], 4
      %s233 = int_to_ptr.vmem [resolvable:$true] %s232
      %235 = dma.vmem_to_hbm [thread:$0]  %s233, 32, %s5, [#allocation4]
    $region45: #{generator_forward.9} parent=1 // pred_fallthru
      _
    // Predicated region
    $region46: #{generator_forward.9} parent=1 // pred_check
      _
    $region47: #{generator_forward.9} parent=1 // pred_check_branch
      %237 = sbr.rel (0) target = $region49
    $region48: #{generator_forward.9} parent=1 // pred_region
      %238 = dma.done [#allocation4], 32
    $region49: #{generator_forward.9} parent=1 // pred_fallthru
      _
    %239 = vsyncpa [#allocation3], 1
    %240 = vsyncpa [#allocation6], 1
    %241 = vsyncpa [#allocation9], 1
    %242 = vsyncpa [#allocation4], 1

// kernel: generator_forward.10
$region0: #{generator_forward.10}
  #allocation0 [shape = 'u32[]', space=smem, size = 0x4, offset = 0x4, fixed_abs, tag = 'smem constant byte address 0x4 - core index']
  #allocation1 [shape = 'u32[144,128]{1,0:T(1,128)}', space=vmem, size = 0x12000, scoped, tag = 'internal scratch']
  %s0 = inlined_call_operand.hbm [shape: f32[2,32], index: 0, kind: input, shape index: {}]
  %s1 = inlined_call_operand.hbm [shape: bf16[32,128], index: 1, kind: input, shape index: {}]
  %s2 = inlined_call_operand.hbm [shape: f32[1,128], index: 2, kind: input, shape index: {}]
  %s3 = inlined_call_operand.hbm [shape: f32[2,128], index: 3, kind: output, shape index: {}]
  %s4 = sld [smem:[#allocation0]]
  $region34: #{generator_forward.10} parent=0
    _
  %s6 = ssub.s32 1, %s4
  %s7 = scalar_select 0, %s6, %s4
  $region1: #{generator_forward.10} parent=0
    #allocation2 [shape = 'u8[1024]{0}', space=vmem, size = 0x400, scoped, tag = 'input window, operand 0, single buffered']
    #allocation3 [shape = 's32[1]{0}', space=sflag, size = 0x4, scoped, tag = 'scoped memory for generator_forward.10']
    #allocation4 [shape = 's32[1]{0}', space=sflag, size = 0x4, scoped, tag = 'scoped memory for generator_forward.10']
    #allocation5 [shape = 'u8[8192]{0}', space=vmem, size = 0x2000, scoped, tag = 'input window, operand 1, single buffered']
    #allocation6 [shape = 's32[1]{0}', space=sflag, size = 0x4, scoped, tag = 'scoped memory for generator_forward.10']
    #allocation7 [shape = 'u8[512]{0}', space=vmem, size = 0x400, scoped, tag = 'input window, operand 2, single buffered']
    #allocation8 [shape = 'u8[1024]{0}', space=vmem, size = 0x400, scoped, tag = 'output window, operand 0, single buffered']
    %8 = vsyncpa [#allocation3], 0
    %9 = vsyncpa [#allocation6], 0
    %10 = vsyncpa [#allocation4], 0
    // Predicated region
    $region2: #{generator_forward.10} parent=1 // pred_check
      _
    $region3: #{generator_forward.10} parent=1 // pred_check_branch
      %12 = sbr.rel (0) target = $region5
    $region4: #{generator_forward.10} parent=1 // pred_region
      %s14 = ssub.s32 32, 32
      %15 = vsyncadd [#allocation3], %s14
      %s17 = sshll.u32 [#allocation2], 4
      %s18 = int_to_ptr.vmem [resolvable:$true] %s17
      %20 = dma.hbm_to_vmem [thread:$0]  %s0, 32, %s18, [#allocation3]
    $region5: #{generator_forward.10} parent=1 // pred_fallthru
      _
    // Predicated region
    $region6: #{generator_forward.10} parent=1 // pred_check
      _
    $region7: #{generator_forward.10} parent=1 // pred_check_branch
      %22 = sbr.rel (0) target = $region9
    $region8: #{generator_forward.10} parent=1 // pred_region
      %s24 = ssub.s32 256, 256
      %25 = vsyncadd [#allocation6], %s24
      %s26 = sshll.u32 [#allocation5], 4
      %s27 = int_to_ptr.vmem [resolvable:$true] %s26
      %32 = dma.hbm_to_vmem [thread:$0]  %s1, 256, %s27, [#allocation6], 64, 64, 4
    $region9: #{generator_forward.10} parent=1 // pred_fallthru
      _
    // Predicated region
    $region10: #{generator_forward.10} parent=1 // pred_check
      _
    $region11: #{generator_forward.10} parent=1 // pred_check_branch
      %34 = sbr.rel (0) target = $region13
    $region12: #{generator_forward.10} parent=1 // pred_region
      %s36 = ssub.s32 16, 16
      %37 = vsyncadd [#allocation6], %s36
      %s39 = sshll.u32 [#allocation7], 4
      %s40 = int_to_ptr.vmem [resolvable:$true] %s39
      %42 = dma.hbm_to_vmem [thread:$0]  %s2, 16, %s40, [#allocation6]
    $region13: #{generator_forward.10} parent=1 // pred_fallthru
      _
    // Predicated region
    $region14: #{generator_forward.10} parent=1 // pred_check
      _
    $region15: #{generator_forward.10} parent=1 // pred_check_branch
      %44 = sbr.rel (0) target = $region17
    $region16: #{generator_forward.10} parent=1 // pred_region
      %45 = dma.done [#allocation3], 32
    $region17: #{generator_forward.10} parent=1 // pred_fallthru
      _
    // Predicated region
    $region18: #{generator_forward.10} parent=1 // pred_check
      _
    $region19: #{generator_forward.10} parent=1 // pred_check_branch
      %47 = sbr.rel (0) target = $region21
    $region20: #{generator_forward.10} parent=1 // pred_region
      %48 = dma.done [#allocation6], 256
    $region21: #{generator_forward.10} parent=1 // pred_fallthru
      _
    // Predicated region
    $region22: #{generator_forward.10} parent=1 // pred_check
      _
    $region23: #{generator_forward.10} parent=1 // pred_check_branch
      %50 = sbr.rel (0) target = $region25
    $region24: #{generator_forward.10} parent=1 // pred_region
      %51 = dma.done [#allocation6], 16
    $region25: #{generator_forward.10} parent=1 // pred_fallthru
      _
    %v53 = vld [vmem:[#allocation2] sm:$0x3]
    %v54 = vpack.c.bf16 %v53, %v53
    %v55 = vld [vmem:[#allocation5] sm:$0xf]
    %v56 = vld [vmem:[#allocation5 + $0x4] sm:$0xf]
    %v57 = vld [vmem:[#allocation5 + $0x8] sm:$0xf]
    %v58 = vld [vmem:[#allocation5 + $0xc] sm:$0xf]
    %v59 = vld [vmem:[#allocation7] sm:$0x1]
    %v61 = vlaneseq
    %v62 = vshrl.u32 %v61, 7
    %v63 = vsub.s32 0, %v62
    %v64 = vrot.slane %v59, %v63
    %v70 = vunpack.c.l.b16 %v55
    %v71 = vunpack.c.l.b16 %v56
    %v72 = vunpack.c.l.b16 %v57
    %v73 = vunpack.c.l.b16 %v58
    %v74 = vpack.c.b16 %v71, %v70
    %v75 = vpack.c.b16 %v73, %v72
    %vm78 = vcmask 261120
    %v80 = vsel %vm78, %v54, 0
    %82 = vmatprep.subr.bf16.mxu0 0
    %83 = vmatpush1.bf16.msra.mxu0 %v74
    %84 = vmatprep.subr.bf16.mxu0 0
    %85 = vmatpush1.bf16.msra.mxu0 %v75
    %86 = vmatprep.subr.bf16.mxu0 0
    %87 = vmatpush1.bf16.msra.mxu0 0
    %88 = vmatprep.subr.bf16.mxu0 0
    %89 = vmatpush1.bf16.msra.mxu0 0
    %90 = vmatprep.subr.bf16.mxu0 0
    %91 = vmatpush1.bf16.msra.mxu0 0
    %92 = vmatprep.subr.bf16.mxu0 0
    %93 = vmatpush1.bf16.msra.mxu0 0
    %94 = vmatprep.subr.bf16.mxu0 0
    %95 = vmatpush1.bf16.msra.mxu0 0
    %96 = vmatprep.subr.bf16.mxu0 0
    %97 = vmatpush1.bf16.msra.mxu0 0
    %98 = vmatprep.subr.bf16.mxu0 0
    %99 = vmatpush1.bf16.msra.mxu0 0
    %100 = vmatprep.subr.bf16.mxu0 0
    %101 = vmatpush1.bf16.msra.mxu0 0
    %102 = vmatprep.subr.bf16.mxu0 0
    %103 = vmatpush1.bf16.msra.mxu0 0
    %104 = vmatprep.subr.bf16.mxu0 0
    %105 = vmatpush1.bf16.msra.mxu0 0
    %106 = vmatprep.subr.bf16.mxu0 0
    %107 = vmatpush1.bf16.msra.mxu0 0
    %108 = vmatprep.subr.bf16.mxu0 0
    %109 = vmatpush1.bf16.msra.mxu0 0
    %110 = vmatprep.subr.bf16.mxu0 0
    %111 = vmatpush1.bf16.msra.mxu0 0
    %112 = vmatprep.subr.bf16.mxu0 0
    %113 = vmatpush1.bf16.msra.mxu0 0
    %114 = vmatprep.mubr.bf16.mxu0 0
    %115 = vmatmul.mubr.bf16.gmra.mrb[0].mxu0 %v80
    %v116 = vpop.f32.mrb[0].mxu0
    %v117 = vadd.f32 %v64, %v116
    %v118 = vpop.f32.mrb[0].mxu0
    %v119 = vpop.f32.mrb[0].mxu0
    %v120 = vpop.f32.mrb[0].mxu0
    %121 = vdwg.mxu0
    %122 = vst [vmem:[#allocation8] sm:$0x3] %v117
    // Predicated region
    $region26: #{generator_forward.10} parent=1 // pred_check
      _
    $region27: #{generator_forward.10} parent=1 // pred_check_branch
      %124 = sbr.rel (0) target = $region29
    $region28: #{generator_forward.10} parent=1 // pred_region
      %s126 = ssub.s32 32, 32
      %127 = vsyncadd [#allocation4], %s126
      %s129 = sshll.u32 [#allocation8], 4
      %s130 = int_to_ptr.vmem [resolvable:$true] %s129
      %132 = dma.vmem_to_hbm [thread:$0]  %s130, 32, %s3, [#allocation4]
    $region29: #{generator_forward.10} parent=1 // pred_fallthru
      _
    // Predicated region
    $region30: #{generator_forward.10} parent=1 // pred_check
      _
    $region31: #{generator_forward.10} parent=1 // pred_check_branch
      %134 = sbr.rel (0) target = $region33
    $region32: #{generator_forward.10} parent=1 // pred_region
      %135 = dma.done [#allocation4], 32
    $region33: #{generator_forward.10} parent=1 // pred_fallthru
      _
    %136 = vsyncpa [#allocation3], 1
    %137 = vsyncpa [#allocation6], 1
    %138 = vsyncpa [#allocation4], 1

// kernel: generator_forward.11
$region0: #{generator_forward.11}
  #allocation0 [shape = 'u32[]', space=smem, size = 0x4, offset = 0x4, fixed_abs, tag = 'smem constant byte address 0x4 - core index']
  #allocation1 [shape = 'u32[144,128]{1,0:T(1,128)}', space=vmem, size = 0x12000, scoped, tag = 'internal scratch']
  %s0 = inlined_call_operand.hbm [shape: f32[2,16,16], index: 0, kind: input, shape index: {}]
  %s1 = inlined_call_operand.hbm [shape: f32[2,16,1], index: 1, kind: input, shape index: {}]
  %s2 = inlined_call_operand.hbm [shape: f32[1,16], index: 2, kind: input, shape index: {}]
  %s3 = inlined_call_operand.hbm [shape: f32[2,4,32], index: 3, kind: input, shape index: {}]
  %s4 = inlined_call_operand.hbm [shape: f32[2,16,16], index: 4, kind: output, shape index: {}]
  %s5 = sld [smem:[#allocation0]]
  $region65: #{generator_forward.11} parent=0
    _
  %s7 = ssub.s32 1, %s5
  %s8 = scalar_select 0, %s7, %s5
  $region1: #{generator_forward.11} parent=0
    #allocation2 [shape = 'u8[16384]{0}', space=vmem, size = 0x4000, scoped, tag = 'input window, operand 0']
    #allocation3 [shape = 's32[2]{0}', space=sflag, size = 0x8, scoped, tag = 'scoped memory for generator_forward.11']
    #allocation4 [shape = 's32[2]{0}', space=sflag, size = 0x8, scoped, tag = 'scoped memory for generator_forward.11']
    #allocation5 [shape = 'u8[16384]{0}', space=vmem, size = 0x4000, scoped, tag = 'input window, operand 1']
    #allocation6 [shape = 's32[2]{0}', space=sflag, size = 0x8, scoped, tag = 'scoped memory for generator_forward.11']
    #allocation7 [shape = 'u8[512]{0}', space=vmem, size = 0x400, scoped, tag = 'input window, operand 2, single buffered']
    #allocation8 [shape = 'u8[4096]{0}', space=vmem, size = 0x1000, scoped, tag = 'input window, operand 3']
    #allocation9 [shape = 's32[2]{0}', space=sflag, size = 0x8, scoped, tag = 'scoped memory for generator_forward.11']
    #allocation10 [shape = 'u8[16384]{0}', space=vmem, size = 0x4000, scoped, tag = 'output window, operand 0']
    %9 = vsyncpa [#allocation3], 0
    %s10 = scalar_lea.sflag [#allocation3], 1
    %11 = vsyncpa %s10, 0
    %12 = vsyncpa [#allocation6], 0
    %s13 = scalar_lea.sflag [#allocation6], 1
    %14 = vsyncpa %s13, 0
    %15 = vsyncpa [#allocation9], 0
    %s16 = scalar_lea.sflag [#allocation9], 1
    %17 = vsyncpa %s16, 0
    %18 = vsyncpa [#allocation4], 0
    %s19 = scalar_lea.sflag [#allocation4], 1
    %20 = vsyncpa %s19, 0
    loop: start=0, step=1, limit=4
    $region2: #{generator_forward.11} parent=1 // loop_pre_header
      _
    $region3: #{generator_forward.11} parent=1 // loop_header
      %s22 = sphi 0, %s26
      %p23 = scmp.ge.s32.totalorder %s22, 4
      %s32 = sphi 0, %s34
      %s35 = sphi 0, %s32
      %s36 = sphi 0, %s35
      %s52 = sphi 0, %s36
      %s58 = sphi 0, %s60
      %s61 = sphi 0, %s58
      %s62 = sphi 0, %s61
      %s78 = sphi 0, %s62
      %s82 = sphi 0, %s82
      %s84 = sphi 0, %s82
      %s85 = sphi 0, %s84
      %s99 = sphi 0, %s85
      %s105 = sphi 0, %s107
      %s108 = sphi 0, %s105
      %s109 = sphi 0, %s108
      %s125 = sphi 0, %s109
      %s131 = sphi 0, %s133
      %s134 = sphi 0, %s131
      %s135 = sphi 0, %s134
      %s151 = sphi 0, %s135
    $region4: #{generator_forward.11} parent=1 // loop_header_branch
      %25 = sbr.rel (%p23) target = $region8
    $region5: #{generator_forward.11} parent=1 // loop_body
      %s27 = ssub.s32 %s22, 1
      %s28 = ssub.s32 %s22, 2
      %s29 = sadd.s32 %s22, 1
      %s30 = ssub.s32 %s22, %s29
      %p31 = scmp.eq.s32.totalorder %s30, 0
      %s33 = sadd.s32 %s32, 1
      %s34 = scalar_select %p31, %s32, %s33
      %p37 = pneg %p31
      %p38 = scmp.eq.s32.totalorder %s22, 1
      %p39 = por %p37, %p38
      %p40 = scmp.ne.s32.totalorder %s32, %s35
      %p41 = scmp.eq.s32.totalorder %s22, 0
      %p42 = por %p40, %p41
      %p43 = scmp.ne.s32.totalorder %s32, %s35
      %p44 = scmp.eq.s32.totalorder %s27, 1
      %p45 = por %p43, %p44
      %p46 = scmp.ne.s32.totalorder %s35, %s36
      %p47 = scmp.eq.s32.totalorder %s27, 0
      %p48 = por %p46, %p47
      %p49 = scmp.ne.s32.totalorder %s35, %s36
      %p50 = scmp.eq.s32.totalorder %s28, 1
      %p51 = por %p49, %p50
      %p53 = scmp.ne.s32.totalorder %s36, %s52
      %p54 = scmp.eq.s32.totalorder %s28, 0
      %p55 = por %p53, %p54
      %s56 = ssub.s32 %s22, %s29
      %p57 = scmp.eq.s32.totalorder %s56, 0
      %s59 = sadd.s32 %s58, 1
      %s60 = scalar_select %p57, %s58, %s59
      %p63 = pneg %p57
      %p64 = scmp.eq.s32.totalorder %s22, 1
      %p65 = por %p63, %p64
      %p66 = scmp.ne.s32.totalorder %s58, %s61
      %p67 = scmp.eq.s32.totalorder %s22, 0
      %p68 = por %p66, %p67
      %p69 = scmp.ne.s32.totalorder %s58, %s61
      %p70 = scmp.eq.s32.totalorder %s27, 1
      %p71 = por %p69, %p70
      %p72 = scmp.ne.s32.totalorder %s61, %s62
      %p73 = scmp.eq.s32.totalorder %s27, 0
      %p74 = por %p72, %p73
      %p75 = scmp.ne.s32.totalorder %s61, %s62
      %p76 = scmp.eq.s32.totalorder %s28, 1
      %p77 = por %p75, %p76
      %p79 = scmp.ne.s32.totalorder %s62, %s78
      %p80 = scmp.eq.s32.totalorder %s28, 0
      %p81 = por %p79, %p80
      %s83 = sadd.s32 %s82, 1
      %p86 = scmp.eq.s32.totalorder %s22, 1
      %p87 = scmp.ne.s32.totalorder %s82, %s84
      %p88 = scmp.eq.s32.totalorder %s22, 0
      %p89 = por %p87, %p88
      %p90 = scmp.ne.s32.totalorder %s82, %s84
      %p91 = scmp.eq.s32.totalorder %s27, 1
      %p92 = por %p90, %p91
      %p93 = scmp.ne.s32.totalorder %s84, %s85
      %p94 = scmp.eq.s32.totalorder %s27, 0
      %p95 = por %p93, %p94
      %p96 = scmp.ne.s32.totalorder %s84, %s85
      %p97 = scmp.eq.s32.totalorder %s28, 1
      %p98 = por %p96, %p97
      %p100 = scmp.ne.s32.totalorder %s85, %s99
      %p101 = scmp.eq.s32.totalorder %s28, 0
      %p102 = por %p100, %p101
      %s103 = ssub.s32 %s22, %s29
      %p104 = scmp.eq.s32.totalorder %s103, 0
      %s106 = sadd.s32 %s105, 1
      %s107 = scalar_select %p104, %s105, %s106
      %p110 = pneg %p104
      %p111 = scmp.eq.s32.totalorder %s22, 1
      %p112 = por %p110, %p111
      %p113 = scmp.ne.s32.totalorder %s105, %s108
      %p114 = scmp.eq.s32.totalorder %s22, 0
      %p115 = por %p113, %p114
      %p116 = scmp.ne.s32.totalorder %s105, %s108
      %p117 = scmp.eq.s32.totalorder %s27, 1
      %p118 = por %p116, %p117
      %p119 = scmp.ne.s32.totalorder %s108, %s109
      %p120 = scmp.eq.s32.totalorder %s27, 0
      %p121 = por %p119, %p120
      %p122 = scmp.ne.s32.totalorder %s108, %s109
      %p123 = scmp.eq.s32.totalorder %s28, 1
      %p124 = por %p122, %p123
      %p126 = scmp.ne.s32.totalorder %s109, %s125
      %p127 = scmp.eq.s32.totalorder %s28, 0
      %p128 = por %p126, %p127
      %s129 = ssub.s32 %s22, %s29
      %p130 = scmp.eq.s32.totalorder %s129, 0
      %s132 = sadd.s32 %s131, 1
      %s133 = scalar_select %p130, %s131, %s132
      %p136 = pneg %p130
      %p137 = scmp.eq.s32.totalorder %s22, 1
      %p138 = por %p136, %p137
      %p139 = scmp.ne.s32.totalorder %s131, %s134
      %p140 = scmp.eq.s32.totalorder %s22, 0
      %p141 = por %p139, %p140
      %p142 = scmp.ne.s32.totalorder %s131, %s134
      %p143 = scmp.eq.s32.totalorder %s27, 1
      %p144 = por %p142, %p143
      %p145 = scmp.ne.s32.totalorder %s134, %s135
      %p146 = scmp.eq.s32.totalorder %s27, 0
      %p147 = por %p145, %p146
      %p148 = scmp.ne.s32.totalorder %s134, %s135
      %p149 = scmp.eq.s32.totalorder %s28, 1
      %p150 = por %p148, %p149
      %p152 = scmp.ne.s32.totalorder %s135, %s151
      %p153 = scmp.eq.s32.totalorder %s28, 0
      %p154 = por %p152, %p153
      %p155 = scmp.le.s32.totalorder 1, %s22
      %p156 = scmp.lt.s32.totalorder %s22, 3
      %p157 = pnand %p155, %p156
      %p158 = pneg %p157
      // Predicated region
      $region9: #{generator_forward.11} parent=5 // pred_check
        _
      $region10: #{generator_forward.11} parent=5 // pred_check_branch
        %160 = sbr.rel (%p157) target = $region12
      $region11: #{generator_forward.11} parent=5 // pred_region
        %s161 = ssub.s32 %s22, 1
        // Predicated region
        $region13: #{generator_forward.11} parent=11 // pred_check
          %p162 = pneg %p95
        $region14: #{generator_forward.11} parent=11 // pred_check_branch
          %164 = sbr.rel (%p162) target = $region16
        $region15: #{generator_forward.11} parent=11 // pred_region
          %s166 = ssub.s32 16, 16
          %167 = vsyncadd [#allocation6], %s166
          %s169 = sshll.u32 [#allocation7], 4
          %s170 = int_to_ptr.vmem [resolvable:$true] %s169
          %172 = dma.hbm_to_vmem [thread:$0]  %s2, 16, %s170, [#allocation6]
        $region16: #{generator_forward.11} parent=11 // pred_fallthru
          _
      $region12: #{generator_forward.11} parent=5 // pred_fallthru
        _
      %p173 = scmp.lt.s32.totalorder %s22, 2
      // Predicated region
      $region17: #{generator_forward.11} parent=5 // pred_check
        %p174 = pneg %p173
      $region18: #{generator_forward.11} parent=5 // pred_check_branch
        %176 = sbr.rel (%p174) target = $region20
      $region19: #{generator_forward.11} parent=5 // pred_region
        // Predicated region
        $region21: #{generator_forward.11} parent=19 // pred_check
          %p177 = pneg %p42
        $region22: #{generator_forward.11} parent=19 // pred_check_branch
          %179 = sbr.rel (%p177) target = $region24
        $region23: #{generator_forward.11} parent=19 // pred_region
          %s180 = sand.u32 %s32, 1
          %s181 = scalar_lea.sflag [#allocation3], %s180
          %s182 = sand.u32 %s32, 1
          %s183 = smul.addr %s182, 16
          %s184 = scalar_lea.vmem [#allocation2], %s183
          %s186 = ssub.s32 256, 256
          %187 = vsyncadd %s181, %s186
          %s188 = smul.addr %s22, 2
          %s189 = smul.addr %s188, 128
          %s190 = scalar_lea.hbm %s0, %s189
          %s191 = sshll.u32 %s184, 4
          %s192 = int_to_ptr.vmem [resolvable:$true] %s191
          %197 = dma.hbm_to_vmem [thread:$0]  %s190, 256, %s192, %s181, 128, 128, 8
        $region24: #{generator_forward.11} parent=19 // pred_fallthru
          _
        // Predicated region
        $region25: #{generator_forward.11} parent=19 // pred_check
          %p198 = pneg %p68
        $region26: #{generator_forward.11} parent=19 // pred_check_branch
          %200 = sbr.rel (%p198) target = $region28
        $region27: #{generator_forward.11} parent=19 // pred_region
          %s201 = sand.u32 %s22, 1
          %s202 = scalar_lea.sflag [#allocation6], %s201
          %s203 = sand.u32 %s58, 1
          %s204 = smul.addr %s203, 16
          %s205 = scalar_lea.vmem [#allocation5], %s204
          %s207 = ssub.s32 256, 256
          %208 = vsyncadd %s202, %s207
          %s209 = smul.addr %s22, 2
          %s210 = smul.addr %s209, 128
          %s211 = scalar_lea.hbm %s1, %s210
          %s212 = sshll.u32 %s205, 4
          %s213 = int_to_ptr.vmem [resolvable:$true] %s212
          %218 = dma.hbm_to_vmem [thread:$0]  %s211, 256, %s213, %s202, 128, 128, 8
        $region28: #{generator_forward.11} parent=19 // pred_fallthru
          _
        // Predicated region
        $region29: #{generator_forward.11} parent=19 // pred_check
          %p219 = pneg %p115
        $region30: #{generator_forward.11} parent=19 // pred_check_branch
          %221 = sbr.rel (%p219) target = $region32
        $region31: #{generator_forward.11} parent=19 // pred_region
          %s222 = sand.u32 %s105, 1
          %s223 = scalar_lea.sflag [#allocation9], %s222
          %s224 = sand.u32 %s105, 1
          %s225 = smul.addr %s224, 4
          %s226 = scalar_lea.vmem [#allocation8], %s225
          %s228 = ssub.s32 64, 64
          %229 = vsyncadd %s223, %s228
          %s230 = smul.addr %s22, 64
          %s231 = scalar_lea.hbm %s3, %s230
          %s233 = sshll.u32 %s226, 4
          %s234 = int_to_ptr.vmem [resolvable:$true] %s233
          %236 = dma.hbm_to_vmem [thread:$0]  %s231, 64, %s234, %s223
        $region32: #{generator_forward.11} parent=19 // pred_fallthru
          _
      $region20: #{generator_forward.11} parent=5 // pred_fallthru
        _
      %p237 = scmp.le.s32.totalorder 1, %s22
      %p238 = scmp.lt.s32.totalorder %s22, 3
      %p239 = pnand %p237, %p238
      %p240 = pneg %p239
      // Predicated region
      $region33: #{generator_forward.11} parent=5 // pred_check
        _
      $region34: #{generator_forward.11} parent=5 // pred_check_branch
        %242 = sbr.rel (%p239) target = $region36
      $region35: #{generator_forward.11} parent=5 // pred_region
        %s243 = ssub.s32 %s22, 1
        %s244 = sand.u32 %s35, 1
        %s245 = scalar_lea.sflag [#allocation3], %s244
        %s246 = sand.u32 %s35, 1
        %s247 = smul.addr %s246, 16
        %s248 = scalar_lea.vmem [#allocation2], %s247
        // Predicated region
        $region37: #{generator_forward.11} parent=35 // pred_check
          %p249 = pneg %p48
        $region38: #{generator_forward.11} parent=35 // pred_check_branch
          %251 = sbr.rel (%p249) target = $region40
        $region39: #{generator_forward.11} parent=35 // pred_region
          %252 = dma.done %s245, 256
        $region40: #{generator_forward.11} parent=35 // pred_fallthru
          _
        %s253 = sand.u32 %s27, 1
        %s254 = scalar_lea.sflag [#allocation6], %s253
        %s255 = sand.u32 %s61, 1
        %s256 = smul.addr %s255, 16
        %s257 = scalar_lea.vmem [#allocation5], %s256
        // Predicated region
        $region41: #{generator_forward.11} parent=35 // pred_check
          %p258 = pneg %p74
        $region42: #{generator_forward.11} parent=35 // pred_check_branch
          %260 = sbr.rel (%p258) target = $region44
        $region43: #{generator_forward.11} parent=35 // pred_region
          %261 = dma.done %s254, 256
        $region44: #{generator_forward.11} parent=35 // pred_fallthru
          _
        // Predicated region
        $region45: #{generator_forward.11} parent=35 // pred_check
          %p262 = pneg %p95
        $region46: #{generator_forward.11} parent=35 // pred_check_branch
          %264 = sbr.rel (%p262) target = $region48
        $region47: #{generator_forward.11} parent=35 // pred_region
          %265 = dma.done [#allocation6], 16
        $region48: #{generator_forward.11} parent=35 // pred_fallthru
          _
        %s266 = sand.u32 %s108, 1
        %s267 = scalar_lea.sflag [#allocation9], %s266
        %s268 = sand.u32 %s108, 1
        %s269 = smul.addr %s268, 4
        %s270 = scalar_lea.vmem [#allocation8], %s269
        // Predicated region
        $region49: #{generator_forward.11} parent=35 // pred_check
          %p271 = pneg %p121
        $region50: #{generator_forward.11} parent=35 // pred_check_branch
          %273 = sbr.rel (%p271) target = $region52
        $region51: #{generator_forward.11} parent=35 // pred_region
          %274 = dma.done %s267, 64
        $region52: #{generator_forward.11} parent=35 // pred_fallthru
          _
        %s275 = sand.u32 %s35, 1
        %s276 = scalar_lea.sflag [#allocation3], %s275
        %s277 = sand.u32 %s35, 1
        %s278 = smul.addr %s277, 16
        %s279 = scalar_lea.vmem [#allocation2], %s278
        %p280 = pneg %p48
        %p281 = pneg %p45
        %s282 = sand.u32 %s27, 1
        %s283 = scalar_lea.sflag [#allocation6], %s282
        %s284 = sand.u32 %s61, 1
        %s285 = smul.addr %s284, 16
        %s286 = scalar_lea.vmem [#allocation5], %s285
        %p287 = pneg %p74
        %p288 = pneg %p71
        %p289 = pneg %p95
        %p290 = pneg %p92
        %s291 = sand.u32 %s108, 1
        %s292 = scalar_lea.sflag [#allocation9], %s291
        %s293 = sand.u32 %s108, 1
        %s294 = smul.addr %s293, 4
        %s295 = scalar_lea.vmem [#allocation8], %s294
        %p296 = pneg %p121
        %p297 = pneg %p118
        %p298 = pneg %p147
        %p299 = pneg %p144
        %s300 = sand.u32 %s134, 1
        %s301 = scalar_lea.sflag [#allocation4], %s300
        %s302 = sand.u32 %s134, 1
        %s303 = smul.addr %s302, 16
        %s304 = scalar_lea.vmem [#allocation10], %s303
        %v305 = vld [vmem:[%s248] sm:$0xff]
        %v306 = vld [vmem:[%s248 + $0x8] sm:$0xff]
        %v307 = vld [vmem:[%s257] sm:$0xff]
        %v308 = vld [vmem:[%s257 + $0x8] sm:$0xff]
        %v309 = vld [vmem:[#allocation7] sm:$0x1]
        %311 = vset.pattern.permute.xlu0 0
        %312 = vperm.xlu0 %311, %v307
        %v313 = vpop.permute.xlu0 %312
        %316 = vset.pattern.permute.xlu0 0
        %317 = vperm.xlu0 %316, %v308
        %v318 = vpop.permute.xlu0 %317
        %v321 = vlaneseq
        %v322 = vshrl.u32 %v321, 7
        %v323 = vsub.s32 0, %v322
        %v324 = vrot.slane %v309, %v323
        %v326 = vmul.f32 %v313, %v324
        %v327 = vmul.f32 %v318, %v324
        %v328 = vadd.f32 %v305, %v326
        %v329 = vadd.f32 %v306, %v327
        %v330 = vmul.f32 %v328, 0.2
        %v331 = vmul.f32 %v329, 0.2
        %v332 = vmax.f32 %v328, %v330
        %v333 = vmax.f32 %v329, %v331
        %vm334 = vcmask 130048
        %v335 = vsel %vm334, %v332, 0.0
        %v336 = vsel %vm334, %v333, 0.0
        %v337 = vadd.f32 %v335, %v336
        %v338 = vrot.slane %v337, 4
        %v339 = vadd.f32 %v337, %v338
        %v340 = vrot.slane %v339, 2
        %v341 = vadd.f32 %v339, %v340
        %v342 = vrot.slane %v341, 1
        %v343 = vadd.f32 %v341, %v342
        %v344 = vmul.f32 %v343, 0.0625
        %v345 = vsub.f32 %v332, %v344
        %v346 = vsub.f32 %v333, %v344
        %v347 = vmul.f32 %v345, %v345
        %v348 = vmul.f32 %v346, %v346
        %v349 = vsel %vm334, %v347, 0.0
        %v350 = vsel %vm334, %v348, 0.0
        %v351 = vadd.f32 %v349, %v350
        %v352 = vrot.slane %v351, 4
        %v353 = vadd.f32 %v351, %v352
        %v354 = vrot.slane %v353, 2
        %v355 = vadd.f32 %v353, %v354
        %v356 = vrot.slane %v355, 1
        %v357 = vadd.f32 %v355, %v356
        %v358 = vmul.f32 %v357, 0.0625
        %v359 = vadd.f32 %v358, 1e-05
        %v360 = vrsqrt.pop %v359
        %v361 = vmul.f32 %v345, %v360
        %v362 = vmul.f32 %v346, %v360
        %v363 = vld [vmem:[%s270] sm:$0x1]
        %v364 = vadd.f32 %v363, 1.0
        %v365 = vlaneseq
        %v366 = vshrl.u32 %v365, 7
        %v367 = vsub.s32 0, %v366
        %v368 = vrot.slane %v364, %v367
        %v369 = vmul.f32 %v361, %v368
        %v370 = vmul.f32 %v362, %v368
        %v371 = vlaneseq
        %v372 = vshrl.u32 %v371, 7
        %v373 = vsub.s32 0, %v372
        %v374 = vrot.slane %v363, %v373
        %376 = vrot.lane.b32.xlu0 %v374, 112
        %v377 = vpop.permute.xlu0 %376
        %v379 = vadd.f32 %v369, %v377
        %v380 = vadd.f32 %v370, %v377
        %381 = vst.msk [vmem:[%s304] sm:$0xff] %vm334, %v379
        %382 = vst.msk [vmem:[%s304 + $0x8] sm:$0xff] %vm334, %v380
        %s383 = sand.u32 %s134, 1
        %s384 = scalar_lea.sflag [#allocation4], %s383
        %s385 = sand.u32 %s134, 1
        %s386 = smul.addr %s385, 16
        %s387 = scalar_lea.vmem [#allocation10], %s386
        // Predicated region
        $region53: #{generator_forward.11} parent=35 // pred_check
          %p388 = pneg %p144
        $region54: #{generator_forward.11} parent=35 // pred_check_branch
          %390 = sbr.rel (%p388) target = $region56
        $region55: #{generator_forward.11} parent=35 // pred_region
          %s392 = ssub.s32 256, 256
          %393 = vsyncadd %s384, %s392
          %s394 = smul.addr %s27, 2
          %s395 = smul.addr %s394, 128
          %s396 = scalar_lea.hbm %s4, %s395
          %s397 = sshll.u32 %s387, 4
          %s398 = int_to_ptr.vmem [resolvable:$true] %s397
          %403 = dma.vmem_to_hbm [thread:$0]  %s398, 256, %s396, %s384, 128, 128, 8
        $region56: #{generator_forward.11} parent=35 // pred_fallthru
          _
      $region36: #{generator_forward.11} parent=5 // pred_fallthru
        _
      %p404 = scmp.le.s32.totalorder 2, %s22
      // Predicated region
      $region57: #{generator_forward.11} parent=5 // pred_check
        %p405 = pneg %p404
      $region58: #{generator_forward.11} parent=5 // pred_check_branch
        %407 = sbr.rel (%p405) target = $region60
      $region59: #{generator_forward.11} parent=5 // pred_region
        %s408 = ssub.s32 %s22, 2
        // Predicated region
        $region61: #{generator_forward.11} parent=59 // pred_check
          %p409 = pneg %p150
        $region62: #{generator_forward.11} parent=59 // pred_check_branch
          %411 = sbr.rel (%p409) target = $region64
        $region63: #{generator_forward.11} parent=59 // pred_region
          %s412 = sand.u32 %s135, 1
          %s413 = scalar_lea.sflag [#allocation4], %s412
          %s414 = sand.u32 %s135, 1
          %s415 = smul.addr %s414, 16
          %s416 = scalar_lea.vmem [#allocation10], %s415
          %417 = dma.done %s413, 256
        $region64: #{generator_forward.11} parent=59 // pred_fallthru
          _
      $region60: #{generator_forward.11} parent=5 // pred_fallthru
        _
    $region6: #{generator_forward.11} parent=1 // loop_footer
      %s26 = sadd.s32 1, %s22
    $region7: #{generator_forward.11} parent=1 // loop_footer_branch
      %21 = sbr.rel target = $region3
    $region8: #{generator_forward.11} parent=1 // loop_exit
      _
    %418 = vsyncpa [#allocation3], 1
    %s419 = scalar_lea.sflag [#allocation3], 1
    %420 = vsyncpa %s419, 1
    %421 = vsyncpa [#allocation6], 1
    %s422 = scalar_lea.sflag [#allocation6], 1
    %423 = vsyncpa %s422, 1
    %424 = vsyncpa [#allocation9], 1
    %s425 = scalar_lea.sflag [#allocation9], 1
    %426 = vsyncpa %s425, 1
    %427 = vsyncpa [#allocation4], 1
    %s428 = scalar_lea.sflag [#allocation4], 1
    %429 = vsyncpa %s428, 1

// kernel: generator_forward.12
$region0: #{generator_forward.12}
  #allocation0 [shape = 'u32[]', space=smem, size = 0x4, offset = 0x4, fixed_abs, tag = 'smem constant byte address 0x4 - core index']
  #allocation1 [shape = 'u32[144,128]{1,0:T(1,128)}', space=vmem, size = 0x12000, scoped, tag = 'internal scratch']
  #allocation2 [shape = 'bf16[22,144]{1,0:T(8,128)(2,1)}', space=vmem, size = 0x3000, scoped, tag = 'scratch operand']
  %s0 = inlined_call_operand.hbm [shape: f32[2,36,16], index: 0, kind: input, shape index: {}]
  %s1 = inlined_call_operand.hbm [shape: f32[1,36,1], index: 1, kind: input, shape index: {}]
  %s2 = inlined_call_operand.hbm [shape: f32[2,36,1], index: 2, kind: input, shape index: {}]
  %s3 = inlined_call_operand.hbm [shape: bf16[144,16], index: 3, kind: input, shape index: {}]
  %s4 = inlined_call_operand.hbm [shape: f32[1,16], index: 4, kind: input, shape index: {}]
  %s5 = inlined_call_operand.hbm [shape: f32[1,16], index: 5, kind: input, shape index: {}]
  %s6 = inlined_call_operand.hbm [shape: f32[2,4,32], index: 6, kind: input, shape index: {}]
  %s7 = inlined_call_operand.hbm [shape: f32[2,36,16], index: 7, kind: output, shape index: {}]
  %s8 = sld [smem:[#allocation0]]
  $region89: #{generator_forward.12} parent=0
    _
  %s10 = ssub.s32 1, %s8
  %s11 = scalar_select 0, %s10, %s8
  $region1: #{generator_forward.12} parent=0
    #allocation3 [shape = 'u8[40960]{0}', space=vmem, size = 0xa000, scoped, tag = 'input window, operand 0']
    #allocation4 [shape = 's32[2]{0}', space=sflag, size = 0x8, scoped, tag = 'scoped memory for generator_forward.12']
    #allocation5 [shape = 's32[2]{0}', space=sflag, size = 0x8, scoped, tag = 'scoped memory for generator_forward.12']
    #allocation6 [shape = 'u8[20480]{0}', space=vmem, size = 0x5000, scoped, tag = 'input window, operand 1, single buffered']
    #allocation7 [shape = 's32[1]{0}', space=sflag, size = 0x4, scoped, tag = 'scoped memory for generator_forward.12']
    #allocation8 [shape = 'u8[40960]{0}', space=vmem, size = 0xa000, scoped, tag = 'input window, operand 2']
    #allocation9 [shape = 'u8[36864]{0}', space=vmem, size = 0x9000, scoped, tag = 'input window, operand 3, single buffered']
    #allocation10 [shape = 'u8[512]{0}', space=vmem, size = 0x400, scoped, tag = 'input window, operand 4, single buffered']
    #allocation11 [shape = 's32[1]{0}', space=sflag, size = 0x4, scoped, tag = 'scoped memory for generator_forward.12']
    #allocation12 [shape = 'u8[512]{0}', space=vmem, size = 0x400, scoped, tag = 'input window, operand 5, single buffered']
    #allocation13 [shape = 'u8[4096]{0}', space=vmem, size = 0x1000, scoped, tag = 'input window, operand 6']
    #allocation14 [shape = 's32[2]{0}', space=sflag, size = 0x8, scoped, tag = 'scoped memory for generator_forward.12']
    #allocation15 [shape = 'u8[40960]{0}', space=vmem, size = 0xa000, scoped, tag = 'output window, operand 0']
    %12 = vsyncpa [#allocation4], 0
    %s13 = scalar_lea.sflag [#allocation4], 1
    %14 = vsyncpa %s13, 0
    %15 = vsyncpa [#allocation7], 0
    %16 = vsyncpa [#allocation11], 0
    %17 = vsyncpa [#allocation14], 0
    %s18 = scalar_lea.sflag [#allocation14], 1
    %19 = vsyncpa %s18, 0
    %20 = vsyncpa [#allocation5], 0
    %s21 = scalar_lea.sflag [#allocation5], 1
    %22 = vsyncpa %s21, 0
    loop: start=0, step=1, limit=4
    $region2: #{generator_forward.12} parent=1 // loop_pre_header
      _
    $region3: #{generator_forward.12} parent=1 // loop_header
      %s24 = sphi 0, %s28
      %p25 = scmp.ge.s32.totalorder %s24, 4
      %s34 = sphi 0, %s36
      %s37 = sphi 0, %s34
      %s38 = sphi 0, %s37
      %s54 = sphi 0, %s38
      %s58 = sphi 0, %s58
      %s60 = sphi 0, %s58
      %s61 = sphi 0, %s60
      %s75 = sphi 0, %s61
      %s81 = sphi 0, %s83
      %s84 = sphi 0, %s81
      %s85 = sphi 0, %s84
      %s101 = sphi 0, %s85
      %s105 = sphi 0, %s105
      %s107 = sphi 0, %s105
      %s108 = sphi 0, %s107
      %s122 = sphi 0, %s108
      %s126 = sphi 0, %s126
      %s128 = sphi 0, %s126
      %s129 = sphi 0, %s128
      %s143 = sphi 0, %s129
      %s147 = sphi 0, %s147
      %s149 = sphi 0, %s147
      %s150 = sphi 0, %s149
      %s164 = sphi 0, %s150
      %s170 = sphi 0, %s172
      %s173 = sphi 0, %s170
      %s174 = sphi 0, %s173
      %s190 = sphi 0, %s174
      %s196 = sphi 0, %s198
      %s199 = sphi 0, %s196
      %s200 = sphi 0, %s199
      %s216 = sphi 0, %s200
    $region4: #{generator_forward.12} parent=1 // loop_header_branch
      %27 = sbr.rel (%p25) target = $region8
    $region5: #{generator_forward.12} parent=1 // loop_body
      %s29 = ssub.s32 %s24, 1
      %s30 = ssub.s32 %s24, 2
      %s31 = sadd.s32 %s24, 1
      %s32 = ssub.s32 %s24, %s31
      %p33 = scmp.eq.s32.totalorder %s32, 0
      %s35 = sadd.s32 %s34, 1
      %s36 = scalar_select %p33, %s34, %s35
      %p39 = pneg %p33
      %p40 = scmp.eq.s32.totalorder %s24, 1
      %p41 = por %p39, %p40
      %p42 = scmp.ne.s32.totalorder %s34, %s37
      %p43 = scmp.eq.s32.totalorder %s24, 0
      %p44 = por %p42, %p43
      %p45 = scmp.ne.s32.totalorder %s34, %s37
      %p46 = scmp.eq.s32.totalorder %s29, 1
      %p47 = por %p45, %p46
      %p48 = scmp.ne.s32.totalorder %s37, %s38
      %p49 = scmp.eq.s32.totalorder %s29, 0
      %p50 = por %p48, %p49
      %p51 = scmp.ne.s32.totalorder %s37, %s38
      %p52 = scmp.eq.s32.totalorder %s30, 1
      %p53 = por %p51, %p52
      %p55 = scmp.ne.s32.totalorder %s38, %s54
      %p56 = scmp.eq.s32.totalorder %s30, 0
      %p57 = por %p55, %p56
      %s59 = sadd.s32 %s58, 1
      %p62 = scmp.eq.s32.totalorder %s24, 1
      %p63 = scmp.ne.s32.totalorder %s58, %s60
      %p64 = scmp.eq.s32.totalorder %s24, 0
      %p65 = por %p63, %p64
      %p66 = scmp.ne.s32.totalorder %s58, %s60
      %p67 = scmp.eq.s32.totalorder %s29, 1
      %p68 = por %p66, %p67
      %p69 = scmp.ne.s32.totalorder %s60, %s61
      %p70 = scmp.eq.s32.totalorder %s29, 0
      %p71 = por %p69, %p70
      %p72 = scmp.ne.s32.totalorder %s60, %s61
      %p73 = scmp.eq.s32.totalorder %s30, 1
      %p74 = por %p72, %p73
      %p76 = scmp.ne.s32.totalorder %s61, %s75
      %p77 = scmp.eq.s32.totalorder %s30, 0
      %p78 = por %p76, %p77
      %s79 = ssub.s32 %s24, %s31
      %p80 = scmp.eq.s32.totalorder %s79, 0
      %s82 = sadd.s32 %s81, 1
      %s83 = scalar_select %p80, %s81, %s82
      %p86 = pneg %p80
      %p87 = scmp.eq.s32.totalorder %s24, 1
      %p88 = por %p86, %p87
      %p89 = scmp.ne.s32.totalorder %s81, %s84
      %p90 = scmp.eq.s32.totalorder %s24, 0
      %p91 = por %p89, %p90
      %p92 = scmp.ne.s32.totalorder %s81, %s84
      %p93 = scmp.eq.s32.totalorder %s29, 1
      %p94 = por %p92, %p93
      %p95 = scmp.ne.s32.totalorder %s84, %s85
      %p96 = scmp.eq.s32.totalorder %s29, 0
      %p97 = por %p95, %p96
      %p98 = scmp.ne.s32.totalorder %s84, %s85
      %p99 = scmp.eq.s32.totalorder %s30, 1
      %p100 = por %p98, %p99
      %p102 = scmp.ne.s32.totalorder %s85, %s101
      %p103 = scmp.eq.s32.totalorder %s30, 0
      %p104 = por %p102, %p103
      %s106 = sadd.s32 %s105, 1
      %p109 = scmp.eq.s32.totalorder %s24, 1
      %p110 = scmp.ne.s32.totalorder %s105, %s107
      %p111 = scmp.eq.s32.totalorder %s24, 0
      %p112 = por %p110, %p111
      %p113 = scmp.ne.s32.totalorder %s105, %s107
      %p114 = scmp.eq.s32.totalorder %s29, 1
      %p115 = por %p113, %p114
      %p116 = scmp.ne.s32.totalorder %s107, %s108
      %p117 = scmp.eq.s32.totalorder %s29, 0
      %p118 = por %p116, %p117
      %p119 = scmp.ne.s32.totalorder %s107, %s108
      %p120 = scmp.eq.s32.totalorder %s30, 1
      %p121 = por %p119, %p120
      %p123 = scmp.ne.s32.totalorder %s108, %s122
      %p124 = scmp.eq.s32.totalorder %s30, 0
      %p125 = por %p123, %p124
      %s127 = sadd.s32 %s126, 1
      %p130 = scmp.eq.s32.totalorder %s24, 1
      %p131 = scmp.ne.s32.totalorder %s126, %s128
      %p132 = scmp.eq.s32.totalorder %s24, 0
      %p133 = por %p131, %p132
      %p134 = scmp.ne.s32.totalorder %s126, %s128
      %p135 = scmp.eq.s32.totalorder %s29, 1
      %p136 = por %p134, %p135
      %p137 = scmp.ne.s32.totalorder %s128, %s129
      %p138 = scmp.eq.s32.totalorder %s29, 0
      %p139 = por %p137, %p138
      %p140 = scmp.ne.s32.totalorder %s128, %s129
      %p141 = scmp.eq.s32.totalorder %s30, 1
      %p142 = por %p140, %p141
      %p144 = scmp.ne.s32.totalorder %s129, %s143
      %p145 = scmp.eq.s32.totalorder %s30, 0
      %p146 = por %p144, %p145
      %s148 = sadd.s32 %s147, 1
      %p151 = scmp.eq.s32.totalorder %s24, 1
      %p152 = scmp.ne.s32.totalorder %s147, %s149
      %p153 = scmp.eq.s32.totalorder %s24, 0
      %p154 = por %p152, %p153
      %p155 = scmp.ne.s32.totalorder %s147, %s149
      %p156 = scmp.eq.s32.totalorder %s29, 1
      %p157 = por %p155, %p156
      %p158 = scmp.ne.s32.totalorder %s149, %s150
      %p159 = scmp.eq.s32.totalorder %s29, 0
      %p160 = por %p158, %p159
      %p161 = scmp.ne.s32.totalorder %s149, %s150
      %p162 = scmp.eq.s32.totalorder %s30, 1
      %p163 = por %p161, %p162
      %p165 = scmp.ne.s32.totalorder %s150, %s164
      %p166 = scmp.eq.s32.totalorder %s30, 0
      %p167 = por %p165, %p166
      %s168 = ssub.s32 %s24, %s31
      %p169 = scmp.eq.s32.totalorder %s168, 0
      %s171 = sadd.s32 %s170, 1
      %s172 = scalar_select %p169, %s170, %s171
      %p175 = pneg %p169
      %p176 = scmp.eq.s32.totalorder %s24, 1
      %p177 = por %p175, %p176
      %p178 = scmp.ne.s32.totalorder %s170, %s173
      %p179 = scmp.eq.s32.totalorder %s24, 0
      %p180 = por %p178, %p179
      %p181 = scmp.ne.s32.totalorder %s170, %s173
      %p182 = scmp.eq.s32.totalorder %s29, 1
      %p183 = por %p181, %p182
      %p184 = scmp.ne.s32.totalorder %s173, %s174
      %p185 = scmp.eq.s32.totalorder %s29, 0
      %p186 = por %p184, %p185
      %p187 = scmp.ne.s32.totalorder %s173, %s174
      %p188 = scmp.eq.s32.totalorder %s30, 1
      %p189 = por %p187, %p188
      %p191 = scmp.ne.s32.totalorder %s174, %s190
      %p192 = scmp.eq.s32.totalorder %s30, 0
      %p193 = por %p191, %p192
      %s194 = ssub.s32 %s24, %s31
      %p195 = scmp.eq.s32.totalorder %s194, 0
      %s197 = sadd.s32 %s196, 1
      %s198 = scalar_select %p195, %s196, %s197
      %p201 = pneg %p195
      %p202 = scmp.eq.s32.totalorder %s24, 1
      %p203 = por %p201, %p202
      %p204 = scmp.ne.s32.totalorder %s196, %s199
      %p205 = scmp.eq.s32.totalorder %s24, 0
      %p206 = por %p204, %p205
      %p207 = scmp.ne.s32.totalorder %s196, %s199
      %p208 = scmp.eq.s32.totalorder %s29, 1
      %p209 = por %p207, %p208
      %p210 = scmp.ne.s32.totalorder %s199, %s200
      %p211 = scmp.eq.s32.totalorder %s29, 0
      %p212 = por %p210, %p211
      %p213 = scmp.ne.s32.totalorder %s199, %s200
      %p214 = scmp.eq.s32.totalorder %s30, 1
      %p215 = por %p213, %p214
      %p217 = scmp.ne.s32.totalorder %s200, %s216
      %p218 = scmp.eq.s32.totalorder %s30, 0
      %p219 = por %p217, %p218
      %p220 = scmp.le.s32.totalorder 1, %s24
      %p221 = scmp.lt.s32.totalorder %s24, 3
      %p222 = pnand %p220, %p221
      %p223 = pneg %p222
      // Predicated region
      $region9: #{generator_forward.12} parent=5 // pred_check
        _
      $region10: #{generator_forward.12} parent=5 // pred_check_branch
        %225 = sbr.rel (%p222) target = $region12
      $region11: #{generator_forward.12} parent=5 // pred_region
        %s226 = ssub.s32 %s24, 1
        // Predicated region
        $region13: #{generator_forward.12} parent=11 // pred_check
          %p227 = pneg %p71
        $region14: #{generator_forward.12} parent=11 // pred_check_branch
          %229 = sbr.rel (%p227) target = $region16
        $region15: #{generator_forward.12} parent=11 // pred_region
          %s231 = ssub.s32 640, 640
          %232 = vsyncadd [#allocation7], %s231
          %s233 = sshll.u32 [#allocation6], 4
          %s234 = int_to_ptr.vmem [resolvable:$true] %s233
          %239 = dma.hbm_to_vmem [thread:$0]  %s1, 640, %s234, [#allocation7], 128, 128, 8
        $region16: #{generator_forward.12} parent=11 // pred_fallthru
          _
        // Predicated region
        $region17: #{generator_forward.12} parent=11 // pred_check
          %p240 = pneg %p118
        $region18: #{generator_forward.12} parent=11 // pred_check_branch
          %242 = sbr.rel (%p240) target = $region20
        $region19: #{generator_forward.12} parent=11 // pred_region
          %s244 = ssub.s32 1152, 1152
          %245 = vsyncadd [#allocation7], %s244
          %s246 = sshll.u32 [#allocation9], 4
          %s247 = int_to_ptr.vmem [resolvable:$true] %s246
          %252 = dma.hbm_to_vmem [thread:$0]  %s3, 1152, %s247, [#allocation7], 64, 64, 4
        $region20: #{generator_forward.12} parent=11 // pred_fallthru
          _
        // Predicated region
        $region21: #{generator_forward.12} parent=11 // pred_check
          %p253 = pneg %p139
        $region22: #{generator_forward.12} parent=11 // pred_check_branch
          %255 = sbr.rel (%p253) target = $region24
        $region23: #{generator_forward.12} parent=11 // pred_region
          %s257 = ssub.s32 16, 16
          %258 = vsyncadd [#allocation11], %s257
          %s260 = sshll.u32 [#allocation10], 4
          %s261 = int_to_ptr.vmem [resolvable:$true] %s260
          %263 = dma.hbm_to_vmem [thread:$0]  %s4, 16, %s261, [#allocation11]
        $region24: #{generator_forward.12} parent=11 // pred_fallthru
          _
        // Predicated region
        $region25: #{generator_forward.12} parent=11 // pred_check
          %p264 = pneg %p160
        $region26: #{generator_forward.12} parent=11 // pred_check_branch
          %266 = sbr.rel (%p264) target = $region28
        $region27: #{generator_forward.12} parent=11 // pred_region
          %s268 = ssub.s32 16, 16
          %269 = vsyncadd [#allocation11], %s268
          %s271 = sshll.u32 [#allocation12], 4
          %s272 = int_to_ptr.vmem [resolvable:$true] %s271
          %274 = dma.hbm_to_vmem [thread:$0]  %s5, 16, %s272, [#allocation11]
        $region28: #{generator_forward.12} parent=11 // pred_fallthru
          _
      $region12: #{generator_forward.12} parent=5 // pred_fallthru
        _
      %p275 = scmp.lt.s32.totalorder %s24, 2
      // Predicated region
      $region29: #{generator_forward.12} parent=5 // pred_check
        %p276 = pneg %p275
      $region30: #{generator_forward.12} parent=5 // pred_check_branch
        %278 = sbr.rel (%p276) target = $region32
      $region31: #{generator_forward.12} parent=5 // pred_region
        // Predicated region
        $region33: #{generator_forward.12} parent=31 // pred_check
          %p279 = pneg %p44
        $region34: #{generator_forward.12} parent=31 // pred_check_branch
          %281 = sbr.rel (%p279) target = $region36
        $region35: #{generator_forward.12} parent=31 // pred_region
          %s282 = sand.u32 %s24, 1
          %s283 = scalar_lea.sflag [#allocation4], %s282
          %s284 = sand.u32 %s34, 1
          %s285 = smul.addr %s284, 40
          %s286 = scalar_lea.vmem [#allocation3], %s285
          %s288 = ssub.s32 640, 640
          %289 = vsyncadd %s283, %s288
          %s290 = smul.addr %s24, 5
          %s291 = smul.addr %s290, 128
          %s292 = scalar_lea.hbm %s0, %s291
          %s293 = sshll.u32 %s286, 4
          %s294 = int_to_ptr.vmem [resolvable:$true] %s293
          %299 = dma.hbm_to_vmem [thread:$0]  %s292, 640, %s294, %s283, 128, 128, 8
        $region36: #{generator_forward.12} parent=31 // pred_fallthru
          _
        // Predicated region
        $region37: #{generator_forward.12} parent=31 // pred_check
          %p300 = pneg %p91
        $region38: #{generator_forward.12} parent=31 // pred_check_branch
          %302 = sbr.rel (%p300) target = $region40
        $region39: #{generator_forward.12} parent=31 // pred_region
          %s303 = sand.u32 %s24, 1
          %s304 = scalar_lea.sflag [#allocation4], %s303
          %s305 = sand.u32 %s81, 1
          %s306 = smul.addr %s305, 40
          %s307 = scalar_lea.vmem [#allocation8], %s306
          %s309 = ssub.s32 640, 640
          %310 = vsyncadd %s304, %s309
          %s311 = smul.addr %s24, 5
          %s312 = smul.addr %s311, 128
          %s313 = scalar_lea.hbm %s2, %s312
          %s314 = sshll.u32 %s307, 4
          %s315 = int_to_ptr.vmem [resolvable:$true] %s314
          %320 = dma.hbm_to_vmem [thread:$0]  %s313, 640, %s315, %s304, 128, 128, 8
        $region40: #{generator_forward.12} parent=31 // pred_fallthru
          _
        // Predicated region
        $region41: #{generator_forward.12} parent=31 // pred_check
          %p321 = pneg %p180
        $region42: #{generator_forward.12} parent=31 // pred_check_branch
          %323 = sbr.rel (%p321) target = $region44
        $region43: #{generator_forward.12} parent=31 // pred_region
          %s324 = sand.u32 %s170, 1
          %s325 = scalar_lea.sflag [#allocation14], %s324
          %s326 = sand.u32 %s170, 1
          %s327 = smul.addr %s326, 4
          %s328 = scalar_lea.vmem [#allocation13], %s327
          %s330 = ssub.s32 64, 64
          %331 = vsyncadd %s325, %s330
          %s332 = smul.addr %s24, 64
          %s333 = scalar_lea.hbm %s6, %s332
          %s335 = sshll.u32 %s328, 4
          %s336 = int_to_ptr.vmem [resolvable:$true] %s335
          %338 = dma.hbm_to_vmem [thread:$0]  %s333, 64, %s336, %s325
        $region44: #{generator_forward.12} parent=31 // pred_fallthru
          _
      $region32: #{generator_forward.12} parent=5 // pred_fallthru
        _
      %p339 = scmp.le.s32.totalorder 1, %s24
      %p340 = scmp.lt.s32.totalorder %s24, 3
      %p341 = pnand %p339, %p340
      %p342 = pneg %p341
      // Predicated region
      $region45: #{generator_forward.12} parent=5 // pred_check
        _
      $region46: #{generator_forward.12} parent=5 // pred_check_branch
        %344 = sbr.rel (%p341) target = $region48
      $region47: #{generator_forward.12} parent=5 // pred_region
        %s345 = ssub.s32 %s24, 1
        %s346 = sand.u32 %s29, 1
        %s347 = scalar_lea.sflag [#allocation4], %s346
        %s348 = sand.u32 %s37, 1
        %s349 = smul.addr %s348, 40
        %s350 = scalar_lea.vmem [#allocation3], %s349
        // Predicated region
        $region49: #{generator_forward.12} parent=47 // pred_check
          %p351 = pneg %p50
        $region50: #{generator_forward.12} parent=47 // pred_check_branch
          %353 = sbr.rel (%p351) target = $region52
        $region51: #{generator_forward.12} parent=47 // pred_region
          %354 = dma.done %s347, 640
        $region52: #{generator_forward.12} parent=47 // pred_fallthru
          _
        // Predicated region
        $region53: #{generator_forward.12} parent=47 // pred_check
          %p355 = pneg %p71
        $region54: #{generator_forward.12} parent=47 // pred_check_branch
          %357 = sbr.rel (%p355) target = $region56
        $region55: #{generator_forward.12} parent=47 // pred_region
          %358 = dma.done [#allocation7], 640
        $region56: #{generator_forward.12} parent=47 // pred_fallthru
          _
        %s359 = sand.u32 %s29, 1
        %s360 = scalar_lea.sflag [#allocation4], %s359
        %s361 = sand.u32 %s84, 1
        %s362 = smul.addr %s361, 40
        %s363 = scalar_lea.vmem [#allocation8], %s362
        // Predicated region
        $region57: #{generator_forward.12} parent=47 // pred_check
          %p364 = pneg %p97
        $region58: #{generator_forward.12} parent=47 // pred_check_branch
          %366 = sbr.rel (%p364) target = $region60
        $region59: #{generator_forward.12} parent=47 // pred_region
          %367 = dma.done %s360, 640
        $region60: #{generator_forward.12} parent=47 // pred_fallthru
          _
        // Predicated region
        $region61: #{generator_forward.12} parent=47 // pred_check
          %p368 = pneg %p118
        $region62: #{generator_forward.12} parent=47 // pred_check_branch
          %370 = sbr.rel (%p368) target = $region64
        $region63: #{generator_forward.12} parent=47 // pred_region
          %371 = dma.done [#allocation7], 1152
        $region64: #{generator_forward.12} parent=47 // pred_fallthru
          _
        // Predicated region
        $region65: #{generator_forward.12} parent=47 // pred_check
          %p372 = pneg %p139
        $region66: #{generator_forward.12} parent=47 // pred_check_branch
          %374 = sbr.rel (%p372) target = $region68
        $region67: #{generator_forward.12} parent=47 // pred_region
          %375 = dma.done [#allocation11], 16
        $region68: #{generator_forward.12} parent=47 // pred_fallthru
          _
        // Predicated region
        $region69: #{generator_forward.12} parent=47 // pred_check
          %p376 = pneg %p160
        $region70: #{generator_forward.12} parent=47 // pred_check_branch
          %378 = sbr.rel (%p376) target = $region72
        $region71: #{generator_forward.12} parent=47 // pred_region
          %379 = dma.done [#allocation11], 16
        $region72: #{generator_forward.12} parent=47 // pred_fallthru
          _
        %s380 = sand.u32 %s173, 1
        %s381 = scalar_lea.sflag [#allocation14], %s380
        %s382 = sand.u32 %s173, 1
        %s383 = smul.addr %s382, 4
        %s384 = scalar_lea.vmem [#allocation13], %s383
        // Predicated region
        $region73: #{generator_forward.12} parent=47 // pred_check
          %p385 = pneg %p186
        $region74: #{generator_forward.12} parent=47 // pred_check_branch
          %387 = sbr.rel (%p385) target = $region76
        $region75: #{generator_forward.12} parent=47 // pred_region
          %388 = dma.done %s381, 64
        $region76: #{generator_forward.12} parent=47 // pred_fallthru
          _
        %s389 = sand.u32 %s29, 1
        %s390 = scalar_lea.sflag [#allocation4], %s389
        %s391 = sand.u32 %s37, 1
        %s392 = smul.addr %s391, 40
        %s393 = scalar_lea.vmem [#allocation3], %s392
        %p394 = pneg %p50
        %p395 = pneg %p47
        %p396 = pneg %p71
        %p397 = pneg %p68
        %s398 = sand.u32 %s29, 1
        %s399 = scalar_lea.sflag [#allocation4], %s398
        %s400 = sand.u32 %s84, 1
        %s401 = smul.addr %s400, 40
        %s402 = scalar_lea.vmem [#allocation8], %s401
        %p403 = pneg %p97
        %p404 = pneg %p94
        %p405 = pneg %p118
        %p406 = pneg %p115
        %p407 = pneg %p139
        %p408 = pneg %p136
        %p409 = pneg %p160
        %p410 = pneg %p157
        %s411 = sand.u32 %s173, 1
        %s412 = scalar_lea.sflag [#allocation14], %s411
        %s413 = sand.u32 %s173, 1
        %s414 = smul.addr %s413, 4
        %s415 = scalar_lea.vmem [#allocation13], %s414
        %p416 = pneg %p186
        %p417 = pneg %p183
        %p418 = pneg %p212
        %p419 = pneg %p209
        %s420 = sand.u32 %s199, 1
        %s421 = scalar_lea.sflag [#allocation5], %s420
        %s422 = sand.u32 %s199, 1
        %s423 = smul.addr %s422, 40
        %s424 = scalar_lea.vmem [#allocation15], %s423
        %v426 = vld [vmem:[#allocation6 + $0x7] sm:$0xff]
        %v427 = vld [vmem:[#allocation6 + $0xf] sm:$0xff]
        %v428 = vld [vmem:[#allocation6 + $0x17] sm:$0x3f]
        %v429 = vld [vmem:[%s350] sm:$0xff]
        %v430 = vld [vmem:[%s350 + $0x8] sm:$0xff]
        %v431 = vld [vmem:[%s350 + $0x10] sm:$0x3f]
        %v432 = vpack.c.bf16 %v430, %v429
        %v433 = vpack.c.bf16 %v431, %v431
        %v436 = vunpack.c.l.b16 %v432
        %v437 = vunpack.c.h.b16 %v432
        %v438 = vunpack.c.l.b16 %v433
        %v439 = vpack.c.b16 %v436, %v436
        %v440 = vpack.c.b16 %v437, %v437
        %v441 = vpack.c.b16 %v438, %v438
        %vm445 = vcmask 125952
        %446 = vst.msk [vmem:[#allocation2] sm:$0xf] %vm445, %v439
        %447 = vst.msk [vmem:[#allocation2 + $0x8] sm:$0xf] %vm445, %v440
        %vm448 = vcmask 124928
        %449 = vst.msk [vmem:[#allocation2 + $0x10] sm:$0x7] %vm448, %v441
        %v450 = vld [vmem:[%s350 + $0x1] sm:$0xff]
        %v451 = vld [vmem:[%s350 + $0x9] sm:$0xff]
        %v452 = vld [vmem:[%s350 + $0x11] sm:$0x3f]
        %v453 = vpack.c.bf16 %v451, %v450
        %v454 = vpack.c.bf16 %v452, %v452
        %v457 = vunpack.c.l.b16 %v453
        %v458 = vunpack.c.h.b16 %v453
        %v459 = vunpack.c.l.b16 %v454
        %v460 = vpack.c.b16 %v457, %v457
        %v461 = vpack.c.b16 %v458, %v458
        %v462 = vpack.c.b16 %v459, %v459
        %463 = vrot.lane.b32.xlu0 %v460, 16
        %v464 = vpop.permute.xlu0 %463
        %465 = vrot.lane.b32.xlu0 %v461, 16
        %v466 = vpop.permute.xlu0 %465
        %467 = vrot.lane.b32.xlu0 %v462, 16
        %v468 = vpop.permute.xlu0 %467
        %vm472 = vcmask 257152
        %473 = vst.msk [vmem:[#allocation2] sm:$0xf] %vm472, %v464
        %474 = vst.msk [vmem:[#allocation2 + $0x8] sm:$0xf] %vm472, %v466
        %vm475 = vcmask 256128
        %476 = vst.msk [vmem:[#allocation2 + $0x10] sm:$0x7] %vm475, %v468
        %v477 = vld [vmem:[%s350 + $0x2] sm:$0xff]
        %v478 = vld [vmem:[%s350 + $0xa] sm:$0xff]
        %v479 = vld [vmem:[%s350 + $0x12] sm:$0x3f]
        %v480 = vpack.c.bf16 %v478, %v477
        %v481 = vpack.c.bf16 %v479, %v479
        %v484 = vunpack.c.l.b16 %v480
        %v485 = vunpack.c.h.b16 %v480
        %v486 = vunpack.c.l.b16 %v481
        %v487 = vpack.c.b16 %v484, %v484
        %v488 = vpack.c.b16 %v485, %v485
        %v489 = vpack.c.b16 %v486, %v486
        %490 = vrot.lane.b32.xlu0 %v487, 32
        %v491 = vpop.permute.xlu0 %490
        %492 = vrot.lane.b32.xlu0 %v488, 32
        %v493 = vpop.permute.xlu0 %492
        %494 = vrot.lane.b32.xlu0 %v489, 32
        %v495 = vpop.permute.xlu0 %494
        %vm499 = vcmask 388352
        %500 = vst.msk [vmem:[#allocation2] sm:$0xf] %vm499, %v491
        %501 = vst.msk [vmem:[#allocation2 + $0x8] sm:$0xf] %vm499, %v493
        %vm502 = vcmask 387328
        %503 = vst.msk [vmem:[#allocation2 + $0x10] sm:$0x7] %vm502, %v495
        %v504 = vld [vmem:[%s350 + $0x6] sm:$0xff]
        %v505 = vld [vmem:[%s350 + $0xe] sm:$0xff]
        %v506 = vld [vmem:[%s350 + $0x16] sm:$0x3f]
        %v507 = vpack.c.bf16 %v505, %v504
        %v508 = vpack.c.bf16 %v506, %v506
        %v511 = vunpack.c.l.b16 %v507
        %v512 = vunpack.c.h.b16 %v507
        %v513 = vunpack.c.l.b16 %v508
        %v514 = vpack.c.b16 %v511, %v511
        %v515 = vpack.c.b16 %v512, %v512
        %v516 = vpack.c.b16 %v513, %v513
        %517 = vrot.lane.b32.xlu0 %v514, 48
        %v518 = vpop.permute.xlu0 %517
        %519 = vrot.lane.b32.xlu0 %v515, 48
        %v520 = vpop.permute.xlu0 %519
        %521 = vrot.lane.b32.xlu0 %v516, 48
        %v522 = vpop.permute.xlu0 %521
        %vm526 = vcmask 519552
        %527 = vst.msk [vmem:[#allocation2] sm:$0xf] %vm526, %v518
        %528 = vst.msk [vmem:[#allocation2 + $0x8] sm:$0xf] %vm526, %v520
        %vm529 = vcmask 518528
        %530 = vst.msk [vmem:[#allocation2 + $0x10] sm:$0x7] %vm529, %v522
        %v531 = vld [vmem:[%s350 + $0x7] sm:$0xff]
        %v532 = vld [vmem:[%s350 + $0xf] sm:$0xff]
        %v533 = vld [vmem:[%s350 + $0x17] sm:$0x3f]
        %v534 = vpack.c.bf16 %v532, %v531
        %v535 = vpack.c.bf16 %v533, %v533
        %v538 = vunpack.c.l.b16 %v534
        %v539 = vunpack.c.h.b16 %v534
        %v540 = vunpack.c.l.b16 %v535
        %v541 = vpack.c.b16 %v538, %v538
        %v542 = vpack.c.b16 %v539, %v539
        %v543 = vpack.c.b16 %v540, %v540
        %544 = vrot.lane.b32.xlu0 %v541, 64
        %v545 = vpop.permute.xlu0 %544
        %546 = vrot.lane.b32.xlu0 %v542, 64
        %v547 = vpop.permute.xlu0 %546
        %548 = vrot.lane.b32.xlu0 %v543, 64
        %v549 = vpop.permute.xlu0 %548
        %vm553 = vcmask 650752
        %554 = vst.msk [vmem:[#allocation2] sm:$0xf] %vm553, %v545
        %555 = vst.msk [vmem:[#allocation2 + $0x8] sm:$0xf] %vm553, %v547
        %vm556 = vcmask 649728
        %557 = vst.msk [vmem:[#allocation2 + $0x10] sm:$0x7] %vm556, %v549
        %v558 = vld [vmem:[%s350 + $0x8] sm:$0xff]
        %v559 = vld [vmem:[%s350 + $0x10] sm:$0xff]
        %v560 = vld [vmem:[%s350 + $0x18] sm:$0x3f]
        %v561 = vpack.c.bf16 %v559, %v558
        %v562 = vpack.c.bf16 %v560, %v560
        %v565 = vunpack.c.l.b16 %v561
        %v566 = vunpack.c.h.b16 %v561
        %v567 = vunpack.c.l.b16 %v562
        %v568 = vpack.c.b16 %v565, %v565
        %v569 = vpack.c.b16 %v566, %v566
        %v570 = vpack.c.b16 %v567, %v567
        %571 = vrot.lane.b32.xlu0 %v568, 80
        %v572 = vpop.permute.xlu0 %571
        %573 = vrot.lane.b32.xlu0 %v569, 80
        %v574 = vpop.permute.xlu0 %573
        %575 = vrot.lane.b32.xlu0 %v570, 80
        %v576 = vpop.permute.xlu0 %575
        %vm580 = vcmask 781952
        %581 = vst.msk [vmem:[#allocation2] sm:$0xf] %vm580, %v572
        %582 = vst.msk [vmem:[#allocation2 + $0x8] sm:$0xf] %vm580, %v574
        %vm583 = vcmask 780928
        %584 = vst.msk [vmem:[#allocation2 + $0x10] sm:$0x7] %vm583, %v576
        %v585 = vld [vmem:[%s350 + $0xc] sm:$0xff]
        %v586 = vld [vmem:[%s350 + $0x14] sm:$0xff]
        %v587 = vld [vmem:[%s350 + $0x1c] sm:$0x3f]
        %v588 = vpack.c.bf16 %v586, %v585
        %v589 = vpack.c.bf16 %v587, %v587
        %v592 = vunpack.c.l.b16 %v588
        %v593 = vunpack.c.h.b16 %v588
        %v594 = vunpack.c.l.b16 %v589
        %v595 = vpack.c.b16 %v592, %v592
        %v596 = vpack.c.b16 %v593, %v593
        %v597 = vpack.c.b16 %v594, %v594
        %598 = vrot.lane.b32.xlu0 %v595, 96
        %v599 = vpop.permute.xlu0 %598
        %600 = vrot.lane.b32.xlu0 %v596, 96
        %v601 = vpop.permute.xlu0 %600
        %602 = vrot.lane.b32.xlu0 %v597, 96
        %v603 = vpop.permute.xlu0 %602
        %vm607 = vcmask 913152
        %608 = vst.msk [vmem:[#allocation2] sm:$0xf] %vm607, %v599
        %609 = vst.msk [vmem:[#allocation2 + $0x8] sm:$0xf] %vm607, %v601
        %vm610 = vcmask 912128
        %611 = vst.msk [vmem:[#allocation2 + $0x10] sm:$0x7] %vm610, %v603
        %v612 = vld [vmem:[%s350 + $0xd] sm:$0xff]
        %v613 = vld [vmem:[%s350 + $0x15] sm:$0xff]
        %v614 = vld [vmem:[%s350 + $0x1d] sm:$0x3f]
        %v615 = vpack.c.bf16 %v613, %v612
        %v616 = vpack.c.bf16 %v614, %v614
        %v619 = vunpack.c.l.b16 %v615
        %v620 = vunpack.c.h.b16 %v615
        %v621 = vunpack.c.l.b16 %v616
        %v622 = vpack.c.b16 %v619, %v619
        %v623 = vpack.c.b16 %v620, %v620
        %v624 = vpack.c.b16 %v621, %v621
        %625 = vrot.lane.b32.xlu0 %v622, 112
        %v626 = vpop.permute.xlu0 %625
        %627 = vrot.lane.b32.xlu0 %v623, 112
        %v628 = vpop.permute.xlu0 %627
        %629 = vrot.lane.b32.xlu0 %v624, 112
        %v630 = vpop.permute.xlu0 %629
        %vm634 = vcmask 1044352
        %635 = vst.msk [vmem:[#allocation2] sm:$0xf] %vm634, %v626
        %636 = vst.msk [vmem:[#allocation2 + $0x8] sm:$0xf] %vm634, %v628
        %vm637 = vcmask 1043328
        %638 = vst.msk [vmem:[#allocation2 + $0x10] sm:$0x7] %vm637, %v630
        %v639 = vld [vmem:[%s350 + $0xe] sm:$0xff]
        %v640 = vld [vmem:[%s350 + $0x16] sm:$0xff]
        %v641 = vld [vmem:[%s350 + $0x1e] sm:$0x3f]
        %v642 = vpack.c.bf16 %v640, %v639
        %v643 = vpack.c.bf16 %v641, %v641
        %v646 = vunpack.c.l.b16 %v642
        %v647 = vunpack.c.h.b16 %v642
        %v648 = vunpack.c.l.b16 %v643
        %v649 = vpack.c.b16 %v646, %v646
        %v650 = vpack.c.b16 %v647, %v647
        %v651 = vpack.c.b16 %v648, %v648
        %655 = vst.msk [vmem:[#allocation2 + $0x4] sm:$0xf] %vm445, %v649
        %656 = vst.msk [vmem:[#allocation2 + $0xc] sm:$0xf] %vm445, %v650
        %657 = vst.msk [vmem:[#allocation2 + $0x14] sm:$0x7] %vm448, %v651
        %v658 = vld [vmem:[#allocation2] sm:$0xff]
        %v659 = vld [vmem:[#allocation2 + $0x8] sm:$0xff]
        %v660 = vld [vmem:[#allocation2 + $0x10] sm:$0x77]
        %v661 = vld [vmem:[#allocation9] sm:$0xf]
        %v662 = vld [vmem:[#allocation9 + $0x4] sm:$0xf]
        %v663 = vld [vmem:[#allocation9 + $0x8] sm:$0xf]
        %v664 = vld [vmem:[#allocation9 + $0xc] sm:$0xf]
        %v665 = vld [vmem:[#allocation9 + $0x10] sm:$0xf]
        %v666 = vld [vmem:[#allocation9 + $0x14] sm:$0xf]
        %v667 = vld [vmem:[#allocation9 + $0x18] sm:$0xf]
        %v668 = vld [vmem:[#allocation9 + $0x1c] sm:$0xf]
        %v669 = vld [vmem:[#allocation9 + $0x20] sm:$0xf]
        %v670 = vld [vmem:[#allocation9 + $0x24] sm:$0xf]
        %v671 = vld [vmem:[#allocation9 + $0x28] sm:$0xf]
        %v672 = vld [vmem:[#allocation9 + $0x2c] sm:$0xf]
        %v673 = vld [vmem:[#allocation9 + $0x30] sm:$0xf]
        %v674 = vld [vmem:[#allocation9 + $0x34] sm:$0xf]
        %v675 = vld [vmem:[#allocation9 + $0x38] sm:$0xf]
        %v676 = vld [vmem:[#allocation9 + $0x3c] sm:$0xf]
        %v677 = vld [vmem:[#allocation9 + $0x40] sm:$0xf]
        %v678 = vld [vmem:[#allocation9 + $0x44] sm:$0xf]
        %v679 = vld [vmem:[#allocation10] sm:$0x1]
        %v681 = vlaneseq
        %v682 = vshrl.u32 %v681, 7
        %v683 = vsub.s32 0, %v682
        %v684 = vrot.slane %v679, %v683
        %v689 = vunpack.c.l.b16 %v658
        %v690 = vunpack.c.h.b16 %v658
        %v691 = vunpack.c.l.b16 %v659
        %v692 = vunpack.c.h.b16 %v659
        %v693 = vunpack.c.l.b16 %v660
        %v694 = vunpack.c.h.b16 %v660
        %v695 = vpack.c.b16 %v691, %v689
        %v696 = vpack.c.b16 %v692, %v690
        %v697 = vpack.c.b16 %v693, %v693
        %v698 = vpack.c.b16 %v694, %v694
        %v719 = vunpack.c.l.b16 %v661
        %v720 = vunpack.c.l.b16 %v662
        %v721 = vunpack.c.l.b16 %v663
        %v722 = vunpack.c.l.b16 %v664
        %v723 = vunpack.c.l.b16 %v665
        %v724 = vunpack.c.l.b16 %v666
        %v725 = vunpack.c.l.b16 %v667
        %v726 = vunpack.c.l.b16 %v668
        %v727 = vunpack.c.l.b16 %v669
        %v728 = vunpack.c.l.b16 %v670
        %v729 = vunpack.c.l.b16 %v671
        %v730 = vunpack.c.l.b16 %v672
        %v731 = vunpack.c.l.b16 %v673
        %v732 = vunpack.c.l.b16 %v674
        %v733 = vunpack.c.l.b16 %v675
        %v734 = vunpack.c.l.b16 %v676
        %v735 = vunpack.c.l.b16 %v677
        %v736 = vunpack.c.l.b16 %v678
        %v737 = vpack.c.b16 %v720, %v719
        %v738 = vpack.c.b16 %v722, %v721
        %v739 = vpack.c.b16 %v724, %v723
        %v740 = vpack.c.b16 %v726, %v725
        %v741 = vpack.c.b16 %v728, %v727
        %v742 = vpack.c.b16 %v730, %v729
        %v743 = vpack.c.b16 %v732, %v731
        %v744 = vpack.c.b16 %v734, %v733
        %v745 = vpack.c.b16 %v736, %v735
        %vm755 = vcmask 130048
        %v757 = vsel %vm755, %v696, 0
        %v760 = vsel %vm755, %v698, 0
        %762 = vmatprep.subr.bf16.mxu0 0
        %763 = vmatpush1.bf16.msra.mxu0 %v737
        %764 = vmatprep.subr.bf16.mxu0 0
        %765 = vmatpush1.bf16.msra.mxu0 %v738
        %766 = vmatprep.subr.bf16.mxu0 0
        %767 = vmatpush1.bf16.msra.mxu0 %v739
        %768 = vmatprep.subr.bf16.mxu0 0
        %769 = vmatpush1.bf16.msra.mxu0 %v740
        %770 = vmatprep.subr.bf16.mxu0 0
        %771 = vmatpush1.bf16.msra.mxu0 %v741
        %772 = vmatprep.subr.bf16.mxu0 0
        %773 = vmatpush1.bf16.msra.mxu0 %v742
        %774 = vmatprep.subr.bf16.mxu0 0
        %775 = vmatpush1.bf16.msra.mxu0 %v743
        %776 = vmatprep.subr.bf16.mxu0 0
        %777 = vmatpush1.bf16.msra.mxu0 %v744
        %778 = vmatprep.subr.bf16.mxu0 0
        %779 = vmatpush1.bf16.msra.mxu0 %v745
        %780 = vmatprep.subr.bf16.mxu0 0
        %781 = vmatpush1.bf16.msra.mxu0 0
        %782 = vmatprep.subr.bf16.mxu0 0
        %783 = vmatpush1.bf16.msra.mxu0 0
        %784 = vmatprep.subr.bf16.mxu0 0
        %785 = vmatpush1.bf16.msra.mxu0 0
        %786 = vmatprep.subr.bf16.mxu0 0
        %787 = vmatpush1.bf16.msra.mxu0 0
        %788 = vmatprep.subr.bf16.mxu0 0
        %789 = vmatpush1.bf16.msra.mxu0 0
        %790 = vmatprep.subr.bf16.mxu0 0
        %791 = vmatpush1.bf16.msra.mxu0 0
        %792 = vmatprep.subr.bf16.mxu0 0
        %793 = vmatpush1.bf16.msra.mxu0 0
        %794 = vmatprep.mubr.bf16.mxu0 %v757
        %795 = vmatmul.mubr.bf16.gmra.mrb[0].mxu0 %v695
        %v796 = vpop.f32.mrb[0].mxu0
        %v797 = vadd.f32 %v684, %v796
        %v798 = vpop.f32.mrb[0].mxu0
        %v799 = vpop.f32.mrb[0].mxu0
        %v800 = vadd.f32 %v684, %v799
        %v801 = vpop.f32.mrb[0].mxu0
        %802 = vmatprep.mubr.bf16.mxu0 %v760
        %803 = vmatmul.mubr.bf16.gmra.mrb[0].mxu0 %v697
        %v804 = vpop.f32.mrb[0].mxu0
        %v805 = vadd.f32 %v684, %v804
        %v806 = vpop.f32.mrb[0].mxu0
        %v807 = vpop.f32.mrb[0].mxu0
        %v808 = vpop.f32.mrb[0].mxu0
        %809 = vdwg.mxu0
        %v810 = vld [vmem:[%s363 + $0x7] sm:$0xff]
        %v811 = vld [vmem:[%s363 + $0xf] sm:$0xff]
        %v812 = vld [vmem:[%s363 + $0x17] sm:$0x3f]
        %v813 = vld [vmem:[#allocation12] sm:$0x1]
        %815 = vset.pattern.permute.xlu0 0
        %816 = vperm.xlu0 %815, %v810
        %v817 = vpop.permute.xlu0 %816
        %820 = vset.pattern.permute.xlu0 0
        %821 = vperm.xlu0 %820, %v811
        %v822 = vpop.permute.xlu0 %821
        %825 = vset.pattern.permute.xlu0 0
        %826 = vperm.xlu0 %825, %v812
        %v827 = vpop.permute.xlu0 %826
        %v830 = vlaneseq
        %v831 = vshrl.u32 %v830, 7
        %v832 = vsub.s32 0, %v831
        %v833 = vrot.slane %v813, %v832
        %v835 = vmul.f32 %v817, %v833
        %v836 = vmul.f32 %v822, %v833
        %v837 = vmul.f32 %v827, %v833
        %v838 = vadd.f32 %v797, %v835
        %v839 = vadd.f32 %v800, %v836
        %v840 = vadd.f32 %v805, %v837
        %v841 = vmul.f32 %v838, 0.2
        %v842 = vmul.f32 %v839, 0.2
        %v843 = vmul.f32 %v840, 0.2
        %v844 = vmax.f32 %v838, %v841
        %v845 = vmax.f32 %v839, %v842
        %v846 = vmax.f32 %v840, %v843
        %848 = vset.pattern.permute.xlu0 0
        %849 = vperm.xlu0 %848, %v426
        %v850 = vpop.permute.xlu0 %849
        %853 = vset.pattern.permute.xlu0 0
        %854 = vperm.xlu0 %853, %v427
        %v855 = vpop.permute.xlu0 %854
        %858 = vset.pattern.permute.xlu0 0
        %859 = vperm.xlu0 %858, %v428
        %v860 = vpop.permute.xlu0 %859
        %v862 = vmul.f32 %v844, %v850
        %v863 = vmul.f32 %v845, %v855
        %v864 = vmul.f32 %v846, %v860
        %v865 = vsel %vm755, %v862, 0.0
        %v866 = vsel %vm755, %v863, 0.0
        %v867 = vadd.f32 %v865, %v866
        %vm868 = vcmask 128000
        %v869 = vsel %vm868, %v864, 0.0
        %v870 = vadd.f32 %v867, %v869
        %v871 = vrot.slane %v870, 4
        %v872 = vadd.f32 %v870, %v871
        %v873 = vrot.slane %v872, 2
        %v874 = vadd.f32 %v872, %v873
        %v875 = vrot.slane %v874, 1
        %v876 = vadd.f32 %v874, %v875
        %v877 = vmul.f32 %v876, 0.0625
        %v878 = vsub.f32 %v844, %v877
        %v879 = vsub.f32 %v845, %v877
        %v880 = vsub.f32 %v846, %v877
        %v881 = vmul.f32 %v878, %v850
        %v882 = vmul.f32 %v879, %v855
        %v883 = vmul.f32 %v880, %v860
        %v884 = vmul.f32 %v881, %v881
        %v885 = vmul.f32 %v882, %v882
        %v886 = vmul.f32 %v883, %v883
        %v887 = vsel %vm755, %v884, 0.0
        %v888 = vsel %vm755, %v885, 0.0
        %v889 = vadd.f32 %v887, %v888
        %v890 = vsel %vm868, %v886, 0.0
        %v891 = vadd.f32 %v889, %v890
        %v892 = vrot.slane %v891, 4
        %v893 = vadd.f32 %v891, %v892
        %v894 = vrot.slane %v893, 2
        %v895 = vadd.f32 %v893, %v894
        %v896 = vrot.slane %v895, 1
        %v897 = vadd.f32 %v895, %v896
        %v898 = vmul.f32 %v897, 0.0625
        %v899 = vadd.f32 %v898, 1e-05
        %v900 = vrsqrt.pop %v899
        %v901 = vmul.f32 %v878, %v900
        %v902 = vmul.f32 %v879, %v900
        %v903 = vmul.f32 %v880, %v900
        %v904 = vld [vmem:[%s384 + $0x1] sm:$0x1]
        %v905 = vadd.f32 %v904, 1.0
        %v906 = vlaneseq
        %v907 = vshrl.u32 %v906, 7
        %v908 = vsub.s32 0, %v907
        %v909 = vrot.slane %v905, %v908
        %v910 = vmul.f32 %v901, %v909
        %v911 = vmul.f32 %v902, %v909
        %v912 = vmul.f32 %v903, %v909
        %v913 = vlaneseq
        %v914 = vshrl.u32 %v913, 7
        %v915 = vsub.s32 0, %v914
        %v916 = vrot.slane %v904, %v915
        %918 = vrot.lane.b32.xlu0 %v916, 112
        %v919 = vpop.permute.xlu0 %918
        %v921 = vadd.f32 %v910, %v919
        %v922 = vadd.f32 %v911, %v919
        %v923 = vadd.f32 %v912, %v919
        %vm924 = vcmask 129024
        %925 = vst.msk [vmem:[%s424] sm:$0x7f] %vm924, 0.0
        %926 = vst.msk [vmem:[%s424 + $0x1d] sm:$0x7f] %vm924, 0.0
        %927 = vst.msk [vmem:[%s424 + $0x7] sm:$0xff] %vm755, %v921
        %928 = vst.msk [vmem:[%s424 + $0xf] sm:$0xff] %vm755, %v922
        %929 = vst.msk [vmem:[%s424 + $0x17] sm:$0x3f] %vm868, %v923
        %s930 = sand.u32 %s199, 1
        %s931 = scalar_lea.sflag [#allocation5], %s930
        %s932 = sand.u32 %s199, 1
        %s933 = smul.addr %s932, 40
        %s934 = scalar_lea.vmem [#allocation15], %s933
        // Predicated region
        $region77: #{generator_forward.12} parent=47 // pred_check
          %p935 = pneg %p209
        $region78: #{generator_forward.12} parent=47 // pred_check_branch
          %937 = sbr.rel (%p935) target = $region80
        $region79: #{generator_forward.12} parent=47 // pred_region
          %s939 = ssub.s32 640, 640
          %940 = vsyncadd %s931, %s939
          %s941 = smul.addr %s29, 5
          %s942 = smul.addr %s941, 128
          %s943 = scalar_lea.hbm %s7, %s942
          %s944 = sshll.u32 %s934, 4
          %s945 = int_to_ptr.vmem [resolvable:$true] %s944
          %950 = dma.vmem_to_hbm [thread:$0]  %s945, 640, %s943, %s931, 128, 128, 8
        $region80: #{generator_forward.12} parent=47 // pred_fallthru
          _
      $region48: #{generator_forward.12} parent=5 // pred_fallthru
        _
      %p951 = scmp.le.s32.totalorder 2, %s24
      // Predicated region
      $region81: #{generator_forward.12} parent=5 // pred_check
        %p952 = pneg %p951
      $region82: #{generator_forward.12} parent=5 // pred_check_branch
        %954 = sbr.rel (%p952) target = $region84
      $region83: #{generator_forward.12} parent=5 // pred_region
        %s955 = ssub.s32 %s24, 2
        // Predicated region
        $region85: #{generator_forward.12} parent=83 // pred_check
          %p956 = pneg %p215
        $region86: #{generator_forward.12} parent=83 // pred_check_branch
          %958 = sbr.rel (%p956) target = $region88
        $region87: #{generator_forward.12} parent=83 // pred_region
          %s959 = sand.u32 %s200, 1
          %s960 = scalar_lea.sflag [#allocation5], %s959
          %s961 = sand.u32 %s200, 1
          %s962 = smul.addr %s961, 40
          %s963 = scalar_lea.vmem [#allocation15], %s962
          %964 = dma.done %s960, 640
        $region88: #{generator_forward.12} parent=83 // pred_fallthru
          _
      $region84: #{generator_forward.12} parent=5 // pred_fallthru
        _
    $region6: #{generator_forward.12} parent=1 // loop_footer
      %s28 = sadd.s32 1, %s24
    $region7: #{generator_forward.12} parent=1 // loop_footer_branch
      %23 = sbr.rel target = $region3
    $region8: #{generator_forward.12} parent=1 // loop_exit
      _
    %965 = vsyncpa [#allocation4], 1
    %s966 = scalar_lea.sflag [#allocation4], 1
    %967 = vsyncpa %s966, 1
    %968 = vsyncpa [#allocation7], 1
    %969 = vsyncpa [#allocation11], 1
    %970 = vsyncpa [#allocation14], 1
    %s971 = scalar_lea.sflag [#allocation14], 1
    %972 = vsyncpa %s971, 1
    %973 = vsyncpa [#allocation5], 1
    %s974 = scalar_lea.sflag [#allocation5], 1
    %975 = vsyncpa %s974, 1

// kernel: generator_forward.15
$region0: #{generator_forward.15}
  #allocation0 [shape = 'u32[]', space=smem, size = 0x4, offset = 0x4, fixed_abs, tag = 'smem constant byte address 0x4 - core index']
  #allocation1 [shape = 'u32[144,128]{1,0:T(1,128)}', space=vmem, size = 0x12000, scoped, tag = 'internal scratch']
  %s0 = inlined_call_operand.hbm [shape: f32[8,128], index: 0, kind: input, shape index: {}]
  %s1 = inlined_call_operand.hbm [shape: bf16[8,8], index: 1, kind: input, shape index: {}]
  %s2 = inlined_call_operand.hbm [shape: f32[8,1], index: 2, kind: input, shape index: {}]
  %s3 = inlined_call_operand.hbm [shape: f32[8,128], index: 3, kind: output, shape index: {}]
  %s4 = sld [smem:[#allocation0]]
  $region34: #{generator_forward.15} parent=0
    _
  %s6 = ssub.s32 1, %s4
  %s7 = scalar_select 0, %s6, %s4
  $region1: #{generator_forward.15} parent=0
    #allocation2 [shape = 'u8[4096]{0}', space=vmem, size = 0x1000, scoped, tag = 'input window, operand 0, single buffered']
    #allocation3 [shape = 's32[1]{0}', space=sflag, size = 0x4, scoped, tag = 'scoped memory for generator_forward.15']
    #allocation4 [shape = 's32[1]{0}', space=sflag, size = 0x4, scoped, tag = 'scoped memory for generator_forward.15']
    #allocation5 [shape = 'u8[2048]{0}', space=vmem, size = 0x800, scoped, tag = 'input window, operand 1, single buffered']
    #allocation6 [shape = 's32[1]{0}', space=sflag, size = 0x4, scoped, tag = 'scoped memory for generator_forward.15']
    #allocation7 [shape = 'u8[4096]{0}', space=vmem, size = 0x1000, scoped, tag = 'input window, operand 2, single buffered']
    #allocation8 [shape = 'u8[4096]{0}', space=vmem, size = 0x1000, scoped, tag = 'output window, operand 0, single buffered']
    %8 = vsyncpa [#allocation3], 0
    %9 = vsyncpa [#allocation6], 0
    %10 = vsyncpa [#allocation4], 0
    // Predicated region
    $region2: #{generator_forward.15} parent=1 // pred_check
      _
    $region3: #{generator_forward.15} parent=1 // pred_check_branch
      %12 = sbr.rel (0) target = $region5
    $region4: #{generator_forward.15} parent=1 // pred_region
      %s14 = ssub.s32 128, 128
      %15 = vsyncadd [#allocation3], %s14
      %s17 = sshll.u32 [#allocation2], 4
      %s18 = int_to_ptr.vmem [resolvable:$true] %s17
      %20 = dma.hbm_to_vmem [thread:$0]  %s0, 128, %s18, [#allocation3]
    $region5: #{generator_forward.15} parent=1 // pred_fallthru
      _
    // Predicated region
    $region6: #{generator_forward.15} parent=1 // pred_check
      _
    $region7: #{generator_forward.15} parent=1 // pred_check_branch
      %22 = sbr.rel (0) target = $region9
    $region8: #{generator_forward.15} parent=1 // pred_region
      %s24 = ssub.s32 64, 64
      %25 = vsyncadd [#allocation6], %s24
      %s27 = sshll.u32 [#allocation5], 4
      %s28 = int_to_ptr.vmem [resolvable:$true] %s27
      %30 = dma.hbm_to_vmem [thread:$0]  %s1, 64, %s28, [#allocation6]
    $region9: #{generator_forward.15} parent=1 // pred_fallthru
      _
    // Predicated region
    $region10: #{generator_forward.15} parent=1 // pred_check
      _
    $region11: #{generator_forward.15} parent=1 // pred_check_branch
      %32 = sbr.rel (0) target = $region13
    $region12: #{generator_forward.15} parent=1 // pred_region
      %s34 = ssub.s32 128, 128
      %35 = vsyncadd [#allocation6], %s34
      %s37 = sshll.u32 [#allocation7], 4
      %s38 = int_to_ptr.vmem [resolvable:$true] %s37
      %40 = dma.hbm_to_vmem [thread:$0]  %s2, 128, %s38, [#allocation6]
    $region13: #{generator_forward.15} parent=1 // pred_fallthru
      _
    // Predicated region
    $region14: #{generator_forward.15} parent=1 // pred_check
      _
    $region15: #{generator_forward.15} parent=1 // pred_check_branch
      %42 = sbr.rel (0) target = $region17
    $region16: #{generator_forward.15} parent=1 // pred_region
      %43 = dma.done [#allocation3], 128
    $region17: #{generator_forward.15} parent=1 // pred_fallthru
      _
    // Predicated region
    $region18: #{generator_forward.15} parent=1 // pred_check
      _
    $region19: #{generator_forward.15} parent=1 // pred_check_branch
      %45 = sbr.rel (0) target = $region21
    $region20: #{generator_forward.15} parent=1 // pred_region
      %46 = dma.done [#allocation6], 64
    $region21: #{generator_forward.15} parent=1 // pred_fallthru
      _
    // Predicated region
    $region22: #{generator_forward.15} parent=1 // pred_check
      _
    $region23: #{generator_forward.15} parent=1 // pred_check_branch
      %48 = sbr.rel (0) target = $region25
    $region24: #{generator_forward.15} parent=1 // pred_region
      %49 = dma.done [#allocation6], 128
    $region25: #{generator_forward.15} parent=1 // pred_fallthru
      _
    %v51 = vld [vmem:[#allocation5] sm:$0xf]
    %v52 = vld [vmem:[#allocation2] sm:$0xff]
    %v53 = vpack.c.bf16 %v52, %v52
    %v54 = vld [vmem:[#allocation7] sm:$0xff]
    %56 = vset.pattern.permute.xlu0 0
    %57 = vperm.xlu0 %56, %v54
    %v58 = vpop.permute.xlu0 %57
    %vm60 = vcmask 64512
    %v62 = vsel %vm60, %v51, 0
    %vm64 = vcmask 1043456
    %v66 = vsel %vm64, %v53, 0
    %68 = vmatprep.subr.bf16.mxu0 0
    %69 = vmatpush1.bf16.msra.mxu0 %v66
    %70 = vmatprep.subr.bf16.mxu0 0
    %71 = vmatpush1.bf16.msra.mxu0 0
    %72 = vmatprep.subr.bf16.mxu0 0
    %73 = vmatpush1.bf16.msra.mxu0 0
    %74 = vmatprep.subr.bf16.mxu0 0
    %75 = vmatpush1.bf16.msra.mxu0 0
    %76 = vmatprep.subr.bf16.mxu0 0
    %77 = vmatpush1.bf16.msra.mxu0 0
    %78 = vmatprep.subr.bf16.mxu0 0
    %79 = vmatpush1.bf16.msra.mxu0 0
    %80 = vmatprep.subr.bf16.mxu0 0
    %81 = vmatpush1.bf16.msra.mxu0 0
    %82 = vmatprep.subr.bf16.mxu0 0
    %83 = vmatpush1.bf16.msra.mxu0 0
    %84 = vmatprep.subr.bf16.mxu0 0
    %85 = vmatpush1.bf16.msra.mxu0 0
    %86 = vmatprep.subr.bf16.mxu0 0
    %87 = vmatpush1.bf16.msra.mxu0 0
    %88 = vmatprep.subr.bf16.mxu0 0
    %89 = vmatpush1.bf16.msra.mxu0 0
    %90 = vmatprep.subr.bf16.mxu0 0
    %91 = vmatpush1.bf16.msra.mxu0 0
    %92 = vmatprep.subr.bf16.mxu0 0
    %93 = vmatpush1.bf16.msra.mxu0 0
    %94 = vmatprep.subr.bf16.mxu0 0
    %95 = vmatpush1.bf16.msra.mxu0 0
    %96 = vmatprep.subr.bf16.mxu0 0
    %97 = vmatpush1.bf16.msra.mxu0 0
    %98 = vmatprep.subr.bf16.mxu0 0
    %99 = vmatpush1.bf16.msra.mxu0 0
    %100 = vmatprep.mubr.bf16.mxu0 0
    %101 = vmatmul.mubr.bf16.gmra.mrb[0].mxu0 %v62
    %v102 = vpop.f32.mrb[0].mxu0
    %v103 = vadd.f32 %v58, %v102
    %v104 = vpop.f32.mrb[0].mxu0
    %v105 = vpop.f32.mrb[0].mxu0
    %v106 = vpop.f32.mrb[0].mxu0
    %107 = vdwg.mxu0
    %108 = vst [vmem:[#allocation8] sm:$0xff] %v103
    // Predicated region
    $region26: #{generator_forward.15} parent=1 // pred_check
      _
    $region27: #{generator_forward.15} parent=1 // pred_check_branch
      %110 = sbr.rel (0) target = $region29
    $region28: #{generator_forward.15} parent=1 // pred_region
      %s112 = ssub.s32 128, 128
      %113 = vsyncadd [#allocation4], %s112
      %s115 = sshll.u32 [#allocation8], 4
      %s116 = int_to_ptr.vmem [resolvable:$true] %s115
      %118 = dma.vmem_to_hbm [thread:$0]  %s116, 128, %s3, [#allocation4]
    $region29: #{generator_forward.15} parent=1 // pred_fallthru
      _
    // Predicated region
    $region30: #{generator_forward.15} parent=1 // pred_check
      _
    $region31: #{generator_forward.15} parent=1 // pred_check_branch
      %120 = sbr.rel (0) target = $region33
    $region32: #{generator_forward.15} parent=1 // pred_region
      %121 = dma.done [#allocation4], 128
    $region33: #{generator_forward.15} parent=1 // pred_fallthru
      _
    %122 = vsyncpa [#allocation3], 1
    %123 = vsyncpa [#allocation6], 1
    %124 = vsyncpa [#allocation4], 1

// kernel: generator_forward.13
$region0: #{generator_forward.13}
  #allocation0 [shape = 'u32[]', space=smem, size = 0x4, offset = 0x4, fixed_abs, tag = 'smem constant byte address 0x4 - core index']
  #allocation1 [shape = 'u32[144,128]{1,0:T(1,128)}', space=vmem, size = 0x12000, scoped, tag = 'internal scratch']
  #allocation2 [shape = 'bf16[78,144]{1,0:T(8,128)(2,1)}', space=vmem, size = 0xa000, scoped, tag = 'scratch operand']
  #allocation3 [shape = 'f32[100,8]{1,0:T(8,128)}', space=vmem, size = 0xd000, scoped, tag = 'scratch operand']
  %s0 = inlined_call_operand.hbm [shape: f32[2,100,16], index: 0, kind: input, shape index: {}]
  %s1 = inlined_call_operand.hbm [shape: f32[1,100,1], index: 1, kind: input, shape index: {}]
  %s2 = inlined_call_operand.hbm [shape: f32[2,100,1], index: 2, kind: input, shape index: {}]
  %s3 = inlined_call_operand.hbm [shape: bf16[144,8], index: 3, kind: input, shape index: {}]
  %s4 = inlined_call_operand.hbm [shape: f32[1,8], index: 4, kind: input, shape index: {}]
  %s5 = inlined_call_operand.hbm [shape: f32[1,8], index: 5, kind: input, shape index: {}]
  %s6 = inlined_call_operand.hbm [shape: f32[2,4,32], index: 6, kind: input, shape index: {}]
  %s7 = inlined_call_operand.hbm [shape: f32[2,100,8], index: 7, kind: output, shape index: {}]
  %s8 = sld [smem:[#allocation0]]
  $region89: #{generator_forward.13} parent=0
    _
  %s10 = ssub.s32 1, %s8
  %s11 = scalar_select 0, %s10, %s8
  $region1: #{generator_forward.13} parent=0
    #allocation4 [shape = 'u8[106496]{0}', space=vmem, size = 0x1a000, scoped, tag = 'input window, operand 0']
    #allocation5 [shape = 's32[2]{0}', space=sflag, size = 0x8, scoped, tag = 'scoped memory for generator_forward.13']
    #allocation6 [shape = 's32[2]{0}', space=sflag, size = 0x8, scoped, tag = 'scoped memory for generator_forward.13']
    #allocation7 [shape = 'u8[53248]{0}', space=vmem, size = 0xd000, scoped, tag = 'input window, operand 1, single buffered']
    #allocation8 [shape = 's32[1]{0}', space=sflag, size = 0x4, scoped, tag = 'scoped memory for generator_forward.13']
    #allocation9 [shape = 'u8[106496]{0}', space=vmem, size = 0x1a000, scoped, tag = 'input window, operand 2']
    #allocation10 [shape = 'u8[36864]{0}', space=vmem, size = 0x9000, scoped, tag = 'input window, operand 3, single buffered']
    #allocation11 [shape = 'u8[512]{0}', space=vmem, size = 0x400, scoped, tag = 'input window, operand 4, single buffered']
    #allocation12 [shape = 's32[1]{0}', space=sflag, size = 0x4, scoped, tag = 'scoped memory for generator_forward.13']
    #allocation13 [shape = 'u8[512]{0}', space=vmem, size = 0x400, scoped, tag = 'input window, operand 5, single buffered']
    #allocation14 [shape = 'u8[4096]{0}', space=vmem, size = 0x1000, scoped, tag = 'input window, operand 6']
    #allocation15 [shape = 's32[2]{0}', space=sflag, size = 0x8, scoped, tag = 'scoped memory for generator_forward.13']
    #allocation16 [shape = 'u8[106496]{0}', space=vmem, size = 0x1a000, scoped, tag = 'output window, operand 0']
    %12 = vsyncpa [#allocation5], 0
    %s13 = scalar_lea.sflag [#allocation5], 1
    %14 = vsyncpa %s13, 0
    %15 = vsyncpa [#allocation8], 0
    %16 = vsyncpa [#allocation12], 0
    %17 = vsyncpa [#allocation15], 0
    %s18 = scalar_lea.sflag [#allocation15], 1
    %19 = vsyncpa %s18, 0
    %20 = vsyncpa [#allocation6], 0
    %s21 = scalar_lea.sflag [#allocation6], 1
    %22 = vsyncpa %s21, 0
    loop: start=0, step=1, limit=4
    $region2: #{generator_forward.13} parent=1 // loop_pre_header
      _
    $region3: #{generator_forward.13} parent=1 // loop_header
      %s24 = sphi 0, %s28
      %p25 = scmp.ge.s32.totalorder %s24, 4
      %s34 = sphi 0, %s36
      %s37 = sphi 0, %s34
      %s38 = sphi 0, %s37
      %s54 = sphi 0, %s38
      %s58 = sphi 0, %s58
      %s60 = sphi 0, %s58
      %s61 = sphi 0, %s60
      %s75 = sphi 0, %s61
      %s81 = sphi 0, %s83
      %s84 = sphi 0, %s81
      %s85 = sphi 0, %s84
      %s101 = sphi 0, %s85
      %s105 = sphi 0, %s105
      %s107 = sphi 0, %s105
      %s108 = sphi 0, %s107
      %s122 = sphi 0, %s108
      %s126 = sphi 0, %s126
      %s128 = sphi 0, %s126
      %s129 = sphi 0, %s128
      %s143 = sphi 0, %s129
      %s147 = sphi 0, %s147
      %s149 = sphi 0, %s147
      %s150 = sphi 0, %s149
      %s164 = sphi 0, %s150
      %s170 = sphi 0, %s172
      %s173 = sphi 0, %s170
      %s174 = sphi 0, %s173
      %s190 = sphi 0, %s174
      %s196 = sphi 0, %s198
      %s199 = sphi 0, %s196
      %s200 = sphi 0, %s199
      %s216 = sphi 0, %s200
    $region4: #{generator_forward.13} parent=1 // loop_header_branch
      %27 = sbr.rel (%p25) target = $region8
    $region5: #{generator_forward.13} parent=1 // loop_body
      %s29 = ssub.s32 %s24, 1
      %s30 = ssub.s32 %s24, 2
      %s31 = sadd.s32 %s24, 1
      %s32 = ssub.s32 %s24, %s31
      %p33 = scmp.eq.s32.totalorder %s32, 0
      %s35 = sadd.s32 %s34, 1
      %s36 = scalar_select %p33, %s34, %s35
      %p39 = pneg %p33
      %p40 = scmp.eq.s32.totalorder %s24, 1
      %p41 = por %p39, %p40
      %p42 = scmp.ne.s32.totalorder %s34, %s37
      %p43 = scmp.eq.s32.totalorder %s24, 0
      %p44 = por %p42, %p43
      %p45 = scmp.ne.s32.totalorder %s34, %s37
      %p46 = scmp.eq.s32.totalorder %s29, 1
      %p47 = por %p45, %p46
      %p48 = scmp.ne.s32.totalorder %s37, %s38
      %p49 = scmp.eq.s32.totalorder %s29, 0
      %p50 = por %p48, %p49
      %p51 = scmp.ne.s32.totalorder %s37, %s38
      %p52 = scmp.eq.s32.totalorder %s30, 1
      %p53 = por %p51, %p52
      %p55 = scmp.ne.s32.totalorder %s38, %s54
      %p56 = scmp.eq.s32.totalorder %s30, 0
      %p57 = por %p55, %p56
      %s59 = sadd.s32 %s58, 1
      %p62 = scmp.eq.s32.totalorder %s24, 1
      %p63 = scmp.ne.s32.totalorder %s58, %s60
      %p64 = scmp.eq.s32.totalorder %s24, 0
      %p65 = por %p63, %p64
      %p66 = scmp.ne.s32.totalorder %s58, %s60
      %p67 = scmp.eq.s32.totalorder %s29, 1
      %p68 = por %p66, %p67
      %p69 = scmp.ne.s32.totalorder %s60, %s61
      %p70 = scmp.eq.s32.totalorder %s29, 0
      %p71 = por %p69, %p70
      %p72 = scmp.ne.s32.totalorder %s60, %s61
      %p73 = scmp.eq.s32.totalorder %s30, 1
      %p74 = por %p72, %p73
      %p76 = scmp.ne.s32.totalorder %s61, %s75
      %p77 = scmp.eq.s32.totalorder %s30, 0
      %p78 = por %p76, %p77
      %s79 = ssub.s32 %s24, %s31
      %p80 = scmp.eq.s32.totalorder %s79, 0
      %s82 = sadd.s32 %s81, 1
      %s83 = scalar_select %p80, %s81, %s82
      %p86 = pneg %p80
      %p87 = scmp.eq.s32.totalorder %s24, 1
      %p88 = por %p86, %p87
      %p89 = scmp.ne.s32.totalorder %s81, %s84
      %p90 = scmp.eq.s32.totalorder %s24, 0
      %p91 = por %p89, %p90
      %p92 = scmp.ne.s32.totalorder %s81, %s84
      %p93 = scmp.eq.s32.totalorder %s29, 1
      %p94 = por %p92, %p93
      %p95 = scmp.ne.s32.totalorder %s84, %s85
      %p96 = scmp.eq.s32.totalorder %s29, 0
      %p97 = por %p95, %p96
      %p98 = scmp.ne.s32.totalorder %s84, %s85
      %p99 = scmp.eq.s32.totalorder %s30, 1
      %p100 = por %p98, %p99
      %p102 = scmp.ne.s32.totalorder %s85, %s101
      %p103 = scmp.eq.s32.totalorder %s30, 0
      %p104 = por %p102, %p103
      %s106 = sadd.s32 %s105, 1
      %p109 = scmp.eq.s32.totalorder %s24, 1
      %p110 = scmp.ne.s32.totalorder %s105, %s107
      %p111 = scmp.eq.s32.totalorder %s24, 0
      %p112 = por %p110, %p111
      %p113 = scmp.ne.s32.totalorder %s105, %s107
      %p114 = scmp.eq.s32.totalorder %s29, 1
      %p115 = por %p113, %p114
      %p116 = scmp.ne.s32.totalorder %s107, %s108
      %p117 = scmp.eq.s32.totalorder %s29, 0
      %p118 = por %p116, %p117
      %p119 = scmp.ne.s32.totalorder %s107, %s108
      %p120 = scmp.eq.s32.totalorder %s30, 1
      %p121 = por %p119, %p120
      %p123 = scmp.ne.s32.totalorder %s108, %s122
      %p124 = scmp.eq.s32.totalorder %s30, 0
      %p125 = por %p123, %p124
      %s127 = sadd.s32 %s126, 1
      %p130 = scmp.eq.s32.totalorder %s24, 1
      %p131 = scmp.ne.s32.totalorder %s126, %s128
      %p132 = scmp.eq.s32.totalorder %s24, 0
      %p133 = por %p131, %p132
      %p134 = scmp.ne.s32.totalorder %s126, %s128
      %p135 = scmp.eq.s32.totalorder %s29, 1
      %p136 = por %p134, %p135
      %p137 = scmp.ne.s32.totalorder %s128, %s129
      %p138 = scmp.eq.s32.totalorder %s29, 0
      %p139 = por %p137, %p138
      %p140 = scmp.ne.s32.totalorder %s128, %s129
      %p141 = scmp.eq.s32.totalorder %s30, 1
      %p142 = por %p140, %p141
      %p144 = scmp.ne.s32.totalorder %s129, %s143
      %p145 = scmp.eq.s32.totalorder %s30, 0
      %p146 = por %p144, %p145
      %s148 = sadd.s32 %s147, 1
      %p151 = scmp.eq.s32.totalorder %s24, 1
      %p152 = scmp.ne.s32.totalorder %s147, %s149
      %p153 = scmp.eq.s32.totalorder %s24, 0
      %p154 = por %p152, %p153
      %p155 = scmp.ne.s32.totalorder %s147, %s149
      %p156 = scmp.eq.s32.totalorder %s29, 1
      %p157 = por %p155, %p156
      %p158 = scmp.ne.s32.totalorder %s149, %s150
      %p159 = scmp.eq.s32.totalorder %s29, 0
      %p160 = por %p158, %p159
      %p161 = scmp.ne.s32.totalorder %s149, %s150
      %p162 = scmp.eq.s32.totalorder %s30, 1
      %p163 = por %p161, %p162
      %p165 = scmp.ne.s32.totalorder %s150, %s164
      %p166 = scmp.eq.s32.totalorder %s30, 0
      %p167 = por %p165, %p166
      %s168 = ssub.s32 %s24, %s31
      %p169 = scmp.eq.s32.totalorder %s168, 0
      %s171 = sadd.s32 %s170, 1
      %s172 = scalar_select %p169, %s170, %s171
      %p175 = pneg %p169
      %p176 = scmp.eq.s32.totalorder %s24, 1
      %p177 = por %p175, %p176
      %p178 = scmp.ne.s32.totalorder %s170, %s173
      %p179 = scmp.eq.s32.totalorder %s24, 0
      %p180 = por %p178, %p179
      %p181 = scmp.ne.s32.totalorder %s170, %s173
      %p182 = scmp.eq.s32.totalorder %s29, 1
      %p183 = por %p181, %p182
      %p184 = scmp.ne.s32.totalorder %s173, %s174
      %p185 = scmp.eq.s32.totalorder %s29, 0
      %p186 = por %p184, %p185
      %p187 = scmp.ne.s32.totalorder %s173, %s174
      %p188 = scmp.eq.s32.totalorder %s30, 1
      %p189 = por %p187, %p188
      %p191 = scmp.ne.s32.totalorder %s174, %s190
      %p192 = scmp.eq.s32.totalorder %s30, 0
      %p193 = por %p191, %p192
      %s194 = ssub.s32 %s24, %s31
      %p195 = scmp.eq.s32.totalorder %s194, 0
      %s197 = sadd.s32 %s196, 1
      %s198 = scalar_select %p195, %s196, %s197
      %p201 = pneg %p195
      %p202 = scmp.eq.s32.totalorder %s24, 1
      %p203 = por %p201, %p202
      %p204 = scmp.ne.s32.totalorder %s196, %s199
      %p205 = scmp.eq.s32.totalorder %s24, 0
      %p206 = por %p204, %p205
      %p207 = scmp.ne.s32.totalorder %s196, %s199
      %p208 = scmp.eq.s32.totalorder %s29, 1
      %p209 = por %p207, %p208
      %p210 = scmp.ne.s32.totalorder %s199, %s200
      %p211 = scmp.eq.s32.totalorder %s29, 0
      %p212 = por %p210, %p211
      %p213 = scmp.ne.s32.totalorder %s199, %s200
      %p214 = scmp.eq.s32.totalorder %s30, 1
      %p215 = por %p213, %p214
      %p217 = scmp.ne.s32.totalorder %s200, %s216
      %p218 = scmp.eq.s32.totalorder %s30, 0
      %p219 = por %p217, %p218
      %p220 = scmp.le.s32.totalorder 1, %s24
      %p221 = scmp.lt.s32.totalorder %s24, 3
      %p222 = pnand %p220, %p221
      %p223 = pneg %p222
      // Predicated region
      $region9: #{generator_forward.13} parent=5 // pred_check
        _
      $region10: #{generator_forward.13} parent=5 // pred_check_branch
        %225 = sbr.rel (%p222) target = $region12
      $region11: #{generator_forward.13} parent=5 // pred_region
        %s226 = ssub.s32 %s24, 1
        // Predicated region
        $region13: #{generator_forward.13} parent=11 // pred_check
          %p227 = pneg %p71
        $region14: #{generator_forward.13} parent=11 // pred_check_branch
          %229 = sbr.rel (%p227) target = $region16
        $region15: #{generator_forward.13} parent=11 // pred_region
          %s231 = ssub.s32 1664, 1664
          %232 = vsyncadd [#allocation8], %s231
          %s233 = sshll.u32 [#allocation7], 4
          %s234 = int_to_ptr.vmem [resolvable:$true] %s233
          %239 = dma.hbm_to_vmem [thread:$0]  %s1, 1664, %s234, [#allocation8], 128, 128, 8
        $region16: #{generator_forward.13} parent=11 // pred_fallthru
          _
        // Predicated region
        $region17: #{generator_forward.13} parent=11 // pred_check
          %p240 = pneg %p118
        $region18: #{generator_forward.13} parent=11 // pred_check_branch
          %242 = sbr.rel (%p240) target = $region20
        $region19: #{generator_forward.13} parent=11 // pred_region
          %s244 = ssub.s32 1152, 1152
          %245 = vsyncadd [#allocation8], %s244
          %s246 = sshll.u32 [#allocation10], 4
          %s247 = int_to_ptr.vmem [resolvable:$true] %s246
          %252 = dma.hbm_to_vmem [thread:$0]  %s3, 1152, %s247, [#allocation8], 64, 64, 4
        $region20: #{generator_forward.13} parent=11 // pred_fallthru
          _
        // Predicated region
        $region21: #{generator_forward.13} parent=11 // pred_check
          %p253 = pneg %p139
        $region22: #{generator_forward.13} parent=11 // pred_check_branch
          %255 = sbr.rel (%p253) target = $region24
        $region23: #{generator_forward.13} parent=11 // pred_region
          %s257 = ssub.s32 16, 16
          %258 = vsyncadd [#allocation12], %s257
          %s260 = sshll.u32 [#allocation11], 4
          %s261 = int_to_ptr.vmem [resolvable:$true] %s260
          %263 = dma.hbm_to_vmem [thread:$0]  %s4, 16, %s261, [#allocation12]
        $region24: #{generator_forward.13} parent=11 // pred_fallthru
          _
        // Predicated region
        $region25: #{generator_forward.13} parent=11 // pred_check
          %p264 = pneg %p160
        $region26: #{generator_forward.13} parent=11 // pred_check_branch
          %266 = sbr.rel (%p264) target = $region28
        $region27: #{generator_forward.13} parent=11 // pred_region
          %s268 = ssub.s32 16, 16
          %269 = vsyncadd [#allocation12], %s268
          %s271 = sshll.u32 [#allocation13], 4
          %s272 = int_to_ptr.vmem [resolvable:$true] %s271
          %274 = dma.hbm_to_vmem [thread:$0]  %s5, 16, %s272, [#allocation12]
        $region28: #{generator_forward.13} parent=11 // pred_fallthru
          _
      $region12: #{generator_forward.13} parent=5 // pred_fallthru
        _
      %p275 = scmp.lt.s32.totalorder %s24, 2
      // Predicated region
      $region29: #{generator_forward.13} parent=5 // pred_check
        %p276 = pneg %p275
      $region30: #{generator_forward.13} parent=5 // pred_check_branch
        %278 = sbr.rel (%p276) target = $region32
      $region31: #{generator_forward.13} parent=5 // pred_region
        // Predicated region
        $region33: #{generator_forward.13} parent=31 // pred_check
          %p279 = pneg %p44
        $region34: #{generator_forward.13} parent=31 // pred_check_branch
          %281 = sbr.rel (%p279) target = $region36
        $region35: #{generator_forward.13} parent=31 // pred_region
          %s282 = sand.u32 %s24, 1
          %s283 = scalar_lea.sflag [#allocation5], %s282
          %s284 = sand.u32 %s34, 1
          %s285 = smul.addr %s284, 104
          %s286 = scalar_lea.vmem [#allocation4], %s285
          %s288 = ssub.s32 1664, 1664
          %289 = vsyncadd %s283, %s288
          %s290 = smul.addr %s24, 13
          %s291 = smul.addr %s290, 128
          %s292 = scalar_lea.hbm %s0, %s291
          %s293 = sshll.u32 %s286, 4
          %s294 = int_to_ptr.vmem [resolvable:$true] %s293
          %299 = dma.hbm_to_vmem [thread:$0]  %s292, 1664, %s294, %s283, 128, 128, 8
        $region36: #{generator_forward.13} parent=31 // pred_fallthru
          _
        // Predicated region
        $region37: #{generator_forward.13} parent=31 // pred_check
          %p300 = pneg %p91
        $region38: #{generator_forward.13} parent=31 // pred_check_branch
          %302 = sbr.rel (%p300) target = $region40
        $region39: #{generator_forward.13} parent=31 // pred_region
          %s303 = sand.u32 %s24, 1
          %s304 = scalar_lea.sflag [#allocation5], %s303
          %s305 = sand.u32 %s81, 1
          %s306 = smul.addr %s305, 104
          %s307 = scalar_lea.vmem [#allocation9], %s306
          %s309 = ssub.s32 1664, 1664
          %310 = vsyncadd %s304, %s309
          %s311 = smul.addr %s24, 13
          %s312 = smul.addr %s311, 128
          %s313 = scalar_lea.hbm %s2, %s312
          %s314 = sshll.u32 %s307, 4
          %s315 = int_to_ptr.vmem [resolvable:$true] %s314
          %320 = dma.hbm_to_vmem [thread:$0]  %s313, 1664, %s315, %s304, 128, 128, 8
        $region40: #{generator_forward.13} parent=31 // pred_fallthru
          _
        // Predicated region
        $region41: #{generator_forward.13} parent=31 // pred_check
          %p321 = pneg %p180
        $region42: #{generator_forward.13} parent=31 // pred_check_branch
          %323 = sbr.rel (%p321) target = $region44
        $region43: #{generator_forward.13} parent=31 // pred_region
          %s324 = sand.u32 %s170, 1
          %s325 = scalar_lea.sflag [#allocation15], %s324
          %s326 = sand.u32 %s170, 1
          %s327 = smul.addr %s326, 4
          %s328 = scalar_lea.vmem [#allocation14], %s327
          %s330 = ssub.s32 64, 64
          %331 = vsyncadd %s325, %s330
          %s332 = smul.addr %s24, 64
          %s333 = scalar_lea.hbm %s6, %s332
          %s335 = sshll.u32 %s328, 4
          %s336 = int_to_ptr.vmem [resolvable:$true] %s335
          %338 = dma.hbm_to_vmem [thread:$0]  %s333, 64, %s336, %s325
        $region44: #{generator_forward.13} parent=31 // pred_fallthru
          _
      $region32: #{generator_forward.13} parent=5 // pred_fallthru
        _
      %p339 = scmp.le.s32.totalorder 1, %s24
      %p340 = scmp.lt.s32.totalorder %s24, 3
      %p341 = pnand %p339, %p340
      %p342 = pneg %p341
      // Predicated region
      $region45: #{generator_forward.13} parent=5 // pred_check
        _
      $region46: #{generator_forward.13} parent=5 // pred_check_branch
        %344 = sbr.rel (%p341) target = $region48
      $region47: #{generator_forward.13} parent=5 // pred_region
        %s345 = ssub.s32 %s24, 1
        %s346 = sand.u32 %s29, 1
        %s347 = scalar_lea.sflag [#allocation5], %s346
        %s348 = sand.u32 %s37, 1
        %s349 = smul.addr %s348, 104
        %s350 = scalar_lea.vmem [#allocation4], %s349
        // Predicated region
        $region49: #{generator_forward.13} parent=47 // pred_check
          %p351 = pneg %p50
        $region50: #{generator_forward.13} parent=47 // pred_check_branch
          %353 = sbr.rel (%p351) target = $region52
        $region51: #{generator_forward.13} parent=47 // pred_region
          %354 = dma.done %s347, 1664
        $region52: #{generator_forward.13} parent=47 // pred_fallthru
          _
        // Predicated region
        $region53: #{generator_forward.13} parent=47 // pred_check
          %p355 = pneg %p71
        $region54: #{generator_forward.13} parent=47 // pred_check_branch
          %357 = sbr.rel (%p355) target = $region56
        $region55: #{generator_forward.13} parent=47 // pred_region
          %358 = dma.done [#allocation8], 1664
        $region56: #{generator_forward.13} parent=47 // pred_fallthru
          _
        %s359 = sand.u32 %s29, 1
        %s360 = scalar_lea.sflag [#allocation5], %s359
        %s361 = sand.u32 %s84, 1
        %s362 = smul.addr %s361, 104
        %s363 = scalar_lea.vmem [#allocation9], %s362
        // Predicated region
        $region57: #{generator_forward.13} parent=47 // pred_check
          %p364 = pneg %p97
        $region58: #{generator_forward.13} parent=47 // pred_check_branch
          %366 = sbr.rel (%p364) target = $region60
        $region59: #{generator_forward.13} parent=47 // pred_region
          %367 = dma.done %s360, 1664
        $region60: #{generator_forward.13} parent=47 // pred_fallthru
          _
        // Predicated region
        $region61: #{generator_forward.13} parent=47 // pred_check
          %p368 = pneg %p118
        $region62: #{generator_forward.13} parent=47 // pred_check_branch
          %370 = sbr.rel (%p368) target = $region64
        $region63: #{generator_forward.13} parent=47 // pred_region
          %371 = dma.done [#allocation8], 1152
        $region64: #{generator_forward.13} parent=47 // pred_fallthru
          _
        // Predicated region
        $region65: #{generator_forward.13} parent=47 // pred_check
          %p372 = pneg %p139
        $region66: #{generator_forward.13} parent=47 // pred_check_branch
          %374 = sbr.rel (%p372) target = $region68
        $region67: #{generator_forward.13} parent=47 // pred_region
          %375 = dma.done [#allocation12], 16
        $region68: #{generator_forward.13} parent=47 // pred_fallthru
          _
        // Predicated region
        $region69: #{generator_forward.13} parent=47 // pred_check
          %p376 = pneg %p160
        $region70: #{generator_forward.13} parent=47 // pred_check_branch
          %378 = sbr.rel (%p376) target = $region72
        $region71: #{generator_forward.13} parent=47 // pred_region
          %379 = dma.done [#allocation12], 16
        $region72: #{generator_forward.13} parent=47 // pred_fallthru
          _
        %s380 = sand.u32 %s173, 1
        %s381 = scalar_lea.sflag [#allocation15], %s380
        %s382 = sand.u32 %s173, 1
        %s383 = smul.addr %s382, 4
        %s384 = scalar_lea.vmem [#allocation14], %s383
        // Predicated region
        $region73: #{generator_forward.13} parent=47 // pred_check
          %p385 = pneg %p186
        $region74: #{generator_forward.13} parent=47 // pred_check_branch
          %387 = sbr.rel (%p385) target = $region76
        $region75: #{generator_forward.13} parent=47 // pred_region
          %388 = dma.done %s381, 64
        $region76: #{generator_forward.13} parent=47 // pred_fallthru
          _
        %s389 = sand.u32 %s29, 1
        %s390 = scalar_lea.sflag [#allocation5], %s389
        %s391 = sand.u32 %s37, 1
        %s392 = smul.addr %s391, 104
        %s393 = scalar_lea.vmem [#allocation4], %s392
        %p394 = pneg %p50
        %p395 = pneg %p47
        %p396 = pneg %p71
        %p397 = pneg %p68
        %s398 = sand.u32 %s29, 1
        %s399 = scalar_lea.sflag [#allocation5], %s398
        %s400 = sand.u32 %s84, 1
        %s401 = smul.addr %s400, 104
        %s402 = scalar_lea.vmem [#allocation9], %s401
        %p403 = pneg %p97
        %p404 = pneg %p94
        %p405 = pneg %p118
        %p406 = pneg %p115
        %p407 = pneg %p139
        %p408 = pneg %p136
        %p409 = pneg %p160
        %p410 = pneg %p157
        %s411 = sand.u32 %s173, 1
        %s412 = scalar_lea.sflag [#allocation15], %s411
        %s413 = sand.u32 %s173, 1
        %s414 = smul.addr %s413, 4
        %s415 = scalar_lea.vmem [#allocation14], %s414
        %p416 = pneg %p186
        %p417 = pneg %p183
        %p418 = pneg %p212
        %p419 = pneg %p209
        %s420 = sand.u32 %s199, 1
        %s421 = scalar_lea.sflag [#allocation6], %s420
        %s422 = sand.u32 %s199, 1
        %s423 = smul.addr %s422, 104
        %s424 = scalar_lea.vmem [#allocation16], %s423
        %v426 = vld [vmem:[#allocation7 + $0xb] sm:$0xff]
        %v427 = vld [vmem:[#allocation7 + $0x13] sm:$0xff]
        %v428 = vld [vmem:[#allocation7 + $0x1b] sm:$0xff]
        %v429 = vld [vmem:[#allocation7 + $0x23] sm:$0xff]
        %v430 = vld [vmem:[#allocation7 + $0x2b] sm:$0xff]
        %v431 = vld [vmem:[#allocation7 + $0x33] sm:$0xff]
        %v432 = vld [vmem:[#allocation7 + $0x3b] sm:$0xff]
        %v433 = vld [vmem:[#allocation7 + $0x43] sm:$0xff]
        %v434 = vld [vmem:[#allocation7 + $0x4b] sm:$0xff]
        %v435 = vld [vmem:[#allocation7 + $0x53] sm:$0x3f]
        %v436 = vld [vmem:[%s350] sm:$0xff]
        %v437 = vld [vmem:[%s350 + $0x8] sm:$0xff]
        %v438 = vld [vmem:[%s350 + $0x10] sm:$0xff]
        %v439 = vld [vmem:[%s350 + $0x18] sm:$0xff]
        %v440 = vld [vmem:[%s350 + $0x20] sm:$0xff]
        %v441 = vld [vmem:[%s350 + $0x28] sm:$0xff]
        %v442 = vld [vmem:[%s350 + $0x30] sm:$0xff]
        %v443 = vld [vmem:[%s350 + $0x38] sm:$0xff]
        %v444 = vld [vmem:[%s350 + $0x40] sm:$0xff]
        %v445 = vld [vmem:[%s350 + $0x48] sm:$0x3f]
        %v446 = vpack.c.bf16 %v437, %v436
        %v447 = vpack.c.bf16 %v439, %v438
        %v448 = vpack.c.bf16 %v441, %v440
        %v449 = vpack.c.bf16 %v443, %v442
        %v450 = vpack.c.bf16 %v445, %v444
        %v456 = vunpack.c.l.b16 %v446
        %v457 = vunpack.c.h.b16 %v446
        %v458 = vunpack.c.l.b16 %v447
        %v459 = vunpack.c.h.b16 %v447
        %v460 = vunpack.c.l.b16 %v448
        %v461 = vunpack.c.h.b16 %v448
        %v462 = vunpack.c.l.b16 %v449
        %v463 = vunpack.c.h.b16 %v449
        %v464 = vunpack.c.l.b16 %v450
        %v465 = vunpack.c.h.b16 %v450
        %v466 = vpack.c.b16 %v456, %v456
        %v467 = vpack.c.b16 %v457, %v457
        %v468 = vpack.c.b16 %v458, %v458
        %v469 = vpack.c.b16 %v459, %v459
        %v470 = vpack.c.b16 %v460, %v460
        %v471 = vpack.c.b16 %v461, %v461
        %v472 = vpack.c.b16 %v462, %v462
        %v473 = vpack.c.b16 %v463, %v463
        %v474 = vpack.c.b16 %v464, %v464
        %v475 = vpack.c.b16 %v465, %v465
        %vm486 = vcmask 125952
        %487 = vst.msk [vmem:[#allocation2] sm:$0xf] %vm486, %v466
        %488 = vst.msk [vmem:[#allocation2 + $0x8] sm:$0xf] %vm486, %v467
        %489 = vst.msk [vmem:[#allocation2 + $0x10] sm:$0xf] %vm486, %v468
        %490 = vst.msk [vmem:[#allocation2 + $0x18] sm:$0xf] %vm486, %v469
        %491 = vst.msk [vmem:[#allocation2 + $0x20] sm:$0xf] %vm486, %v470
        %492 = vst.msk [vmem:[#allocation2 + $0x28] sm:$0xf] %vm486, %v471
        %493 = vst.msk [vmem:[#allocation2 + $0x30] sm:$0xf] %vm486, %v472
        %494 = vst.msk [vmem:[#allocation2 + $0x38] sm:$0xf] %vm486, %v473
        %495 = vst.msk [vmem:[#allocation2 + $0x40] sm:$0xf] %vm486, %v474
        %vm496 = vcmask 124928
        %497 = vst.msk [vmem:[#allocation2 + $0x48] sm:$0x7] %vm496, %v475
        %v498 = vld [vmem:[%s350 + $0x1] sm:$0xff]
        %v499 = vld [vmem:[%s350 + $0x9] sm:$0xff]
        %v500 = vld [vmem:[%s350 + $0x11] sm:$0xff]
        %v501 = vld [vmem:[%s350 + $0x19] sm:$0xff]
        %v502 = vld [vmem:[%s350 + $0x21] sm:$0xff]
        %v503 = vld [vmem:[%s350 + $0x29] sm:$0xff]
        %v504 = vld [vmem:[%s350 + $0x31] sm:$0xff]
        %v505 = vld [vmem:[%s350 + $0x39] sm:$0xff]
        %v506 = vld [vmem:[%s350 + $0x41] sm:$0xff]
        %v507 = vld [vmem:[%s350 + $0x49] sm:$0x3f]
        %v508 = vpack.c.bf16 %v499, %v498
        %v509 = vpack.c.bf16 %v501, %v500
        %v510 = vpack.c.bf16 %v503, %v502
        %v511 = vpack.c.bf16 %v505, %v504
        %v512 = vpack.c.bf16 %v507, %v506
        %v518 = vunpack.c.l.b16 %v508
        %v519 = vunpack.c.h.b16 %v508
        %v520 = vunpack.c.l.b16 %v509
        %v521 = vunpack.c.h.b16 %v509
        %v522 = vunpack.c.l.b16 %v510
        %v523 = vunpack.c.h.b16 %v510
        %v524 = vunpack.c.l.b16 %v511
        %v525 = vunpack.c.h.b16 %v511
        %v526 = vunpack.c.l.b16 %v512
        %v527 = vunpack.c.h.b16 %v512
        %v528 = vpack.c.b16 %v518, %v518
        %v529 = vpack.c.b16 %v519, %v519
        %v530 = vpack.c.b16 %v520, %v520
        %v531 = vpack.c.b16 %v521, %v521
        %v532 = vpack.c.b16 %v522, %v522
        %v533 = vpack.c.b16 %v523, %v523
        %v534 = vpack.c.b16 %v524, %v524
        %v535 = vpack.c.b16 %v525, %v525
        %v536 = vpack.c.b16 %v526, %v526
        %v537 = vpack.c.b16 %v527, %v527
        %538 = vrot.lane.b32.xlu0 %v528, 16
        %v539 = vpop.permute.xlu0 %538
        %540 = vrot.lane.b32.xlu0 %v529, 16
        %v541 = vpop.permute.xlu0 %540
        %542 = vrot.lane.b32.xlu0 %v530, 16
        %v543 = vpop.permute.xlu0 %542
        %544 = vrot.lane.b32.xlu0 %v531, 16
        %v545 = vpop.permute.xlu0 %544
        %546 = vrot.lane.b32.xlu0 %v532, 16
        %v547 = vpop.permute.xlu0 %546
        %548 = vrot.lane.b32.xlu0 %v533, 16
        %v549 = vpop.permute.xlu0 %548
        %550 = vrot.lane.b32.xlu0 %v534, 16
        %v551 = vpop.permute.xlu0 %550
        %552 = vrot.lane.b32.xlu0 %v535, 16
        %v553 = vpop.permute.xlu0 %552
        %554 = vrot.lane.b32.xlu0 %v536, 16
        %v555 = vpop.permute.xlu0 %554
        %556 = vrot.lane.b32.xlu0 %v537, 16
        %v557 = vpop.permute.xlu0 %556
        %vm568 = vcmask 257152
        %569 = vst.msk [vmem:[#allocation2] sm:$0xf] %vm568, %v539
        %570 = vst.msk [vmem:[#allocation2 + $0x8] sm:$0xf] %vm568, %v541
        %571 = vst.msk [vmem:[#allocation2 + $0x10] sm:$0xf] %vm568, %v543
        %572 = vst.msk [vmem:[#allocation2 + $0x18] sm:$0xf] %vm568, %v545
        %573 = vst.msk [vmem:[#allocation2 + $0x20] sm:$0xf] %vm568, %v547
        %574 = vst.msk [vmem:[#allocation2 + $0x28] sm:$0xf] %vm568, %v549
        %575 = vst.msk [vmem:[#allocation2 + $0x30] sm:$0xf] %vm568, %v551
        %576 = vst.msk [vmem:[#allocation2 + $0x38] sm:$0xf] %vm568, %v553
        %577 = vst.msk [vmem:[#allocation2 + $0x40] sm:$0xf] %vm568, %v555
        %vm578 = vcmask 256128
        %579 = vst.msk [vmem:[#allocation2 + $0x48] sm:$0x7] %vm578, %v557
        %v580 = vld [vmem:[%s350 + $0x2] sm:$0xff]
        %v581 = vld [vmem:[%s350 + $0xa] sm:$0xff]
        %v582 = vld [vmem:[%s350 + $0x12] sm:$0xff]
        %v583 = vld [vmem:[%s350 + $0x1a] sm:$0xff]
        %v584 = vld [vmem:[%s350 + $0x22] sm:$0xff]
        %v585 = vld [vmem:[%s350 + $0x2a] sm:$0xff]
        %v586 = vld [vmem:[%s350 + $0x32] sm:$0xff]
        %v587 = vld [vmem:[%s350 + $0x3a] sm:$0xff]
        %v588 = vld [vmem:[%s350 + $0x42] sm:$0xff]
        %v589 = vld [vmem:[%s350 + $0x4a] sm:$0x3f]
        %v590 = vpack.c.bf16 %v581, %v580
        %v591 = vpack.c.bf16 %v583, %v582
        %v592 = vpack.c.bf16 %v585, %v584
        %v593 = vpack.c.bf16 %v587, %v586
        %v594 = vpack.c.bf16 %v589, %v588
        %v600 = vunpack.c.l.b16 %v590
        %v601 = vunpack.c.h.b16 %v590
        %v602 = vunpack.c.l.b16 %v591
        %v603 = vunpack.c.h.b16 %v591
        %v604 = vunpack.c.l.b16 %v592
        %v605 = vunpack.c.h.b16 %v592
        %v606 = vunpack.c.l.b16 %v593
        %v607 = vunpack.c.h.b16 %v593
        %v608 = vunpack.c.l.b16 %v594
        %v609 = vunpack.c.h.b16 %v594
        %v610 = vpack.c.b16 %v600, %v600
        %v611 = vpack.c.b16 %v601, %v601
        %v612 = vpack.c.b16 %v602, %v602
        %v613 = vpack.c.b16 %v603, %v603
        %v614 = vpack.c.b16 %v604, %v604
        %v615 = vpack.c.b16 %v605, %v605
        %v616 = vpack.c.b16 %v606, %v606
        %v617 = vpack.c.b16 %v607, %v607
        %v618 = vpack.c.b16 %v608, %v608
        %v619 = vpack.c.b16 %v609, %v609
        %620 = vrot.lane.b32.xlu0 %v610, 32
        %v621 = vpop.permute.xlu0 %620
        %622 = vrot.lane.b32.xlu0 %v611, 32
        %v623 = vpop.permute.xlu0 %622
        %624 = vrot.lane.b32.xlu0 %v612, 32
        %v625 = vpop.permute.xlu0 %624
        %626 = vrot.lane.b32.xlu0 %v613, 32
        %v627 = vpop.permute.xlu0 %626
        %628 = vrot.lane.b32.xlu0 %v614, 32
        %v629 = vpop.permute.xlu0 %628
        %630 = vrot.lane.b32.xlu0 %v615, 32
        %v631 = vpop.permute.xlu0 %630
        %632 = vrot.lane.b32.xlu0 %v616, 32
        %v633 = vpop.permute.xlu0 %632
        %634 = vrot.lane.b32.xlu0 %v617, 32
        %v635 = vpop.permute.xlu0 %634
        %636 = vrot.lane.b32.xlu0 %v618, 32
        %v637 = vpop.permute.xlu0 %636
        %638 = vrot.lane.b32.xlu0 %v619, 32
        %v639 = vpop.permute.xlu0 %638
        %vm650 = vcmask 388352
        %651 = vst.msk [vmem:[#allocation2] sm:$0xf] %vm650, %v621
        %652 = vst.msk [vmem:[#allocation2 + $0x8] sm:$0xf] %vm650, %v623
        %653 = vst.msk [vmem:[#allocation2 + $0x10] sm:$0xf] %vm650, %v625
        %654 = vst.msk [vmem:[#allocation2 + $0x18] sm:$0xf] %vm650, %v627
        %655 = vst.msk [vmem:[#allocation2 + $0x20] sm:$0xf] %vm650, %v629
        %656 = vst.msk [vmem:[#allocation2 + $0x28] sm:$0xf] %vm650, %v631
        %657 = vst.msk [vmem:[#allocation2 + $0x30] sm:$0xf] %vm650, %v633
        %658 = vst.msk [vmem:[#allocation2 + $0x38] sm:$0xf] %vm650, %v635
        %659 = vst.msk [vmem:[#allocation2 + $0x40] sm:$0xf] %vm650, %v637
        %vm660 = vcmask 387328
        %661 = vst.msk [vmem:[#allocation2 + $0x48] sm:$0x7] %vm660, %v639
        %v662 = vld [vmem:[%s350 + $0xa] sm:$0xff]
        %v663 = vld [vmem:[%s350 + $0x12] sm:$0xff]
        %v664 = vld [vmem:[%s350 + $0x1a] sm:$0xff]
        %v665 = vld [vmem:[%s350 + $0x22] sm:$0xff]
        %v666 = vld [vmem:[%s350 + $0x2a] sm:$0xff]
        %v667 = vld [vmem:[%s350 + $0x32] sm:$0xff]
        %v668 = vld [vmem:[%s350 + $0x3a] sm:$0xff]
        %v669 = vld [vmem:[%s350 + $0x42] sm:$0xff]
        %v670 = vld [vmem:[%s350 + $0x4a] sm:$0xff]
        %v671 = vld [vmem:[%s350 + $0x52] sm:$0x3f]
        %v672 = vpack.c.bf16 %v663, %v662
        %v673 = vpack.c.bf16 %v665, %v664
        %v674 = vpack.c.bf16 %v667, %v666
        %v675 = vpack.c.bf16 %v669, %v668
        %v676 = vpack.c.bf16 %v671, %v670
        %v682 = vunpack.c.l.b16 %v672
        %v683 = vunpack.c.h.b16 %v672
        %v684 = vunpack.c.l.b16 %v673
        %v685 = vunpack.c.h.b16 %v673
        %v686 = vunpack.c.l.b16 %v674
        %v687 = vunpack.c.h.b16 %v674
        %v688 = vunpack.c.l.b16 %v675
        %v689 = vunpack.c.h.b16 %v675
        %v690 = vunpack.c.l.b16 %v676
        %v691 = vunpack.c.h.b16 %v676
        %v692 = vpack.c.b16 %v682, %v682
        %v693 = vpack.c.b16 %v683, %v683
        %v694 = vpack.c.b16 %v684, %v684
        %v695 = vpack.c.b16 %v685, %v685
        %v696 = vpack.c.b16 %v686, %v686
        %v697 = vpack.c.b16 %v687, %v687
        %v698 = vpack.c.b16 %v688, %v688
        %v699 = vpack.c.b16 %v689, %v689
        %v700 = vpack.c.b16 %v690, %v690
        %v701 = vpack.c.b16 %v691, %v691
        %702 = vrot.lane.b32.xlu0 %v692, 48
        %v703 = vpop.permute.xlu0 %702
        %704 = vrot.lane.b32.xlu0 %v693, 48
        %v705 = vpop.permute.xlu0 %704
        %706 = vrot.lane.b32.xlu0 %v694, 48
        %v707 = vpop.permute.xlu0 %706
        %708 = vrot.lane.b32.xlu0 %v695, 48
        %v709 = vpop.permute.xlu0 %708
        %710 = vrot.lane.b32.xlu0 %v696, 48
        %v711 = vpop.permute.xlu0 %710
        %712 = vrot.lane.b32.xlu0 %v697, 48
        %v713 = vpop.permute.xlu0 %712
        %714 = vrot.lane.b32.xlu0 %v698, 48
        %v715 = vpop.permute.xlu0 %714
        %716 = vrot.lane.b32.xlu0 %v699, 48
        %v717 = vpop.permute.xlu0 %716
        %718 = vrot.lane.b32.xlu0 %v700, 48
        %v719 = vpop.permute.xlu0 %718
        %720 = vrot.lane.b32.xlu0 %v701, 48
        %v721 = vpop.permute.xlu0 %720
        %vm732 = vcmask 519552
        %733 = vst.msk [vmem:[#allocation2] sm:$0xf] %vm732, %v703
        %734 = vst.msk [vmem:[#allocation2 + $0x8] sm:$0xf] %vm732, %v705
        %735 = vst.msk [vmem:[#allocation2 + $0x10] sm:$0xf] %vm732, %v707
        %736 = vst.msk [vmem:[#allocation2 + $0x18] sm:$0xf] %vm732, %v709
        %737 = vst.msk [vmem:[#allocation2 + $0x20] sm:$0xf] %vm732, %v711
        %738 = vst.msk [vmem:[#allocation2 + $0x28] sm:$0xf] %vm732, %v713
        %739 = vst.msk [vmem:[#allocation2 + $0x30] sm:$0xf] %vm732, %v715
        %740 = vst.msk [vmem:[#allocation2 + $0x38] sm:$0xf] %vm732, %v717
        %741 = vst.msk [vmem:[#allocation2 + $0x40] sm:$0xf] %vm732, %v719
        %vm742 = vcmask 518528
        %743 = vst.msk [vmem:[#allocation2 + $0x48] sm:$0x7] %vm742, %v721
        %v744 = vld [vmem:[%s350 + $0xb] sm:$0xff]
        %v745 = vld [vmem:[%s350 + $0x13] sm:$0xff]
        %v746 = vld [vmem:[%s350 + $0x1b] sm:$0xff]
        %v747 = vld [vmem:[%s350 + $0x23] sm:$0xff]
        %v748 = vld [vmem:[%s350 + $0x2b] sm:$0xff]
        %v749 = vld [vmem:[%s350 + $0x33] sm:$0xff]
        %v750 = vld [vmem:[%s350 + $0x3b] sm:$0xff]
        %v751 = vld [vmem:[%s350 + $0x43] sm:$0xff]
        %v752 = vld [vmem:[%s350 + $0x4b] sm:$0xff]
        %v753 = vld [vmem:[%s350 + $0x53] sm:$0x3f]
        %v754 = vpack.c.bf16 %v745, %v744
        %v755 = vpack.c.bf16 %v747, %v746
        %v756 = vpack.c.bf16 %v749, %v748
        %v757 = vpack.c.bf16 %v751, %v750
        %v758 = vpack.c.bf16 %v753, %v752
        %v764 = vunpack.c.l.b16 %v754
        %v765 = vunpack.c.h.b16 %v754
        %v766 = vunpack.c.l.b16 %v755
        %v767 = vunpack.c.h.b16 %v755
        %v768 = vunpack.c.l.b16 %v756
        %v769 = vunpack.c.h.b16 %v756
        %v770 = vunpack.c.l.b16 %v757
        %v771 = vunpack.c.h.b16 %v757
        %v772 = vunpack.c.l.b16 %v758
        %v773 = vunpack.c.h.b16 %v758
        %v774 = vpack.c.b16 %v764, %v764
        %v775 = vpack.c.b16 %v765, %v765
        %v776 = vpack.c.b16 %v766, %v766
        %v777 = vpack.c.b16 %v767, %v767
        %v778 = vpack.c.b16 %v768, %v768
        %v779 = vpack.c.b16 %v769, %v769
        %v780 = vpack.c.b16 %v770, %v770
        %v781 = vpack.c.b16 %v771, %v771
        %v782 = vpack.c.b16 %v772, %v772
        %v783 = vpack.c.b16 %v773, %v773
        %784 = vrot.lane.b32.xlu0 %v774, 64
        %v785 = vpop.permute.xlu0 %784
        %786 = vrot.lane.b32.xlu0 %v775, 64
        %v787 = vpop.permute.xlu0 %786
        %788 = vrot.lane.b32.xlu0 %v776, 64
        %v789 = vpop.permute.xlu0 %788
        %790 = vrot.lane.b32.xlu0 %v777, 64
        %v791 = vpop.permute.xlu0 %790
        %792 = vrot.lane.b32.xlu0 %v778, 64
        %v793 = vpop.permute.xlu0 %792
        %794 = vrot.lane.b32.xlu0 %v779, 64
        %v795 = vpop.permute.xlu0 %794
        %796 = vrot.lane.b32.xlu0 %v780, 64
        %v797 = vpop.permute.xlu0 %796
        %798 = vrot.lane.b32.xlu0 %v781, 64
        %v799 = vpop.permute.xlu0 %798
        %800 = vrot.lane.b32.xlu0 %v782, 64
        %v801 = vpop.permute.xlu0 %800
        %802 = vrot.lane.b32.xlu0 %v783, 64
        %v803 = vpop.permute.xlu0 %802
        %vm814 = vcmask 650752
        %815 = vst.msk [vmem:[#allocation2] sm:$0xf] %vm814, %v785
        %816 = vst.msk [vmem:[#allocation2 + $0x8] sm:$0xf] %vm814, %v787
        %817 = vst.msk [vmem:[#allocation2 + $0x10] sm:$0xf] %vm814, %v789
        %818 = vst.msk [vmem:[#allocation2 + $0x18] sm:$0xf] %vm814, %v791
        %819 = vst.msk [vmem:[#allocation2 + $0x20] sm:$0xf] %vm814, %v793
        %820 = vst.msk [vmem:[#allocation2 + $0x28] sm:$0xf] %vm814, %v795
        %821 = vst.msk [vmem:[#allocation2 + $0x30] sm:$0xf] %vm814, %v797
        %822 = vst.msk [vmem:[#allocation2 + $0x38] sm:$0xf] %vm814, %v799
        %823 = vst.msk [vmem:[#allocation2 + $0x40] sm:$0xf] %vm814, %v801
        %vm824 = vcmask 649728
        %825 = vst.msk [vmem:[#allocation2 + $0x48] sm:$0x7] %vm824, %v803
        %v826 = vld [vmem:[%s350 + $0xc] sm:$0xff]
        %v827 = vld [vmem:[%s350 + $0x14] sm:$0xff]
        %v828 = vld [vmem:[%s350 + $0x1c] sm:$0xff]
        %v829 = vld [vmem:[%s350 + $0x24] sm:$0xff]
        %v830 = vld [vmem:[%s350 + $0x2c] sm:$0xff]
        %v831 = vld [vmem:[%s350 + $0x34] sm:$0xff]
        %v832 = vld [vmem:[%s350 + $0x3c] sm:$0xff]
        %v833 = vld [vmem:[%s350 + $0x44] sm:$0xff]
        %v834 = vld [vmem:[%s350 + $0x4c] sm:$0xff]
        %v835 = vld [vmem:[%s350 + $0x54] sm:$0x3f]
        %v836 = vpack.c.bf16 %v827, %v826
        %v837 = vpack.c.bf16 %v829, %v828
        %v838 = vpack.c.bf16 %v831, %v830
        %v839 = vpack.c.bf16 %v833, %v832
        %v840 = vpack.c.bf16 %v835, %v834
        %v846 = vunpack.c.l.b16 %v836
        %v847 = vunpack.c.h.b16 %v836
        %v848 = vunpack.c.l.b16 %v837
        %v849 = vunpack.c.h.b16 %v837
        %v850 = vunpack.c.l.b16 %v838
        %v851 = vunpack.c.h.b16 %v838
        %v852 = vunpack.c.l.b16 %v839
        %v853 = vunpack.c.h.b16 %v839
        %v854 = vunpack.c.l.b16 %v840
        %v855 = vunpack.c.h.b16 %v840
        %v856 = vpack.c.b16 %v846, %v846
        %v857 = vpack.c.b16 %v847, %v847
        %v858 = vpack.c.b16 %v848, %v848
        %v859 = vpack.c.b16 %v849, %v849
        %v860 = vpack.c.b16 %v850, %v850
        %v861 = vpack.c.b16 %v851, %v851
        %v862 = vpack.c.b16 %v852, %v852
        %v863 = vpack.c.b16 %v853, %v853
        %v864 = vpack.c.b16 %v854, %v854
        %v865 = vpack.c.b16 %v855, %v855
        %866 = vrot.lane.b32.xlu0 %v856, 80
        %v867 = vpop.permute.xlu0 %866
        %868 = vrot.lane.b32.xlu0 %v857, 80
        %v869 = vpop.permute.xlu0 %868
        %870 = vrot.lane.b32.xlu0 %v858, 80
        %v871 = vpop.permute.xlu0 %870
        %872 = vrot.lane.b32.xlu0 %v859, 80
        %v873 = vpop.permute.xlu0 %872
        %874 = vrot.lane.b32.xlu0 %v860, 80
        %v875 = vpop.permute.xlu0 %874
        %876 = vrot.lane.b32.xlu0 %v861, 80
        %v877 = vpop.permute.xlu0 %876
        %878 = vrot.lane.b32.xlu0 %v862, 80
        %v879 = vpop.permute.xlu0 %878
        %880 = vrot.lane.b32.xlu0 %v863, 80
        %v881 = vpop.permute.xlu0 %880
        %882 = vrot.lane.b32.xlu0 %v864, 80
        %v883 = vpop.permute.xlu0 %882
        %884 = vrot.lane.b32.xlu0 %v865, 80
        %v885 = vpop.permute.xlu0 %884
        %vm896 = vcmask 781952
        %897 = vst.msk [vmem:[#allocation2] sm:$0xf] %vm896, %v867
        %898 = vst.msk [vmem:[#allocation2 + $0x8] sm:$0xf] %vm896, %v869
        %899 = vst.msk [vmem:[#allocation2 + $0x10] sm:$0xf] %vm896, %v871
        %900 = vst.msk [vmem:[#allocation2 + $0x18] sm:$0xf] %vm896, %v873
        %901 = vst.msk [vmem:[#allocation2 + $0x20] sm:$0xf] %vm896, %v875
        %902 = vst.msk [vmem:[#allocation2 + $0x28] sm:$0xf] %vm896, %v877
        %903 = vst.msk [vmem:[#allocation2 + $0x30] sm:$0xf] %vm896, %v879
        %904 = vst.msk [vmem:[#allocation2 + $0x38] sm:$0xf] %vm896, %v881
        %905 = vst.msk [vmem:[#allocation2 + $0x40] sm:$0xf] %vm896, %v883
        %vm906 = vcmask 780928
        %907 = vst.msk [vmem:[#allocation2 + $0x48] sm:$0x7] %vm906, %v885
        %v908 = vld [vmem:[%s350 + $0x14] sm:$0xff]
        %v909 = vld [vmem:[%s350 + $0x1c] sm:$0xff]
        %v910 = vld [vmem:[%s350 + $0x24] sm:$0xff]
        %v911 = vld [vmem:[%s350 + $0x2c] sm:$0xff]
        %v912 = vld [vmem:[%s350 + $0x34] sm:$0xff]
        %v913 = vld [vmem:[%s350 + $0x3c] sm:$0xff]
        %v914 = vld [vmem:[%s350 + $0x44] sm:$0xff]
        %v915 = vld [vmem:[%s350 + $0x4c] sm:$0xff]
        %v916 = vld [vmem:[%s350 + $0x54] sm:$0xff]
        %v917 = vld [vmem:[%s350 + $0x5c] sm:$0x3f]
        %v918 = vpack.c.bf16 %v909, %v908
        %v919 = vpack.c.bf16 %v911, %v910
        %v920 = vpack.c.bf16 %v913, %v912
        %v921 = vpack.c.bf16 %v915, %v914
        %v922 = vpack.c.bf16 %v917, %v916
        %v928 = vunpack.c.l.b16 %v918
        %v929 = vunpack.c.h.b16 %v918
        %v930 = vunpack.c.l.b16 %v919
        %v931 = vunpack.c.h.b16 %v919
        %v932 = vunpack.c.l.b16 %v920
        %v933 = vunpack.c.h.b16 %v920
        %v934 = vunpack.c.l.b16 %v921
        %v935 = vunpack.c.h.b16 %v921
        %v936 = vunpack.c.l.b16 %v922
        %v937 = vunpack.c.h.b16 %v922
        %v938 = vpack.c.b16 %v928, %v928
        %v939 = vpack.c.b16 %v929, %v929
        %v940 = vpack.c.b16 %v930, %v930
        %v941 = vpack.c.b16 %v931, %v931
        %v942 = vpack.c.b16 %v932, %v932
        %v943 = vpack.c.b16 %v933, %v933
        %v944 = vpack.c.b16 %v934, %v934
        %v945 = vpack.c.b16 %v935, %v935
        %v946 = vpack.c.b16 %v936, %v936
        %v947 = vpack.c.b16 %v937, %v937
        %948 = vrot.lane.b32.xlu0 %v938, 96
        %v949 = vpop.permute.xlu0 %948
        %950 = vrot.lane.b32.xlu0 %v939, 96
        %v951 = vpop.permute.xlu0 %950
        %952 = vrot.lane.b32.xlu0 %v940, 96
        %v953 = vpop.permute.xlu0 %952
        %954 = vrot.lane.b32.xlu0 %v941, 96
        %v955 = vpop.permute.xlu0 %954
        %956 = vrot.lane.b32.xlu0 %v942, 96
        %v957 = vpop.permute.xlu0 %956
        %958 = vrot.lane.b32.xlu0 %v943, 96
        %v959 = vpop.permute.xlu0 %958
        %960 = vrot.lane.b32.xlu0 %v944, 96
        %v961 = vpop.permute.xlu0 %960
        %962 = vrot.lane.b32.xlu0 %v945, 96
        %v963 = vpop.permute.xlu0 %962
        %964 = vrot.lane.b32.xlu0 %v946, 96
        %v965 = vpop.permute.xlu0 %964
        %966 = vrot.lane.b32.xlu0 %v947, 96
        %v967 = vpop.permute.xlu0 %966
        %vm978 = vcmask 913152
        %979 = vst.msk [vmem:[#allocation2] sm:$0xf] %vm978, %v949
        %980 = vst.msk [vmem:[#allocation2 + $0x8] sm:$0xf] %vm978, %v951
        %981 = vst.msk [vmem:[#allocation2 + $0x10] sm:$0xf] %vm978, %v953
        %982 = vst.msk [vmem:[#allocation2 + $0x18] sm:$0xf] %vm978, %v955
        %983 = vst.msk [vmem:[#allocation2 + $0x20] sm:$0xf] %vm978, %v957
        %984 = vst.msk [vmem:[#allocation2 + $0x28] sm:$0xf] %vm978, %v959
        %985 = vst.msk [vmem:[#allocation2 + $0x30] sm:$0xf] %vm978, %v961
        %986 = vst.msk [vmem:[#allocation2 + $0x38] sm:$0xf] %vm978, %v963
        %987 = vst.msk [vmem:[#allocation2 + $0x40] sm:$0xf] %vm978, %v965
        %vm988 = vcmask 912128
        %989 = vst.msk [vmem:[#allocation2 + $0x48] sm:$0x7] %vm988, %v967
        %v990 = vld [vmem:[%s350 + $0x15] sm:$0xff]
        %v991 = vld [vmem:[%s350 + $0x1d] sm:$0xff]
        %v992 = vld [vmem:[%s350 + $0x25] sm:$0xff]
        %v993 = vld [vmem:[%s350 + $0x2d] sm:$0xff]
        %v994 = vld [vmem:[%s350 + $0x35] sm:$0xff]
        %v995 = vld [vmem:[%s350 + $0x3d] sm:$0xff]
        %v996 = vld [vmem:[%s350 + $0x45] sm:$0xff]
        %v997 = vld [vmem:[%s350 + $0x4d] sm:$0xff]
        %v998 = vld [vmem:[%s350 + $0x55] sm:$0xff]
        %v999 = vld [vmem:[%s350 + $0x5d] sm:$0x3f]
        %v1000 = vpack.c.bf16 %v991, %v990
        %v1001 = vpack.c.bf16 %v993, %v992
        %v1002 = vpack.c.bf16 %v995, %v994
        %v1003 = vpack.c.bf16 %v997, %v996
        %v1004 = vpack.c.bf16 %v999, %v998
        %v1010 = vunpack.c.l.b16 %v1000
        %v1011 = vunpack.c.h.b16 %v1000
        %v1012 = vunpack.c.l.b16 %v1001
        %v1013 = vunpack.c.h.b16 %v1001
        %v1014 = vunpack.c.l.b16 %v1002
        %v1015 = vunpack.c.h.b16 %v1002
        %v1016 = vunpack.c.l.b16 %v1003
        %v1017 = vunpack.c.h.b16 %v1003
        %v1018 = vunpack.c.l.b16 %v1004
        %v1019 = vunpack.c.h.b16 %v1004
        %v1020 = vpack.c.b16 %v1010, %v1010
        %v1021 = vpack.c.b16 %v1011, %v1011
        %v1022 = vpack.c.b16 %v1012, %v1012
        %v1023 = vpack.c.b16 %v1013, %v1013
        %v1024 = vpack.c.b16 %v1014, %v1014
        %v1025 = vpack.c.b16 %v1015, %v1015
        %v1026 = vpack.c.b16 %v1016, %v1016
        %v1027 = vpack.c.b16 %v1017, %v1017
        %v1028 = vpack.c.b16 %v1018, %v1018
        %v1029 = vpack.c.b16 %v1019, %v1019
        %1030 = vrot.lane.b32.xlu0 %v1020, 112
        %v1031 = vpop.permute.xlu0 %1030
        %1032 = vrot.lane.b32.xlu0 %v1021, 112
        %v1033 = vpop.permute.xlu0 %1032
        %1034 = vrot.lane.b32.xlu0 %v1022, 112
        %v1035 = vpop.permute.xlu0 %1034
        %1036 = vrot.lane.b32.xlu0 %v1023, 112
        %v1037 = vpop.permute.xlu0 %1036
        %1038 = vrot.lane.b32.xlu0 %v1024, 112
        %v1039 = vpop.permute.xlu0 %1038
        %1040 = vrot.lane.b32.xlu0 %v1025, 112
        %v1041 = vpop.permute.xlu0 %1040
        %1042 = vrot.lane.b32.xlu0 %v1026, 112
        %v1043 = vpop.permute.xlu0 %1042
        %1044 = vrot.lane.b32.xlu0 %v1027, 112
        %v1045 = vpop.permute.xlu0 %1044
        %1046 = vrot.lane.b32.xlu0 %v1028, 112
        %v1047 = vpop.permute.xlu0 %1046
        %1048 = vrot.lane.b32.xlu0 %v1029, 112
        %v1049 = vpop.permute.xlu0 %1048
        %vm1060 = vcmask 1044352
        %1061 = vst.msk [vmem:[#allocation2] sm:$0xf] %vm1060, %v1031
        %1062 = vst.msk [vmem:[#allocation2 + $0x8] sm:$0xf] %vm1060, %v1033
        %1063 = vst.msk [vmem:[#allocation2 + $0x10] sm:$0xf] %vm1060, %v1035
        %1064 = vst.msk [vmem:[#allocation2 + $0x18] sm:$0xf] %vm1060, %v1037
        %1065 = vst.msk [vmem:[#allocation2 + $0x20] sm:$0xf] %vm1060, %v1039
        %1066 = vst.msk [vmem:[#allocation2 + $0x28] sm:$0xf] %vm1060, %v1041
        %1067 = vst.msk [vmem:[#allocation2 + $0x30] sm:$0xf] %vm1060, %v1043
        %1068 = vst.msk [vmem:[#allocation2 + $0x38] sm:$0xf] %vm1060, %v1045
        %1069 = vst.msk [vmem:[#allocation2 + $0x40] sm:$0xf] %vm1060, %v1047
        %vm1070 = vcmask 1043328
        %1071 = vst.msk [vmem:[#allocation2 + $0x48] sm:$0x7] %vm1070, %v1049
        %v1072 = vld [vmem:[%s350 + $0x16] sm:$0xff]
        %v1073 = vld [vmem:[%s350 + $0x1e] sm:$0xff]
        %v1074 = vld [vmem:[%s350 + $0x26] sm:$0xff]
        %v1075 = vld [vmem:[%s350 + $0x2e] sm:$0xff]
        %v1076 = vld [vmem:[%s350 + $0x36] sm:$0xff]
        %v1077 = vld [vmem:[%s350 + $0x3e] sm:$0xff]
        %v1078 = vld [vmem:[%s350 + $0x46] sm:$0xff]
        %v1079 = vld [vmem:[%s350 + $0x4e] sm:$0xff]
        %v1080 = vld [vmem:[%s350 + $0x56] sm:$0xff]
        %v1081 = vld [vmem:[%s350 + $0x5e] sm:$0x3f]
        %v1082 = vpack.c.bf16 %v1073, %v1072
        %v1083 = vpack.c.bf16 %v1075, %v1074
        %v1084 = vpack.c.bf16 %v1077, %v1076
        %v1085 = vpack.c.bf16 %v1079, %v1078
        %v1086 = vpack.c.bf16 %v1081, %v1080
        %v1092 = vunpack.c.l.b16 %v1082
        %v1093 = vunpack.c.h.b16 %v1082
        %v1094 = vunpack.c.l.b16 %v1083
        %v1095 = vunpack.c.h.b16 %v1083
        %v1096 = vunpack.c.l.b16 %v1084
        %v1097 = vunpack.c.h.b16 %v1084
        %v1098 = vunpack.c.l.b16 %v1085
        %v1099 = vunpack.c.h.b16 %v1085
        %v1100 = vunpack.c.l.b16 %v1086
        %v1101 = vunpack.c.h.b16 %v1086
        %v1102 = vpack.c.b16 %v1092, %v1092
        %v1103 = vpack.c.b16 %v1093, %v1093
        %v1104 = vpack.c.b16 %v1094, %v1094
        %v1105 = vpack.c.b16 %v1095, %v1095
        %v1106 = vpack.c.b16 %v1096, %v1096
        %v1107 = vpack.c.b16 %v1097, %v1097
        %v1108 = vpack.c.b16 %v1098, %v1098
        %v1109 = vpack.c.b16 %v1099, %v1099
        %v1110 = vpack.c.b16 %v1100, %v1100
        %v1111 = vpack.c.b16 %v1101, %v1101
        %1122 = vst.msk [vmem:[#allocation2 + $0x4] sm:$0xf] %vm486, %v1102
        %1123 = vst.msk [vmem:[#allocation2 + $0xc] sm:$0xf] %vm486, %v1103
        %1124 = vst.msk [vmem:[#allocation2 + $0x14] sm:$0xf] %vm486, %v1104
        %1125 = vst.msk [vmem:[#allocation2 + $0x1c] sm:$0xf] %vm486, %v1105
        %1126 = vst.msk [vmem:[#allocation2 + $0x24] sm:$0xf] %vm486, %v1106
        %1127 = vst.msk [vmem:[#allocation2 + $0x2c] sm:$0xf] %vm486, %v1107
        %1128 = vst.msk [vmem:[#allocation2 + $0x34] sm:$0xf] %vm486, %v1108
        %1129 = vst.msk [vmem:[#allocation2 + $0x3c] sm:$0xf] %vm486, %v1109
        %1130 = vst.msk [vmem:[#allocation2 + $0x44] sm:$0xf] %vm486, %v1110
        %1131 = vst.msk [vmem:[#allocation2 + $0x4c] sm:$0x7] %vm496, %v1111
        %v1132 = vld [vmem:[#allocation2] sm:$0xff]
        %v1133 = vld [vmem:[#allocation2 + $0x8] sm:$0xff]
        %v1134 = vld [vmem:[#allocation2 + $0x10] sm:$0xff]
        %v1135 = vld [vmem:[#allocation2 + $0x18] sm:$0xff]
        %v1136 = vld [vmem:[#allocation2 + $0x20] sm:$0xff]
        %v1137 = vld [vmem:[#allocation2 + $0x28] sm:$0xff]
        %v1138 = vld [vmem:[#allocation2 + $0x30] sm:$0xff]
        %v1139 = vld [vmem:[#allocation2 + $0x38] sm:$0xff]
        %v1140 = vld [vmem:[#allocation2 + $0x40] sm:$0xff]
        %v1141 = vld [vmem:[#allocation2 + $0x48] sm:$0x77]
        %v1142 = vld [vmem:[#allocation10] sm:$0xf]
        %v1143 = vld [vmem:[#allocation10 + $0x4] sm:$0xf]
        %v1144 = vld [vmem:[#allocation10 + $0x8] sm:$0xf]
        %v1145 = vld [vmem:[#allocation10 + $0xc] sm:$0xf]
        %v1146 = vld [vmem:[#allocation10 + $0x10] sm:$0xf]
        %v1147 = vld [vmem:[#allocation10 + $0x14] sm:$0xf]
        %v1148 = vld [vmem:[#allocation10 + $0x18] sm:$0xf]
        %v1149 = vld [vmem:[#allocation10 + $0x1c] sm:$0xf]
        %v1150 = vld [vmem:[#allocation10 + $0x20] sm:$0xf]
        %v1151 = vld [vmem:[#allocation10 + $0x24] sm:$0xf]
        %v1152 = vld [vmem:[#allocation10 + $0x28] sm:$0xf]
        %v1153 = vld [vmem:[#allocation10 + $0x2c] sm:$0xf]
        %v1154 = vld [vmem:[#allocation10 + $0x30] sm:$0xf]
        %v1155 = vld [vmem:[#allocation10 + $0x34] sm:$0xf]
        %v1156 = vld [vmem:[#allocation10 + $0x38] sm:$0xf]
        %v1157 = vld [vmem:[#allocation10 + $0x3c] sm:$0xf]
        %v1158 = vld [vmem:[#allocation10 + $0x40] sm:$0xf]
        %v1159 = vld [vmem:[#allocation10 + $0x44] sm:$0xf]
        %v1160 = vld [vmem:[#allocation11] sm:$0x1]
        %v1162 = vlaneseq
        %v1163 = vshrl.u32 %v1162, 7
        %v1164 = vsub.s32 0, %v1163
        %v1165 = vrot.slane %v1160, %v1164
        %v1177 = vunpack.c.l.b16 %v1132
        %v1178 = vunpack.c.h.b16 %v1132
        %v1179 = vunpack.c.l.b16 %v1133
        %v1180 = vunpack.c.h.b16 %v1133
        %v1181 = vunpack.c.l.b16 %v1134
        %v1182 = vunpack.c.h.b16 %v1134
        %v1183 = vunpack.c.l.b16 %v1135
        %v1184 = vunpack.c.h.b16 %v1135
        %v1185 = vunpack.c.l.b16 %v1136
        %v1186 = vunpack.c.h.b16 %v1136
        %v1187 = vunpack.c.l.b16 %v1137
        %v1188 = vunpack.c.h.b16 %v1137
        %v1189 = vunpack.c.l.b16 %v1138
        %v1190 = vunpack.c.h.b16 %v1138
        %v1191 = vunpack.c.l.b16 %v1139
        %v1192 = vunpack.c.h.b16 %v1139
        %v1193 = vunpack.c.l.b16 %v1140
        %v1194 = vunpack.c.h.b16 %v1140
        %v1195 = vunpack.c.l.b16 %v1141
        %v1196 = vunpack.c.h.b16 %v1141
        %v1197 = vpack.c.b16 %v1179, %v1177
        %v1198 = vpack.c.b16 %v1180, %v1178
        %v1199 = vpack.c.b16 %v1183, %v1181
        %v1200 = vpack.c.b16 %v1184, %v1182
        %v1201 = vpack.c.b16 %v1187, %v1185
        %v1202 = vpack.c.b16 %v1188, %v1186
        %v1203 = vpack.c.b16 %v1191, %v1189
        %v1204 = vpack.c.b16 %v1192, %v1190
        %v1205 = vpack.c.b16 %v1195, %v1193
        %v1206 = vpack.c.b16 %v1196, %v1194
        %v1230 = vunpack.c.l.b16 %v1142
        %v1231 = vunpack.c.l.b16 %v1143
        %v1232 = vunpack.c.l.b16 %v1144
        %v1233 = vunpack.c.l.b16 %v1145
        %v1234 = vunpack.c.l.b16 %v1146
        %v1235 = vunpack.c.l.b16 %v1147
        %v1236 = vunpack.c.l.b16 %v1148
        %v1237 = vunpack.c.l.b16 %v1149
        %v1238 = vunpack.c.l.b16 %v1150
        %v1239 = vunpack.c.l.b16 %v1151
        %v1240 = vunpack.c.l.b16 %v1152
        %v1241 = vunpack.c.l.b16 %v1153
        %v1242 = vunpack.c.l.b16 %v1154
        %v1243 = vunpack.c.l.b16 %v1155
        %v1244 = vunpack.c.l.b16 %v1156
        %v1245 = vunpack.c.l.b16 %v1157
        %v1246 = vunpack.c.l.b16 %v1158
        %v1247 = vunpack.c.l.b16 %v1159
        %v1248 = vpack.c.b16 %v1231, %v1230
        %v1249 = vpack.c.b16 %v1233, %v1232
        %v1250 = vpack.c.b16 %v1235, %v1234
        %v1251 = vpack.c.b16 %v1237, %v1236
        %v1252 = vpack.c.b16 %v1239, %v1238
        %v1253 = vpack.c.b16 %v1241, %v1240
        %v1254 = vpack.c.b16 %v1243, %v1242
        %v1255 = vpack.c.b16 %v1245, %v1244
        %v1256 = vpack.c.b16 %v1247, %v1246
        %vm1266 = vcmask 130048
        %v1268 = vsel %vm1266, %v1198, 0
        %v1271 = vsel %vm1266, %v1200, 0
        %v1274 = vsel %vm1266, %v1202, 0
        %v1277 = vsel %vm1266, %v1204, 0
        %v1280 = vsel %vm1266, %v1206, 0
        %1282 = vmatprep.subr.bf16.mxu0 0
        %1283 = vmatpush1.bf16.msra.mxu0 %v1248
        %1284 = vmatprep.subr.bf16.mxu0 0
        %1285 = vmatpush1.bf16.msra.mxu0 %v1249
        %1286 = vmatprep.subr.bf16.mxu0 0
        %1287 = vmatpush1.bf16.msra.mxu0 %v1250
        %1288 = vmatprep.subr.bf16.mxu0 0
        %1289 = vmatpush1.bf16.msra.mxu0 %v1251
        %1290 = vmatprep.subr.bf16.mxu0 0
        %1291 = vmatpush1.bf16.msra.mxu0 %v1252
        %1292 = vmatprep.subr.bf16.mxu0 0
        %1293 = vmatpush1.bf16.msra.mxu0 %v1253
        %1294 = vmatprep.subr.bf16.mxu0 0
        %1295 = vmatpush1.bf16.msra.mxu0 %v1254
        %1296 = vmatprep.subr.bf16.mxu0 0
        %1297 = vmatpush1.bf16.msra.mxu0 %v1255
        %1298 = vmatprep.subr.bf16.mxu0 0
        %1299 = vmatpush1.bf16.msra.mxu0 %v1256
        %1300 = vmatprep.subr.bf16.mxu0 0
        %1301 = vmatpush1.bf16.msra.mxu0 0
        %1302 = vmatprep.subr.bf16.mxu0 0
        %1303 = vmatpush1.bf16.msra.mxu0 0
        %1304 = vmatprep.subr.bf16.mxu0 0
        %1305 = vmatpush1.bf16.msra.mxu0 0
        %1306 = vmatprep.subr.bf16.mxu0 0
        %1307 = vmatpush1.bf16.msra.mxu0 0
        %1308 = vmatprep.subr.bf16.mxu0 0
        %1309 = vmatpush1.bf16.msra.mxu0 0
        %1310 = vmatprep.subr.bf16.mxu0 0
        %1311 = vmatpush1.bf16.msra.mxu0 0
        %1312 = vmatprep.subr.bf16.mxu0 0
        %1313 = vmatpush1.bf16.msra.mxu0 0
        %1314 = vmatprep.mubr.bf16.mxu0 %v1268
        %1315 = vmatmul.mubr.bf16.gmra.mrb[0].mxu0 %v1197
        %v1316 = vpop.f32.mrb[0].mxu0
        %v1317 = vadd.f32 %v1165, %v1316
        %v1318 = vpop.f32.mrb[0].mxu0
        %v1319 = vpop.f32.mrb[0].mxu0
        %v1320 = vadd.f32 %v1165, %v1319
        %v1321 = vpop.f32.mrb[0].mxu0
        %1322 = vmatprep.mubr.bf16.mxu0 %v1271
        %1323 = vmatmul.mubr.bf16.gmra.mrb[0].mxu0 %v1199
        %v1324 = vpop.f32.mrb[0].mxu0
        %v1325 = vadd.f32 %v1165, %v1324
        %v1326 = vpop.f32.mrb[0].mxu0
        %v1327 = vpop.f32.mrb[0].mxu0
        %v1328 = vadd.f32 %v1165, %v1327
        %v1329 = vpop.f32.mrb[0].mxu0
        %1330 = vmatprep.mubr.bf16.mxu0 %v1274
        %1331 = vmatmul.mubr.bf16.gmra.mrb[0].mxu0 %v1201
        %v1332 = vpop.f32.mrb[0].mxu0
        %v1333 = vadd.f32 %v1165, %v1332
        %v1334 = vpop.f32.mrb[0].mxu0
        %v1335 = vpop.f32.mrb[0].mxu0
        %v1336 = vadd.f32 %v1165, %v1335
        %v1337 = vpop.f32.mrb[0].mxu0
        %1338 = vmatprep.mubr.bf16.mxu0 %v1277
        %1339 = vmatmul.mubr.bf16.gmra.mrb[0].mxu0 %v1203
        %v1340 = vpop.f32.mrb[0].mxu0
        %v1341 = vadd.f32 %v1165, %v1340
        %v1342 = vpop.f32.mrb[0].mxu0
        %v1343 = vpop.f32.mrb[0].mxu0
        %v1344 = vadd.f32 %v1165, %v1343
        %v1345 = vpop.f32.mrb[0].mxu0
        %1346 = vmatprep.mubr.bf16.mxu0 %v1280
        %1347 = vmatmul.mubr.bf16.gmra.mrb[0].mxu0 %v1205
        %v1348 = vpop.f32.mrb[0].mxu0
        %v1349 = vadd.f32 %v1165, %v1348
        %v1350 = vpop.f32.mrb[0].mxu0
        %v1351 = vpop.f32.mrb[0].mxu0
        %v1352 = vadd.f32 %v1165, %v1351
        %v1353 = vpop.f32.mrb[0].mxu0
        %1354 = vdwg.mxu0
        %vm1355 = vcmask 64512
        %1356 = vst.msk [vmem:[#allocation3] sm:$0xff] %vm1355, 0.0
        %vm1357 = vcmask 59392
        %1358 = vst.msk [vmem:[#allocation3 + $0x8] sm:$0x7] %vm1357, 0.0
        %1359 = vst.msk [vmem:[#allocation3 + $0x59] sm:$0xff] %vm1355, 0.0
        %1360 = vst.msk [vmem:[#allocation3 + $0x61] sm:$0x7] %vm1357, 0.0
        %1362 = vset.pattern.permute.xlu0 0
        %1363 = vperm.xlu0 %1362, %v426
        %v1364 = vpop.permute.xlu0 %1363
        %1367 = vset.pattern.permute.xlu0 0
        %1368 = vperm.xlu0 %1367, %v427
        %v1369 = vpop.permute.xlu0 %1368
        %1372 = vset.pattern.permute.xlu0 0
        %1373 = vperm.xlu0 %1372, %v428
        %v1374 = vpop.permute.xlu0 %1373
        %1377 = vset.pattern.permute.xlu0 0
        %1378 = vperm.xlu0 %1377, %v429
        %v1379 = vpop.permute.xlu0 %1378
        %1382 = vset.pattern.permute.xlu0 0
        %1383 = vperm.xlu0 %1382, %v430
        %v1384 = vpop.permute.xlu0 %1383
        %1387 = vset.pattern.permute.xlu0 0
        %1388 = vperm.xlu0 %1387, %v431
        %v1389 = vpop.permute.xlu0 %1388
        %1392 = vset.pattern.permute.xlu0 0
        %1393 = vperm.xlu0 %1392, %v432
        %v1394 = vpop.permute.xlu0 %1393
        %1397 = vset.pattern.permute.xlu0 0
        %1398 = vperm.xlu0 %1397, %v433
        %v1399 = vpop.permute.xlu0 %1398
        %1402 = vset.pattern.permute.xlu0 0
        %1403 = vperm.xlu0 %1402, %v434
        %v1404 = vpop.permute.xlu0 %1403
        %1407 = vset.pattern.permute.xlu0 0
        %1408 = vperm.xlu0 %1407, %v435
        %v1409 = vpop.permute.xlu0 %1408
        %v1411 = vmul.f32 %v1317, %v1364
        %v1412 = vmul.f32 %v1320, %v1369
        %v1413 = vmul.f32 %v1325, %v1374
        %v1414 = vmul.f32 %v1328, %v1379
        %v1415 = vmul.f32 %v1333, %v1384
        %v1416 = vmul.f32 %v1336, %v1389
        %v1417 = vmul.f32 %v1341, %v1394
        %v1418 = vmul.f32 %v1344, %v1399
        %v1419 = vmul.f32 %v1349, %v1404
        %v1420 = vmul.f32 %v1352, %v1409
        %1421 = vst.msk [vmem:[#allocation3 + $0xb] sm:$0xff] %vm1355, %v1411
        %1422 = vst.msk [vmem:[#allocation3 + $0x13] sm:$0xff] %vm1355, %v1412
        %1423 = vst.msk [vmem:[#allocation3 + $0x1b] sm:$0xff] %vm1355, %v1413
        %1424 = vst.msk [vmem:[#allocation3 + $0x23] sm:$0xff] %vm1355, %v1414
        %1425 = vst.msk [vmem:[#allocation3 + $0x2b] sm:$0xff] %vm1355, %v1415
        %1426 = vst.msk [vmem:[#allocation3 + $0x33] sm:$0xff] %vm1355, %v1416
        %1427 = vst.msk [vmem:[#allocation3 + $0x3b] sm:$0xff] %vm1355, %v1417
        %1428 = vst.msk [vmem:[#allocation3 + $0x43] sm:$0xff] %vm1355, %v1418
        %1429 = vst.msk [vmem:[#allocation3 + $0x4b] sm:$0xff] %vm1355, %v1419
        %vm1430 = vcmask 62464
        %1431 = vst.msk [vmem:[#allocation3 + $0x53] sm:$0x3f] %vm1430, %v1420
        %v1432 = vld [vmem:[#allocation3] sm:$0xff]
        %v1433 = vld [vmem:[#allocation3 + $0x8] sm:$0xff]
        %v1434 = vld [vmem:[#allocation3 + $0x10] sm:$0xff]
        %v1435 = vld [vmem:[#allocation3 + $0x18] sm:$0xff]
        %v1436 = vld [vmem:[#allocation3 + $0x20] sm:$0xff]
        %v1437 = vld [vmem:[#allocation3 + $0x28] sm:$0xff]
        %v1438 = vld [vmem:[#allocation3 + $0x30] sm:$0xff]
        %v1439 = vld [vmem:[#allocation3 + $0x38] sm:$0xff]
        %v1440 = vld [vmem:[#allocation3 + $0x40] sm:$0xff]
        %v1441 = vld [vmem:[#allocation3 + $0x48] sm:$0x3f]
        %v1442 = vld [vmem:[#allocation3 + $0x2] sm:$0xff]
        %v1443 = vld [vmem:[#allocation3 + $0xa] sm:$0xff]
        %v1444 = vld [vmem:[#allocation3 + $0x12] sm:$0xff]
        %v1445 = vld [vmem:[#allocation3 + $0x1a] sm:$0xff]
        %v1446 = vld [vmem:[#allocation3 + $0x22] sm:$0xff]
        %v1447 = vld [vmem:[#allocation3 + $0x2a] sm:$0xff]
        %v1448 = vld [vmem:[#allocation3 + $0x32] sm:$0xff]
        %v1449 = vld [vmem:[#allocation3 + $0x3a] sm:$0xff]
        %v1450 = vld [vmem:[#allocation3 + $0x42] sm:$0xff]
        %v1451 = vld [vmem:[#allocation3 + $0x4a] sm:$0x3f]
        %v1452 = vadd.f32 %v1432, %v1442
        %v1453 = vadd.f32 %v1433, %v1443
        %v1454 = vadd.f32 %v1434, %v1444
        %v1455 = vadd.f32 %v1435, %v1445
        %v1456 = vadd.f32 %v1436, %v1446
        %v1457 = vadd.f32 %v1437, %v1447
        %v1458 = vadd.f32 %v1438, %v1448
        %v1459 = vadd.f32 %v1439, %v1449
        %v1460 = vadd.f32 %v1440, %v1450
        %v1461 = vadd.f32 %v1441, %v1451
        %v1462 = vld [vmem:[#allocation3 + $0x14] sm:$0xff]
        %v1463 = vld [vmem:[#allocation3 + $0x1c] sm:$0xff]
        %v1464 = vld [vmem:[#allocation3 + $0x24] sm:$0xff]
        %v1465 = vld [vmem:[#allocation3 + $0x2c] sm:$0xff]
        %v1466 = vld [vmem:[#allocation3 + $0x34] sm:$0xff]
        %v1467 = vld [vmem:[#allocation3 + $0x3c] sm:$0xff]
        %v1468 = vld [vmem:[#allocation3 + $0x44] sm:$0xff]
        %v1469 = vld [vmem:[#allocation3 + $0x4c] sm:$0xff]
        %v1470 = vld [vmem:[#allocation3 + $0x54] sm:$0xff]
        %v1471 = vld [vmem:[#allocation3 + $0x5c] sm:$0x3f]
        %v1472 = vadd.f32 %v1452, %v1462
        %v1473 = vadd.f32 %v1453, %v1463
        %v1474 = vadd.f32 %v1454, %v1464
        %v1475 = vadd.f32 %v1455, %v1465
        %v1476 = vadd.f32 %v1456, %v1466
        %v1477 = vadd.f32 %v1457, %v1467
        %v1478 = vadd.f32 %v1458, %v1468
        %v1479 = vadd.f32 %v1459, %v1469
        %v1480 = vadd.f32 %v1460, %v1470
        %v1481 = vadd.f32 %v1461, %v1471
        %v1482 = vld [vmem:[#allocation3 + $0x16] sm:$0xff]
        %v1483 = vld [vmem:[#allocation3 + $0x1e] sm:$0xff]
        %v1484 = vld [vmem:[#allocation3 + $0x26] sm:$0xff]
        %v1485 = vld [vmem:[#allocation3 + $0x2e] sm:$0xff]
        %v1486 = vld [vmem:[#allocation3 + $0x36] sm:$0xff]
        %v1487 = vld [vmem:[#allocation3 + $0x3e] sm:$0xff]
        %v1488 = vld [vmem:[#allocation3 + $0x46] sm:$0xff]
        %v1489 = vld [vmem:[#allocation3 + $0x4e] sm:$0xff]
        %v1490 = vld [vmem:[#allocation3 + $0x56] sm:$0xff]
        %v1491 = vld [vmem:[#allocation3 + $0x5e] sm:$0x3f]
        %v1492 = vadd.f32 %v1472, %v1482
        %v1493 = vadd.f32 %v1473, %v1483
        %v1494 = vadd.f32 %v1474, %v1484
        %v1495 = vadd.f32 %v1475, %v1485
        %v1496 = vadd.f32 %v1476, %v1486
        %v1497 = vadd.f32 %v1477, %v1487
        %v1498 = vadd.f32 %v1478, %v1488
        %v1499 = vadd.f32 %v1479, %v1489
        %v1500 = vadd.f32 %v1480, %v1490
        %v1501 = vadd.f32 %v1481, %v1491
        %v1502 = vld [vmem:[#allocation3 + $0x1] sm:$0xff]
        %v1503 = vld [vmem:[#allocation3 + $0x9] sm:$0xff]
        %v1504 = vld [vmem:[#allocation3 + $0x11] sm:$0xff]
        %v1505 = vld [vmem:[#allocation3 + $0x19] sm:$0xff]
        %v1506 = vld [vmem:[#allocation3 + $0x21] sm:$0xff]
        %v1507 = vld [vmem:[#allocation3 + $0x29] sm:$0xff]
        %v1508 = vld [vmem:[#allocation3 + $0x31] sm:$0xff]
        %v1509 = vld [vmem:[#allocation3 + $0x39] sm:$0xff]
        %v1510 = vld [vmem:[#allocation3 + $0x41] sm:$0xff]
        %v1511 = vld [vmem:[#allocation3 + $0x49] sm:$0x3f]
        %v1512 = vld [vmem:[#allocation3 + $0x4a] sm:$0xff]
        %v1513 = vld [vmem:[#allocation3 + $0x52] sm:$0x3f]
        %v1514 = vadd.f32 %v1502, %v1443
        %v1515 = vadd.f32 %v1503, %v1444
        %v1516 = vadd.f32 %v1504, %v1445
        %v1517 = vadd.f32 %v1505, %v1446
        %v1518 = vadd.f32 %v1506, %v1447
        %v1519 = vadd.f32 %v1507, %v1448
        %v1520 = vadd.f32 %v1508, %v1449
        %v1521 = vadd.f32 %v1509, %v1450
        %v1522 = vadd.f32 %v1510, %v1512
        %v1523 = vadd.f32 %v1511, %v1513
        %v1524 = vld [vmem:[#allocation3 + $0xc] sm:$0xff]
        %v1525 = vld [vmem:[#allocation3 + $0x54] sm:$0x3f]
        %v1526 = vadd.f32 %v1514, %v1524
        %v1527 = vadd.f32 %v1515, %v1462
        %v1528 = vadd.f32 %v1516, %v1463
        %v1529 = vadd.f32 %v1517, %v1464
        %v1530 = vadd.f32 %v1518, %v1465
        %v1531 = vadd.f32 %v1519, %v1466
        %v1532 = vadd.f32 %v1520, %v1467
        %v1533 = vadd.f32 %v1521, %v1468
        %v1534 = vadd.f32 %v1522, %v1469
        %v1535 = vadd.f32 %v1523, %v1525
        %v1536 = vld [vmem:[#allocation3 + $0x15] sm:$0xff]
        %v1537 = vld [vmem:[#allocation3 + $0x1d] sm:$0xff]
        %v1538 = vld [vmem:[#allocation3 + $0x25] sm:$0xff]
        %v1539 = vld [vmem:[#allocation3 + $0x2d] sm:$0xff]
        %v1540 = vld [vmem:[#allocation3 + $0x35] sm:$0xff]
        %v1541 = vld [vmem:[#allocation3 + $0x3d] sm:$0xff]
        %v1542 = vld [vmem:[#allocation3 + $0x45] sm:$0xff]
        %v1543 = vld [vmem:[#allocation3 + $0x4d] sm:$0xff]
        %v1544 = vld [vmem:[#allocation3 + $0x55] sm:$0xff]
        %v1545 = vld [vmem:[#allocation3 + $0x5d] sm:$0x3f]
        %v1546 = vadd.f32 %v1526, %v1536
        %v1547 = vadd.f32 %v1527, %v1537
        %v1548 = vadd.f32 %v1528, %v1538
        %v1549 = vadd.f32 %v1529, %v1539
        %v1550 = vadd.f32 %v1530, %v1540
        %v1551 = vadd.f32 %v1531, %v1541
        %v1552 = vadd.f32 %v1532, %v1542
        %v1553 = vadd.f32 %v1533, %v1543
        %v1554 = vadd.f32 %v1534, %v1544
        %v1555 = vadd.f32 %v1535, %v1545
        %v1556 = vmul.f32 %v1546, 2.0
        %v1557 = vmul.f32 %v1547, 2.0
        %v1558 = vmul.f32 %v1548, 2.0
        %v1559 = vmul.f32 %v1549, 2.0
        %v1560 = vmul.f32 %v1550, 2.0
        %v1561 = vmul.f32 %v1551, 2.0
        %v1562 = vmul.f32 %v1552, 2.0
        %v1563 = vmul.f32 %v1553, 2.0
        %v1564 = vmul.f32 %v1554, 2.0
        %v1565 = vmul.f32 %v1555, 2.0
        %v1566 = vadd.f32 %v1492, %v1556
        %v1567 = vadd.f32 %v1493, %v1557
        %v1568 = vadd.f32 %v1494, %v1558
        %v1569 = vadd.f32 %v1495, %v1559
        %v1570 = vadd.f32 %v1496, %v1560
        %v1571 = vadd.f32 %v1497, %v1561
        %v1572 = vadd.f32 %v1498, %v1562
        %v1573 = vadd.f32 %v1499, %v1563
        %v1574 = vadd.f32 %v1500, %v1564
        %v1575 = vadd.f32 %v1501, %v1565
        %v1576 = vld [vmem:[#allocation3 + $0xb] sm:$0xff]
        %v1577 = vld [vmem:[#allocation3 + $0x13] sm:$0xff]
        %v1578 = vld [vmem:[#allocation3 + $0x1b] sm:$0xff]
        %v1579 = vld [vmem:[#allocation3 + $0x23] sm:$0xff]
        %v1580 = vld [vmem:[#allocation3 + $0x2b] sm:$0xff]
        %v1581 = vld [vmem:[#allocation3 + $0x33] sm:$0xff]
        %v1582 = vld [vmem:[#allocation3 + $0x3b] sm:$0xff]
        %v1583 = vld [vmem:[#allocation3 + $0x43] sm:$0xff]
        %v1584 = vld [vmem:[#allocation3 + $0x4b] sm:$0xff]
        %v1585 = vld [vmem:[#allocation3 + $0x53] sm:$0x3f]
        %v1586 = vmul.f32 %v1576, 4.0
        %v1587 = vmul.f32 %v1577, 4.0
        %v1588 = vmul.f32 %v1578, 4.0
        %v1589 = vmul.f32 %v1579, 4.0
        %v1590 = vmul.f32 %v1580, 4.0
        %v1591 = vmul.f32 %v1581, 4.0
        %v1592 = vmul.f32 %v1582, 4.0
        %v1593 = vmul.f32 %v1583, 4.0
        %v1594 = vmul.f32 %v1584, 4.0
        %v1595 = vmul.f32 %v1585, 4.0
        %v1596 = vadd.f32 %v1566, %v1586
        %v1597 = vadd.f32 %v1567, %v1587
        %v1598 = vadd.f32 %v1568, %v1588
        %v1599 = vadd.f32 %v1569, %v1589
        %v1600 = vadd.f32 %v1570, %v1590
        %v1601 = vadd.f32 %v1571, %v1591
        %v1602 = vadd.f32 %v1572, %v1592
        %v1603 = vadd.f32 %v1573, %v1593
        %v1604 = vadd.f32 %v1574, %v1594
        %v1605 = vadd.f32 %v1575, %v1595
        %v1606 = vmul.f32 %v1596, 0.0625
        %v1607 = vmul.f32 %v1597, 0.0625
        %v1608 = vmul.f32 %v1598, 0.0625
        %v1609 = vmul.f32 %v1599, 0.0625
        %v1610 = vmul.f32 %v1600, 0.0625
        %v1611 = vmul.f32 %v1601, 0.0625
        %v1612 = vmul.f32 %v1602, 0.0625
        %v1613 = vmul.f32 %v1603, 0.0625
        %v1614 = vmul.f32 %v1604, 0.0625
        %v1615 = vmul.f32 %v1605, 0.0625
        %v1616 = vld [vmem:[%s363 + $0xb] sm:$0xff]
        %v1617 = vld [vmem:[%s363 + $0x13] sm:$0xff]
        %v1618 = vld [vmem:[%s363 + $0x1b] sm:$0xff]
        %v1619 = vld [vmem:[%s363 + $0x23] sm:$0xff]
        %v1620 = vld [vmem:[%s363 + $0x2b] sm:$0xff]
        %v1621 = vld [vmem:[%s363 + $0x33] sm:$0xff]
        %v1622 = vld [vmem:[%s363 + $0x3b] sm:$0xff]
        %v1623 = vld [vmem:[%s363 + $0x43] sm:$0xff]
        %v1624 = vld [vmem:[%s363 + $0x4b] sm:$0xff]
        %v1625 = vld [vmem:[%s363 + $0x53] sm:$0x3f]
        %v1626 = vld [vmem:[#allocation13] sm:$0x1]
        %1628 = vset.pattern.permute.xlu0 0
        %1629 = vperm.xlu0 %1628, %v1616
        %v1630 = vpop.permute.xlu0 %1629
        %1633 = vset.pattern.permute.xlu0 0
        %1634 = vperm.xlu0 %1633, %v1617
        %v1635 = vpop.permute.xlu0 %1634
        %1638 = vset.pattern.permute.xlu0 0
        %1639 = vperm.xlu0 %1638, %v1618
        %v1640 = vpop.permute.xlu0 %1639
        %1643 = vset.pattern.permute.xlu0 0
        %1644 = vperm.xlu0 %1643, %v1619
        %v1645 = vpop.permute.xlu0 %1644
        %1648 = vset.pattern.permute.xlu0 0
        %1649 = vperm.xlu0 %1648, %v1620
        %v1650 = vpop.permute.xlu0 %1649
        %1653 = vset.pattern.permute.xlu0 0
        %1654 = vperm.xlu0 %1653, %v1621
        %v1655 = vpop.permute.xlu0 %1654
        %1658 = vset.pattern.permute.xlu0 0
        %1659 = vperm.xlu0 %1658, %v1622
        %v1660 = vpop.permute.xlu0 %1659
        %1663 = vset.pattern.permute.xlu0 0
        %1664 = vperm.xlu0 %1663, %v1623
        %v1665 = vpop.permute.xlu0 %1664
        %1668 = vset.pattern.permute.xlu0 0
        %1669 = vperm.xlu0 %1668, %v1624
        %v1670 = vpop.permute.xlu0 %1669
        %1673 = vset.pattern.permute.xlu0 0
        %1674 = vperm.xlu0 %1673, %v1625
        %v1675 = vpop.permute.xlu0 %1674
        %v1678 = vlaneseq
        %v1679 = vshrl.u32 %v1678, 7
        %v1680 = vsub.s32 0, %v1679
        %v1681 = vrot.slane %v1626, %v1680
        %v1683 = vmul.f32 %v1630, %v1681
        %v1684 = vmul.f32 %v1635, %v1681
        %v1685 = vmul.f32 %v1640, %v1681
        %v1686 = vmul.f32 %v1645, %v1681
        %v1687 = vmul.f32 %v1650, %v1681
        %v1688 = vmul.f32 %v1655, %v1681
        %v1689 = vmul.f32 %v1660, %v1681
        %v1690 = vmul.f32 %v1665, %v1681
        %v1691 = vmul.f32 %v1670, %v1681
        %v1692 = vmul.f32 %v1675, %v1681
        %v1693 = vadd.f32 %v1606, %v1683
        %v1694 = vadd.f32 %v1607, %v1684
        %v1695 = vadd.f32 %v1608, %v1685
        %v1696 = vadd.f32 %v1609, %v1686
        %v1697 = vadd.f32 %v1610, %v1687
        %v1698 = vadd.f32 %v1611, %v1688
        %v1699 = vadd.f32 %v1612, %v1689
        %v1700 = vadd.f32 %v1613, %v1690
        %v1701 = vadd.f32 %v1614, %v1691
        %v1702 = vadd.f32 %v1615, %v1692
        %v1703 = vmul.f32 %v1693, 0.2
        %v1704 = vmul.f32 %v1694, 0.2
        %v1705 = vmul.f32 %v1695, 0.2
        %v1706 = vmul.f32 %v1696, 0.2
        %v1707 = vmul.f32 %v1697, 0.2
        %v1708 = vmul.f32 %v1698, 0.2
        %v1709 = vmul.f32 %v1699, 0.2
        %v1710 = vmul.f32 %v1700, 0.2
        %v1711 = vmul.f32 %v1701, 0.2
        %v1712 = vmul.f32 %v1702, 0.2
        %v1713 = vmax.f32 %v1693, %v1703
        %v1714 = vmax.f32 %v1694, %v1704
        %v1715 = vmax.f32 %v1695, %v1705
        %v1716 = vmax.f32 %v1696, %v1706
        %v1717 = vmax.f32 %v1697, %v1707
        %v1718 = vmax.f32 %v1698, %v1708
        %v1719 = vmax.f32 %v1699, %v1709
        %v1720 = vmax.f32 %v1700, %v1710
        %v1721 = vmax.f32 %v1701, %v1711
        %v1722 = vmax.f32 %v1702, %v1712
        %v1723 = vmul.f32 %v1713, %v1364
        %v1724 = vmul.f32 %v1714, %v1369
        %v1725 = vmul.f32 %v1715, %v1374
        %v1726 = vmul.f32 %v1716, %v1379
        %v1727 = vmul.f32 %v1717, %v1384
        %v1728 = vmul.f32 %v1718, %v1389
        %v1729 = vmul.f32 %v1719, %v1394
        %v1730 = vmul.f32 %v1720, %v1399
        %v1731 = vmul.f32 %v1721, %v1404
        %v1732 = vmul.f32 %v1722, %v1409
        %v1733 = vsel %vm1355, %v1723, 0.0
        %v1734 = vsel %vm1355, %v1724, 0.0
        %v1735 = vadd.f32 %v1733, %v1734
        %v1736 = vsel %vm1355, %v1725, 0.0
        %v1737 = vadd.f32 %v1735, %v1736
        %v1738 = vsel %vm1355, %v1726, 0.0
        %v1739 = vadd.f32 %v1737, %v1738
        %v1740 = vsel %vm1355, %v1727, 0.0
        %v1741 = vadd.f32 %v1739, %v1740
        %v1742 = vsel %vm1355, %v1728, 0.0
        %v1743 = vadd.f32 %v1741, %v1742
        %v1744 = vsel %vm1355, %v1729, 0.0
        %v1745 = vadd.f32 %v1743, %v1744
        %v1746 = vsel %vm1355, %v1730, 0.0
        %v1747 = vadd.f32 %v1745, %v1746
        %v1748 = vsel %vm1355, %v1731, 0.0
        %v1749 = vadd.f32 %v1747, %v1748
        %v1750 = vsel %vm1430, %v1732, 0.0
        %v1751 = vadd.f32 %v1749, %v1750
        %v1752 = vrot.slane %v1751, 4
        %v1753 = vadd.f32 %v1751, %v1752
        %v1754 = vrot.slane %v1753, 2
        %v1755 = vadd.f32 %v1753, %v1754
        %v1756 = vrot.slane %v1755, 1
        %v1757 = vadd.f32 %v1755, %v1756
        %v1758 = vmul.f32 %v1757, 0.015625
        %v1759 = vsub.f32 %v1713, %v1758
        %v1760 = vsub.f32 %v1714, %v1758
        %v1761 = vsub.f32 %v1715, %v1758
        %v1762 = vsub.f32 %v1716, %v1758
        %v1763 = vsub.f32 %v1717, %v1758
        %v1764 = vsub.f32 %v1718, %v1758
        %v1765 = vsub.f32 %v1719, %v1758
        %v1766 = vsub.f32 %v1720, %v1758
        %v1767 = vsub.f32 %v1721, %v1758
        %v1768 = vsub.f32 %v1722, %v1758
        %v1769 = vmul.f32 %v1759, %v1364
        %v1770 = vmul.f32 %v1760, %v1369
        %v1771 = vmul.f32 %v1761, %v1374
        %v1772 = vmul.f32 %v1762, %v1379
        %v1773 = vmul.f32 %v1763, %v1384
        %v1774 = vmul.f32 %v1764, %v1389
        %v1775 = vmul.f32 %v1765, %v1394
        %v1776 = vmul.f32 %v1766, %v1399
        %v1777 = vmul.f32 %v1767, %v1404
        %v1778 = vmul.f32 %v1768, %v1409
        %v1779 = vmul.f32 %v1769, %v1769
        %v1780 = vmul.f32 %v1770, %v1770
        %v1781 = vmul.f32 %v1771, %v1771
        %v1782 = vmul.f32 %v1772, %v1772
        %v1783 = vmul.f32 %v1773, %v1773
        %v1784 = vmul.f32 %v1774, %v1774
        %v1785 = vmul.f32 %v1775, %v1775
        %v1786 = vmul.f32 %v1776, %v1776
        %v1787 = vmul.f32 %v1777, %v1777
        %v1788 = vmul.f32 %v1778, %v1778
        %v1789 = vsel %vm1355, %v1779, 0.0
        %v1790 = vsel %vm1355, %v1780, 0.0
        %v1791 = vadd.f32 %v1789, %v1790
        %v1792 = vsel %vm1355, %v1781, 0.0
        %v1793 = vadd.f32 %v1791, %v1792
        %v1794 = vsel %vm1355, %v1782, 0.0
        %v1795 = vadd.f32 %v1793, %v1794
        %v1796 = vsel %vm1355, %v1783, 0.0
        %v1797 = vadd.f32 %v1795, %v1796
        %v1798 = vsel %vm1355, %v1784, 0.0
        %v1799 = vadd.f32 %v1797, %v1798
        %v1800 = vsel %vm1355, %v1785, 0.0
        %v1801 = vadd.f32 %v1799, %v1800
        %v1802 = vsel %vm1355, %v1786, 0.0
        %v1803 = vadd.f32 %v1801, %v1802
        %v1804 = vsel %vm1355, %v1787, 0.0
        %v1805 = vadd.f32 %v1803, %v1804
        %v1806 = vsel %vm1430, %v1788, 0.0
        %v1807 = vadd.f32 %v1805, %v1806
        %v1808 = vrot.slane %v1807, 4
        %v1809 = vadd.f32 %v1807, %v1808
        %v1810 = vrot.slane %v1809, 2
        %v1811 = vadd.f32 %v1809, %v1810
        %v1812 = vrot.slane %v1811, 1
        %v1813 = vadd.f32 %v1811, %v1812
        %v1814 = vmul.f32 %v1813, 0.015625
        %v1815 = vadd.f32 %v1814, 1e-05
        %v1816 = vrsqrt.pop %v1815
        %v1817 = vmul.f32 %v1759, %v1816
        %v1818 = vmul.f32 %v1760, %v1816
        %v1819 = vmul.f32 %v1761, %v1816
        %v1820 = vmul.f32 %v1762, %v1816
        %v1821 = vmul.f32 %v1763, %v1816
        %v1822 = vmul.f32 %v1764, %v1816
        %v1823 = vmul.f32 %v1765, %v1816
        %v1824 = vmul.f32 %v1766, %v1816
        %v1825 = vmul.f32 %v1767, %v1816
        %v1826 = vmul.f32 %v1768, %v1816
        %v1827 = vld [vmem:[%s384 + $0x2] sm:$0x1]
        %v1828 = vadd.f32 %v1827, 1.0
        %v1829 = vlaneseq
        %v1830 = vshrl.u32 %v1829, 7
        %v1831 = vsub.s32 0, %v1830
        %v1832 = vrot.slane %v1828, %v1831
        %v1833 = vmul.f32 %v1817, %v1832
        %v1834 = vmul.f32 %v1818, %v1832
        %v1835 = vmul.f32 %v1819, %v1832
        %v1836 = vmul.f32 %v1820, %v1832
        %v1837 = vmul.f32 %v1821, %v1832
        %v1838 = vmul.f32 %v1822, %v1832
        %v1839 = vmul.f32 %v1823, %v1832
        %v1840 = vmul.f32 %v1824, %v1832
        %v1841 = vmul.f32 %v1825, %v1832
        %v1842 = vmul.f32 %v1826, %v1832
        %v1843 = vlaneseq
        %v1844 = vshrl.u32 %v1843, 7
        %v1845 = vsub.s32 0, %v1844
        %v1846 = vrot.slane %v1827, %v1845
        %1848 = vrot.lane.b32.xlu0 %v1846, 120
        %v1849 = vpop.permute.xlu0 %1848
        %v1851 = vadd.f32 %v1833, %v1849
        %v1852 = vadd.f32 %v1834, %v1849
        %v1853 = vadd.f32 %v1835, %v1849
        %v1854 = vadd.f32 %v1836, %v1849
        %v1855 = vadd.f32 %v1837, %v1849
        %v1856 = vadd.f32 %v1838, %v1849
        %v1857 = vadd.f32 %v1839, %v1849
        %v1858 = vadd.f32 %v1840, %v1849
        %v1859 = vadd.f32 %v1841, %v1849
        %v1860 = vadd.f32 %v1842, %v1849
        %1861 = vst.msk [vmem:[%s424] sm:$0xff] %vm1355, 0.0
        %1862 = vst.msk [vmem:[%s424 + $0x8] sm:$0x7] %vm1357, 0.0
        %1863 = vst.msk [vmem:[%s424 + $0x59] sm:$0xff] %vm1355, 0.0
        %1864 = vst.msk [vmem:[%s424 + $0x61] sm:$0x7] %vm1357, 0.0
        %1865 = vst.msk [vmem:[%s424 + $0xb] sm:$0xff] %vm1355, %v1851
        %1866 = vst.msk [vmem:[%s424 + $0x13] sm:$0xff] %vm1355, %v1852
        %1867 = vst.msk [vmem:[%s424 + $0x1b] sm:$0xff] %vm1355, %v1853
        %1868 = vst.msk [vmem:[%s424 + $0x23] sm:$0xff] %vm1355, %v1854
        %1869 = vst.msk [vmem:[%s424 + $0x2b] sm:$0xff] %vm1355, %v1855
        %1870 = vst.msk [vmem:[%s424 + $0x33] sm:$0xff] %vm1355, %v1856
        %1871 = vst.msk [vmem:[%s424 + $0x3b] sm:$0xff] %vm1355, %v1857
        %1872 = vst.msk [vmem:[%s424 + $0x43] sm:$0xff] %vm1355, %v1858
        %1873 = vst.msk [vmem:[%s424 + $0x4b] sm:$0xff] %vm1355, %v1859
        %1874 = vst.msk [vmem:[%s424 + $0x53] sm:$0x3f] %vm1430, %v1860
        %s1875 = sand.u32 %s199, 1
        %s1876 = scalar_lea.sflag [#allocation6], %s1875
        %s1877 = sand.u32 %s199, 1
        %s1878 = smul.addr %s1877, 104
        %s1879 = scalar_lea.vmem [#allocation16], %s1878
        // Predicated region
        $region77: #{generator_forward.13} parent=47 // pred_check
          %p1880 = pneg %p209
        $region78: #{generator_forward.13} parent=47 // pred_check_branch
          %1882 = sbr.rel (%p1880) target = $region80
        $region79: #{generator_forward.13} parent=47 // pred_region
          %s1884 = ssub.s32 1664, 1664
          %1885 = vsyncadd %s1876, %s1884
          %s1886 = smul.addr %s29, 13
          %s1887 = smul.addr %s1886, 128
          %s1888 = scalar_lea.hbm %s7, %s1887
          %s1889 = sshll.u32 %s1879, 4
          %s1890 = int_to_ptr.vmem [resolvable:$true] %s1889
          %1895 = dma.vmem_to_hbm [thread:$0]  %s1890, 1664, %s1888, %s1876, 128, 128, 8
        $region80: #{generator_forward.13} parent=47 // pred_fallthru
          _
      $region48: #{generator_forward.13} parent=5 // pred_fallthru
        _
      %p1896 = scmp.le.s32.totalorder 2, %s24
      // Predicated region
      $region81: #{generator_forward.13} parent=5 // pred_check
        %p1897 = pneg %p1896
      $region82: #{generator_forward.13} parent=5 // pred_check_branch
        %1899 = sbr.rel (%p1897) target = $region84
      $region83: #{generator_forward.13} parent=5 // pred_region
        %s1900 = ssub.s32 %s24, 2
        // Predicated region
        $region85: #{generator_forward.13} parent=83 // pred_check
          %p1901 = pneg %p215
        $region86: #{generator_forward.13} parent=83 // pred_check_branch
          %1903 = sbr.rel (%p1901) target = $region88
        $region87: #{generator_forward.13} parent=83 // pred_region
          %s1904 = sand.u32 %s200, 1
          %s1905 = scalar_lea.sflag [#allocation6], %s1904
          %s1906 = sand.u32 %s200, 1
          %s1907 = smul.addr %s1906, 104
          %s1908 = scalar_lea.vmem [#allocation16], %s1907
          %1909 = dma.done %s1905, 1664
        $region88: #{generator_forward.13} parent=83 // pred_fallthru
          _
      $region84: #{generator_forward.13} parent=5 // pred_fallthru
        _
    $region6: #{generator_forward.13} parent=1 // loop_footer
      %s28 = sadd.s32 1, %s24
    $region7: #{generator_forward.13} parent=1 // loop_footer_branch
      %23 = sbr.rel target = $region3
    $region8: #{generator_forward.13} parent=1 // loop_exit
      _
    %1910 = vsyncpa [#allocation5], 1
    %s1911 = scalar_lea.sflag [#allocation5], 1
    %1912 = vsyncpa %s1911, 1
    %1913 = vsyncpa [#allocation8], 1
    %1914 = vsyncpa [#allocation12], 1
    %1915 = vsyncpa [#allocation15], 1
    %s1916 = scalar_lea.sflag [#allocation15], 1
    %1917 = vsyncpa %s1916, 1
    %1918 = vsyncpa [#allocation6], 1
    %s1919 = scalar_lea.sflag [#allocation6], 1
    %1920 = vsyncpa %s1919, 1

// kernel: generator_forward.14
$region0: #{generator_forward.14}
  #allocation0 [shape = 'u32[]', space=smem, size = 0x4, offset = 0x4, fixed_abs, tag = 'smem constant byte address 0x4 - core index']
  #allocation1 [shape = 'u32[144,128]{1,0:T(1,128)}', space=vmem, size = 0x12000, scoped, tag = 'internal scratch']
  #allocation2 [shape = 'bf16[78,72]{1,0:T(8,128)(2,1)}', space=vmem, size = 0x5000, scoped, tag = 'scratch operand']
  %s0 = inlined_call_operand.hbm [shape: f32[2,100,8], index: 0, kind: input, shape index: {}]
  %s1 = inlined_call_operand.hbm [shape: f32[1,100,1], index: 1, kind: input, shape index: {}]
  %s2 = inlined_call_operand.hbm [shape: f32[2,100,1], index: 2, kind: input, shape index: {}]
  %s3 = inlined_call_operand.hbm [shape: bf16[72,8], index: 3, kind: input, shape index: {}]
  %s4 = inlined_call_operand.hbm [shape: f32[1,8], index: 4, kind: input, shape index: {}]
  %s5 = inlined_call_operand.hbm [shape: f32[1,8], index: 5, kind: input, shape index: {}]
  %s6 = inlined_call_operand.hbm [shape: f32[2,4,32], index: 6, kind: input, shape index: {}]
  %s7 = inlined_call_operand.hbm [shape: f32[2,100,8], index: 7, kind: output, shape index: {}]
  %s8 = sld [smem:[#allocation0]]
  $region89: #{generator_forward.14} parent=0
    _
  %s10 = ssub.s32 1, %s8
  %s11 = scalar_select 0, %s10, %s8
  $region1: #{generator_forward.14} parent=0
    #allocation3 [shape = 'u8[106496]{0}', space=vmem, size = 0x1a000, scoped, tag = 'input window, operand 0']
    #allocation4 [shape = 's32[2]{0}', space=sflag, size = 0x8, scoped, tag = 'scoped memory for generator_forward.14']
    #allocation5 [shape = 's32[2]{0}', space=sflag, size = 0x8, scoped, tag = 'scoped memory for generator_forward.14']
    #allocation6 [shape = 'u8[53248]{0}', space=vmem, size = 0xd000, scoped, tag = 'input window, operand 1, single buffered']
    #allocation7 [shape = 's32[1]{0}', space=sflag, size = 0x4, scoped, tag = 'scoped memory for generator_forward.14']
    #allocation8 [shape = 'u8[106496]{0}', space=vmem, size = 0x1a000, scoped, tag = 'input window, operand 2']
    #allocation9 [shape = 'u8[18432]{0}', space=vmem, size = 0x4800, scoped, tag = 'input window, operand 3, single buffered']
    #allocation10 [shape = 'u8[512]{0}', space=vmem, size = 0x400, scoped, tag = 'input window, operand 4, single buffered']
    #allocation11 [shape = 's32[1]{0}', space=sflag, size = 0x4, scoped, tag = 'scoped memory for generator_forward.14']
    #allocation12 [shape = 'u8[512]{0}', space=vmem, size = 0x400, scoped, tag = 'input window, operand 5, single buffered']
    #allocation13 [shape = 'u8[4096]{0}', space=vmem, size = 0x1000, scoped, tag = 'input window, operand 6']
    #allocation14 [shape = 's32[2]{0}', space=sflag, size = 0x8, scoped, tag = 'scoped memory for generator_forward.14']
    #allocation15 [shape = 'u8[106496]{0}', space=vmem, size = 0x1a000, scoped, tag = 'output window, operand 0']
    %12 = vsyncpa [#allocation4], 0
    %s13 = scalar_lea.sflag [#allocation4], 1
    %14 = vsyncpa %s13, 0
    %15 = vsyncpa [#allocation7], 0
    %16 = vsyncpa [#allocation11], 0
    %17 = vsyncpa [#allocation14], 0
    %s18 = scalar_lea.sflag [#allocation14], 1
    %19 = vsyncpa %s18, 0
    %20 = vsyncpa [#allocation5], 0
    %s21 = scalar_lea.sflag [#allocation5], 1
    %22 = vsyncpa %s21, 0
    loop: start=0, step=1, limit=4
    $region2: #{generator_forward.14} parent=1 // loop_pre_header
      _
    $region3: #{generator_forward.14} parent=1 // loop_header
      %s24 = sphi 0, %s28
      %p25 = scmp.ge.s32.totalorder %s24, 4
      %s34 = sphi 0, %s36
      %s37 = sphi 0, %s34
      %s38 = sphi 0, %s37
      %s54 = sphi 0, %s38
      %s58 = sphi 0, %s58
      %s60 = sphi 0, %s58
      %s61 = sphi 0, %s60
      %s75 = sphi 0, %s61
      %s81 = sphi 0, %s83
      %s84 = sphi 0, %s81
      %s85 = sphi 0, %s84
      %s101 = sphi 0, %s85
      %s105 = sphi 0, %s105
      %s107 = sphi 0, %s105
      %s108 = sphi 0, %s107
      %s122 = sphi 0, %s108
      %s126 = sphi 0, %s126
      %s128 = sphi 0, %s126
      %s129 = sphi 0, %s128
      %s143 = sphi 0, %s129
      %s147 = sphi 0, %s147
      %s149 = sphi 0, %s147
      %s150 = sphi 0, %s149
      %s164 = sphi 0, %s150
      %s170 = sphi 0, %s172
      %s173 = sphi 0, %s170
      %s174 = sphi 0, %s173
      %s190 = sphi 0, %s174
      %s196 = sphi 0, %s198
      %s199 = sphi 0, %s196
      %s200 = sphi 0, %s199
      %s216 = sphi 0, %s200
    $region4: #{generator_forward.14} parent=1 // loop_header_branch
      %27 = sbr.rel (%p25) target = $region8
    $region5: #{generator_forward.14} parent=1 // loop_body
      %s29 = ssub.s32 %s24, 1
      %s30 = ssub.s32 %s24, 2
      %s31 = sadd.s32 %s24, 1
      %s32 = ssub.s32 %s24, %s31
      %p33 = scmp.eq.s32.totalorder %s32, 0
      %s35 = sadd.s32 %s34, 1
      %s36 = scalar_select %p33, %s34, %s35
      %p39 = pneg %p33
      %p40 = scmp.eq.s32.totalorder %s24, 1
      %p41 = por %p39, %p40
      %p42 = scmp.ne.s32.totalorder %s34, %s37
      %p43 = scmp.eq.s32.totalorder %s24, 0
      %p44 = por %p42, %p43
      %p45 = scmp.ne.s32.totalorder %s34, %s37
      %p46 = scmp.eq.s32.totalorder %s29, 1
      %p47 = por %p45, %p46
      %p48 = scmp.ne.s32.totalorder %s37, %s38
      %p49 = scmp.eq.s32.totalorder %s29, 0
      %p50 = por %p48, %p49
      %p51 = scmp.ne.s32.totalorder %s37, %s38
      %p52 = scmp.eq.s32.totalorder %s30, 1
      %p53 = por %p51, %p52
      %p55 = scmp.ne.s32.totalorder %s38, %s54
      %p56 = scmp.eq.s32.totalorder %s30, 0
      %p57 = por %p55, %p56
      %s59 = sadd.s32 %s58, 1
      %p62 = scmp.eq.s32.totalorder %s24, 1
      %p63 = scmp.ne.s32.totalorder %s58, %s60
      %p64 = scmp.eq.s32.totalorder %s24, 0
      %p65 = por %p63, %p64
      %p66 = scmp.ne.s32.totalorder %s58, %s60
      %p67 = scmp.eq.s32.totalorder %s29, 1
      %p68 = por %p66, %p67
      %p69 = scmp.ne.s32.totalorder %s60, %s61
      %p70 = scmp.eq.s32.totalorder %s29, 0
      %p71 = por %p69, %p70
      %p72 = scmp.ne.s32.totalorder %s60, %s61
      %p73 = scmp.eq.s32.totalorder %s30, 1
      %p74 = por %p72, %p73
      %p76 = scmp.ne.s32.totalorder %s61, %s75
      %p77 = scmp.eq.s32.totalorder %s30, 0
      %p78 = por %p76, %p77
      %s79 = ssub.s32 %s24, %s31
      %p80 = scmp.eq.s32.totalorder %s79, 0
      %s82 = sadd.s32 %s81, 1
      %s83 = scalar_select %p80, %s81, %s82
      %p86 = pneg %p80
      %p87 = scmp.eq.s32.totalorder %s24, 1
      %p88 = por %p86, %p87
      %p89 = scmp.ne.s32.totalorder %s81, %s84
      %p90 = scmp.eq.s32.totalorder %s24, 0
      %p91 = por %p89, %p90
      %p92 = scmp.ne.s32.totalorder %s81, %s84
      %p93 = scmp.eq.s32.totalorder %s29, 1
      %p94 = por %p92, %p93
      %p95 = scmp.ne.s32.totalorder %s84, %s85
      %p96 = scmp.eq.s32.totalorder %s29, 0
      %p97 = por %p95, %p96
      %p98 = scmp.ne.s32.totalorder %s84, %s85
      %p99 = scmp.eq.s32.totalorder %s30, 1
      %p100 = por %p98, %p99
      %p102 = scmp.ne.s32.totalorder %s85, %s101
      %p103 = scmp.eq.s32.totalorder %s30, 0
      %p104 = por %p102, %p103
      %s106 = sadd.s32 %s105, 1
      %p109 = scmp.eq.s32.totalorder %s24, 1
      %p110 = scmp.ne.s32.totalorder %s105, %s107
      %p111 = scmp.eq.s32.totalorder %s24, 0
      %p112 = por %p110, %p111
      %p113 = scmp.ne.s32.totalorder %s105, %s107
      %p114 = scmp.eq.s32.totalorder %s29, 1
      %p115 = por %p113, %p114
      %p116 = scmp.ne.s32.totalorder %s107, %s108
      %p117 = scmp.eq.s32.totalorder %s29, 0
      %p118 = por %p116, %p117
      %p119 = scmp.ne.s32.totalorder %s107, %s108
      %p120 = scmp.eq.s32.totalorder %s30, 1
      %p121 = por %p119, %p120
      %p123 = scmp.ne.s32.totalorder %s108, %s122
      %p124 = scmp.eq.s32.totalorder %s30, 0
      %p125 = por %p123, %p124
      %s127 = sadd.s32 %s126, 1
      %p130 = scmp.eq.s32.totalorder %s24, 1
      %p131 = scmp.ne.s32.totalorder %s126, %s128
      %p132 = scmp.eq.s32.totalorder %s24, 0
      %p133 = por %p131, %p132
      %p134 = scmp.ne.s32.totalorder %s126, %s128
      %p135 = scmp.eq.s32.totalorder %s29, 1
      %p136 = por %p134, %p135
      %p137 = scmp.ne.s32.totalorder %s128, %s129
      %p138 = scmp.eq.s32.totalorder %s29, 0
      %p139 = por %p137, %p138
      %p140 = scmp.ne.s32.totalorder %s128, %s129
      %p141 = scmp.eq.s32.totalorder %s30, 1
      %p142 = por %p140, %p141
      %p144 = scmp.ne.s32.totalorder %s129, %s143
      %p145 = scmp.eq.s32.totalorder %s30, 0
      %p146 = por %p144, %p145
      %s148 = sadd.s32 %s147, 1
      %p151 = scmp.eq.s32.totalorder %s24, 1
      %p152 = scmp.ne.s32.totalorder %s147, %s149
      %p153 = scmp.eq.s32.totalorder %s24, 0
      %p154 = por %p152, %p153
      %p155 = scmp.ne.s32.totalorder %s147, %s149
      %p156 = scmp.eq.s32.totalorder %s29, 1
      %p157 = por %p155, %p156
      %p158 = scmp.ne.s32.totalorder %s149, %s150
      %p159 = scmp.eq.s32.totalorder %s29, 0
      %p160 = por %p158, %p159
      %p161 = scmp.ne.s32.totalorder %s149, %s150
      %p162 = scmp.eq.s32.totalorder %s30, 1
      %p163 = por %p161, %p162
      %p165 = scmp.ne.s32.totalorder %s150, %s164
      %p166 = scmp.eq.s32.totalorder %s30, 0
      %p167 = por %p165, %p166
      %s168 = ssub.s32 %s24, %s31
      %p169 = scmp.eq.s32.totalorder %s168, 0
      %s171 = sadd.s32 %s170, 1
      %s172 = scalar_select %p169, %s170, %s171
      %p175 = pneg %p169
      %p176 = scmp.eq.s32.totalorder %s24, 1
      %p177 = por %p175, %p176
      %p178 = scmp.ne.s32.totalorder %s170, %s173
      %p179 = scmp.eq.s32.totalorder %s24, 0
      %p180 = por %p178, %p179
      %p181 = scmp.ne.s32.totalorder %s170, %s173
      %p182 = scmp.eq.s32.totalorder %s29, 1
      %p183 = por %p181, %p182
      %p184 = scmp.ne.s32.totalorder %s173, %s174
      %p185 = scmp.eq.s32.totalorder %s29, 0
      %p186 = por %p184, %p185
      %p187 = scmp.ne.s32.totalorder %s173, %s174
      %p188 = scmp.eq.s32.totalorder %s30, 1
      %p189 = por %p187, %p188
      %p191 = scmp.ne.s32.totalorder %s174, %s190
      %p192 = scmp.eq.s32.totalorder %s30, 0
      %p193 = por %p191, %p192
      %s194 = ssub.s32 %s24, %s31
      %p195 = scmp.eq.s32.totalorder %s194, 0
      %s197 = sadd.s32 %s196, 1
      %s198 = scalar_select %p195, %s196, %s197
      %p201 = pneg %p195
      %p202 = scmp.eq.s32.totalorder %s24, 1
      %p203 = por %p201, %p202
      %p204 = scmp.ne.s32.totalorder %s196, %s199
      %p205 = scmp.eq.s32.totalorder %s24, 0
      %p206 = por %p204, %p205
      %p207 = scmp.ne.s32.totalorder %s196, %s199
      %p208 = scmp.eq.s32.totalorder %s29, 1
      %p209 = por %p207, %p208
      %p210 = scmp.ne.s32.totalorder %s199, %s200
      %p211 = scmp.eq.s32.totalorder %s29, 0
      %p212 = por %p210, %p211
      %p213 = scmp.ne.s32.totalorder %s199, %s200
      %p214 = scmp.eq.s32.totalorder %s30, 1
      %p215 = por %p213, %p214
      %p217 = scmp.ne.s32.totalorder %s200, %s216
      %p218 = scmp.eq.s32.totalorder %s30, 0
      %p219 = por %p217, %p218
      %p220 = scmp.le.s32.totalorder 1, %s24
      %p221 = scmp.lt.s32.totalorder %s24, 3
      %p222 = pnand %p220, %p221
      %p223 = pneg %p222
      // Predicated region
      $region9: #{generator_forward.14} parent=5 // pred_check
        _
      $region10: #{generator_forward.14} parent=5 // pred_check_branch
        %225 = sbr.rel (%p222) target = $region12
      $region11: #{generator_forward.14} parent=5 // pred_region
        %s226 = ssub.s32 %s24, 1
        // Predicated region
        $region13: #{generator_forward.14} parent=11 // pred_check
          %p227 = pneg %p71
        $region14: #{generator_forward.14} parent=11 // pred_check_branch
          %229 = sbr.rel (%p227) target = $region16
        $region15: #{generator_forward.14} parent=11 // pred_region
          %s231 = ssub.s32 1664, 1664
          %232 = vsyncadd [#allocation7], %s231
          %s233 = sshll.u32 [#allocation6], 4
          %s234 = int_to_ptr.vmem [resolvable:$true] %s233
          %239 = dma.hbm_to_vmem [thread:$0]  %s1, 1664, %s234, [#allocation7], 128, 128, 8
        $region16: #{generator_forward.14} parent=11 // pred_fallthru
          _
        // Predicated region
        $region17: #{generator_forward.14} parent=11 // pred_check
          %p240 = pneg %p118
        $region18: #{generator_forward.14} parent=11 // pred_check_branch
          %242 = sbr.rel (%p240) target = $region20
        $region19: #{generator_forward.14} parent=11 // pred_region
          %s244 = ssub.s32 576, 576
          %245 = vsyncadd [#allocation7], %s244
          %s246 = sshll.u32 [#allocation9], 4
          %s247 = int_to_ptr.vmem [resolvable:$true] %s246
          %252 = dma.hbm_to_vmem [thread:$0]  %s3, 576, %s247, [#allocation7], 64, 64, 4
        $region20: #{generator_forward.14} parent=11 // pred_fallthru
          _
        // Predicated region
        $region21: #{generator_forward.14} parent=11 // pred_check
          %p253 = pneg %p139
        $region22: #{generator_forward.14} parent=11 // pred_check_branch
          %255 = sbr.rel (%p253) target = $region24
        $region23: #{generator_forward.14} parent=11 // pred_region
          %s257 = ssub.s32 16, 16
          %258 = vsyncadd [#allocation11], %s257
          %s260 = sshll.u32 [#allocation10], 4
          %s261 = int_to_ptr.vmem [resolvable:$true] %s260
          %263 = dma.hbm_to_vmem [thread:$0]  %s4, 16, %s261, [#allocation11]
        $region24: #{generator_forward.14} parent=11 // pred_fallthru
          _
        // Predicated region
        $region25: #{generator_forward.14} parent=11 // pred_check
          %p264 = pneg %p160
        $region26: #{generator_forward.14} parent=11 // pred_check_branch
          %266 = sbr.rel (%p264) target = $region28
        $region27: #{generator_forward.14} parent=11 // pred_region
          %s268 = ssub.s32 16, 16
          %269 = vsyncadd [#allocation11], %s268
          %s271 = sshll.u32 [#allocation12], 4
          %s272 = int_to_ptr.vmem [resolvable:$true] %s271
          %274 = dma.hbm_to_vmem [thread:$0]  %s5, 16, %s272, [#allocation11]
        $region28: #{generator_forward.14} parent=11 // pred_fallthru
          _
      $region12: #{generator_forward.14} parent=5 // pred_fallthru
        _
      %p275 = scmp.lt.s32.totalorder %s24, 2
      // Predicated region
      $region29: #{generator_forward.14} parent=5 // pred_check
        %p276 = pneg %p275
      $region30: #{generator_forward.14} parent=5 // pred_check_branch
        %278 = sbr.rel (%p276) target = $region32
      $region31: #{generator_forward.14} parent=5 // pred_region
        // Predicated region
        $region33: #{generator_forward.14} parent=31 // pred_check
          %p279 = pneg %p44
        $region34: #{generator_forward.14} parent=31 // pred_check_branch
          %281 = sbr.rel (%p279) target = $region36
        $region35: #{generator_forward.14} parent=31 // pred_region
          %s282 = sand.u32 %s24, 1
          %s283 = scalar_lea.sflag [#allocation4], %s282
          %s284 = sand.u32 %s34, 1
          %s285 = smul.addr %s284, 104
          %s286 = scalar_lea.vmem [#allocation3], %s285
          %s288 = ssub.s32 1664, 1664
          %289 = vsyncadd %s283, %s288
          %s290 = smul.addr %s24, 13
          %s291 = smul.addr %s290, 128
          %s292 = scalar_lea.hbm %s0, %s291
          %s293 = sshll.u32 %s286, 4
          %s294 = int_to_ptr.vmem [resolvable:$true] %s293
          %299 = dma.hbm_to_vmem [thread:$0]  %s292, 1664, %s294, %s283, 128, 128, 8
        $region36: #{generator_forward.14} parent=31 // pred_fallthru
          _
        // Predicated region
        $region37: #{generator_forward.14} parent=31 // pred_check
          %p300 = pneg %p91
        $region38: #{generator_forward.14} parent=31 // pred_check_branch
          %302 = sbr.rel (%p300) target = $region40
        $region39: #{generator_forward.14} parent=31 // pred_region
          %s303 = sand.u32 %s24, 1
          %s304 = scalar_lea.sflag [#allocation4], %s303
          %s305 = sand.u32 %s81, 1
          %s306 = smul.addr %s305, 104
          %s307 = scalar_lea.vmem [#allocation8], %s306
          %s309 = ssub.s32 1664, 1664
          %310 = vsyncadd %s304, %s309
          %s311 = smul.addr %s24, 13
          %s312 = smul.addr %s311, 128
          %s313 = scalar_lea.hbm %s2, %s312
          %s314 = sshll.u32 %s307, 4
          %s315 = int_to_ptr.vmem [resolvable:$true] %s314
          %320 = dma.hbm_to_vmem [thread:$0]  %s313, 1664, %s315, %s304, 128, 128, 8
        $region40: #{generator_forward.14} parent=31 // pred_fallthru
          _
        // Predicated region
        $region41: #{generator_forward.14} parent=31 // pred_check
          %p321 = pneg %p180
        $region42: #{generator_forward.14} parent=31 // pred_check_branch
          %323 = sbr.rel (%p321) target = $region44
        $region43: #{generator_forward.14} parent=31 // pred_region
          %s324 = sand.u32 %s170, 1
          %s325 = scalar_lea.sflag [#allocation14], %s324
          %s326 = sand.u32 %s170, 1
          %s327 = smul.addr %s326, 4
          %s328 = scalar_lea.vmem [#allocation13], %s327
          %s330 = ssub.s32 64, 64
          %331 = vsyncadd %s325, %s330
          %s332 = smul.addr %s24, 64
          %s333 = scalar_lea.hbm %s6, %s332
          %s335 = sshll.u32 %s328, 4
          %s336 = int_to_ptr.vmem [resolvable:$true] %s335
          %338 = dma.hbm_to_vmem [thread:$0]  %s333, 64, %s336, %s325
        $region44: #{generator_forward.14} parent=31 // pred_fallthru
          _
      $region32: #{generator_forward.14} parent=5 // pred_fallthru
        _
      %p339 = scmp.le.s32.totalorder 1, %s24
      %p340 = scmp.lt.s32.totalorder %s24, 3
      %p341 = pnand %p339, %p340
      %p342 = pneg %p341
      // Predicated region
      $region45: #{generator_forward.14} parent=5 // pred_check
        _
      $region46: #{generator_forward.14} parent=5 // pred_check_branch
        %344 = sbr.rel (%p341) target = $region48
      $region47: #{generator_forward.14} parent=5 // pred_region
        %s345 = ssub.s32 %s24, 1
        %s346 = sand.u32 %s29, 1
        %s347 = scalar_lea.sflag [#allocation4], %s346
        %s348 = sand.u32 %s37, 1
        %s349 = smul.addr %s348, 104
        %s350 = scalar_lea.vmem [#allocation3], %s349
        // Predicated region
        $region49: #{generator_forward.14} parent=47 // pred_check
          %p351 = pneg %p50
        $region50: #{generator_forward.14} parent=47 // pred_check_branch
          %353 = sbr.rel (%p351) target = $region52
        $region51: #{generator_forward.14} parent=47 // pred_region
          %354 = dma.done %s347, 1664
        $region52: #{generator_forward.14} parent=47 // pred_fallthru
          _
        // Predicated region
        $region53: #{generator_forward.14} parent=47 // pred_check
          %p355 = pneg %p71
        $region54: #{generator_forward.14} parent=47 // pred_check_branch
          %357 = sbr.rel (%p355) target = $region56
        $region55: #{generator_forward.14} parent=47 // pred_region
          %358 = dma.done [#allocation7], 1664
        $region56: #{generator_forward.14} parent=47 // pred_fallthru
          _
        %s359 = sand.u32 %s29, 1
        %s360 = scalar_lea.sflag [#allocation4], %s359
        %s361 = sand.u32 %s84, 1
        %s362 = smul.addr %s361, 104
        %s363 = scalar_lea.vmem [#allocation8], %s362
        // Predicated region
        $region57: #{generator_forward.14} parent=47 // pred_check
          %p364 = pneg %p97
        $region58: #{generator_forward.14} parent=47 // pred_check_branch
          %366 = sbr.rel (%p364) target = $region60
        $region59: #{generator_forward.14} parent=47 // pred_region
          %367 = dma.done %s360, 1664
        $region60: #{generator_forward.14} parent=47 // pred_fallthru
          _
        // Predicated region
        $region61: #{generator_forward.14} parent=47 // pred_check
          %p368 = pneg %p118
        $region62: #{generator_forward.14} parent=47 // pred_check_branch
          %370 = sbr.rel (%p368) target = $region64
        $region63: #{generator_forward.14} parent=47 // pred_region
          %371 = dma.done [#allocation7], 576
        $region64: #{generator_forward.14} parent=47 // pred_fallthru
          _
        // Predicated region
        $region65: #{generator_forward.14} parent=47 // pred_check
          %p372 = pneg %p139
        $region66: #{generator_forward.14} parent=47 // pred_check_branch
          %374 = sbr.rel (%p372) target = $region68
        $region67: #{generator_forward.14} parent=47 // pred_region
          %375 = dma.done [#allocation11], 16
        $region68: #{generator_forward.14} parent=47 // pred_fallthru
          _
        // Predicated region
        $region69: #{generator_forward.14} parent=47 // pred_check
          %p376 = pneg %p160
        $region70: #{generator_forward.14} parent=47 // pred_check_branch
          %378 = sbr.rel (%p376) target = $region72
        $region71: #{generator_forward.14} parent=47 // pred_region
          %379 = dma.done [#allocation11], 16
        $region72: #{generator_forward.14} parent=47 // pred_fallthru
          _
        %s380 = sand.u32 %s173, 1
        %s381 = scalar_lea.sflag [#allocation14], %s380
        %s382 = sand.u32 %s173, 1
        %s383 = smul.addr %s382, 4
        %s384 = scalar_lea.vmem [#allocation13], %s383
        // Predicated region
        $region73: #{generator_forward.14} parent=47 // pred_check
          %p385 = pneg %p186
        $region74: #{generator_forward.14} parent=47 // pred_check_branch
          %387 = sbr.rel (%p385) target = $region76
        $region75: #{generator_forward.14} parent=47 // pred_region
          %388 = dma.done %s381, 64
        $region76: #{generator_forward.14} parent=47 // pred_fallthru
          _
        %s389 = sand.u32 %s29, 1
        %s390 = scalar_lea.sflag [#allocation4], %s389
        %s391 = sand.u32 %s37, 1
        %s392 = smul.addr %s391, 104
        %s393 = scalar_lea.vmem [#allocation3], %s392
        %p394 = pneg %p50
        %p395 = pneg %p47
        %p396 = pneg %p71
        %p397 = pneg %p68
        %s398 = sand.u32 %s29, 1
        %s399 = scalar_lea.sflag [#allocation4], %s398
        %s400 = sand.u32 %s84, 1
        %s401 = smul.addr %s400, 104
        %s402 = scalar_lea.vmem [#allocation8], %s401
        %p403 = pneg %p97
        %p404 = pneg %p94
        %p405 = pneg %p118
        %p406 = pneg %p115
        %p407 = pneg %p139
        %p408 = pneg %p136
        %p409 = pneg %p160
        %p410 = pneg %p157
        %s411 = sand.u32 %s173, 1
        %s412 = scalar_lea.sflag [#allocation14], %s411
        %s413 = sand.u32 %s173, 1
        %s414 = smul.addr %s413, 4
        %s415 = scalar_lea.vmem [#allocation13], %s414
        %p416 = pneg %p186
        %p417 = pneg %p183
        %p418 = pneg %p212
        %p419 = pneg %p209
        %s420 = sand.u32 %s199, 1
        %s421 = scalar_lea.sflag [#allocation5], %s420
        %s422 = sand.u32 %s199, 1
        %s423 = smul.addr %s422, 104
        %s424 = scalar_lea.vmem [#allocation15], %s423
        %v426 = vld [vmem:[#allocation6 + $0xb] sm:$0xff]
        %v427 = vld [vmem:[#allocation6 + $0x13] sm:$0xff]
        %v428 = vld [vmem:[#allocation6 + $0x1b] sm:$0xff]
        %v429 = vld [vmem:[#allocation6 + $0x23] sm:$0xff]
        %v430 = vld [vmem:[#allocation6 + $0x2b] sm:$0xff]
        %v431 = vld [vmem:[#allocation6 + $0x33] sm:$0xff]
        %v432 = vld [vmem:[#allocation6 + $0x3b] sm:$0xff]
        %v433 = vld [vmem:[#allocation6 + $0x43] sm:$0xff]
        %v434 = vld [vmem:[#allocation6 + $0x4b] sm:$0xff]
        %v435 = vld [vmem:[#allocation6 + $0x53] sm:$0x3f]
        %v436 = vld [vmem:[%s350] sm:$0xff]
        %v437 = vld [vmem:[%s350 + $0x8] sm:$0xff]
        %v438 = vld [vmem:[%s350 + $0x10] sm:$0xff]
        %v439 = vld [vmem:[%s350 + $0x18] sm:$0xff]
        %v440 = vld [vmem:[%s350 + $0x20] sm:$0xff]
        %v441 = vld [vmem:[%s350 + $0x28] sm:$0xff]
        %v442 = vld [vmem:[%s350 + $0x30] sm:$0xff]
        %v443 = vld [vmem:[%s350 + $0x38] sm:$0xff]
        %v444 = vld [vmem:[%s350 + $0x40] sm:$0xff]
        %v445 = vld [vmem:[%s350 + $0x48] sm:$0x3f]
        %v446 = vpack.c.bf16 %v437, %v436
        %v447 = vpack.c.bf16 %v439, %v438
        %v448 = vpack.c.bf16 %v441, %v440
        %v449 = vpack.c.bf16 %v443, %v442
        %v450 = vpack.c.bf16 %v445, %v444
        %v456 = vunpack.c.l.b16 %v446
        %v457 = vunpack.c.h.b16 %v446
        %v458 = vunpack.c.l.b16 %v447
        %v459 = vunpack.c.h.b16 %v447
        %v460 = vunpack.c.l.b16 %v448
        %v461 = vunpack.c.h.b16 %v448
        %v462 = vunpack.c.l.b16 %v449
        %v463 = vunpack.c.h.b16 %v449
        %v464 = vunpack.c.l.b16 %v450
        %v465 = vunpack.c.h.b16 %v450
        %v466 = vpack.c.b16 %v456, %v456
        %v467 = vpack.c.b16 %v457, %v457
        %v468 = vpack.c.b16 %v458, %v458
        %v469 = vpack.c.b16 %v459, %v459
        %v470 = vpack.c.b16 %v460, %v460
        %v471 = vpack.c.b16 %v461, %v461
        %v472 = vpack.c.b16 %v462, %v462
        %v473 = vpack.c.b16 %v463, %v463
        %v474 = vpack.c.b16 %v464, %v464
        %v475 = vpack.c.b16 %v465, %v465
        %vm486 = vcmask 60416
        %487 = vst.msk [vmem:[#allocation2] sm:$0xf] %vm486, %v466
        %488 = vst.msk [vmem:[#allocation2 + $0x4] sm:$0xf] %vm486, %v467
        %489 = vst.msk [vmem:[#allocation2 + $0x8] sm:$0xf] %vm486, %v468
        %490 = vst.msk [vmem:[#allocation2 + $0xc] sm:$0xf] %vm486, %v469
        %491 = vst.msk [vmem:[#allocation2 + $0x10] sm:$0xf] %vm486, %v470
        %492 = vst.msk [vmem:[#allocation2 + $0x14] sm:$0xf] %vm486, %v471
        %493 = vst.msk [vmem:[#allocation2 + $0x18] sm:$0xf] %vm486, %v472
        %494 = vst.msk [vmem:[#allocation2 + $0x1c] sm:$0xf] %vm486, %v473
        %495 = vst.msk [vmem:[#allocation2 + $0x20] sm:$0xf] %vm486, %v474
        %vm496 = vcmask 59392
        %497 = vst.msk [vmem:[#allocation2 + $0x24] sm:$0x7] %vm496, %v475
        %v498 = vld [vmem:[%s350 + $0x1] sm:$0xff]
        %v499 = vld [vmem:[%s350 + $0x9] sm:$0xff]
        %v500 = vld [vmem:[%s350 + $0x11] sm:$0xff]
        %v501 = vld [vmem:[%s350 + $0x19] sm:$0xff]
        %v502 = vld [vmem:[%s350 + $0x21] sm:$0xff]
        %v503 = vld [vmem:[%s350 + $0x29] sm:$0xff]
        %v504 = vld [vmem:[%s350 + $0x31] sm:$0xff]
        %v505 = vld [vmem:[%s350 + $0x39] sm:$0xff]
        %v506 = vld [vmem:[%s350 + $0x41] sm:$0xff]
        %v507 = vld [vmem:[%s350 + $0x49] sm:$0x3f]
        %v508 = vpack.c.bf16 %v499, %v498
        %v509 = vpack.c.bf16 %v501, %v500
        %v510 = vpack.c.bf16 %v503, %v502
        %v511 = vpack.c.bf16 %v505, %v504
        %v512 = vpack.c.bf16 %v507, %v506
        %v518 = vunpack.c.l.b16 %v508
        %v519 = vunpack.c.h.b16 %v508
        %v520 = vunpack.c.l.b16 %v509
        %v521 = vunpack.c.h.b16 %v509
        %v522 = vunpack.c.l.b16 %v510
        %v523 = vunpack.c.h.b16 %v510
        %v524 = vunpack.c.l.b16 %v511
        %v525 = vunpack.c.h.b16 %v511
        %v526 = vunpack.c.l.b16 %v512
        %v527 = vunpack.c.h.b16 %v512
        %v528 = vpack.c.b16 %v518, %v518
        %v529 = vpack.c.b16 %v519, %v519
        %v530 = vpack.c.b16 %v520, %v520
        %v531 = vpack.c.b16 %v521, %v521
        %v532 = vpack.c.b16 %v522, %v522
        %v533 = vpack.c.b16 %v523, %v523
        %v534 = vpack.c.b16 %v524, %v524
        %v535 = vpack.c.b16 %v525, %v525
        %v536 = vpack.c.b16 %v526, %v526
        %v537 = vpack.c.b16 %v527, %v527
        %538 = vrot.lane.b32.xlu0 %v528, 8
        %v539 = vpop.permute.xlu0 %538
        %540 = vrot.lane.b32.xlu0 %v529, 8
        %v541 = vpop.permute.xlu0 %540
        %542 = vrot.lane.b32.xlu0 %v530, 8
        %v543 = vpop.permute.xlu0 %542
        %544 = vrot.lane.b32.xlu0 %v531, 8
        %v545 = vpop.permute.xlu0 %544
        %546 = vrot.lane.b32.xlu0 %v532, 8
        %v547 = vpop.permute.xlu0 %546
        %548 = vrot.lane.b32.xlu0 %v533, 8
        %v549 = vpop.permute.xlu0 %548
        %550 = vrot.lane.b32.xlu0 %v534, 8
        %v551 = vpop.permute.xlu0 %550
        %552 = vrot.lane.b32.xlu0 %v535, 8
        %v553 = vpop.permute.xlu0 %552
        %554 = vrot.lane.b32.xlu0 %v536, 8
        %v555 = vpop.permute.xlu0 %554
        %556 = vrot.lane.b32.xlu0 %v537, 8
        %v557 = vpop.permute.xlu0 %556
        %vm568 = vcmask 126016
        %569 = vst.msk [vmem:[#allocation2] sm:$0xf] %vm568, %v539
        %570 = vst.msk [vmem:[#allocation2 + $0x4] sm:$0xf] %vm568, %v541
        %571 = vst.msk [vmem:[#allocation2 + $0x8] sm:$0xf] %vm568, %v543
        %572 = vst.msk [vmem:[#allocation2 + $0xc] sm:$0xf] %vm568, %v545
        %573 = vst.msk [vmem:[#allocation2 + $0x10] sm:$0xf] %vm568, %v547
        %574 = vst.msk [vmem:[#allocation2 + $0x14] sm:$0xf] %vm568, %v549
        %575 = vst.msk [vmem:[#allocation2 + $0x18] sm:$0xf] %vm568, %v551
        %576 = vst.msk [vmem:[#allocation2 + $0x1c] sm:$0xf] %vm568, %v553
        %577 = vst.msk [vmem:[#allocation2 + $0x20] sm:$0xf] %vm568, %v555
        %vm578 = vcmask 124992
        %579 = vst.msk [vmem:[#allocation2 + $0x24] sm:$0x7] %vm578, %v557
        %v580 = vld [vmem:[%s350 + $0x2] sm:$0xff]
        %v581 = vld [vmem:[%s350 + $0xa] sm:$0xff]
        %v582 = vld [vmem:[%s350 + $0x12] sm:$0xff]
        %v583 = vld [vmem:[%s350 + $0x1a] sm:$0xff]
        %v584 = vld [vmem:[%s350 + $0x22] sm:$0xff]
        %v585 = vld [vmem:[%s350 + $0x2a] sm:$0xff]
        %v586 = vld [vmem:[%s350 + $0x32] sm:$0xff]
        %v587 = vld [vmem:[%s350 + $0x3a] sm:$0xff]
        %v588 = vld [vmem:[%s350 + $0x42] sm:$0xff]
        %v589 = vld [vmem:[%s350 + $0x4a] sm:$0x3f]
        %v590 = vpack.c.bf16 %v581, %v580
        %v591 = vpack.c.bf16 %v583, %v582
        %v592 = vpack.c.bf16 %v585, %v584
        %v593 = vpack.c.bf16 %v587, %v586
        %v594 = vpack.c.bf16 %v589, %v588
        %v600 = vunpack.c.l.b16 %v590
        %v601 = vunpack.c.h.b16 %v590
        %v602 = vunpack.c.l.b16 %v591
        %v603 = vunpack.c.h.b16 %v591
        %v604 = vunpack.c.l.b16 %v592
        %v605 = vunpack.c.h.b16 %v592
        %v606 = vunpack.c.l.b16 %v593
        %v607 = vunpack.c.h.b16 %v593
        %v608 = vunpack.c.l.b16 %v594
        %v609 = vunpack.c.h.b16 %v594
        %v610 = vpack.c.b16 %v600, %v600
        %v611 = vpack.c.b16 %v601, %v601
        %v612 = vpack.c.b16 %v602, %v602
        %v613 = vpack.c.b16 %v603, %v603
        %v614 = vpack.c.b16 %v604, %v604
        %v615 = vpack.c.b16 %v605, %v605
        %v616 = vpack.c.b16 %v606, %v606
        %v617 = vpack.c.b16 %v607, %v607
        %v618 = vpack.c.b16 %v608, %v608
        %v619 = vpack.c.b16 %v609, %v609
        %620 = vrot.lane.b32.xlu0 %v610, 16
        %v621 = vpop.permute.xlu0 %620
        %622 = vrot.lane.b32.xlu0 %v611, 16
        %v623 = vpop.permute.xlu0 %622
        %624 = vrot.lane.b32.xlu0 %v612, 16
        %v625 = vpop.permute.xlu0 %624
        %626 = vrot.lane.b32.xlu0 %v613, 16
        %v627 = vpop.permute.xlu0 %626
        %628 = vrot.lane.b32.xlu0 %v614, 16
        %v629 = vpop.permute.xlu0 %628
        %630 = vrot.lane.b32.xlu0 %v615, 16
        %v631 = vpop.permute.xlu0 %630
        %632 = vrot.lane.b32.xlu0 %v616, 16
        %v633 = vpop.permute.xlu0 %632
        %634 = vrot.lane.b32.xlu0 %v617, 16
        %v635 = vpop.permute.xlu0 %634
        %636 = vrot.lane.b32.xlu0 %v618, 16
        %v637 = vpop.permute.xlu0 %636
        %638 = vrot.lane.b32.xlu0 %v619, 16
        %v639 = vpop.permute.xlu0 %638
        %vm650 = vcmask 191616
        %651 = vst.msk [vmem:[#allocation2] sm:$0xf] %vm650, %v621
        %652 = vst.msk [vmem:[#allocation2 + $0x4] sm:$0xf] %vm650, %v623
        %653 = vst.msk [vmem:[#allocation2 + $0x8] sm:$0xf] %vm650, %v625
        %654 = vst.msk [vmem:[#allocation2 + $0xc] sm:$0xf] %vm650, %v627
        %655 = vst.msk [vmem:[#allocation2 + $0x10] sm:$0xf] %vm650, %v629
        %656 = vst.msk [vmem:[#allocation2 + $0x14] sm:$0xf] %vm650, %v631
        %657 = vst.msk [vmem:[#allocation2 + $0x18] sm:$0xf] %vm650, %v633
        %658 = vst.msk [vmem:[#allocation2 + $0x1c] sm:$0xf] %vm650, %v635
        %659 = vst.msk [vmem:[#allocation2 + $0x20] sm:$0xf] %vm650, %v637
        %vm660 = vcmask 190592
        %661 = vst.msk [vmem:[#allocation2 + $0x24] sm:$0x7] %vm660, %v639
        %v662 = vld [vmem:[%s350 + $0xa] sm:$0xff]
        %v663 = vld [vmem:[%s350 + $0x12] sm:$0xff]
        %v664 = vld [vmem:[%s350 + $0x1a] sm:$0xff]
        %v665 = vld [vmem:[%s350 + $0x22] sm:$0xff]
        %v666 = vld [vmem:[%s350 + $0x2a] sm:$0xff]
        %v667 = vld [vmem:[%s350 + $0x32] sm:$0xff]
        %v668 = vld [vmem:[%s350 + $0x3a] sm:$0xff]
        %v669 = vld [vmem:[%s350 + $0x42] sm:$0xff]
        %v670 = vld [vmem:[%s350 + $0x4a] sm:$0xff]
        %v671 = vld [vmem:[%s350 + $0x52] sm:$0x3f]
        %v672 = vpack.c.bf16 %v663, %v662
        %v673 = vpack.c.bf16 %v665, %v664
        %v674 = vpack.c.bf16 %v667, %v666
        %v675 = vpack.c.bf16 %v669, %v668
        %v676 = vpack.c.bf16 %v671, %v670
        %v682 = vunpack.c.l.b16 %v672
        %v683 = vunpack.c.h.b16 %v672
        %v684 = vunpack.c.l.b16 %v673
        %v685 = vunpack.c.h.b16 %v673
        %v686 = vunpack.c.l.b16 %v674
        %v687 = vunpack.c.h.b16 %v674
        %v688 = vunpack.c.l.b16 %v675
        %v689 = vunpack.c.h.b16 %v675
        %v690 = vunpack.c.l.b16 %v676
        %v691 = vunpack.c.h.b16 %v676
        %v692 = vpack.c.b16 %v682, %v682
        %v693 = vpack.c.b16 %v683, %v683
        %v694 = vpack.c.b16 %v684, %v684
        %v695 = vpack.c.b16 %v685, %v685
        %v696 = vpack.c.b16 %v686, %v686
        %v697 = vpack.c.b16 %v687, %v687
        %v698 = vpack.c.b16 %v688, %v688
        %v699 = vpack.c.b16 %v689, %v689
        %v700 = vpack.c.b16 %v690, %v690
        %v701 = vpack.c.b16 %v691, %v691
        %702 = vrot.lane.b32.xlu0 %v692, 24
        %v703 = vpop.permute.xlu0 %702
        %704 = vrot.lane.b32.xlu0 %v693, 24
        %v705 = vpop.permute.xlu0 %704
        %706 = vrot.lane.b32.xlu0 %v694, 24
        %v707 = vpop.permute.xlu0 %706
        %708 = vrot.lane.b32.xlu0 %v695, 24
        %v709 = vpop.permute.xlu0 %708
        %710 = vrot.lane.b32.xlu0 %v696, 24
        %v711 = vpop.permute.xlu0 %710
        %712 = vrot.lane.b32.xlu0 %v697, 24
        %v713 = vpop.permute.xlu0 %712
        %714 = vrot.lane.b32.xlu0 %v698, 24
        %v715 = vpop.permute.xlu0 %714
        %716 = vrot.lane.b32.xlu0 %v699, 24
        %v717 = vpop.permute.xlu0 %716
        %718 = vrot.lane.b32.xlu0 %v700, 24
        %v719 = vpop.permute.xlu0 %718
        %720 = vrot.lane.b32.xlu0 %v701, 24
        %v721 = vpop.permute.xlu0 %720
        %vm732 = vcmask 257216
        %733 = vst.msk [vmem:[#allocation2] sm:$0xf] %vm732, %v703
        %734 = vst.msk [vmem:[#allocation2 + $0x4] sm:$0xf] %vm732, %v705
        %735 = vst.msk [vmem:[#allocation2 + $0x8] sm:$0xf] %vm732, %v707
        %736 = vst.msk [vmem:[#allocation2 + $0xc] sm:$0xf] %vm732, %v709
        %737 = vst.msk [vmem:[#allocation2 + $0x10] sm:$0xf] %vm732, %v711
        %738 = vst.msk [vmem:[#allocation2 + $0x14] sm:$0xf] %vm732, %v713
        %739 = vst.msk [vmem:[#allocation2 + $0x18] sm:$0xf] %vm732, %v715
        %740 = vst.msk [vmem:[#allocation2 + $0x1c] sm:$0xf] %vm732, %v717
        %741 = vst.msk [vmem:[#allocation2 + $0x20] sm:$0xf] %vm732, %v719
        %vm742 = vcmask 256192
        %743 = vst.msk [vmem:[#allocation2 + $0x24] sm:$0x7] %vm742, %v721
        %v744 = vld [vmem:[%s350 + $0xb] sm:$0xff]
        %v745 = vld [vmem:[%s350 + $0x13] sm:$0xff]
        %v746 = vld [vmem:[%s350 + $0x1b] sm:$0xff]
        %v747 = vld [vmem:[%s350 + $0x23] sm:$0xff]
        %v748 = vld [vmem:[%s350 + $0x2b] sm:$0xff]
        %v749 = vld [vmem:[%s350 + $0x33] sm:$0xff]
        %v750 = vld [vmem:[%s350 + $0x3b] sm:$0xff]
        %v751 = vld [vmem:[%s350 + $0x43] sm:$0xff]
        %v752 = vld [vmem:[%s350 + $0x4b] sm:$0xff]
        %v753 = vld [vmem:[%s350 + $0x53] sm:$0x3f]
        %v754 = vpack.c.bf16 %v745, %v744
        %v755 = vpack.c.bf16 %v747, %v746
        %v756 = vpack.c.bf16 %v749, %v748
        %v757 = vpack.c.bf16 %v751, %v750
        %v758 = vpack.c.bf16 %v753, %v752
        %v764 = vunpack.c.l.b16 %v754
        %v765 = vunpack.c.h.b16 %v754
        %v766 = vunpack.c.l.b16 %v755
        %v767 = vunpack.c.h.b16 %v755
        %v768 = vunpack.c.l.b16 %v756
        %v769 = vunpack.c.h.b16 %v756
        %v770 = vunpack.c.l.b16 %v757
        %v771 = vunpack.c.h.b16 %v757
        %v772 = vunpack.c.l.b16 %v758
        %v773 = vunpack.c.h.b16 %v758
        %v774 = vpack.c.b16 %v764, %v764
        %v775 = vpack.c.b16 %v765, %v765
        %v776 = vpack.c.b16 %v766, %v766
        %v777 = vpack.c.b16 %v767, %v767
        %v778 = vpack.c.b16 %v768, %v768
        %v779 = vpack.c.b16 %v769, %v769
        %v780 = vpack.c.b16 %v770, %v770
        %v781 = vpack.c.b16 %v771, %v771
        %v782 = vpack.c.b16 %v772, %v772
        %v783 = vpack.c.b16 %v773, %v773
        %784 = vrot.lane.b32.xlu0 %v774, 32
        %v785 = vpop.permute.xlu0 %784
        %786 = vrot.lane.b32.xlu0 %v775, 32
        %v787 = vpop.permute.xlu0 %786
        %788 = vrot.lane.b32.xlu0 %v776, 32
        %v789 = vpop.permute.xlu0 %788
        %790 = vrot.lane.b32.xlu0 %v777, 32
        %v791 = vpop.permute.xlu0 %790
        %792 = vrot.lane.b32.xlu0 %v778, 32
        %v793 = vpop.permute.xlu0 %792
        %794 = vrot.lane.b32.xlu0 %v779, 32
        %v795 = vpop.permute.xlu0 %794
        %796 = vrot.lane.b32.xlu0 %v780, 32
        %v797 = vpop.permute.xlu0 %796
        %798 = vrot.lane.b32.xlu0 %v781, 32
        %v799 = vpop.permute.xlu0 %798
        %800 = vrot.lane.b32.xlu0 %v782, 32
        %v801 = vpop.permute.xlu0 %800
        %802 = vrot.lane.b32.xlu0 %v783, 32
        %v803 = vpop.permute.xlu0 %802
        %vm814 = vcmask 322816
        %815 = vst.msk [vmem:[#allocation2] sm:$0xf] %vm814, %v785
        %816 = vst.msk [vmem:[#allocation2 + $0x4] sm:$0xf] %vm814, %v787
        %817 = vst.msk [vmem:[#allocation2 + $0x8] sm:$0xf] %vm814, %v789
        %818 = vst.msk [vmem:[#allocation2 + $0xc] sm:$0xf] %vm814, %v791
        %819 = vst.msk [vmem:[#allocation2 + $0x10] sm:$0xf] %vm814, %v793
        %820 = vst.msk [vmem:[#allocation2 + $0x14] sm:$0xf] %vm814, %v795
        %821 = vst.msk [vmem:[#allocation2 + $0x18] sm:$0xf] %vm814, %v797
        %822 = vst.msk [vmem:[#allocation2 + $0x1c] sm:$0xf] %vm814, %v799
        %823 = vst.msk [vmem:[#allocation2 + $0x20] sm:$0xf] %vm814, %v801
        %vm824 = vcmask 321792
        %825 = vst.msk [vmem:[#allocation2 + $0x24] sm:$0x7] %vm824, %v803
        %v826 = vld [vmem:[%s350 + $0xc] sm:$0xff]
        %v827 = vld [vmem:[%s350 + $0x14] sm:$0xff]
        %v828 = vld [vmem:[%s350 + $0x1c] sm:$0xff]
        %v829 = vld [vmem:[%s350 + $0x24] sm:$0xff]
        %v830 = vld [vmem:[%s350 + $0x2c] sm:$0xff]
        %v831 = vld [vmem:[%s350 + $0x34] sm:$0xff]
        %v832 = vld [vmem:[%s350 + $0x3c] sm:$0xff]
        %v833 = vld [vmem:[%s350 + $0x44] sm:$0xff]
        %v834 = vld [vmem:[%s350 + $0x4c] sm:$0xff]
        %v835 = vld [vmem:[%s350 + $0x54] sm:$0x3f]
        %v836 = vpack.c.bf16 %v827, %v826
        %v837 = vpack.c.bf16 %v829, %v828
        %v838 = vpack.c.bf16 %v831, %v830
        %v839 = vpack.c.bf16 %v833, %v832
        %v840 = vpack.c.bf16 %v835, %v834
        %v846 = vunpack.c.l.b16 %v836
        %v847 = vunpack.c.h.b16 %v836
        %v848 = vunpack.c.l.b16 %v837
        %v849 = vunpack.c.h.b16 %v837
        %v850 = vunpack.c.l.b16 %v838
        %v851 = vunpack.c.h.b16 %v838
        %v852 = vunpack.c.l.b16 %v839
        %v853 = vunpack.c.h.b16 %v839
        %v854 = vunpack.c.l.b16 %v840
        %v855 = vunpack.c.h.b16 %v840
        %v856 = vpack.c.b16 %v846, %v846
        %v857 = vpack.c.b16 %v847, %v847
        %v858 = vpack.c.b16 %v848, %v848
        %v859 = vpack.c.b16 %v849, %v849
        %v860 = vpack.c.b16 %v850, %v850
        %v861 = vpack.c.b16 %v851, %v851
        %v862 = vpack.c.b16 %v852, %v852
        %v863 = vpack.c.b16 %v853, %v853
        %v864 = vpack.c.b16 %v854, %v854
        %v865 = vpack.c.b16 %v855, %v855
        %866 = vrot.lane.b32.xlu0 %v856, 40
        %v867 = vpop.permute.xlu0 %866
        %868 = vrot.lane.b32.xlu0 %v857, 40
        %v869 = vpop.permute.xlu0 %868
        %870 = vrot.lane.b32.xlu0 %v858, 40
        %v871 = vpop.permute.xlu0 %870
        %872 = vrot.lane.b32.xlu0 %v859, 40
        %v873 = vpop.permute.xlu0 %872
        %874 = vrot.lane.b32.xlu0 %v860, 40
        %v875 = vpop.permute.xlu0 %874
        %876 = vrot.lane.b32.xlu0 %v861, 40
        %v877 = vpop.permute.xlu0 %876
        %878 = vrot.lane.b32.xlu0 %v862, 40
        %v879 = vpop.permute.xlu0 %878
        %880 = vrot.lane.b32.xlu0 %v863, 40
        %v881 = vpop.permute.xlu0 %880
        %882 = vrot.lane.b32.xlu0 %v864, 40
        %v883 = vpop.permute.xlu0 %882
        %884 = vrot.lane.b32.xlu0 %v865, 40
        %v885 = vpop.permute.xlu0 %884
        %vm896 = vcmask 388416
        %897 = vst.msk [vmem:[#allocation2] sm:$0xf] %vm896, %v867
        %898 = vst.msk [vmem:[#allocation2 + $0x4] sm:$0xf] %vm896, %v869
        %899 = vst.msk [vmem:[#allocation2 + $0x8] sm:$0xf] %vm896, %v871
        %900 = vst.msk [vmem:[#allocation2 + $0xc] sm:$0xf] %vm896, %v873
        %901 = vst.msk [vmem:[#allocation2 + $0x10] sm:$0xf] %vm896, %v875
        %902 = vst.msk [vmem:[#allocation2 + $0x14] sm:$0xf] %vm896, %v877
        %903 = vst.msk [vmem:[#allocation2 + $0x18] sm:$0xf] %vm896, %v879
        %904 = vst.msk [vmem:[#allocation2 + $0x1c] sm:$0xf] %vm896, %v881
        %905 = vst.msk [vmem:[#allocation2 + $0x20] sm:$0xf] %vm896, %v883
        %vm906 = vcmask 387392
        %907 = vst.msk [vmem:[#allocation2 + $0x24] sm:$0x7] %vm906, %v885
        %v908 = vld [vmem:[%s350 + $0x14] sm:$0xff]
        %v909 = vld [vmem:[%s350 + $0x1c] sm:$0xff]
        %v910 = vld [vmem:[%s350 + $0x24] sm:$0xff]
        %v911 = vld [vmem:[%s350 + $0x2c] sm:$0xff]
        %v912 = vld [vmem:[%s350 + $0x34] sm:$0xff]
        %v913 = vld [vmem:[%s350 + $0x3c] sm:$0xff]
        %v914 = vld [vmem:[%s350 + $0x44] sm:$0xff]
        %v915 = vld [vmem:[%s350 + $0x4c] sm:$0xff]
        %v916 = vld [vmem:[%s350 + $0x54] sm:$0xff]
        %v917 = vld [vmem:[%s350 + $0x5c] sm:$0x3f]
        %v918 = vpack.c.bf16 %v909, %v908
        %v919 = vpack.c.bf16 %v911, %v910
        %v920 = vpack.c.bf16 %v913, %v912
        %v921 = vpack.c.bf16 %v915, %v914
        %v922 = vpack.c.bf16 %v917, %v916
        %v928 = vunpack.c.l.b16 %v918
        %v929 = vunpack.c.h.b16 %v918
        %v930 = vunpack.c.l.b16 %v919
        %v931 = vunpack.c.h.b16 %v919
        %v932 = vunpack.c.l.b16 %v920
        %v933 = vunpack.c.h.b16 %v920
        %v934 = vunpack.c.l.b16 %v921
        %v935 = vunpack.c.h.b16 %v921
        %v936 = vunpack.c.l.b16 %v922
        %v937 = vunpack.c.h.b16 %v922
        %v938 = vpack.c.b16 %v928, %v928
        %v939 = vpack.c.b16 %v929, %v929
        %v940 = vpack.c.b16 %v930, %v930
        %v941 = vpack.c.b16 %v931, %v931
        %v942 = vpack.c.b16 %v932, %v932
        %v943 = vpack.c.b16 %v933, %v933
        %v944 = vpack.c.b16 %v934, %v934
        %v945 = vpack.c.b16 %v935, %v935
        %v946 = vpack.c.b16 %v936, %v936
        %v947 = vpack.c.b16 %v937, %v937
        %948 = vrot.lane.b32.xlu0 %v938, 48
        %v949 = vpop.permute.xlu0 %948
        %950 = vrot.lane.b32.xlu0 %v939, 48
        %v951 = vpop.permute.xlu0 %950
        %952 = vrot.lane.b32.xlu0 %v940, 48
        %v953 = vpop.permute.xlu0 %952
        %954 = vrot.lane.b32.xlu0 %v941, 48
        %v955 = vpop.permute.xlu0 %954
        %956 = vrot.lane.b32.xlu0 %v942, 48
        %v957 = vpop.permute.xlu0 %956
        %958 = vrot.lane.b32.xlu0 %v943, 48
        %v959 = vpop.permute.xlu0 %958
        %960 = vrot.lane.b32.xlu0 %v944, 48
        %v961 = vpop.permute.xlu0 %960
        %962 = vrot.lane.b32.xlu0 %v945, 48
        %v963 = vpop.permute.xlu0 %962
        %964 = vrot.lane.b32.xlu0 %v946, 48
        %v965 = vpop.permute.xlu0 %964
        %966 = vrot.lane.b32.xlu0 %v947, 48
        %v967 = vpop.permute.xlu0 %966
        %vm978 = vcmask 454016
        %979 = vst.msk [vmem:[#allocation2] sm:$0xf] %vm978, %v949
        %980 = vst.msk [vmem:[#allocation2 + $0x4] sm:$0xf] %vm978, %v951
        %981 = vst.msk [vmem:[#allocation2 + $0x8] sm:$0xf] %vm978, %v953
        %982 = vst.msk [vmem:[#allocation2 + $0xc] sm:$0xf] %vm978, %v955
        %983 = vst.msk [vmem:[#allocation2 + $0x10] sm:$0xf] %vm978, %v957
        %984 = vst.msk [vmem:[#allocation2 + $0x14] sm:$0xf] %vm978, %v959
        %985 = vst.msk [vmem:[#allocation2 + $0x18] sm:$0xf] %vm978, %v961
        %986 = vst.msk [vmem:[#allocation2 + $0x1c] sm:$0xf] %vm978, %v963
        %987 = vst.msk [vmem:[#allocation2 + $0x20] sm:$0xf] %vm978, %v965
        %vm988 = vcmask 452992
        %989 = vst.msk [vmem:[#allocation2 + $0x24] sm:$0x7] %vm988, %v967
        %v990 = vld [vmem:[%s350 + $0x15] sm:$0xff]
        %v991 = vld [vmem:[%s350 + $0x1d] sm:$0xff]
        %v992 = vld [vmem:[%s350 + $0x25] sm:$0xff]
        %v993 = vld [vmem:[%s350 + $0x2d] sm:$0xff]
        %v994 = vld [vmem:[%s350 + $0x35] sm:$0xff]
        %v995 = vld [vmem:[%s350 + $0x3d] sm:$0xff]
        %v996 = vld [vmem:[%s350 + $0x45] sm:$0xff]
        %v997 = vld [vmem:[%s350 + $0x4d] sm:$0xff]
        %v998 = vld [vmem:[%s350 + $0x55] sm:$0xff]
        %v999 = vld [vmem:[%s350 + $0x5d] sm:$0x3f]
        %v1000 = vpack.c.bf16 %v991, %v990
        %v1001 = vpack.c.bf16 %v993, %v992
        %v1002 = vpack.c.bf16 %v995, %v994
        %v1003 = vpack.c.bf16 %v997, %v996
        %v1004 = vpack.c.bf16 %v999, %v998
        %v1010 = vunpack.c.l.b16 %v1000
        %v1011 = vunpack.c.h.b16 %v1000
        %v1012 = vunpack.c.l.b16 %v1001
        %v1013 = vunpack.c.h.b16 %v1001
        %v1014 = vunpack.c.l.b16 %v1002
        %v1015 = vunpack.c.h.b16 %v1002
        %v1016 = vunpack.c.l.b16 %v1003
        %v1017 = vunpack.c.h.b16 %v1003
        %v1018 = vunpack.c.l.b16 %v1004
        %v1019 = vunpack.c.h.b16 %v1004
        %v1020 = vpack.c.b16 %v1010, %v1010
        %v1021 = vpack.c.b16 %v1011, %v1011
        %v1022 = vpack.c.b16 %v1012, %v1012
        %v1023 = vpack.c.b16 %v1013, %v1013
        %v1024 = vpack.c.b16 %v1014, %v1014
        %v1025 = vpack.c.b16 %v1015, %v1015
        %v1026 = vpack.c.b16 %v1016, %v1016
        %v1027 = vpack.c.b16 %v1017, %v1017
        %v1028 = vpack.c.b16 %v1018, %v1018
        %v1029 = vpack.c.b16 %v1019, %v1019
        %1030 = vrot.lane.b32.xlu0 %v1020, 56
        %v1031 = vpop.permute.xlu0 %1030
        %1032 = vrot.lane.b32.xlu0 %v1021, 56
        %v1033 = vpop.permute.xlu0 %1032
        %1034 = vrot.lane.b32.xlu0 %v1022, 56
        %v1035 = vpop.permute.xlu0 %1034
        %1036 = vrot.lane.b32.xlu0 %v1023, 56
        %v1037 = vpop.permute.xlu0 %1036
        %1038 = vrot.lane.b32.xlu0 %v1024, 56
        %v1039 = vpop.permute.xlu0 %1038
        %1040 = vrot.lane.b32.xlu0 %v1025, 56
        %v1041 = vpop.permute.xlu0 %1040
        %1042 = vrot.lane.b32.xlu0 %v1026, 56
        %v1043 = vpop.permute.xlu0 %1042
        %1044 = vrot.lane.b32.xlu0 %v1027, 56
        %v1045 = vpop.permute.xlu0 %1044
        %1046 = vrot.lane.b32.xlu0 %v1028, 56
        %v1047 = vpop.permute.xlu0 %1046
        %1048 = vrot.lane.b32.xlu0 %v1029, 56
        %v1049 = vpop.permute.xlu0 %1048
        %vm1060 = vcmask 519616
        %1061 = vst.msk [vmem:[#allocation2] sm:$0xf] %vm1060, %v1031
        %1062 = vst.msk [vmem:[#allocation2 + $0x4] sm:$0xf] %vm1060, %v1033
        %1063 = vst.msk [vmem:[#allocation2 + $0x8] sm:$0xf] %vm1060, %v1035
        %1064 = vst.msk [vmem:[#allocation2 + $0xc] sm:$0xf] %vm1060, %v1037
        %1065 = vst.msk [vmem:[#allocation2 + $0x10] sm:$0xf] %vm1060, %v1039
        %1066 = vst.msk [vmem:[#allocation2 + $0x14] sm:$0xf] %vm1060, %v1041
        %1067 = vst.msk [vmem:[#allocation2 + $0x18] sm:$0xf] %vm1060, %v1043
        %1068 = vst.msk [vmem:[#allocation2 + $0x1c] sm:$0xf] %vm1060, %v1045
        %1069 = vst.msk [vmem:[#allocation2 + $0x20] sm:$0xf] %vm1060, %v1047
        %vm1070 = vcmask 518592
        %1071 = vst.msk [vmem:[#allocation2 + $0x24] sm:$0x7] %vm1070, %v1049
        %v1072 = vld [vmem:[%s350 + $0x16] sm:$0xff]
        %v1073 = vld [vmem:[%s350 + $0x1e] sm:$0xff]
        %v1074 = vld [vmem:[%s350 + $0x26] sm:$0xff]
        %v1075 = vld [vmem:[%s350 + $0x2e] sm:$0xff]
        %v1076 = vld [vmem:[%s350 + $0x36] sm:$0xff]
        %v1077 = vld [vmem:[%s350 + $0x3e] sm:$0xff]
        %v1078 = vld [vmem:[%s350 + $0x46] sm:$0xff]
        %v1079 = vld [vmem:[%s350 + $0x4e] sm:$0xff]
        %v1080 = vld [vmem:[%s350 + $0x56] sm:$0xff]
        %v1081 = vld [vmem:[%s350 + $0x5e] sm:$0x3f]
        %v1082 = vpack.c.bf16 %v1073, %v1072
        %v1083 = vpack.c.bf16 %v1075, %v1074
        %v1084 = vpack.c.bf16 %v1077, %v1076
        %v1085 = vpack.c.bf16 %v1079, %v1078
        %v1086 = vpack.c.bf16 %v1081, %v1080
        %v1092 = vunpack.c.l.b16 %v1082
        %v1093 = vunpack.c.h.b16 %v1082
        %v1094 = vunpack.c.l.b16 %v1083
        %v1095 = vunpack.c.h.b16 %v1083
        %v1096 = vunpack.c.l.b16 %v1084
        %v1097 = vunpack.c.h.b16 %v1084
        %v1098 = vunpack.c.l.b16 %v1085
        %v1099 = vunpack.c.h.b16 %v1085
        %v1100 = vunpack.c.l.b16 %v1086
        %v1101 = vunpack.c.h.b16 %v1086
        %v1102 = vpack.c.b16 %v1092, %v1092
        %v1103 = vpack.c.b16 %v1093, %v1093
        %v1104 = vpack.c.b16 %v1094, %v1094
        %v1105 = vpack.c.b16 %v1095, %v1095
        %v1106 = vpack.c.b16 %v1096, %v1096
        %v1107 = vpack.c.b16 %v1097, %v1097
        %v1108 = vpack.c.b16 %v1098, %v1098
        %v1109 = vpack.c.b16 %v1099, %v1099
        %v1110 = vpack.c.b16 %v1100, %v1100
        %v1111 = vpack.c.b16 %v1101, %v1101
        %1112 = vrot.lane.b32.xlu0 %v1102, 64
        %v1113 = vpop.permute.xlu0 %1112
        %1114 = vrot.lane.b32.xlu0 %v1103, 64
        %v1115 = vpop.permute.xlu0 %1114
        %1116 = vrot.lane.b32.xlu0 %v1104, 64
        %v1117 = vpop.permute.xlu0 %1116
        %1118 = vrot.lane.b32.xlu0 %v1105, 64
        %v1119 = vpop.permute.xlu0 %1118
        %1120 = vrot.lane.b32.xlu0 %v1106, 64
        %v1121 = vpop.permute.xlu0 %1120
        %1122 = vrot.lane.b32.xlu0 %v1107, 64
        %v1123 = vpop.permute.xlu0 %1122
        %1124 = vrot.lane.b32.xlu0 %v1108, 64
        %v1125 = vpop.permute.xlu0 %1124
        %1126 = vrot.lane.b32.xlu0 %v1109, 64
        %v1127 = vpop.permute.xlu0 %1126
        %1128 = vrot.lane.b32.xlu0 %v1110, 64
        %v1129 = vpop.permute.xlu0 %1128
        %1130 = vrot.lane.b32.xlu0 %v1111, 64
        %v1131 = vpop.permute.xlu0 %1130
        %vm1142 = vcmask 585216
        %1143 = vst.msk [vmem:[#allocation2] sm:$0xf] %vm1142, %v1113
        %1144 = vst.msk [vmem:[#allocation2 + $0x4] sm:$0xf] %vm1142, %v1115
        %1145 = vst.msk [vmem:[#allocation2 + $0x8] sm:$0xf] %vm1142, %v1117
        %1146 = vst.msk [vmem:[#allocation2 + $0xc] sm:$0xf] %vm1142, %v1119
        %1147 = vst.msk [vmem:[#allocation2 + $0x10] sm:$0xf] %vm1142, %v1121
        %1148 = vst.msk [vmem:[#allocation2 + $0x14] sm:$0xf] %vm1142, %v1123
        %1149 = vst.msk [vmem:[#allocation2 + $0x18] sm:$0xf] %vm1142, %v1125
        %1150 = vst.msk [vmem:[#allocation2 + $0x1c] sm:$0xf] %vm1142, %v1127
        %1151 = vst.msk [vmem:[#allocation2 + $0x20] sm:$0xf] %vm1142, %v1129
        %vm1152 = vcmask 584192
        %1153 = vst.msk [vmem:[#allocation2 + $0x24] sm:$0x7] %vm1152, %v1131
        %v1154 = vld [vmem:[#allocation2] sm:$0xf]
        %v1155 = vld [vmem:[#allocation2 + $0x4] sm:$0xf]
        %v1156 = vld [vmem:[#allocation2 + $0x8] sm:$0xf]
        %v1157 = vld [vmem:[#allocation2 + $0xc] sm:$0xf]
        %v1158 = vld [vmem:[#allocation2 + $0x10] sm:$0xf]
        %v1159 = vld [vmem:[#allocation2 + $0x14] sm:$0xf]
        %v1160 = vld [vmem:[#allocation2 + $0x18] sm:$0xf]
        %v1161 = vld [vmem:[#allocation2 + $0x1c] sm:$0xf]
        %v1162 = vld [vmem:[#allocation2 + $0x20] sm:$0xf]
        %v1163 = vld [vmem:[#allocation2 + $0x24] sm:$0x7]
        %v1164 = vld [vmem:[#allocation9] sm:$0xf]
        %v1165 = vld [vmem:[#allocation9 + $0x4] sm:$0xf]
        %v1166 = vld [vmem:[#allocation9 + $0x8] sm:$0xf]
        %v1167 = vld [vmem:[#allocation9 + $0xc] sm:$0xf]
        %v1168 = vld [vmem:[#allocation9 + $0x10] sm:$0xf]
        %v1169 = vld [vmem:[#allocation9 + $0x14] sm:$0xf]
        %v1170 = vld [vmem:[#allocation9 + $0x18] sm:$0xf]
        %v1171 = vld [vmem:[#allocation9 + $0x1c] sm:$0xf]
        %v1172 = vld [vmem:[#allocation9 + $0x20] sm:$0xf]
        %v1173 = vld [vmem:[#allocation10] sm:$0x1]
        %v1175 = vlaneseq
        %v1176 = vshrl.u32 %v1175, 7
        %v1177 = vsub.s32 0, %v1176
        %v1178 = vrot.slane %v1173, %v1177
        %v1190 = vunpack.c.l.b16 %v1154
        %v1191 = vunpack.c.l.b16 %v1155
        %v1192 = vunpack.c.l.b16 %v1156
        %v1193 = vunpack.c.l.b16 %v1157
        %v1194 = vunpack.c.l.b16 %v1158
        %v1195 = vunpack.c.l.b16 %v1159
        %v1196 = vunpack.c.l.b16 %v1160
        %v1197 = vunpack.c.l.b16 %v1161
        %v1198 = vunpack.c.l.b16 %v1162
        %v1199 = vunpack.c.l.b16 %v1163
        %v1200 = vpack.c.b16 %v1191, %v1190
        %v1201 = vpack.c.b16 %v1193, %v1192
        %v1202 = vpack.c.b16 %v1195, %v1194
        %v1203 = vpack.c.b16 %v1197, %v1196
        %v1204 = vpack.c.b16 %v1199, %v1198
        %v1214 = vunpack.c.l.b16 %v1164
        %v1215 = vunpack.c.l.b16 %v1165
        %v1216 = vunpack.c.l.b16 %v1166
        %v1217 = vunpack.c.l.b16 %v1167
        %v1218 = vunpack.c.l.b16 %v1168
        %v1219 = vunpack.c.l.b16 %v1169
        %v1220 = vunpack.c.l.b16 %v1170
        %v1221 = vunpack.c.l.b16 %v1171
        %v1222 = vunpack.c.l.b16 %v1172
        %v1223 = vpack.c.b16 %v1215, %v1214
        %v1224 = vpack.c.b16 %v1217, %v1216
        %v1225 = vpack.c.b16 %v1219, %v1218
        %v1226 = vpack.c.b16 %v1221, %v1220
        %v1227 = vpack.c.b16 %v1222, %v1222
        %vm1232 = vcmask 588800
        %v1234 = vsel %vm1232, %v1200, 0
        %v1237 = vsel %vm1232, %v1201, 0
        %v1240 = vsel %vm1232, %v1202, 0
        %v1243 = vsel %vm1232, %v1203, 0
        %v1246 = vsel %vm1232, %v1204, 0
        %vm1248 = vcmask 1043456
        %v1250 = vsel %vm1248, %v1227, 0
        %1252 = vmatprep.subr.bf16.mxu0 0
        %1253 = vmatpush1.bf16.msra.mxu0 %v1223
        %1254 = vmatprep.subr.bf16.mxu0 0
        %1255 = vmatpush1.bf16.msra.mxu0 %v1224
        %1256 = vmatprep.subr.bf16.mxu0 0
        %1257 = vmatpush1.bf16.msra.mxu0 %v1225
        %1258 = vmatprep.subr.bf16.mxu0 0
        %1259 = vmatpush1.bf16.msra.mxu0 %v1226
        %1260 = vmatprep.subr.bf16.mxu0 0
        %1261 = vmatpush1.bf16.msra.mxu0 %v1250
        %1262 = vmatprep.subr.bf16.mxu0 0
        %1263 = vmatpush1.bf16.msra.mxu0 0
        %1264 = vmatprep.subr.bf16.mxu0 0
        %1265 = vmatpush1.bf16.msra.mxu0 0
        %1266 = vmatprep.subr.bf16.mxu0 0
        %1267 = vmatpush1.bf16.msra.mxu0 0
        %1268 = vmatprep.subr.bf16.mxu0 0
        %1269 = vmatpush1.bf16.msra.mxu0 0
        %1270 = vmatprep.subr.bf16.mxu0 0
        %1271 = vmatpush1.bf16.msra.mxu0 0
        %1272 = vmatprep.subr.bf16.mxu0 0
        %1273 = vmatpush1.bf16.msra.mxu0 0
        %1274 = vmatprep.subr.bf16.mxu0 0
        %1275 = vmatpush1.bf16.msra.mxu0 0
        %1276 = vmatprep.subr.bf16.mxu0 0
        %1277 = vmatpush1.bf16.msra.mxu0 0
        %1278 = vmatprep.subr.bf16.mxu0 0
        %1279 = vmatpush1.bf16.msra.mxu0 0
        %1280 = vmatprep.subr.bf16.mxu0 0
        %1281 = vmatpush1.bf16.msra.mxu0 0
        %1282 = vmatprep.subr.bf16.mxu0 0
        %1283 = vmatpush1.bf16.msra.mxu0 0
        %1284 = vmatprep.mubr.bf16.mxu0 0
        %1285 = vmatmul.mubr.bf16.gmra.mrb[0].mxu0 %v1234
        %v1286 = vpop.f32.mrb[0].mxu0
        %v1287 = vadd.f32 %v1178, %v1286
        %v1288 = vpop.f32.mrb[0].mxu0
        %v1289 = vpop.f32.mrb[0].mxu0
        %v1290 = vadd.f32 %v1178, %v1289
        %v1291 = vpop.f32.mrb[0].mxu0
        %1292 = vmatprep.mubr.bf16.mxu0 0
        %1293 = vmatmul.mubr.bf16.gmra.mrb[0].mxu0 %v1237
        %v1294 = vpop.f32.mrb[0].mxu0
        %v1295 = vadd.f32 %v1178, %v1294
        %v1296 = vpop.f32.mrb[0].mxu0
        %v1297 = vpop.f32.mrb[0].mxu0
        %v1298 = vadd.f32 %v1178, %v1297
        %v1299 = vpop.f32.mrb[0].mxu0
        %1300 = vmatprep.mubr.bf16.mxu0 0
        %1301 = vmatmul.mubr.bf16.gmra.mrb[0].mxu0 %v1240
        %v1302 = vpop.f32.mrb[0].mxu0
        %v1303 = vadd.f32 %v1178, %v1302
        %v1304 = vpop.f32.mrb[0].mxu0
        %v1305 = vpop.f32.mrb[0].mxu0
        %v1306 = vadd.f32 %v1178, %v1305
        %v1307 = vpop.f32.mrb[0].mxu0
        %1308 = vmatprep.mubr.bf16.mxu0 0
        %1309 = vmatmul.mubr.bf16.gmra.mrb[0].mxu0 %v1243
        %v1310 = vpop.f32.mrb[0].mxu0
        %v1311 = vadd.f32 %v1178, %v1310
        %v1312 = vpop.f32.mrb[0].mxu0
        %v1313 = vpop.f32.mrb[0].mxu0
        %v1314 = vadd.f32 %v1178, %v1313
        %v1315 = vpop.f32.mrb[0].mxu0
        %1316 = vmatprep.mubr.bf16.mxu0 0
        %1317 = vmatmul.mubr.bf16.gmra.mrb[0].mxu0 %v1246
        %v1318 = vpop.f32.mrb[0].mxu0
        %v1319 = vadd.f32 %v1178, %v1318
        %v1320 = vpop.f32.mrb[0].mxu0
        %v1321 = vpop.f32.mrb[0].mxu0
        %v1322 = vadd.f32 %v1178, %v1321
        %v1323 = vpop.f32.mrb[0].mxu0
        %1324 = vdwg.mxu0
        %v1325 = vld [vmem:[%s363 + $0xb] sm:$0xff]
        %v1326 = vld [vmem:[%s363 + $0x13] sm:$0xff]
        %v1327 = vld [vmem:[%s363 + $0x1b] sm:$0xff]
        %v1328 = vld [vmem:[%s363 + $0x23] sm:$0xff]
        %v1329 = vld [vmem:[%s363 + $0x2b] sm:$0xff]
        %v1330 = vld [vmem:[%s363 + $0x33] sm:$0xff]
        %v1331 = vld [vmem:[%s363 + $0x3b] sm:$0xff]
        %v1332 = vld [vmem:[%s363 + $0x43] sm:$0xff]
        %v1333 = vld [vmem:[%s363 + $0x4b] sm:$0xff]
        %v1334 = vld [vmem:[%s363 + $0x53] sm:$0x3f]
        %v1335 = vld [vmem:[#allocation12] sm:$0x1]
        %1337 = vset.pattern.permute.xlu0 0
        %1338 = vperm.xlu0 %1337, %v1325
        %v1339 = vpop.permute.xlu0 %1338
        %1342 = vset.pattern.permute.xlu0 0
        %1343 = vperm.xlu0 %1342, %v1326
        %v1344 = vpop.permute.xlu0 %1343
        %1347 = vset.pattern.permute.xlu0 0
        %1348 = vperm.xlu0 %1347, %v1327
        %v1349 = vpop.permute.xlu0 %1348
        %1352 = vset.pattern.permute.xlu0 0
        %1353 = vperm.xlu0 %1352, %v1328
        %v1354 = vpop.permute.xlu0 %1353
        %1357 = vset.pattern.permute.xlu0 0
        %1358 = vperm.xlu0 %1357, %v1329
        %v1359 = vpop.permute.xlu0 %1358
        %1362 = vset.pattern.permute.xlu0 0
        %1363 = vperm.xlu0 %1362, %v1330
        %v1364 = vpop.permute.xlu0 %1363
        %1367 = vset.pattern.permute.xlu0 0
        %1368 = vperm.xlu0 %1367, %v1331
        %v1369 = vpop.permute.xlu0 %1368
        %1372 = vset.pattern.permute.xlu0 0
        %1373 = vperm.xlu0 %1372, %v1332
        %v1374 = vpop.permute.xlu0 %1373
        %1377 = vset.pattern.permute.xlu0 0
        %1378 = vperm.xlu0 %1377, %v1333
        %v1379 = vpop.permute.xlu0 %1378
        %1382 = vset.pattern.permute.xlu0 0
        %1383 = vperm.xlu0 %1382, %v1334
        %v1384 = vpop.permute.xlu0 %1383
        %v1387 = vlaneseq
        %v1388 = vshrl.u32 %v1387, 7
        %v1389 = vsub.s32 0, %v1388
        %v1390 = vrot.slane %v1335, %v1389
        %v1392 = vmul.f32 %v1339, %v1390
        %v1393 = vmul.f32 %v1344, %v1390
        %v1394 = vmul.f32 %v1349, %v1390
        %v1395 = vmul.f32 %v1354, %v1390
        %v1396 = vmul.f32 %v1359, %v1390
        %v1397 = vmul.f32 %v1364, %v1390
        %v1398 = vmul.f32 %v1369, %v1390
        %v1399 = vmul.f32 %v1374, %v1390
        %v1400 = vmul.f32 %v1379, %v1390
        %v1401 = vmul.f32 %v1384, %v1390
        %v1402 = vadd.f32 %v1287, %v1392
        %v1403 = vadd.f32 %v1290, %v1393
        %v1404 = vadd.f32 %v1295, %v1394
        %v1405 = vadd.f32 %v1298, %v1395
        %v1406 = vadd.f32 %v1303, %v1396
        %v1407 = vadd.f32 %v1306, %v1397
        %v1408 = vadd.f32 %v1311, %v1398
        %v1409 = vadd.f32 %v1314, %v1399
        %v1410 = vadd.f32 %v1319, %v1400
        %v1411 = vadd.f32 %v1322, %v1401
        %v1412 = vmul.f32 %v1402, 0.2
        %v1413 = vmul.f32 %v1403, 0.2
        %v1414 = vmul.f32 %v1404, 0.2
        %v1415 = vmul.f32 %v1405, 0.2
        %v1416 = vmul.f32 %v1406, 0.2
        %v1417 = vmul.f32 %v1407, 0.2
        %v1418 = vmul.f32 %v1408, 0.2
        %v1419 = vmul.f32 %v1409, 0.2
        %v1420 = vmul.f32 %v1410, 0.2
        %v1421 = vmul.f32 %v1411, 0.2
        %v1422 = vmax.f32 %v1402, %v1412
        %v1423 = vmax.f32 %v1403, %v1413
        %v1424 = vmax.f32 %v1404, %v1414
        %v1425 = vmax.f32 %v1405, %v1415
        %v1426 = vmax.f32 %v1406, %v1416
        %v1427 = vmax.f32 %v1407, %v1417
        %v1428 = vmax.f32 %v1408, %v1418
        %v1429 = vmax.f32 %v1409, %v1419
        %v1430 = vmax.f32 %v1410, %v1420
        %v1431 = vmax.f32 %v1411, %v1421
        %1433 = vset.pattern.permute.xlu0 0
        %1434 = vperm.xlu0 %1433, %v426
        %v1435 = vpop.permute.xlu0 %1434
        %1438 = vset.pattern.permute.xlu0 0
        %1439 = vperm.xlu0 %1438, %v427
        %v1440 = vpop.permute.xlu0 %1439
        %1443 = vset.pattern.permute.xlu0 0
        %1444 = vperm.xlu0 %1443, %v428
        %v1445 = vpop.permute.xlu0 %1444
        %1448 = vset.pattern.permute.xlu0 0
        %1449 = vperm.xlu0 %1448, %v429
        %v1450 = vpop.permute.xlu0 %1449
        %1453 = vset.pattern.permute.xlu0 0
        %1454 = vperm.xlu0 %1453, %v430
        %v1455 = vpop.permute.xlu0 %1454
        %1458 = vset.pattern.permute.xlu0 0
        %1459 = vperm.xlu0 %1458, %v431
        %v1460 = vpop.permute.xlu0 %1459
        %1463 = vset.pattern.permute.xlu0 0
        %1464 = vperm.xlu0 %1463, %v432
        %v1465 = vpop.permute.xlu0 %1464
        %1468 = vset.pattern.permute.xlu0 0
        %1469 = vperm.xlu0 %1468, %v433
        %v1470 = vpop.permute.xlu0 %1469
        %1473 = vset.pattern.permute.xlu0 0
        %1474 = vperm.xlu0 %1473, %v434
        %v1475 = vpop.permute.xlu0 %1474
        %1478 = vset.pattern.permute.xlu0 0
        %1479 = vperm.xlu0 %1478, %v435
        %v1480 = vpop.permute.xlu0 %1479
        %v1482 = vmul.f32 %v1422, %v1435
        %v1483 = vmul.f32 %v1423, %v1440
        %v1484 = vmul.f32 %v1424, %v1445
        %v1485 = vmul.f32 %v1425, %v1450
        %v1486 = vmul.f32 %v1426, %v1455
        %v1487 = vmul.f32 %v1427, %v1460
        %v1488 = vmul.f32 %v1428, %v1465
        %v1489 = vmul.f32 %v1429, %v1470
        %v1490 = vmul.f32 %v1430, %v1475
        %v1491 = vmul.f32 %v1431, %v1480
        %vm1492 = vcmask 64512
        %v1493 = vsel %vm1492, %v1482, 0.0
        %v1494 = vsel %vm1492, %v1483, 0.0
        %v1495 = vadd.f32 %v1493, %v1494
        %v1496 = vsel %vm1492, %v1484, 0.0
        %v1497 = vadd.f32 %v1495, %v1496
        %v1498 = vsel %vm1492, %v1485, 0.0
        %v1499 = vadd.f32 %v1497, %v1498
        %v1500 = vsel %vm1492, %v1486, 0.0
        %v1501 = vadd.f32 %v1499, %v1500
        %v1502 = vsel %vm1492, %v1487, 0.0
        %v1503 = vadd.f32 %v1501, %v1502
        %v1504 = vsel %vm1492, %v1488, 0.0
        %v1505 = vadd.f32 %v1503, %v1504
        %v1506 = vsel %vm1492, %v1489, 0.0
        %v1507 = vadd.f32 %v1505, %v1506
        %v1508 = vsel %vm1492, %v1490, 0.0
        %v1509 = vadd.f32 %v1507, %v1508
        %vm1510 = vcmask 62464
        %v1511 = vsel %vm1510, %v1491, 0.0
        %v1512 = vadd.f32 %v1509, %v1511
        %v1513 = vrot.slane %v1512, 4
        %v1514 = vadd.f32 %v1512, %v1513
        %v1515 = vrot.slane %v1514, 2
        %v1516 = vadd.f32 %v1514, %v1515
        %v1517 = vrot.slane %v1516, 1
        %v1518 = vadd.f32 %v1516, %v1517
        %v1519 = vmul.f32 %v1518, 0.015625
        %v1520 = vsub.f32 %v1422, %v1519
        %v1521 = vsub.f32 %v1423, %v1519
        %v1522 = vsub.f32 %v1424, %v1519
        %v1523 = vsub.f32 %v1425, %v1519
        %v1524 = vsub.f32 %v1426, %v1519
        %v1525 = vsub.f32 %v1427, %v1519
        %v1526 = vsub.f32 %v1428, %v1519
        %v1527 = vsub.f32 %v1429, %v1519
        %v1528 = vsub.f32 %v1430, %v1519
        %v1529 = vsub.f32 %v1431, %v1519
        %v1530 = vmul.f32 %v1520, %v1435
        %v1531 = vmul.f32 %v1521, %v1440
        %v1532 = vmul.f32 %v1522, %v1445
        %v1533 = vmul.f32 %v1523, %v1450
        %v1534 = vmul.f32 %v1524, %v1455
        %v1535 = vmul.f32 %v1525, %v1460
        %v1536 = vmul.f32 %v1526, %v1465
        %v1537 = vmul.f32 %v1527, %v1470
        %v1538 = vmul.f32 %v1528, %v1475
        %v1539 = vmul.f32 %v1529, %v1480
        %v1540 = vmul.f32 %v1530, %v1530
        %v1541 = vmul.f32 %v1531, %v1531
        %v1542 = vmul.f32 %v1532, %v1532
        %v1543 = vmul.f32 %v1533, %v1533
        %v1544 = vmul.f32 %v1534, %v1534
        %v1545 = vmul.f32 %v1535, %v1535
        %v1546 = vmul.f32 %v1536, %v1536
        %v1547 = vmul.f32 %v1537, %v1537
        %v1548 = vmul.f32 %v1538, %v1538
        %v1549 = vmul.f32 %v1539, %v1539
        %v1550 = vsel %vm1492, %v1540, 0.0
        %v1551 = vsel %vm1492, %v1541, 0.0
        %v1552 = vadd.f32 %v1550, %v1551
        %v1553 = vsel %vm1492, %v1542, 0.0
        %v1554 = vadd.f32 %v1552, %v1553
        %v1555 = vsel %vm1492, %v1543, 0.0
        %v1556 = vadd.f32 %v1554, %v1555
        %v1557 = vsel %vm1492, %v1544, 0.0
        %v1558 = vadd.f32 %v1556, %v1557
        %v1559 = vsel %vm1492, %v1545, 0.0
        %v1560 = vadd.f32 %v1558, %v1559
        %v1561 = vsel %vm1492, %v1546, 0.0
        %v1562 = vadd.f32 %v1560, %v1561
        %v1563 = vsel %vm1492, %v1547, 0.0
        %v1564 = vadd.f32 %v1562, %v1563
        %v1565 = vsel %vm1492, %v1548, 0.0
        %v1566 = vadd.f32 %v1564, %v1565
        %v1567 = vsel %vm1510, %v1549, 0.0
        %v1568 = vadd.f32 %v1566, %v1567
        %v1569 = vrot.slane %v1568, 4
        %v1570 = vadd.f32 %v1568, %v1569
        %v1571 = vrot.slane %v1570, 2
        %v1572 = vadd.f32 %v1570, %v1571
        %v1573 = vrot.slane %v1572, 1
        %v1574 = vadd.f32 %v1572, %v1573
        %v1575 = vmul.f32 %v1574, 0.015625
        %v1576 = vadd.f32 %v1575, 1e-05
        %v1577 = vrsqrt.pop %v1576
        %v1578 = vmul.f32 %v1520, %v1577
        %v1579 = vmul.f32 %v1521, %v1577
        %v1580 = vmul.f32 %v1522, %v1577
        %v1581 = vmul.f32 %v1523, %v1577
        %v1582 = vmul.f32 %v1524, %v1577
        %v1583 = vmul.f32 %v1525, %v1577
        %v1584 = vmul.f32 %v1526, %v1577
        %v1585 = vmul.f32 %v1527, %v1577
        %v1586 = vmul.f32 %v1528, %v1577
        %v1587 = vmul.f32 %v1529, %v1577
        %v1588 = vld [vmem:[%s384 + $0x3] sm:$0x1]
        %v1589 = vadd.f32 %v1588, 1.0
        %v1590 = vlaneseq
        %v1591 = vshrl.u32 %v1590, 7
        %v1592 = vsub.s32 0, %v1591
        %v1593 = vrot.slane %v1589, %v1592
        %v1594 = vmul.f32 %v1578, %v1593
        %v1595 = vmul.f32 %v1579, %v1593
        %v1596 = vmul.f32 %v1580, %v1593
        %v1597 = vmul.f32 %v1581, %v1593
        %v1598 = vmul.f32 %v1582, %v1593
        %v1599 = vmul.f32 %v1583, %v1593
        %v1600 = vmul.f32 %v1584, %v1593
        %v1601 = vmul.f32 %v1585, %v1593
        %v1602 = vmul.f32 %v1586, %v1593
        %v1603 = vmul.f32 %v1587, %v1593
        %v1604 = vlaneseq
        %v1605 = vshrl.u32 %v1604, 7
        %v1606 = vsub.s32 0, %v1605
        %v1607 = vrot.slane %v1588, %v1606
        %1609 = vrot.lane.b32.xlu0 %v1607, 120
        %v1610 = vpop.permute.xlu0 %1609
        %v1612 = vadd.f32 %v1594, %v1610
        %v1613 = vadd.f32 %v1595, %v1610
        %v1614 = vadd.f32 %v1596, %v1610
        %v1615 = vadd.f32 %v1597, %v1610
        %v1616 = vadd.f32 %v1598, %v1610
        %v1617 = vadd.f32 %v1599, %v1610
        %v1618 = vadd.f32 %v1600, %v1610
        %v1619 = vadd.f32 %v1601, %v1610
        %v1620 = vadd.f32 %v1602, %v1610
        %v1621 = vadd.f32 %v1603, %v1610
        %1622 = vst.msk [vmem:[%s424] sm:$0xff] %vm1492, 0.0
        %1623 = vst.msk [vmem:[%s424 + $0x8] sm:$0x7] %vm496, 0.0
        %1624 = vst.msk [vmem:[%s424 + $0x59] sm:$0xff] %vm1492, 0.0
        %1625 = vst.msk [vmem:[%s424 + $0x61] sm:$0x7] %vm496, 0.0
        %1626 = vst.msk [vmem:[%s424 + $0xb] sm:$0xff] %vm1492, %v1612
        %1627 = vst.msk [vmem:[%s424 + $0x13] sm:$0xff] %vm1492, %v1613
        %1628 = vst.msk [vmem:[%s424 + $0x1b] sm:$0xff] %vm1492, %v1614
        %1629 = vst.msk [vmem:[%s424 + $0x23] sm:$0xff] %vm1492, %v1615
        %1630 = vst.msk [vmem:[%s424 + $0x2b] sm:$0xff] %vm1492, %v1616
        %1631 = vst.msk [vmem:[%s424 + $0x33] sm:$0xff] %vm1492, %v1617
        %1632 = vst.msk [vmem:[%s424 + $0x3b] sm:$0xff] %vm1492, %v1618
        %1633 = vst.msk [vmem:[%s424 + $0x43] sm:$0xff] %vm1492, %v1619
        %1634 = vst.msk [vmem:[%s424 + $0x4b] sm:$0xff] %vm1492, %v1620
        %1635 = vst.msk [vmem:[%s424 + $0x53] sm:$0x3f] %vm1510, %v1621
        %s1636 = sand.u32 %s199, 1
        %s1637 = scalar_lea.sflag [#allocation5], %s1636
        %s1638 = sand.u32 %s199, 1
        %s1639 = smul.addr %s1638, 104
        %s1640 = scalar_lea.vmem [#allocation15], %s1639
        // Predicated region
        $region77: #{generator_forward.14} parent=47 // pred_check
          %p1641 = pneg %p209
        $region78: #{generator_forward.14} parent=47 // pred_check_branch
          %1643 = sbr.rel (%p1641) target = $region80
        $region79: #{generator_forward.14} parent=47 // pred_region
          %s1645 = ssub.s32 1664, 1664
          %1646 = vsyncadd %s1637, %s1645
          %s1647 = smul.addr %s29, 13
          %s1648 = smul.addr %s1647, 128
          %s1649 = scalar_lea.hbm %s7, %s1648
          %s1650 = sshll.u32 %s1640, 4
          %s1651 = int_to_ptr.vmem [resolvable:$true] %s1650
          %1656 = dma.vmem_to_hbm [thread:$0]  %s1651, 1664, %s1649, %s1637, 128, 128, 8
        $region80: #{generator_forward.14} parent=47 // pred_fallthru
          _
      $region48: #{generator_forward.14} parent=5 // pred_fallthru
        _
      %p1657 = scmp.le.s32.totalorder 2, %s24
      // Predicated region
      $region81: #{generator_forward.14} parent=5 // pred_check
        %p1658 = pneg %p1657
      $region82: #{generator_forward.14} parent=5 // pred_check_branch
        %1660 = sbr.rel (%p1658) target = $region84
      $region83: #{generator_forward.14} parent=5 // pred_region
        %s1661 = ssub.s32 %s24, 2
        // Predicated region
        $region85: #{generator_forward.14} parent=83 // pred_check
          %p1662 = pneg %p215
        $region86: #{generator_forward.14} parent=83 // pred_check_branch
          %1664 = sbr.rel (%p1662) target = $region88
        $region87: #{generator_forward.14} parent=83 // pred_region
          %s1665 = sand.u32 %s200, 1
          %s1666 = scalar_lea.sflag [#allocation5], %s1665
          %s1667 = sand.u32 %s200, 1
          %s1668 = smul.addr %s1667, 104
          %s1669 = scalar_lea.vmem [#allocation15], %s1668
          %1670 = dma.done %s1666, 1664
        $region88: #{generator_forward.14} parent=83 // pred_fallthru
          _
      $region84: #{generator_forward.14} parent=5 // pred_fallthru
        _
    $region6: #{generator_forward.14} parent=1 // loop_footer
      %s28 = sadd.s32 1, %s24
    $region7: #{generator_forward.14} parent=1 // loop_footer_branch
      %23 = sbr.rel target = $region3
    $region8: #{generator_forward.14} parent=1 // loop_exit
      _
    %1671 = vsyncpa [#allocation4], 1
    %s1672 = scalar_lea.sflag [#allocation4], 1
    %1673 = vsyncpa %s1672, 1
    %1674 = vsyncpa [#allocation7], 1
    %1675 = vsyncpa [#allocation11], 1
    %1676 = vsyncpa [#allocation14], 1
    %s1677 = scalar_lea.sflag [#allocation14], 1
    %1678 = vsyncpa %s1677, 1
    %1679 = vsyncpa [#allocation5], 1
    %s1680 = scalar_lea.sflag [#allocation5], 1
    %1681 = vsyncpa %s1680, 1

</llo_original>
